<compile_context>
chip_gen: v7x
topology: tpu7x:2x2x1
jax: 0.10.0
libtpu: 0.0.40
codegen_flags: <defaults>
</compile_context>

<pallas_src>
import functools

import jax
import jax.numpy as jnp
import numpy as np
from jax.experimental import pallas as pl
from jax.experimental.pallas import tpu as pltpu

NEG_SLOPE = 0.01          # nn.LeakyReLU() default negative_slope
KSIZE = 3
PAD = 1
STRIDES = (1, 2, 2)
TILE_COUT = 256           # 2x128 lanes -> unmasked lane-dense stores


# --------------------------------------------------------------------------- #
# Kernel: fused matmul + bias + LeakyReLU, tiled over output channels.
# --------------------------------------------------------------------------- #
def _matmul_bias_lrelu_kernel(x_ref, w_ref, b_ref, o_ref, *, negative_slope):
    """x_ref: (M, K*Cin) bf16   w_ref: (K*Cin, Tco) bf16
       b_ref: (1, Tco)   f32    o_ref: (M, Tco)     f32
    """
    acc = jnp.dot(x_ref[...], w_ref[...], preferred_element_type=jnp.float32)
    acc = acc + b_ref[...]
    o_ref[...] = jnp.where(acc >= 0, acc, acc * negative_slope).astype(o_ref.dtype)


def _im2col(x_nlc_bf16, *, k, stride, pad):
    """(N, L, Cin) -> (N*Lout, K*Cin) with the strided conv windows laid out as
    column index = tap*Cin + cin (matches the (K, Cin, Cout)-flattened weights)."""
    n, l, c = x_nlc_bf16.shape
    x_pad = jnp.pad(x_nlc_bf16, ((0, 0), (pad, pad), (0, 0)))
    l_out = (l + 2 * pad - k) // stride + 1
    taps = [x_pad[:, t: t + stride * (l_out - 1) + 1: stride, :] for t in range(k)]
    cols = jnp.stack(taps, axis=2)                       # (N, Lout, K, Cin)
    return cols.reshape(n * l_out, k * c), l_out


def conv1d_bias_lrelu(x_nlc, w_flat, b_row, *, stride):
    """x_nlc: (N, L, Cin) f32.  w_flat: (K*Cin, Cout) bf16 (pre-normalized).
    b_row: (1, Cout) f32.  Returns (N, Lout, Cout) f32."""
    n, l, c_in = x_nlc.shape
    kc, c_out = w_flat.shape

    cols, l_out = _im2col(x_nlc.astype(jnp.bfloat16), k=KSIZE, stride=stride, pad=PAD)
    m = n * l_out

    tile = min(TILE_COUT, c_out)
    assert c_out % tile == 0
    grid = (c_out // tile,)

    out = pl.pallas_call(
        functools.partial(_matmul_bias_lrelu_kernel, negative_slope=NEG_SLOPE),
        out_shape=jax.ShapeDtypeStruct((m, c_out), jnp.float32),
        grid_spec=pltpu.PrefetchScalarGridSpec(
            num_scalar_prefetch=0,
            grid=grid,
            in_specs=[
                pl.BlockSpec((m, kc), lambda j: (0, 0)),      # activations (tiny, reused)
                pl.BlockSpec((kc, tile), lambda j: (0, j)),   # weight tile (dominant DMA)
                pl.BlockSpec((1, tile), lambda j: (0, j)),    # bias tile
            ],
            out_specs=pl.BlockSpec((m, tile), lambda j: (0, j)),
        ),
        compiler_params=pltpu.CompilerParams(
            dimension_semantics=("parallel",),                # megacore split on v7x
            vmem_limit_bytes=16 * 1024 * 1024,
        ),
    )(cols, w_flat, b_row)

    return out.reshape(n, l_out, c_out)


# --------------------------------------------------------------------------- #
# Parameters
# --------------------------------------------------------------------------- #
def init_encoder_params(key):
    specs = [(1024, 1025, KSIZE),   # conv1
             (512, 1024, KSIZE),    # conv2
             (256, 512, KSIZE)]     # conv3
    params = []
    for co, ci, k in specs:
        kv, kg, kb, key = jax.random.split(key, 4)
        v = 0.05 * jax.random.normal(kv, (co, ci, k), jnp.float32)
        g = 1.0 + 0.1 * jax.random.normal(kg, (co,), jnp.float32)
        b = 0.1 * jax.random.normal(kb, (co,), jnp.float32)
        params.append((v, g, b))
    return params


def prepare_encoder_params(raw_params):
    """One-time: weight_norm (torch default dim=0), transpose to (K*Cin, Cout),
    cast to bf16.  Done outside the forward so no per-call weight re-layout."""
    prepared = []
    for v, g, b in raw_params:
        c_out, c_in, k = v.shape
        norm = jnp.sqrt(jnp.sum(v.astype(jnp.float32) ** 2, axis=(1, 2), keepdims=True))
        w = g[:, None, None] * v / norm                              # (Cout, Cin, K) f32
        w_flat = jnp.transpose(w, (2, 1, 0)).reshape(k * c_in, c_out)
        prepared.append((w_flat.astype(jnp.bfloat16),
                         b.astype(jnp.float32).reshape(1, c_out)))
    return prepared


# --------------------------------------------------------------------------- #
# Forward
# --------------------------------------------------------------------------- #
@jax.jit
def _encoder_convs(x_ncl, prepared):
    x = jnp.transpose(x_ncl, (0, 2, 1))                    # NCL -> NLC
    outs = []
    for (w_flat, b_row), s in zip(prepared, STRIDES):
        x = conv1d_bias_lrelu(x, w_flat, b_row, stride=s)
        outs.append(jnp.transpose(x, (0, 2, 1)))           # back to NCL
    return tuple(outs)


def encoder_forward(x_ncl, prepared):
    """Mirrors Encoder.forward: returns (osize, x1, x2, x) in PyTorch NCL layout."""
    osize = tuple(x_ncl.shape)
    x1, x2, x3 = _encoder_convs(x_ncl, prepared)
    return osize, x1, x2, x3


# --------------------------------------------------------------------------- #
# Pure-JAX reference (lax conv, same bf16 operand quantization, f32 accum)
# --------------------------------------------------------------------------- #
def encoder_ref(x_ncl, raw_params):
    x = x_ncl
    outs = []
    for (v, g, b), s in zip(raw_params, STRIDES):
        norm = jnp.sqrt(jnp.sum(v ** 2, axis=(1, 2), keepdims=True))
        w = (g[:, None, None] * v / norm).astype(jnp.bfloat16)
        y = jax.lax.conv_general_dilated(
            x.astype(jnp.bfloat16), w, window_strides=(s,), padding=((PAD, PAD),),
            dimension_numbers=("NCH", "OIH", "NCH"),
            preferred_element_type=jnp.float32)
        y = y + b[None, :, None]
        x = jnp.where(y >= 0, y, NEG_SLOPE * y)
        outs.append(x)
    return tuple(outs)


if __name__ == "__main__":
    key = jax.random.PRNGKey(0)
    kx, kp = jax.random.split(key)

    N, C_IN, L = 2, 1025, 16                               # channels fixed by the module
    x = jax.random.normal(kx, (N, C_IN, L), jnp.float32)

    raw_params = init_encoder_params(kp)
    prepared = prepare_encoder_params(raw_params)          # one-time weight prep

    osize, x1, x2, x3 = encoder_forward(x, prepared)
    x1, x2, x3 = jax.block_until_ready((x1, x2, x3))

    assert osize == (N, C_IN, L)
    assert x1.shape == (N, 1024, L)
    assert x2.shape == (N, 512, L // 2)
    assert x3.shape == (N, 256, L // 4)

    r1, r2, r3 = encoder_ref(x, raw_params)
    for got, ref in ((x1, r1), (x2, r2), (x3, r3)):
        np.testing.assert_allclose(np.asarray(got), np.asarray(ref),
                                   rtol=2e-3, atol=2e-3)

    print("KERNEL_OK")
</pallas_src>

<mosaic_0001>
module attributes {stable_mosaic.version = 11 : i64} {
  func.func @_matmul_bias_lrelu_kernel(%arg0: i32, %arg1: memref<32x3075xbf16, #tpu.memory_space<vmem>>, %arg2: memref<3075x256xbf16, #tpu.memory_space<vmem>>, %arg3: memref<1x256xf32, #tpu.memory_space<vmem>>, %arg4: memref<32x256xf32, #tpu.memory_space<vmem>>) attributes {dimension_semantics = [#tpu.dimension_semantics<parallel>], iteration_bounds = array<i64: 4>, scalar_prefetch = 0 : i64, scratch_operands = 0 : i64, tpu.core_type = #tpu.core_type<tc>, window_params = [{pipeline_mode = #tpu.pipeline_mode<synchronous>, transform_indices = @transform_0, window_bounds = array<i64: 32, 3075>}, {transform_indices = @transform_1, window_bounds = array<i64: 3075, 256>}, {transform_indices = @transform_2, window_bounds = array<i64: 1, 256>}, {transform_indices = @transform_3, window_bounds = array<i64: 32, 256>}]} {
    %c0 = arith.constant 0 : index
    %c0_0 = arith.constant 0 : index
    %0 = vector.load %arg1[%c0, %c0_0] : memref<32x3075xbf16, #tpu.memory_space<vmem>>, vector<32x3075xbf16>
    %c0_1 = arith.constant 0 : index
    %c0_2 = arith.constant 0 : index
    %1 = vector.load %arg2[%c0_1, %c0_2] : memref<3075x256xbf16, #tpu.memory_space<vmem>>, vector<3075x256xbf16>
    %cst = arith.constant dense<0.000000e+00> : vector<32x256xf32>
    %2 = tpu.matmul %0, %1, %cst {dimension_numbers = #tpu.dot_dimension_numbers<[1], [0], [0], [1], [0, 0, 1, 1], [], []>} : vector<32x3075xbf16>, vector<3075x256xbf16>, vector<32x256xf32> -> vector<32x256xf32>
    %c0_3 = arith.constant 0 : index
    %c0_4 = arith.constant 0 : index
    %3 = vector.load %arg3[%c0_3, %c0_4] : memref<1x256xf32, #tpu.memory_space<vmem>>, vector<1x256xf32>
    %4 = vector.broadcast %3 : vector<1x256xf32> to vector<32x256xf32>
    %5 = arith.addf %2, %4 : vector<32x256xf32>
    %cst_5 = arith.constant 0.000000e+00 : f32
    %6 = vector.broadcast %cst_5 : f32 to vector<32x256xf32>
    %7 = arith.cmpf oge, %5, %6 : vector<32x256xf32>
    %cst_6 = arith.constant 0.00999999977 : f32
    %8 = vector.broadcast %cst_6 : f32 to vector<32x256xf32>
    %9 = arith.mulf %5, %8 : vector<32x256xf32>
    %10 = arith.select %7, %5, %9 : vector<32x256xi1>, vector<32x256xf32>
    %c0_7 = arith.constant 0 : index
    %c0_8 = arith.constant 0 : index
    %11 = vector.load %arg4[%c0_7, %c0_8] : memref<32x256xf32, #tpu.memory_space<vmem>>, vector<32x256xf32>
    tpu.vector_store %arg4[%c0_7, %c0_8], %10 {strides = array<i32>} : memref<32x256xf32, #tpu.memory_space<vmem>>, vector<32x256xf32>,
    return
  }
  func.func @transform_0(%arg0: i32) -> (i32, i32) {
    %c0_i32 = arith.constant 0 : i32
    %c0_i32_0 = arith.constant 0 : i32
    %c0_i32_1 = arith.constant 0 : i32
    return %c0_i32, %c0_i32_0 : i32, i32
  }
  func.func @transform_1(%arg0: i32) -> (i32, i32) {
    %c0_i32 = arith.constant 0 : i32
    %c0_i32_0 = arith.constant 0 : i32
    return %c0_i32, %arg0 : i32, i32
  }
  func.func @transform_2(%arg0: i32) -> (i32, i32) {
    %c0_i32 = arith.constant 0 : i32
    %c0_i32_0 = arith.constant 0 : i32
    return %c0_i32, %arg0 : i32, i32
  }
  func.func @transform_3(%arg0: i32) -> (i32, i32) {
    %c0_i32 = arith.constant 0 : i32
    %c0_i32_0 = arith.constant 0 : i32
    return %c0_i32, %arg0 : i32, i32
  }
}

module attributes {stable_mosaic.version = 11 : i64} {
  func.func @_matmul_bias_lrelu_kernel(%arg0: i32, %arg1: memref<16x3072xbf16, #tpu.memory_space<vmem>>, %arg2: memref<3072x256xbf16, #tpu.memory_space<vmem>>, %arg3: memref<1x256xf32, #tpu.memory_space<vmem>>, %arg4: memref<16x256xf32, #tpu.memory_space<vmem>>) attributes {dimension_semantics = [#tpu.dimension_semantics<parallel>], iteration_bounds = array<i64: 2>, scalar_prefetch = 0 : i64, scratch_operands = 0 : i64, tpu.core_type = #tpu.core_type<tc>, window_params = [{pipeline_mode = #tpu.pipeline_mode<synchronous>, transform_indices = @transform_0, window_bounds = array<i64: 16, 3072>}, {transform_indices = @transform_1, window_bounds = array<i64: 3072, 256>}, {transform_indices = @transform_2, window_bounds = array<i64: 1, 256>}, {transform_indices = @transform_3, window_bounds = array<i64: 16, 256>}]} {
    %c0 = arith.constant 0 : index
    %c0_0 = arith.constant 0 : index
    %0 = vector.load %arg1[%c0, %c0_0] : memref<16x3072xbf16, #tpu.memory_space<vmem>>, vector<16x3072xbf16>
    %c0_1 = arith.constant 0 : index
    %c0_2 = arith.constant 0 : index
    %1 = vector.load %arg2[%c0_1, %c0_2] : memref<3072x256xbf16, #tpu.memory_space<vmem>>, vector<3072x256xbf16>
    %cst = arith.constant dense<0.000000e+00> : vector<16x256xf32>
    %2 = tpu.matmul %0, %1, %cst {dimension_numbers = #tpu.dot_dimension_numbers<[1], [0], [0], [1], [0, 0, 1, 1], [], []>} : vector<16x3072xbf16>, vector<3072x256xbf16>, vector<16x256xf32> -> vector<16x256xf32>
    %c0_3 = arith.constant 0 : index
    %c0_4 = arith.constant 0 : index
    %3 = vector.load %arg3[%c0_3, %c0_4] : memref<1x256xf32, #tpu.memory_space<vmem>>, vector<1x256xf32>
    %4 = vector.broadcast %3 : vector<1x256xf32> to vector<16x256xf32>
    %5 = arith.addf %2, %4 : vector<16x256xf32>
    %cst_5 = arith.constant 0.000000e+00 : f32
    %6 = vector.broadcast %cst_5 : f32 to vector<16x256xf32>
    %7 = arith.cmpf oge, %5, %6 : vector<16x256xf32>
    %cst_6 = arith.constant 0.00999999977 : f32
    %8 = vector.broadcast %cst_6 : f32 to vector<16x256xf32>
    %9 = arith.mulf %5, %8 : vector<16x256xf32>
    %10 = arith.select %7, %5, %9 : vector<16x256xi1>, vector<16x256xf32>
    %c0_7 = arith.constant 0 : index
    %c0_8 = arith.constant 0 : index
    %11 = vector.load %arg4[%c0_7, %c0_8] : memref<16x256xf32, #tpu.memory_space<vmem>>, vector<16x256xf32>
    tpu.vector_store %arg4[%c0_7, %c0_8], %10 {strides = array<i32>} : memref<16x256xf32, #tpu.memory_space<vmem>>, vector<16x256xf32>,
    return
  }
  func.func @transform_0(%arg0: i32) -> (i32, i32) {
    %c0_i32 = arith.constant 0 : i32
    %c0_i32_0 = arith.constant 0 : i32
    %c0_i32_1 = arith.constant 0 : i32
    return %c0_i32, %c0_i32_0 : i32, i32
  }
  func.func @transform_1(%arg0: i32) -> (i32, i32) {
    %c0_i32 = arith.constant 0 : i32
    %c0_i32_0 = arith.constant 0 : i32
    return %c0_i32, %arg0 : i32, i32
  }
  func.func @transform_2(%arg0: i32) -> (i32, i32) {
    %c0_i32 = arith.constant 0 : i32
    %c0_i32_0 = arith.constant 0 : i32
    return %c0_i32, %arg0 : i32, i32
  }
  func.func @transform_3(%arg0: i32) -> (i32, i32) {
    %c0_i32 = arith.constant 0 : i32
    %c0_i32_0 = arith.constant 0 : i32
    return %c0_i32, %arg0 : i32, i32
  }
}

module attributes {stable_mosaic.version = 11 : i64} {
  func.func @_matmul_bias_lrelu_kernel(%arg0: i32, %arg1: memref<8x1536xbf16, #tpu.memory_space<vmem>>, %arg2: memref<1536x256xbf16, #tpu.memory_space<vmem>>, %arg3: memref<1x256xf32, #tpu.memory_space<vmem>>, %arg4: memref<8x256xf32, #tpu.memory_space<vmem>>) attributes {dimension_semantics = [#tpu.dimension_semantics<parallel>], iteration_bounds = array<i64: 1>, scalar_prefetch = 0 : i64, scratch_operands = 0 : i64, tpu.core_type = #tpu.core_type<tc>, window_params = [{pipeline_mode = #tpu.pipeline_mode<synchronous>, transform_indices = @transform_0, window_bounds = array<i64: 8, 1536>}, {transform_indices = @transform_1, window_bounds = array<i64: 1536, 256>}, {transform_indices = @transform_2, window_bounds = array<i64: 1, 256>}, {transform_indices = @transform_3, window_bounds = array<i64: 8, 256>}]} {
    %c0 = arith.constant 0 : index
    %c0_0 = arith.constant 0 : index
    %0 = vector.load %arg1[%c0, %c0_0] : memref<8x1536xbf16, #tpu.memory_space<vmem>>, vector<8x1536xbf16>
    %c0_1 = arith.constant 0 : index
    %c0_2 = arith.constant 0 : index
    %1 = vector.load %arg2[%c0_1, %c0_2] : memref<1536x256xbf16, #tpu.memory_space<vmem>>, vector<1536x256xbf16>
    %cst = arith.constant dense<0.000000e+00> : vector<8x256xf32>
    %2 = tpu.matmul %0, %1, %cst {dimension_numbers = #tpu.dot_dimension_numbers<[1], [0], [0], [1], [0, 0, 1, 1], [], []>} : vector<8x1536xbf16>, vector<1536x256xbf16>, vector<8x256xf32> -> vector<8x256xf32>
    %c0_3 = arith.constant 0 : index
    %c0_4 = arith.constant 0 : index
    %3 = vector.load %arg3[%c0_3, %c0_4] : memref<1x256xf32, #tpu.memory_space<vmem>>, vector<1x256xf32>
    %4 = vector.broadcast %3 : vector<1x256xf32> to vector<8x256xf32>
    %5 = arith.addf %2, %4 : vector<8x256xf32>
    %cst_5 = arith.constant 0.000000e+00 : f32
    %6 = vector.broadcast %cst_5 : f32 to vector<8x256xf32>
    %7 = arith.cmpf oge, %5, %6 : vector<8x256xf32>
    %cst_6 = arith.constant 0.00999999977 : f32
    %8 = vector.broadcast %cst_6 : f32 to vector<8x256xf32>
    %9 = arith.mulf %5, %8 : vector<8x256xf32>
    %10 = arith.select %7, %5, %9 : vector<8x256xi1>, vector<8x256xf32>
    %c0_7 = arith.constant 0 : index
    %c0_8 = arith.constant 0 : index
    %11 = vector.load %arg4[%c0_7, %c0_8] : memref<8x256xf32, #tpu.memory_space<vmem>>, vector<8x256xf32>
    tpu.vector_store %arg4[%c0_7, %c0_8], %10 {strides = array<i32>} : memref<8x256xf32, #tpu.memory_space<vmem>>, vector<8x256xf32>,
    return
  }
  func.func @transform_0(%arg0: i32) -> (i32, i32) {
    %c0_i32 = arith.constant 0 : i32
    %c0_i32_0 = arith.constant 0 : i32
    %c0_i32_1 = arith.constant 0 : i32
    return %c0_i32, %c0_i32_0 : i32, i32
  }
  func.func @transform_1(%arg0: i32) -> (i32, i32) {
    %c0_i32 = arith.constant 0 : i32
    %c0_i32_0 = arith.constant 0 : i32
    return %c0_i32, %arg0 : i32, i32
  }
  func.func @transform_2(%arg0: i32) -> (i32, i32) {
    %c0_i32 = arith.constant 0 : i32
    %c0_i32_0 = arith.constant 0 : i32
    return %c0_i32, %arg0 : i32, i32
  }
  func.func @transform_3(%arg0: i32) -> (i32, i32) {
    %c0_i32 = arith.constant 0 : i32
    %c0_i32_0 = arith.constant 0 : i32
    return %c0_i32, %arg0 : i32, i32
  }
}

</mosaic_0001>

<llo_original>
// kernel: _encoder_convs.3
$region0: #{_encoder_convs.3}
  #allocation0 [shape = 'u32[]', space=smem, size = 0x4, offset = 0x4, fixed_abs, tag = 'smem constant byte address 0x4 - core index']
  #allocation1 [shape = 'u32[144,128]{1,0:T(1,128)}', space=vmem, size = 0x12000, scoped, tag = 'internal scratch']
  %s0 = inlined_call_operand.vmem [shape: bf16[32,3075], index: 0, kind: input, shape index: {}]
  %s1 = inlined_call_operand.hbm [shape: bf16[3075,1024], index: 1, kind: input, shape index: {}]
  %s2 = inlined_call_operand.hbm [shape: f32[1,1024], index: 2, kind: input, shape index: {}]
  %s3 = inlined_call_operand.vmem [shape: f32[32,1024], index: 3, kind: output, shape index: {}]
  %s4 = sld [smem:[#allocation0]]
  $region72: #{_encoder_convs.3} parent=0
    _
  %s6 = ssub.s32 1, %s4
  %s7 = scalar_select 0, %s6, %s4
  $region1: #{_encoder_convs.3} parent=0
    #allocation2 [shape = 'u8[3153920]{0}', space=vmem, size = 0x302000, scoped, tag = 'input window, operand 1']
    #allocation3 [shape = 's32[2]{0}', space=sflag, size = 0x8, scoped, tag = 'scoped memory for _encoder_convs.3']
    #allocation4 [shape = 'u8[2048]{0}', space=vmem, size = 0x800, scoped, tag = 'input window, operand 2']
    #allocation5 [shape = 's32[2]{0}', space=sflag, size = 0x8, scoped, tag = 'scoped memory for _encoder_convs.3']
    #allocation6 [shape = 'u8[65536]{0}', space=vmem, size = 0x10000, scoped, tag = 'output window, operand 0']
    %8 = vsyncpa [#allocation3], 0
    %s9 = scalar_lea.sflag [#allocation3], 1
    %10 = vsyncpa %s9, 0
    %11 = vsyncpa [#allocation5], 0
    %s12 = scalar_lea.sflag [#allocation5], 1
    %13 = vsyncpa %s12, 0
    loop: start=0, step=1, limit=6
    $region2: #{_encoder_convs.3} parent=1 // loop_pre_header
      _
    $region3: #{_encoder_convs.3} parent=1 // loop_header
      %s15 = sphi 0, %s19
      %p16 = scmp.ge.s32.totalorder %s15, 6
      %s23 = sphi 0, %s23
      %s25 = sphi 0, %s23
      %s26 = sphi 0, %s25
      %s40 = sphi 0, %s26
      %s46 = sphi 0, %s48
      %s49 = sphi 0, %s46
      %s50 = sphi 0, %s49
      %s66 = sphi 0, %s50
      %s72 = sphi 0, %s74
      %s75 = sphi 0, %s72
      %s76 = sphi 0, %s75
      %s92 = sphi 0, %s76
      %s98 = sphi 0, %s100
      %s101 = sphi 0, %s98
      %s102 = sphi 0, %s101
      %s118 = sphi 0, %s102
    $region4: #{_encoder_convs.3} parent=1 // loop_header_branch
      %18 = sbr.rel (%p16) target = $region8
    $region5: #{_encoder_convs.3} parent=1 // loop_body
      %s20 = ssub.s32 %s15, 1
      %s21 = ssub.s32 %s15, 2
      %s22 = sadd.s32 %s15, 1
      %s24 = sadd.s32 %s23, 1
      %p27 = scmp.eq.s32.totalorder %s15, 3
      %p28 = scmp.ne.s32.totalorder %s23, %s25
      %p29 = scmp.eq.s32.totalorder %s15, 0
      %p30 = por %p28, %p29
      %p31 = scmp.ne.s32.totalorder %s23, %s25
      %p32 = scmp.eq.s32.totalorder %s20, 3
      %p33 = por %p31, %p32
      %p34 = scmp.ne.s32.totalorder %s25, %s26
      %p35 = scmp.eq.s32.totalorder %s20, 0
      %p36 = por %p34, %p35
      %p37 = scmp.ne.s32.totalorder %s25, %s26
      %p38 = scmp.eq.s32.totalorder %s21, 3
      %p39 = por %p37, %p38
      %p41 = scmp.ne.s32.totalorder %s26, %s40
      %p42 = scmp.eq.s32.totalorder %s21, 0
      %p43 = por %p41, %p42
      %s44 = ssub.s32 %s15, %s22
      %p45 = scmp.eq.s32.totalorder %s44, 0
      %s47 = sadd.s32 %s46, 1
      %s48 = scalar_select %p45, %s46, %s47
      %p51 = pneg %p45
      %p52 = scmp.eq.s32.totalorder %s15, 3
      %p53 = por %p51, %p52
      %p54 = scmp.ne.s32.totalorder %s46, %s49
      %p55 = scmp.eq.s32.totalorder %s15, 0
      %p56 = por %p54, %p55
      %p57 = scmp.ne.s32.totalorder %s46, %s49
      %p58 = scmp.eq.s32.totalorder %s20, 3
      %p59 = por %p57, %p58
      %p60 = scmp.ne.s32.totalorder %s49, %s50
      %p61 = scmp.eq.s32.totalorder %s20, 0
      %p62 = por %p60, %p61
      %p63 = scmp.ne.s32.totalorder %s49, %s50
      %p64 = scmp.eq.s32.totalorder %s21, 3
      %p65 = por %p63, %p64
      %p67 = scmp.ne.s32.totalorder %s50, %s66
      %p68 = scmp.eq.s32.totalorder %s21, 0
      %p69 = por %p67, %p68
      %s70 = ssub.s32 %s15, %s22
      %p71 = scmp.eq.s32.totalorder %s70, 0
      %s73 = sadd.s32 %s72, 1
      %s74 = scalar_select %p71, %s72, %s73
      %p77 = pneg %p71
      %p78 = scmp.eq.s32.totalorder %s15, 3
      %p79 = por %p77, %p78
      %p80 = scmp.ne.s32.totalorder %s72, %s75
      %p81 = scmp.eq.s32.totalorder %s15, 0
      %p82 = por %p80, %p81
      %p83 = scmp.ne.s32.totalorder %s72, %s75
      %p84 = scmp.eq.s32.totalorder %s20, 3
      %p85 = por %p83, %p84
      %p86 = scmp.ne.s32.totalorder %s75, %s76
      %p87 = scmp.eq.s32.totalorder %s20, 0
      %p88 = por %p86, %p87
      %p89 = scmp.ne.s32.totalorder %s75, %s76
      %p90 = scmp.eq.s32.totalorder %s21, 3
      %p91 = por %p89, %p90
      %p93 = scmp.ne.s32.totalorder %s76, %s92
      %p94 = scmp.eq.s32.totalorder %s21, 0
      %p95 = por %p93, %p94
      %s96 = ssub.s32 %s15, %s22
      %p97 = scmp.eq.s32.totalorder %s96, 0
      %s99 = sadd.s32 %s98, 1
      %s100 = scalar_select %p97, %s98, %s99
      %p103 = pneg %p97
      %p104 = scmp.eq.s32.totalorder %s15, 3
      %p105 = por %p103, %p104
      %p106 = scmp.ne.s32.totalorder %s98, %s101
      %p107 = scmp.eq.s32.totalorder %s15, 0
      %p108 = por %p106, %p107
      %p109 = scmp.ne.s32.totalorder %s98, %s101
      %p110 = scmp.eq.s32.totalorder %s20, 3
      %p111 = por %p109, %p110
      %p112 = scmp.ne.s32.totalorder %s101, %s102
      %p113 = scmp.eq.s32.totalorder %s20, 0
      %p114 = por %p112, %p113
      %p115 = scmp.ne.s32.totalorder %s101, %s102
      %p116 = scmp.eq.s32.totalorder %s21, 3
      %p117 = por %p115, %p116
      %p119 = scmp.ne.s32.totalorder %s102, %s118
      %p120 = scmp.eq.s32.totalorder %s21, 0
      %p121 = por %p119, %p120
      %p122 = scmp.le.s32.totalorder 1, %s15
      %p123 = scmp.lt.s32.totalorder %s15, 5
      %p124 = pnand %p122, %p123
      %p125 = pneg %p124
      // Predicated region
      $region9: #{_encoder_convs.3} parent=5 // pred_check
        _
      $region10: #{_encoder_convs.3} parent=5 // pred_check_branch
        %127 = sbr.rel (%p124) target = $region12
      $region11: #{_encoder_convs.3} parent=5 // pred_region
        %s128 = ssub.s32 %s15, 1
        // Predicated region
        $region13: #{_encoder_convs.3} parent=11 // pred_check
          %p129 = pneg %p36
        $region14: #{_encoder_convs.3} parent=11 // pred_check_branch
          %131 = sbr.rel (%p129) target = $region16
        $region15: #{_encoder_convs.3} parent=11 // pred_region
          _
        $region16: #{_encoder_convs.3} parent=11 // pred_fallthru
          _
      $region12: #{_encoder_convs.3} parent=5 // pred_fallthru
        _
      %p132 = scmp.lt.s32.totalorder %s15, 4
      // Predicated region
      $region17: #{_encoder_convs.3} parent=5 // pred_check
        %p133 = pneg %p132
      $region18: #{_encoder_convs.3} parent=5 // pred_check_branch
        %135 = sbr.rel (%p133) target = $region20
      $region19: #{_encoder_convs.3} parent=5 // pred_region
        // Predicated region
        $region21: #{_encoder_convs.3} parent=19 // pred_check
          %p136 = pneg %p56
        $region22: #{_encoder_convs.3} parent=19 // pred_check_branch
          %138 = sbr.rel (%p136) target = $region24
        $region23: #{_encoder_convs.3} parent=19 // pred_region
          %s139 = sand.u32 %s46, 1
          %s140 = scalar_lea.sflag [#allocation3], %s139
          %s141 = sand.u32 %s46, 1
          %s142 = smul.addr %s141, 3080
          %s143 = scalar_lea.vmem [#allocation2], %s142
          %s144 = smul.u32 2, %s15
          %s146 = ssub.s32 49280, 49280
          %147 = vsyncadd %s140, %s146
          %s148 = smul.addr %s144, 64
          %s149 = scalar_lea.hbm %s1, %s148
          %s150 = sshll.u32 %s143, 4
          %s151 = int_to_ptr.vmem [resolvable:$true] %s150
          %156 = dma.hbm_to_vmem [thread:$0]  %s149, 49280, %s151, %s140, 512, 128, 8
        $region24: #{_encoder_convs.3} parent=19 // pred_fallthru
          _
        // Predicated region
        $region25: #{_encoder_convs.3} parent=19 // pred_check
          %p157 = pneg %p82
        $region26: #{_encoder_convs.3} parent=19 // pred_check_branch
          %159 = sbr.rel (%p157) target = $region28
        $region27: #{_encoder_convs.3} parent=19 // pred_region
          %s160 = sand.u32 %s72, 1
          %s161 = scalar_lea.sflag [#allocation5], %s160
          %s162 = sand.u32 %s72, 1
          %s163 = smul.addr %s162, 2
          %s164 = scalar_lea.vmem [#allocation4], %s163
          %s165 = smul.u32 2, %s15
          %s167 = ssub.s32 32, 32
          %168 = vsyncadd %s161, %s167
          %s169 = smul.addr %s165, 16
          %s170 = scalar_lea.hbm %s2, %s169
          %s172 = sshll.u32 %s164, 4
          %s173 = int_to_ptr.vmem [resolvable:$true] %s172
          %175 = dma.hbm_to_vmem [thread:$0]  %s170, 32, %s173, %s161
        $region28: #{_encoder_convs.3} parent=19 // pred_fallthru
          _
      $region20: #{_encoder_convs.3} parent=5 // pred_fallthru
        _
      %p176 = scmp.le.s32.totalorder 1, %s15
      %p177 = scmp.lt.s32.totalorder %s15, 5
      %p178 = pnand %p176, %p177
      %p179 = pneg %p178
      // Predicated region
      $region29: #{_encoder_convs.3} parent=5 // pred_check
        _
      $region30: #{_encoder_convs.3} parent=5 // pred_check_branch
        %181 = sbr.rel (%p178) target = $region32
      $region31: #{_encoder_convs.3} parent=5 // pred_region
        %s182 = ssub.s32 %s15, 1
        %s183 = sand.u32 %s49, 1
        %s184 = scalar_lea.sflag [#allocation3], %s183
        %s185 = sand.u32 %s49, 1
        %s186 = smul.addr %s185, 3080
        %s187 = scalar_lea.vmem [#allocation2], %s186
        // Predicated region
        $region33: #{_encoder_convs.3} parent=31 // pred_check
          %p188 = pneg %p62
        $region34: #{_encoder_convs.3} parent=31 // pred_check_branch
          %190 = sbr.rel (%p188) target = $region36
        $region35: #{_encoder_convs.3} parent=31 // pred_region
          %191 = dma.done %s184, 49280
        $region36: #{_encoder_convs.3} parent=31 // pred_fallthru
          _
        %s192 = sand.u32 %s75, 1
        %s193 = scalar_lea.sflag [#allocation5], %s192
        %s194 = sand.u32 %s75, 1
        %s195 = smul.addr %s194, 2
        %s196 = scalar_lea.vmem [#allocation4], %s195
        // Predicated region
        $region37: #{_encoder_convs.3} parent=31 // pred_check
          %p197 = pneg %p88
        $region38: #{_encoder_convs.3} parent=31 // pred_check_branch
          %199 = sbr.rel (%p197) target = $region40
        $region39: #{_encoder_convs.3} parent=31 // pred_region
          %200 = dma.done %s193, 32
        $region40: #{_encoder_convs.3} parent=31 // pred_fallthru
          _
        %p201 = pneg %p36
        %p202 = pneg %p33
        %s203 = sand.u32 %s49, 1
        %s204 = scalar_lea.sflag [#allocation3], %s203
        %s205 = sand.u32 %s49, 1
        %s206 = smul.addr %s205, 3080
        %s207 = scalar_lea.vmem [#allocation2], %s206
        %p208 = pneg %p62
        %p209 = pneg %p59
        %s210 = sand.u32 %s75, 1
        %s211 = scalar_lea.sflag [#allocation5], %s210
        %s212 = sand.u32 %s75, 1
        %s213 = smul.addr %s212, 2
        %s214 = scalar_lea.vmem [#allocation4], %s213
        %p215 = pneg %p88
        %p216 = pneg %p85
        %p217 = pneg %p114
        %p218 = pneg %p111
        %s219 = sand.u32 %s101, 1
        %s220 = sand.u32 %s101, 1
        %s221 = smul.addr %s220, 64
        %s222 = scalar_lea.vmem [#allocation6], %s221
        %s223 = smul.u32 2, %s20
        %s224 = smul.u32 2, %s20
        %s225 = smul.u32 2, %s20
        %v227 = vld [vmem:[%s0] sm:$0xff]
        %v228 = vld [vmem:[%s0 + $0x8] sm:$0xff]
        %v229 = vld [vmem:[%s0 + $0x10] sm:$0xff]
        %v230 = vld [vmem:[%s0 + $0x18] sm:$0xff]
        %v231 = vld [vmem:[%s0 + $0x20] sm:$0xff]
        %v232 = vld [vmem:[%s0 + $0x28] sm:$0xff]
        %v233 = vld [vmem:[%s0 + $0x30] sm:$0xff]
        %v234 = vld [vmem:[%s0 + $0x38] sm:$0xff]
        %v235 = vld [vmem:[%s0 + $0x40] sm:$0xff]
        %v236 = vld [vmem:[%s0 + $0x48] sm:$0xff]
        %v237 = vld [vmem:[%s0 + $0x50] sm:$0xff]
        %v238 = vld [vmem:[%s0 + $0x58] sm:$0xff]
        %v239 = vld [vmem:[%s0 + $0x60] sm:$0xf]
        %v240 = vld [vmem:[%s0 + $0x64] sm:$0xff]
        %v241 = vld [vmem:[%s0 + $0x6c] sm:$0xff]
        %v242 = vld [vmem:[%s0 + $0x74] sm:$0xff]
        %v243 = vld [vmem:[%s0 + $0x7c] sm:$0xff]
        %v244 = vld [vmem:[%s0 + $0x84] sm:$0xff]
        %v245 = vld [vmem:[%s0 + $0x8c] sm:$0xff]
        %v246 = vld [vmem:[%s0 + $0x94] sm:$0xff]
        %v247 = vld [vmem:[%s0 + $0x9c] sm:$0xff]
        %v248 = vld [vmem:[%s0 + $0xa4] sm:$0xff]
        %v249 = vld [vmem:[%s0 + $0xac] sm:$0xff]
        %v250 = vld [vmem:[%s0 + $0xb4] sm:$0xff]
        %v251 = vld [vmem:[%s0 + $0xbc] sm:$0xff]
        %v252 = vld [vmem:[%s0 + $0xc4] sm:$0xf]
        %v253 = vld [vmem:[%s0 + $0xc8] sm:$0xff]
        %v254 = vld [vmem:[%s0 + $0xd0] sm:$0xff]
        %v255 = vld [vmem:[%s0 + $0xd8] sm:$0xff]
        %v256 = vld [vmem:[%s0 + $0xe0] sm:$0xff]
        %v257 = vld [vmem:[%s0 + $0xe8] sm:$0xff]
        %v258 = vld [vmem:[%s0 + $0xf0] sm:$0xff]
        %v259 = vld [vmem:[%s0 + $0xf8] sm:$0xff]
        %v260 = vld [vmem:[%s0 + $0x100] sm:$0xff]
        %v261 = vld [vmem:[%s0 + $0x108] sm:$0xff]
        %v262 = vld [vmem:[%s0 + $0x110] sm:$0xff]
        %v263 = vld [vmem:[%s0 + $0x118] sm:$0xff]
        %v264 = vld [vmem:[%s0 + $0x120] sm:$0xff]
        %v265 = vld [vmem:[%s0 + $0x128] sm:$0xf]
        %v266 = vld [vmem:[%s0 + $0x12c] sm:$0xff]
        %v267 = vld [vmem:[%s0 + $0x134] sm:$0xff]
        %v268 = vld [vmem:[%s0 + $0x13c] sm:$0xff]
        %v269 = vld [vmem:[%s0 + $0x144] sm:$0xff]
        %v270 = vld [vmem:[%s0 + $0x14c] sm:$0xff]
        %v271 = vld [vmem:[%s0 + $0x154] sm:$0xff]
        %v272 = vld [vmem:[%s0 + $0x15c] sm:$0xff]
        %v273 = vld [vmem:[%s0 + $0x164] sm:$0xff]
        %v274 = vld [vmem:[%s0 + $0x16c] sm:$0xff]
        %v275 = vld [vmem:[%s0 + $0x174] sm:$0xff]
        %v276 = vld [vmem:[%s0 + $0x17c] sm:$0xff]
        %v277 = vld [vmem:[%s0 + $0x184] sm:$0xff]
        %v278 = vld [vmem:[%s0 + $0x18c] sm:$0xf]
        %v279 = vld [vmem:[%s187] sm:$0xff]
        %v280 = vld [vmem:[%s187 + $0x8] sm:$0xff]
        %v281 = vld [vmem:[%s187 + $0x10] sm:$0xff]
        %v282 = vld [vmem:[%s187 + $0x18] sm:$0xff]
        %v283 = vld [vmem:[%s187 + $0x20] sm:$0xff]
        %v284 = vld [vmem:[%s187 + $0x28] sm:$0xff]
        %v285 = vld [vmem:[%s187 + $0x30] sm:$0xff]
        %v286 = vld [vmem:[%s187 + $0x38] sm:$0xff]
        %v287 = vld [vmem:[%s187 + $0x40] sm:$0xff]
        %v288 = vld [vmem:[%s187 + $0x48] sm:$0xff]
        %v289 = vld [vmem:[%s187 + $0x50] sm:$0xff]
        %v290 = vld [vmem:[%s187 + $0x58] sm:$0xff]
        %v291 = vld [vmem:[%s187 + $0x60] sm:$0xff]
        %v292 = vld [vmem:[%s187 + $0x68] sm:$0xff]
        %v293 = vld [vmem:[%s187 + $0x70] sm:$0xff]
        %v294 = vld [vmem:[%s187 + $0x78] sm:$0xff]
        %v295 = vld [vmem:[%s187 + $0x80] sm:$0xff]
        %v296 = vld [vmem:[%s187 + $0x88] sm:$0xff]
        %v297 = vld [vmem:[%s187 + $0x90] sm:$0xff]
        %v298 = vld [vmem:[%s187 + $0x98] sm:$0xff]
        %v299 = vld [vmem:[%s187 + $0xa0] sm:$0xff]
        %v300 = vld [vmem:[%s187 + $0xa8] sm:$0xff]
        %v301 = vld [vmem:[%s187 + $0xb0] sm:$0xff]
        %v302 = vld [vmem:[%s187 + $0xb8] sm:$0xff]
        %v303 = vld [vmem:[%s187 + $0xc0] sm:$0xff]
        %v304 = vld [vmem:[%s187 + $0xc8] sm:$0xff]
        %v305 = vld [vmem:[%s187 + $0xd0] sm:$0xff]
        %v306 = vld [vmem:[%s187 + $0xd8] sm:$0xff]
        %v307 = vld [vmem:[%s187 + $0xe0] sm:$0xff]
        %v308 = vld [vmem:[%s187 + $0xe8] sm:$0xff]
        %v309 = vld [vmem:[%s187 + $0xf0] sm:$0xff]
        %v310 = vld [vmem:[%s187 + $0xf8] sm:$0xff]
        %v311 = vld [vmem:[%s187 + $0x100] sm:$0xff]
        %v312 = vld [vmem:[%s187 + $0x108] sm:$0xff]
        %v313 = vld [vmem:[%s187 + $0x110] sm:$0xff]
        %v314 = vld [vmem:[%s187 + $0x118] sm:$0xff]
        %v315 = vld [vmem:[%s187 + $0x120] sm:$0xff]
        %v316 = vld [vmem:[%s187 + $0x128] sm:$0xff]
        %v317 = vld [vmem:[%s187 + $0x130] sm:$0xff]
        %v318 = vld [vmem:[%s187 + $0x138] sm:$0xff]
        %v319 = vld [vmem:[%s187 + $0x140] sm:$0xff]
        %v320 = vld [vmem:[%s187 + $0x148] sm:$0xff]
        %v321 = vld [vmem:[%s187 + $0x150] sm:$0xff]
        %v322 = vld [vmem:[%s187 + $0x158] sm:$0xff]
        %v323 = vld [vmem:[%s187 + $0x160] sm:$0xff]
        %v324 = vld [vmem:[%s187 + $0x168] sm:$0xff]
        %v325 = vld [vmem:[%s187 + $0x170] sm:$0xff]
        %v326 = vld [vmem:[%s187 + $0x178] sm:$0xff]
        %v327 = vld [vmem:[%s187 + $0x180] sm:$0xff]
        %v328 = vld [vmem:[%s187 + $0x188] sm:$0xff]
        %v329 = vld [vmem:[%s187 + $0x190] sm:$0xff]
        %v330 = vld [vmem:[%s187 + $0x198] sm:$0xff]
        %v331 = vld [vmem:[%s187 + $0x1a0] sm:$0xff]
        %v332 = vld [vmem:[%s187 + $0x1a8] sm:$0xff]
        %v333 = vld [vmem:[%s187 + $0x1b0] sm:$0xff]
        %v334 = vld [vmem:[%s187 + $0x1b8] sm:$0xff]
        %v335 = vld [vmem:[%s187 + $0x1c0] sm:$0xff]
        %v336 = vld [vmem:[%s187 + $0x1c8] sm:$0xff]
        %v337 = vld [vmem:[%s187 + $0x1d0] sm:$0xff]
        %v338 = vld [vmem:[%s187 + $0x1d8] sm:$0xff]
        %v339 = vld [vmem:[%s187 + $0x1e0] sm:$0xff]
        %v340 = vld [vmem:[%s187 + $0x1e8] sm:$0xff]
        %v341 = vld [vmem:[%s187 + $0x1f0] sm:$0xff]
        %v342 = vld [vmem:[%s187 + $0x1f8] sm:$0xff]
        %v343 = vld [vmem:[%s187 + $0x200] sm:$0xff]
        %v344 = vld [vmem:[%s187 + $0x208] sm:$0xff]
        %v345 = vld [vmem:[%s187 + $0x210] sm:$0xff]
        %v346 = vld [vmem:[%s187 + $0x218] sm:$0xff]
        %v347 = vld [vmem:[%s187 + $0x220] sm:$0xff]
        %v348 = vld [vmem:[%s187 + $0x228] sm:$0xff]
        %v349 = vld [vmem:[%s187 + $0x230] sm:$0xff]
        %v350 = vld [vmem:[%s187 + $0x238] sm:$0xff]
        %v351 = vld [vmem:[%s187 + $0x240] sm:$0xff]
        %v352 = vld [vmem:[%s187 + $0x248] sm:$0xff]
        %v353 = vld [vmem:[%s187 + $0x250] sm:$0xff]
        %v354 = vld [vmem:[%s187 + $0x258] sm:$0xff]
        %v355 = vld [vmem:[%s187 + $0x260] sm:$0xff]
        %v356 = vld [vmem:[%s187 + $0x268] sm:$0xff]
        %v357 = vld [vmem:[%s187 + $0x270] sm:$0xff]
        %v358 = vld [vmem:[%s187 + $0x278] sm:$0xff]
        %v359 = vld [vmem:[%s187 + $0x280] sm:$0xff]
        %v360 = vld [vmem:[%s187 + $0x288] sm:$0xff]
        %v361 = vld [vmem:[%s187 + $0x290] sm:$0xff]
        %v362 = vld [vmem:[%s187 + $0x298] sm:$0xff]
        %v363 = vld [vmem:[%s187 + $0x2a0] sm:$0xff]
        %v364 = vld [vmem:[%s187 + $0x2a8] sm:$0xff]
        %v365 = vld [vmem:[%s187 + $0x2b0] sm:$0xff]
        %v366 = vld [vmem:[%s187 + $0x2b8] sm:$0xff]
        %v367 = vld [vmem:[%s187 + $0x2c0] sm:$0xff]
        %v368 = vld [vmem:[%s187 + $0x2c8] sm:$0xff]
        %v369 = vld [vmem:[%s187 + $0x2d0] sm:$0xff]
        %v370 = vld [vmem:[%s187 + $0x2d8] sm:$0xff]
        %v371 = vld [vmem:[%s187 + $0x2e0] sm:$0xff]
        %v372 = vld [vmem:[%s187 + $0x2e8] sm:$0xff]
        %v373 = vld [vmem:[%s187 + $0x2f0] sm:$0xff]
        %v374 = vld [vmem:[%s187 + $0x2f8] sm:$0xff]
        %v375 = vld [vmem:[%s187 + $0x300] sm:$0xff]
        %v376 = vld [vmem:[%s187 + $0x308] sm:$0xff]
        %v377 = vld [vmem:[%s187 + $0x310] sm:$0xff]
        %v378 = vld [vmem:[%s187 + $0x318] sm:$0xff]
        %v379 = vld [vmem:[%s187 + $0x320] sm:$0xff]
        %v380 = vld [vmem:[%s187 + $0x328] sm:$0xff]
        %v381 = vld [vmem:[%s187 + $0x330] sm:$0xff]
        %v382 = vld [vmem:[%s187 + $0x338] sm:$0xff]
        %v383 = vld [vmem:[%s187 + $0x340] sm:$0xff]
        %v384 = vld [vmem:[%s187 + $0x348] sm:$0xff]
        %v385 = vld [vmem:[%s187 + $0x350] sm:$0xff]
        %v386 = vld [vmem:[%s187 + $0x358] sm:$0xff]
        %v387 = vld [vmem:[%s187 + $0x360] sm:$0xff]
        %v388 = vld [vmem:[%s187 + $0x368] sm:$0xff]
        %v389 = vld [vmem:[%s187 + $0x370] sm:$0xff]
        %v390 = vld [vmem:[%s187 + $0x378] sm:$0xff]
        %v391 = vld [vmem:[%s187 + $0x380] sm:$0xff]
        %v392 = vld [vmem:[%s187 + $0x388] sm:$0xff]
        %v393 = vld [vmem:[%s187 + $0x390] sm:$0xff]
        %v394 = vld [vmem:[%s187 + $0x398] sm:$0xff]
        %v395 = vld [vmem:[%s187 + $0x3a0] sm:$0xff]
        %v396 = vld [vmem:[%s187 + $0x3a8] sm:$0xff]
        %v397 = vld [vmem:[%s187 + $0x3b0] sm:$0xff]
        %v398 = vld [vmem:[%s187 + $0x3b8] sm:$0xff]
        %v399 = vld [vmem:[%s187 + $0x3c0] sm:$0xff]
        %v400 = vld [vmem:[%s187 + $0x3c8] sm:$0xff]
        %v401 = vld [vmem:[%s187 + $0x3d0] sm:$0xff]
        %v402 = vld [vmem:[%s187 + $0x3d8] sm:$0xff]
        %v403 = vld [vmem:[%s187 + $0x3e0] sm:$0xff]
        %v404 = vld [vmem:[%s187 + $0x3e8] sm:$0xff]
        %v405 = vld [vmem:[%s187 + $0x3f0] sm:$0xff]
        %v406 = vld [vmem:[%s187 + $0x3f8] sm:$0xff]
        %v407 = vld [vmem:[%s187 + $0x400] sm:$0xff]
        %v408 = vld [vmem:[%s187 + $0x408] sm:$0xff]
        %v409 = vld [vmem:[%s187 + $0x410] sm:$0xff]
        %v410 = vld [vmem:[%s187 + $0x418] sm:$0xff]
        %v411 = vld [vmem:[%s187 + $0x420] sm:$0xff]
        %v412 = vld [vmem:[%s187 + $0x428] sm:$0xff]
        %v413 = vld [vmem:[%s187 + $0x430] sm:$0xff]
        %v414 = vld [vmem:[%s187 + $0x438] sm:$0xff]
        %v415 = vld [vmem:[%s187 + $0x440] sm:$0xff]
        %v416 = vld [vmem:[%s187 + $0x448] sm:$0xff]
        %v417 = vld [vmem:[%s187 + $0x450] sm:$0xff]
        %v418 = vld [vmem:[%s187 + $0x458] sm:$0xff]
        %v419 = vld [vmem:[%s187 + $0x460] sm:$0xff]
        %v420 = vld [vmem:[%s187 + $0x468] sm:$0xff]
        %v421 = vld [vmem:[%s187 + $0x470] sm:$0xff]
        %v422 = vld [vmem:[%s187 + $0x478] sm:$0xff]
        %v423 = vld [vmem:[%s187 + $0x480] sm:$0xff]
        %v424 = vld [vmem:[%s187 + $0x488] sm:$0xff]
        %v425 = vld [vmem:[%s187 + $0x490] sm:$0xff]
        %v426 = vld [vmem:[%s187 + $0x498] sm:$0xff]
        %v427 = vld [vmem:[%s187 + $0x4a0] sm:$0xff]
        %v428 = vld [vmem:[%s187 + $0x4a8] sm:$0xff]
        %v429 = vld [vmem:[%s187 + $0x4b0] sm:$0xff]
        %v430 = vld [vmem:[%s187 + $0x4b8] sm:$0xff]
        %v431 = vld [vmem:[%s187 + $0x4c0] sm:$0xff]
        %v432 = vld [vmem:[%s187 + $0x4c8] sm:$0xff]
        %v433 = vld [vmem:[%s187 + $0x4d0] sm:$0xff]
        %v434 = vld [vmem:[%s187 + $0x4d8] sm:$0xff]
        %v435 = vld [vmem:[%s187 + $0x4e0] sm:$0xff]
        %v436 = vld [vmem:[%s187 + $0x4e8] sm:$0xff]
        %v437 = vld [vmem:[%s187 + $0x4f0] sm:$0xff]
        %v438 = vld [vmem:[%s187 + $0x4f8] sm:$0xff]
        %v439 = vld [vmem:[%s187 + $0x500] sm:$0xff]
        %v440 = vld [vmem:[%s187 + $0x508] sm:$0xff]
        %v441 = vld [vmem:[%s187 + $0x510] sm:$0xff]
        %v442 = vld [vmem:[%s187 + $0x518] sm:$0xff]
        %v443 = vld [vmem:[%s187 + $0x520] sm:$0xff]
        %v444 = vld [vmem:[%s187 + $0x528] sm:$0xff]
        %v445 = vld [vmem:[%s187 + $0x530] sm:$0xff]
        %v446 = vld [vmem:[%s187 + $0x538] sm:$0xff]
        %v447 = vld [vmem:[%s187 + $0x540] sm:$0xff]
        %v448 = vld [vmem:[%s187 + $0x548] sm:$0xff]
        %v449 = vld [vmem:[%s187 + $0x550] sm:$0xff]
        %v450 = vld [vmem:[%s187 + $0x558] sm:$0xff]
        %v451 = vld [vmem:[%s187 + $0x560] sm:$0xff]
        %v452 = vld [vmem:[%s187 + $0x568] sm:$0xff]
        %v453 = vld [vmem:[%s187 + $0x570] sm:$0xff]
        %v454 = vld [vmem:[%s187 + $0x578] sm:$0xff]
        %v455 = vld [vmem:[%s187 + $0x580] sm:$0xff]
        %v456 = vld [vmem:[%s187 + $0x588] sm:$0xff]
        %v457 = vld [vmem:[%s187 + $0x590] sm:$0xff]
        %v458 = vld [vmem:[%s187 + $0x598] sm:$0xff]
        %v459 = vld [vmem:[%s187 + $0x5a0] sm:$0xff]
        %v460 = vld [vmem:[%s187 + $0x5a8] sm:$0xff]
        %v461 = vld [vmem:[%s187 + $0x5b0] sm:$0xff]
        %v462 = vld [vmem:[%s187 + $0x5b8] sm:$0xff]
        %v463 = vld [vmem:[%s187 + $0x5c0] sm:$0xff]
        %v464 = vld [vmem:[%s187 + $0x5c8] sm:$0xff]
        %v465 = vld [vmem:[%s187 + $0x5d0] sm:$0xff]
        %v466 = vld [vmem:[%s187 + $0x5d8] sm:$0xff]
        %v467 = vld [vmem:[%s187 + $0x5e0] sm:$0xff]
        %v468 = vld [vmem:[%s187 + $0x5e8] sm:$0xff]
        %v469 = vld [vmem:[%s187 + $0x5f0] sm:$0xff]
        %v470 = vld [vmem:[%s187 + $0x5f8] sm:$0xff]
        %v471 = vld [vmem:[%s187 + $0x600] sm:$0xff]
        %v472 = vld [vmem:[%s187 + $0x608] sm:$0xff]
        %v473 = vld [vmem:[%s187 + $0x610] sm:$0xff]
        %v474 = vld [vmem:[%s187 + $0x618] sm:$0xff]
        %v475 = vld [vmem:[%s187 + $0x620] sm:$0xff]
        %v476 = vld [vmem:[%s187 + $0x628] sm:$0xff]
        %v477 = vld [vmem:[%s187 + $0x630] sm:$0xff]
        %v478 = vld [vmem:[%s187 + $0x638] sm:$0xff]
        %v479 = vld [vmem:[%s187 + $0x640] sm:$0xff]
        %v480 = vld [vmem:[%s187 + $0x648] sm:$0xff]
        %v481 = vld [vmem:[%s187 + $0x650] sm:$0xff]
        %v482 = vld [vmem:[%s187 + $0x658] sm:$0xff]
        %v483 = vld [vmem:[%s187 + $0x660] sm:$0xff]
        %v484 = vld [vmem:[%s187 + $0x668] sm:$0xff]
        %v485 = vld [vmem:[%s187 + $0x670] sm:$0xff]
        %v486 = vld [vmem:[%s187 + $0x678] sm:$0xff]
        %v487 = vld [vmem:[%s187 + $0x680] sm:$0xff]
        %v488 = vld [vmem:[%s187 + $0x688] sm:$0xff]
        %v489 = vld [vmem:[%s187 + $0x690] sm:$0xff]
        %v490 = vld [vmem:[%s187 + $0x698] sm:$0xff]
        %v491 = vld [vmem:[%s187 + $0x6a0] sm:$0xff]
        %v492 = vld [vmem:[%s187 + $0x6a8] sm:$0xff]
        %v493 = vld [vmem:[%s187 + $0x6b0] sm:$0xff]
        %v494 = vld [vmem:[%s187 + $0x6b8] sm:$0xff]
        %v495 = vld [vmem:[%s187 + $0x6c0] sm:$0xff]
        %v496 = vld [vmem:[%s187 + $0x6c8] sm:$0xff]
        %v497 = vld [vmem:[%s187 + $0x6d0] sm:$0xff]
        %v498 = vld [vmem:[%s187 + $0x6d8] sm:$0xff]
        %v499 = vld [vmem:[%s187 + $0x6e0] sm:$0xff]
        %v500 = vld [vmem:[%s187 + $0x6e8] sm:$0xff]
        %v501 = vld [vmem:[%s187 + $0x6f0] sm:$0xff]
        %v502 = vld [vmem:[%s187 + $0x6f8] sm:$0xff]
        %v503 = vld [vmem:[%s187 + $0x700] sm:$0xff]
        %v504 = vld [vmem:[%s187 + $0x708] sm:$0xff]
        %v505 = vld [vmem:[%s187 + $0x710] sm:$0xff]
        %v506 = vld [vmem:[%s187 + $0x718] sm:$0xff]
        %v507 = vld [vmem:[%s187 + $0x720] sm:$0xff]
        %v508 = vld [vmem:[%s187 + $0x728] sm:$0xff]
        %v509 = vld [vmem:[%s187 + $0x730] sm:$0xff]
        %v510 = vld [vmem:[%s187 + $0x738] sm:$0xff]
        %v511 = vld [vmem:[%s187 + $0x740] sm:$0xff]
        %v512 = vld [vmem:[%s187 + $0x748] sm:$0xff]
        %v513 = vld [vmem:[%s187 + $0x750] sm:$0xff]
        %v514 = vld [vmem:[%s187 + $0x758] sm:$0xff]
        %v515 = vld [vmem:[%s187 + $0x760] sm:$0xff]
        %v516 = vld [vmem:[%s187 + $0x768] sm:$0xff]
        %v517 = vld [vmem:[%s187 + $0x770] sm:$0xff]
        %v518 = vld [vmem:[%s187 + $0x778] sm:$0xff]
        %v519 = vld [vmem:[%s187 + $0x780] sm:$0xff]
        %v520 = vld [vmem:[%s187 + $0x788] sm:$0xff]
        %v521 = vld [vmem:[%s187 + $0x790] sm:$0xff]
        %v522 = vld [vmem:[%s187 + $0x798] sm:$0xff]
        %v523 = vld [vmem:[%s187 + $0x7a0] sm:$0xff]
        %v524 = vld [vmem:[%s187 + $0x7a8] sm:$0xff]
        %v525 = vld [vmem:[%s187 + $0x7b0] sm:$0xff]
        %v526 = vld [vmem:[%s187 + $0x7b8] sm:$0xff]
        %v527 = vld [vmem:[%s187 + $0x7c0] sm:$0xff]
        %v528 = vld [vmem:[%s187 + $0x7c8] sm:$0xff]
        %v529 = vld [vmem:[%s187 + $0x7d0] sm:$0xff]
        %v530 = vld [vmem:[%s187 + $0x7d8] sm:$0xff]
        %v531 = vld [vmem:[%s187 + $0x7e0] sm:$0xff]
        %v532 = vld [vmem:[%s187 + $0x7e8] sm:$0xff]
        %v533 = vld [vmem:[%s187 + $0x7f0] sm:$0xff]
        %v534 = vld [vmem:[%s187 + $0x7f8] sm:$0xff]
        %v535 = vld [vmem:[%s187 + $0x800] sm:$0xff]
        %v536 = vld [vmem:[%s187 + $0x808] sm:$0xff]
        %v537 = vld [vmem:[%s187 + $0x810] sm:$0xff]
        %v538 = vld [vmem:[%s187 + $0x818] sm:$0xff]
        %v539 = vld [vmem:[%s187 + $0x820] sm:$0xff]
        %v540 = vld [vmem:[%s187 + $0x828] sm:$0xff]
        %v541 = vld [vmem:[%s187 + $0x830] sm:$0xff]
        %v542 = vld [vmem:[%s187 + $0x838] sm:$0xff]
        %v543 = vld [vmem:[%s187 + $0x840] sm:$0xff]
        %v544 = vld [vmem:[%s187 + $0x848] sm:$0xff]
        %v545 = vld [vmem:[%s187 + $0x850] sm:$0xff]
        %v546 = vld [vmem:[%s187 + $0x858] sm:$0xff]
        %v547 = vld [vmem:[%s187 + $0x860] sm:$0xff]
        %v548 = vld [vmem:[%s187 + $0x868] sm:$0xff]
        %v549 = vld [vmem:[%s187 + $0x870] sm:$0xff]
        %v550 = vld [vmem:[%s187 + $0x878] sm:$0xff]
        %v551 = vld [vmem:[%s187 + $0x880] sm:$0xff]
        %v552 = vld [vmem:[%s187 + $0x888] sm:$0xff]
        %v553 = vld [vmem:[%s187 + $0x890] sm:$0xff]
        %v554 = vld [vmem:[%s187 + $0x898] sm:$0xff]
        %v555 = vld [vmem:[%s187 + $0x8a0] sm:$0xff]
        %v556 = vld [vmem:[%s187 + $0x8a8] sm:$0xff]
        %v557 = vld [vmem:[%s187 + $0x8b0] sm:$0xff]
        %v558 = vld [vmem:[%s187 + $0x8b8] sm:$0xff]
        %v559 = vld [vmem:[%s187 + $0x8c0] sm:$0xff]
        %v560 = vld [vmem:[%s187 + $0x8c8] sm:$0xff]
        %v561 = vld [vmem:[%s187 + $0x8d0] sm:$0xff]
        %v562 = vld [vmem:[%s187 + $0x8d8] sm:$0xff]
        %v563 = vld [vmem:[%s187 + $0x8e0] sm:$0xff]
        %v564 = vld [vmem:[%s187 + $0x8e8] sm:$0xff]
        %v565 = vld [vmem:[%s187 + $0x8f0] sm:$0xff]
        %v566 = vld [vmem:[%s187 + $0x8f8] sm:$0xff]
        %v567 = vld [vmem:[%s187 + $0x900] sm:$0xff]
        %v568 = vld [vmem:[%s187 + $0x908] sm:$0xff]
        %v569 = vld [vmem:[%s187 + $0x910] sm:$0xff]
        %v570 = vld [vmem:[%s187 + $0x918] sm:$0xff]
        %v571 = vld [vmem:[%s187 + $0x920] sm:$0xff]
        %v572 = vld [vmem:[%s187 + $0x928] sm:$0xff]
        %v573 = vld [vmem:[%s187 + $0x930] sm:$0xff]
        %v574 = vld [vmem:[%s187 + $0x938] sm:$0xff]
        %v575 = vld [vmem:[%s187 + $0x940] sm:$0xff]
        %v576 = vld [vmem:[%s187 + $0x948] sm:$0xff]
        %v577 = vld [vmem:[%s187 + $0x950] sm:$0xff]
        %v578 = vld [vmem:[%s187 + $0x958] sm:$0xff]
        %v579 = vld [vmem:[%s187 + $0x960] sm:$0xff]
        %v580 = vld [vmem:[%s187 + $0x968] sm:$0xff]
        %v581 = vld [vmem:[%s187 + $0x970] sm:$0xff]
        %v582 = vld [vmem:[%s187 + $0x978] sm:$0xff]
        %v583 = vld [vmem:[%s187 + $0x980] sm:$0xff]
        %v584 = vld [vmem:[%s187 + $0x988] sm:$0xff]
        %v585 = vld [vmem:[%s187 + $0x990] sm:$0xff]
        %v586 = vld [vmem:[%s187 + $0x998] sm:$0xff]
        %v587 = vld [vmem:[%s187 + $0x9a0] sm:$0xff]
        %v588 = vld [vmem:[%s187 + $0x9a8] sm:$0xff]
        %v589 = vld [vmem:[%s187 + $0x9b0] sm:$0xff]
        %v590 = vld [vmem:[%s187 + $0x9b8] sm:$0xff]
        %v591 = vld [vmem:[%s187 + $0x9c0] sm:$0xff]
        %v592 = vld [vmem:[%s187 + $0x9c8] sm:$0xff]
        %v593 = vld [vmem:[%s187 + $0x9d0] sm:$0xff]
        %v594 = vld [vmem:[%s187 + $0x9d8] sm:$0xff]
        %v595 = vld [vmem:[%s187 + $0x9e0] sm:$0xff]
        %v596 = vld [vmem:[%s187 + $0x9e8] sm:$0xff]
        %v597 = vld [vmem:[%s187 + $0x9f0] sm:$0xff]
        %v598 = vld [vmem:[%s187 + $0x9f8] sm:$0xff]
        %v599 = vld [vmem:[%s187 + $0xa00] sm:$0xff]
        %v600 = vld [vmem:[%s187 + $0xa08] sm:$0xff]
        %v601 = vld [vmem:[%s187 + $0xa10] sm:$0xff]
        %v602 = vld [vmem:[%s187 + $0xa18] sm:$0xff]
        %v603 = vld [vmem:[%s187 + $0xa20] sm:$0xff]
        %v604 = vld [vmem:[%s187 + $0xa28] sm:$0xff]
        %v605 = vld [vmem:[%s187 + $0xa30] sm:$0xff]
        %v606 = vld [vmem:[%s187 + $0xa38] sm:$0xff]
        %v607 = vld [vmem:[%s187 + $0xa40] sm:$0xff]
        %v608 = vld [vmem:[%s187 + $0xa48] sm:$0xff]
        %v609 = vld [vmem:[%s187 + $0xa50] sm:$0xff]
        %v610 = vld [vmem:[%s187 + $0xa58] sm:$0xff]
        %v611 = vld [vmem:[%s187 + $0xa60] sm:$0xff]
        %v612 = vld [vmem:[%s187 + $0xa68] sm:$0xff]
        %v613 = vld [vmem:[%s187 + $0xa70] sm:$0xff]
        %v614 = vld [vmem:[%s187 + $0xa78] sm:$0xff]
        %v615 = vld [vmem:[%s187 + $0xa80] sm:$0xff]
        %v616 = vld [vmem:[%s187 + $0xa88] sm:$0xff]
        %v617 = vld [vmem:[%s187 + $0xa90] sm:$0xff]
        %v618 = vld [vmem:[%s187 + $0xa98] sm:$0xff]
        %v619 = vld [vmem:[%s187 + $0xaa0] sm:$0xff]
        %v620 = vld [vmem:[%s187 + $0xaa8] sm:$0xff]
        %v621 = vld [vmem:[%s187 + $0xab0] sm:$0xff]
        %v622 = vld [vmem:[%s187 + $0xab8] sm:$0xff]
        %v623 = vld [vmem:[%s187 + $0xac0] sm:$0xff]
        %v624 = vld [vmem:[%s187 + $0xac8] sm:$0xff]
        %v625 = vld [vmem:[%s187 + $0xad0] sm:$0xff]
        %v626 = vld [vmem:[%s187 + $0xad8] sm:$0xff]
        %v627 = vld [vmem:[%s187 + $0xae0] sm:$0xff]
        %v628 = vld [vmem:[%s187 + $0xae8] sm:$0xff]
        %v629 = vld [vmem:[%s187 + $0xaf0] sm:$0xff]
        %v630 = vld [vmem:[%s187 + $0xaf8] sm:$0xff]
        %v631 = vld [vmem:[%s187 + $0xb00] sm:$0xff]
        %v632 = vld [vmem:[%s187 + $0xb08] sm:$0xff]
        %v633 = vld [vmem:[%s187 + $0xb10] sm:$0xff]
        %v634 = vld [vmem:[%s187 + $0xb18] sm:$0xff]
        %v635 = vld [vmem:[%s187 + $0xb20] sm:$0xff]
        %v636 = vld [vmem:[%s187 + $0xb28] sm:$0xff]
        %v637 = vld [vmem:[%s187 + $0xb30] sm:$0xff]
        %v638 = vld [vmem:[%s187 + $0xb38] sm:$0xff]
        %v639 = vld [vmem:[%s187 + $0xb40] sm:$0xff]
        %v640 = vld [vmem:[%s187 + $0xb48] sm:$0xff]
        %v641 = vld [vmem:[%s187 + $0xb50] sm:$0xff]
        %v642 = vld [vmem:[%s187 + $0xb58] sm:$0xff]
        %v643 = vld [vmem:[%s187 + $0xb60] sm:$0xff]
        %v644 = vld [vmem:[%s187 + $0xb68] sm:$0xff]
        %v645 = vld [vmem:[%s187 + $0xb70] sm:$0xff]
        %v646 = vld [vmem:[%s187 + $0xb78] sm:$0xff]
        %v647 = vld [vmem:[%s187 + $0xb80] sm:$0xff]
        %v648 = vld [vmem:[%s187 + $0xb88] sm:$0xff]
        %v649 = vld [vmem:[%s187 + $0xb90] sm:$0xff]
        %v650 = vld [vmem:[%s187 + $0xb98] sm:$0xff]
        %v651 = vld [vmem:[%s187 + $0xba0] sm:$0xff]
        %v652 = vld [vmem:[%s187 + $0xba8] sm:$0xff]
        %v653 = vld [vmem:[%s187 + $0xbb0] sm:$0xff]
        %v654 = vld [vmem:[%s187 + $0xbb8] sm:$0xff]
        %v655 = vld [vmem:[%s187 + $0xbc0] sm:$0xff]
        %v656 = vld [vmem:[%s187 + $0xbc8] sm:$0xff]
        %v657 = vld [vmem:[%s187 + $0xbd0] sm:$0xff]
        %v658 = vld [vmem:[%s187 + $0xbd8] sm:$0xff]
        %v659 = vld [vmem:[%s187 + $0xbe0] sm:$0xff]
        %v660 = vld [vmem:[%s187 + $0xbe8] sm:$0xff]
        %v661 = vld [vmem:[%s187 + $0xbf0] sm:$0xff]
        %v662 = vld [vmem:[%s187 + $0xbf8] sm:$0xff]
        %v663 = vld [vmem:[%s187 + $0xc00] sm:$0x33]
        %v664 = vld [vmem:[%s196] sm:$0x3]
        %v666 = vlaneseq
        %v667 = vshrl.u32 %v666, 7
        %v668 = vsub.s32 0, %v667
        %v669 = vrot.slane %v664, %v668
        %v670 = vlaneseq
        %v671 = vshrl.u32 %v670, 7
        %v672 = vsub.s32 1, %v671
        %v673 = vrot.slane %v664, %v672
        %v728 = vunpack.c.l.b16 %v227
        %v729 = vunpack.c.h.b16 %v227
        %v730 = vunpack.c.l.b16 %v228
        %v731 = vunpack.c.h.b16 %v228
        %v732 = vunpack.c.l.b16 %v229
        %v733 = vunpack.c.h.b16 %v229
        %v734 = vunpack.c.l.b16 %v230
        %v735 = vunpack.c.h.b16 %v230
        %v736 = vunpack.c.l.b16 %v231
        %v737 = vunpack.c.h.b16 %v231
        %v738 = vunpack.c.l.b16 %v232
        %v739 = vunpack.c.h.b16 %v232
        %v740 = vunpack.c.l.b16 %v233
        %v741 = vunpack.c.h.b16 %v233
        %v742 = vunpack.c.l.b16 %v234
        %v743 = vunpack.c.h.b16 %v234
        %v744 = vunpack.c.l.b16 %v235
        %v745 = vunpack.c.h.b16 %v235
        %v746 = vunpack.c.l.b16 %v236
        %v747 = vunpack.c.h.b16 %v236
        %v748 = vunpack.c.l.b16 %v237
        %v749 = vunpack.c.h.b16 %v237
        %v750 = vunpack.c.l.b16 %v238
        %v751 = vunpack.c.h.b16 %v238
        %v752 = vunpack.c.l.b16 %v239
        %v753 = vunpack.c.l.b16 %v240
        %v754 = vunpack.c.h.b16 %v240
        %v755 = vunpack.c.l.b16 %v241
        %v756 = vunpack.c.h.b16 %v241
        %v757 = vunpack.c.l.b16 %v242
        %v758 = vunpack.c.h.b16 %v242
        %v759 = vunpack.c.l.b16 %v243
        %v760 = vunpack.c.h.b16 %v243
        %v761 = vunpack.c.l.b16 %v244
        %v762 = vunpack.c.h.b16 %v244
        %v763 = vunpack.c.l.b16 %v245
        %v764 = vunpack.c.h.b16 %v245
        %v765 = vunpack.c.l.b16 %v246
        %v766 = vunpack.c.h.b16 %v246
        %v767 = vunpack.c.l.b16 %v247
        %v768 = vunpack.c.h.b16 %v247
        %v769 = vunpack.c.l.b16 %v248
        %v770 = vunpack.c.h.b16 %v248
        %v771 = vunpack.c.l.b16 %v249
        %v772 = vunpack.c.h.b16 %v249
        %v773 = vunpack.c.l.b16 %v250
        %v774 = vunpack.c.h.b16 %v250
        %v775 = vunpack.c.l.b16 %v251
        %v776 = vunpack.c.h.b16 %v251
        %v777 = vunpack.c.l.b16 %v252
        %v778 = vunpack.c.l.b16 %v253
        %v779 = vunpack.c.h.b16 %v253
        %v780 = vunpack.c.l.b16 %v254
        %v781 = vunpack.c.h.b16 %v254
        %v782 = vunpack.c.l.b16 %v255
        %v783 = vunpack.c.h.b16 %v255
        %v784 = vunpack.c.l.b16 %v256
        %v785 = vunpack.c.h.b16 %v256
        %v786 = vunpack.c.l.b16 %v257
        %v787 = vunpack.c.h.b16 %v257
        %v788 = vunpack.c.l.b16 %v258
        %v789 = vunpack.c.h.b16 %v258
        %v790 = vunpack.c.l.b16 %v259
        %v791 = vunpack.c.h.b16 %v259
        %v792 = vunpack.c.l.b16 %v260
        %v793 = vunpack.c.h.b16 %v260
        %v794 = vunpack.c.l.b16 %v261
        %v795 = vunpack.c.h.b16 %v261
        %v796 = vunpack.c.l.b16 %v262
        %v797 = vunpack.c.h.b16 %v262
        %v798 = vunpack.c.l.b16 %v263
        %v799 = vunpack.c.h.b16 %v263
        %v800 = vunpack.c.l.b16 %v264
        %v801 = vunpack.c.h.b16 %v264
        %v802 = vunpack.c.l.b16 %v265
        %v803 = vunpack.c.l.b16 %v266
        %v804 = vunpack.c.h.b16 %v266
        %v805 = vunpack.c.l.b16 %v267
        %v806 = vunpack.c.h.b16 %v267
        %v807 = vunpack.c.l.b16 %v268
        %v808 = vunpack.c.h.b16 %v268
        %v809 = vunpack.c.l.b16 %v269
        %v810 = vunpack.c.h.b16 %v269
        %v811 = vunpack.c.l.b16 %v270
        %v812 = vunpack.c.h.b16 %v270
        %v813 = vunpack.c.l.b16 %v271
        %v814 = vunpack.c.h.b16 %v271
        %v815 = vunpack.c.l.b16 %v272
        %v816 = vunpack.c.h.b16 %v272
        %v817 = vunpack.c.l.b16 %v273
        %v818 = vunpack.c.h.b16 %v273
        %v819 = vunpack.c.l.b16 %v274
        %v820 = vunpack.c.h.b16 %v274
        %v821 = vunpack.c.l.b16 %v275
        %v822 = vunpack.c.h.b16 %v275
        %v823 = vunpack.c.l.b16 %v276
        %v824 = vunpack.c.h.b16 %v276
        %v825 = vunpack.c.l.b16 %v277
        %v826 = vunpack.c.h.b16 %v277
        %v827 = vunpack.c.l.b16 %v278
        %v828 = vpack.c.b16 %v753, %v728
        %v829 = vpack.c.b16 %v754, %v729
        %v830 = vpack.c.b16 %v755, %v730
        %v831 = vpack.c.b16 %v756, %v731
        %v832 = vpack.c.b16 %v757, %v732
        %v833 = vpack.c.b16 %v758, %v733
        %v834 = vpack.c.b16 %v759, %v734
        %v835 = vpack.c.b16 %v760, %v735
        %v836 = vpack.c.b16 %v761, %v736
        %v837 = vpack.c.b16 %v762, %v737
        %v838 = vpack.c.b16 %v763, %v738
        %v839 = vpack.c.b16 %v764, %v739
        %v840 = vpack.c.b16 %v765, %v740
        %v841 = vpack.c.b16 %v766, %v741
        %v842 = vpack.c.b16 %v767, %v742
        %v843 = vpack.c.b16 %v768, %v743
        %v844 = vpack.c.b16 %v769, %v744
        %v845 = vpack.c.b16 %v770, %v745
        %v846 = vpack.c.b16 %v771, %v746
        %v847 = vpack.c.b16 %v772, %v747
        %v848 = vpack.c.b16 %v773, %v748
        %v849 = vpack.c.b16 %v774, %v749
        %v850 = vpack.c.b16 %v775, %v750
        %v851 = vpack.c.b16 %v776, %v751
        %v852 = vpack.c.b16 %v777, %v752
        %v853 = vpack.c.b16 %v803, %v778
        %v854 = vpack.c.b16 %v804, %v779
        %v855 = vpack.c.b16 %v805, %v780
        %v856 = vpack.c.b16 %v806, %v781
        %v857 = vpack.c.b16 %v807, %v782
        %v858 = vpack.c.b16 %v808, %v783
        %v859 = vpack.c.b16 %v809, %v784
        %v860 = vpack.c.b16 %v810, %v785
        %v861 = vpack.c.b16 %v811, %v786
        %v862 = vpack.c.b16 %v812, %v787
        %v863 = vpack.c.b16 %v813, %v788
        %v864 = vpack.c.b16 %v814, %v789
        %v865 = vpack.c.b16 %v815, %v790
        %v866 = vpack.c.b16 %v816, %v791
        %v867 = vpack.c.b16 %v817, %v792
        %v868 = vpack.c.b16 %v818, %v793
        %v869 = vpack.c.b16 %v819, %v794
        %v870 = vpack.c.b16 %v820, %v795
        %v871 = vpack.c.b16 %v821, %v796
        %v872 = vpack.c.b16 %v822, %v797
        %v873 = vpack.c.b16 %v823, %v798
        %v874 = vpack.c.b16 %v824, %v799
        %v875 = vpack.c.b16 %v825, %v800
        %v876 = vpack.c.b16 %v826, %v801
        %v877 = vpack.c.b16 %v827, %v802
        %v1311 = vunpack.c.l.b16 %v279
        %v1312 = vunpack.c.h.b16 %v279
        %v1313 = vunpack.c.l.b16 %v280
        %v1314 = vunpack.c.h.b16 %v280
        %v1315 = vunpack.c.l.b16 %v281
        %v1316 = vunpack.c.h.b16 %v281
        %v1317 = vunpack.c.l.b16 %v282
        %v1318 = vunpack.c.h.b16 %v282
        %v1319 = vunpack.c.l.b16 %v283
        %v1320 = vunpack.c.h.b16 %v283
        %v1321 = vunpack.c.l.b16 %v284
        %v1322 = vunpack.c.h.b16 %v284
        %v1323 = vunpack.c.l.b16 %v285
        %v1324 = vunpack.c.h.b16 %v285
        %v1325 = vunpack.c.l.b16 %v286
        %v1326 = vunpack.c.h.b16 %v286
        %v1327 = vunpack.c.l.b16 %v287
        %v1328 = vunpack.c.h.b16 %v287
        %v1329 = vunpack.c.l.b16 %v288
        %v1330 = vunpack.c.h.b16 %v288
        %v1331 = vunpack.c.l.b16 %v289
        %v1332 = vunpack.c.h.b16 %v289
        %v1333 = vunpack.c.l.b16 %v290
        %v1334 = vunpack.c.h.b16 %v290
        %v1335 = vunpack.c.l.b16 %v291
        %v1336 = vunpack.c.h.b16 %v291
        %v1337 = vunpack.c.l.b16 %v292
        %v1338 = vunpack.c.h.b16 %v292
        %v1339 = vunpack.c.l.b16 %v293
        %v1340 = vunpack.c.h.b16 %v293
        %v1341 = vunpack.c.l.b16 %v294
        %v1342 = vunpack.c.h.b16 %v294
        %v1343 = vunpack.c.l.b16 %v295
        %v1344 = vunpack.c.h.b16 %v295
        %v1345 = vunpack.c.l.b16 %v296
        %v1346 = vunpack.c.h.b16 %v296
        %v1347 = vunpack.c.l.b16 %v297
        %v1348 = vunpack.c.h.b16 %v297
        %v1349 = vunpack.c.l.b16 %v298
        %v1350 = vunpack.c.h.b16 %v298
        %v1351 = vunpack.c.l.b16 %v299
        %v1352 = vunpack.c.h.b16 %v299
        %v1353 = vunpack.c.l.b16 %v300
        %v1354 = vunpack.c.h.b16 %v300
        %v1355 = vunpack.c.l.b16 %v301
        %v1356 = vunpack.c.h.b16 %v301
        %v1357 = vunpack.c.l.b16 %v302
        %v1358 = vunpack.c.h.b16 %v302
        %v1359 = vunpack.c.l.b16 %v303
        %v1360 = vunpack.c.h.b16 %v303
        %v1361 = vunpack.c.l.b16 %v304
        %v1362 = vunpack.c.h.b16 %v304
        %v1363 = vunpack.c.l.b16 %v305
        %v1364 = vunpack.c.h.b16 %v305
        %v1365 = vunpack.c.l.b16 %v306
        %v1366 = vunpack.c.h.b16 %v306
        %v1367 = vunpack.c.l.b16 %v307
        %v1368 = vunpack.c.h.b16 %v307
        %v1369 = vunpack.c.l.b16 %v308
        %v1370 = vunpack.c.h.b16 %v308
        %v1371 = vunpack.c.l.b16 %v309
        %v1372 = vunpack.c.h.b16 %v309
        %v1373 = vunpack.c.l.b16 %v310
        %v1374 = vunpack.c.h.b16 %v310
        %v1375 = vunpack.c.l.b16 %v311
        %v1376 = vunpack.c.h.b16 %v311
        %v1377 = vunpack.c.l.b16 %v312
        %v1378 = vunpack.c.h.b16 %v312
        %v1379 = vunpack.c.l.b16 %v313
        %v1380 = vunpack.c.h.b16 %v313
        %v1381 = vunpack.c.l.b16 %v314
        %v1382 = vunpack.c.h.b16 %v314
        %v1383 = vunpack.c.l.b16 %v315
        %v1384 = vunpack.c.h.b16 %v315
        %v1385 = vunpack.c.l.b16 %v316
        %v1386 = vunpack.c.h.b16 %v316
        %v1387 = vunpack.c.l.b16 %v317
        %v1388 = vunpack.c.h.b16 %v317
        %v1389 = vunpack.c.l.b16 %v318
        %v1390 = vunpack.c.h.b16 %v318
        %v1391 = vunpack.c.l.b16 %v319
        %v1392 = vunpack.c.h.b16 %v319
        %v1393 = vunpack.c.l.b16 %v320
        %v1394 = vunpack.c.h.b16 %v320
        %v1395 = vunpack.c.l.b16 %v321
        %v1396 = vunpack.c.h.b16 %v321
        %v1397 = vunpack.c.l.b16 %v322
        %v1398 = vunpack.c.h.b16 %v322
        %v1399 = vunpack.c.l.b16 %v323
        %v1400 = vunpack.c.h.b16 %v323
        %v1401 = vunpack.c.l.b16 %v324
        %v1402 = vunpack.c.h.b16 %v324
        %v1403 = vunpack.c.l.b16 %v325
        %v1404 = vunpack.c.h.b16 %v325
        %v1405 = vunpack.c.l.b16 %v326
        %v1406 = vunpack.c.h.b16 %v326
        %v1407 = vunpack.c.l.b16 %v327
        %v1408 = vunpack.c.h.b16 %v327
        %v1409 = vunpack.c.l.b16 %v328
        %v1410 = vunpack.c.h.b16 %v328
        %v1411 = vunpack.c.l.b16 %v329
        %v1412 = vunpack.c.h.b16 %v329
        %v1413 = vunpack.c.l.b16 %v330
        %v1414 = vunpack.c.h.b16 %v330
        %v1415 = vunpack.c.l.b16 %v331
        %v1416 = vunpack.c.h.b16 %v331
        %v1417 = vunpack.c.l.b16 %v332
        %v1418 = vunpack.c.h.b16 %v332
        %v1419 = vunpack.c.l.b16 %v333
        %v1420 = vunpack.c.h.b16 %v333
        %v1421 = vunpack.c.l.b16 %v334
        %v1422 = vunpack.c.h.b16 %v334
        %v1423 = vunpack.c.l.b16 %v335
        %v1424 = vunpack.c.h.b16 %v335
        %v1425 = vunpack.c.l.b16 %v336
        %v1426 = vunpack.c.h.b16 %v336
        %v1427 = vunpack.c.l.b16 %v337
        %v1428 = vunpack.c.h.b16 %v337
        %v1429 = vunpack.c.l.b16 %v338
        %v1430 = vunpack.c.h.b16 %v338
        %v1431 = vunpack.c.l.b16 %v339
        %v1432 = vunpack.c.h.b16 %v339
        %v1433 = vunpack.c.l.b16 %v340
        %v1434 = vunpack.c.h.b16 %v340
        %v1435 = vunpack.c.l.b16 %v341
        %v1436 = vunpack.c.h.b16 %v341
        %v1437 = vunpack.c.l.b16 %v342
        %v1438 = vunpack.c.h.b16 %v342
        %v1439 = vunpack.c.l.b16 %v343
        %v1440 = vunpack.c.h.b16 %v343
        %v1441 = vunpack.c.l.b16 %v344
        %v1442 = vunpack.c.h.b16 %v344
        %v1443 = vunpack.c.l.b16 %v345
        %v1444 = vunpack.c.h.b16 %v345
        %v1445 = vunpack.c.l.b16 %v346
        %v1446 = vunpack.c.h.b16 %v346
        %v1447 = vunpack.c.l.b16 %v347
        %v1448 = vunpack.c.h.b16 %v347
        %v1449 = vunpack.c.l.b16 %v348
        %v1450 = vunpack.c.h.b16 %v348
        %v1451 = vunpack.c.l.b16 %v349
        %v1452 = vunpack.c.h.b16 %v349
        %v1453 = vunpack.c.l.b16 %v350
        %v1454 = vunpack.c.h.b16 %v350
        %v1455 = vunpack.c.l.b16 %v351
        %v1456 = vunpack.c.h.b16 %v351
        %v1457 = vunpack.c.l.b16 %v352
        %v1458 = vunpack.c.h.b16 %v352
        %v1459 = vunpack.c.l.b16 %v353
        %v1460 = vunpack.c.h.b16 %v353
        %v1461 = vunpack.c.l.b16 %v354
        %v1462 = vunpack.c.h.b16 %v354
        %v1463 = vunpack.c.l.b16 %v355
        %v1464 = vunpack.c.h.b16 %v355
        %v1465 = vunpack.c.l.b16 %v356
        %v1466 = vunpack.c.h.b16 %v356
        %v1467 = vunpack.c.l.b16 %v357
        %v1468 = vunpack.c.h.b16 %v357
        %v1469 = vunpack.c.l.b16 %v358
        %v1470 = vunpack.c.h.b16 %v358
        %v1471 = vunpack.c.l.b16 %v359
        %v1472 = vunpack.c.h.b16 %v359
        %v1473 = vunpack.c.l.b16 %v360
        %v1474 = vunpack.c.h.b16 %v360
        %v1475 = vunpack.c.l.b16 %v361
        %v1476 = vunpack.c.h.b16 %v361
        %v1477 = vunpack.c.l.b16 %v362
        %v1478 = vunpack.c.h.b16 %v362
        %v1479 = vunpack.c.l.b16 %v363
        %v1480 = vunpack.c.h.b16 %v363
        %v1481 = vunpack.c.l.b16 %v364
        %v1482 = vunpack.c.h.b16 %v364
        %v1483 = vunpack.c.l.b16 %v365
        %v1484 = vunpack.c.h.b16 %v365
        %v1485 = vunpack.c.l.b16 %v366
        %v1486 = vunpack.c.h.b16 %v366
        %v1487 = vunpack.c.l.b16 %v367
        %v1488 = vunpack.c.h.b16 %v367
        %v1489 = vunpack.c.l.b16 %v368
        %v1490 = vunpack.c.h.b16 %v368
        %v1491 = vunpack.c.l.b16 %v369
        %v1492 = vunpack.c.h.b16 %v369
        %v1493 = vunpack.c.l.b16 %v370
        %v1494 = vunpack.c.h.b16 %v370
        %v1495 = vunpack.c.l.b16 %v371
        %v1496 = vunpack.c.h.b16 %v371
        %v1497 = vunpack.c.l.b16 %v372
        %v1498 = vunpack.c.h.b16 %v372
        %v1499 = vunpack.c.l.b16 %v373
        %v1500 = vunpack.c.h.b16 %v373
        %v1501 = vunpack.c.l.b16 %v374
        %v1502 = vunpack.c.h.b16 %v374
        %v1503 = vunpack.c.l.b16 %v375
        %v1504 = vunpack.c.h.b16 %v375
        %v1505 = vunpack.c.l.b16 %v376
        %v1506 = vunpack.c.h.b16 %v376
        %v1507 = vunpack.c.l.b16 %v377
        %v1508 = vunpack.c.h.b16 %v377
        %v1509 = vunpack.c.l.b16 %v378
        %v1510 = vunpack.c.h.b16 %v378
        %v1511 = vunpack.c.l.b16 %v379
        %v1512 = vunpack.c.h.b16 %v379
        %v1513 = vunpack.c.l.b16 %v380
        %v1514 = vunpack.c.h.b16 %v380
        %v1515 = vunpack.c.l.b16 %v381
        %v1516 = vunpack.c.h.b16 %v381
        %v1517 = vunpack.c.l.b16 %v382
        %v1518 = vunpack.c.h.b16 %v382
        %v1519 = vunpack.c.l.b16 %v383
        %v1520 = vunpack.c.h.b16 %v383
        %v1521 = vunpack.c.l.b16 %v384
        %v1522 = vunpack.c.h.b16 %v384
        %v1523 = vunpack.c.l.b16 %v385
        %v1524 = vunpack.c.h.b16 %v385
        %v1525 = vunpack.c.l.b16 %v386
        %v1526 = vunpack.c.h.b16 %v386
        %v1527 = vunpack.c.l.b16 %v387
        %v1528 = vunpack.c.h.b16 %v387
        %v1529 = vunpack.c.l.b16 %v388
        %v1530 = vunpack.c.h.b16 %v388
        %v1531 = vunpack.c.l.b16 %v389
        %v1532 = vunpack.c.h.b16 %v389
        %v1533 = vunpack.c.l.b16 %v390
        %v1534 = vunpack.c.h.b16 %v390
        %v1535 = vunpack.c.l.b16 %v391
        %v1536 = vunpack.c.h.b16 %v391
        %v1537 = vunpack.c.l.b16 %v392
        %v1538 = vunpack.c.h.b16 %v392
        %v1539 = vunpack.c.l.b16 %v393
        %v1540 = vunpack.c.h.b16 %v393
        %v1541 = vunpack.c.l.b16 %v394
        %v1542 = vunpack.c.h.b16 %v394
        %v1543 = vunpack.c.l.b16 %v395
        %v1544 = vunpack.c.h.b16 %v395
        %v1545 = vunpack.c.l.b16 %v396
        %v1546 = vunpack.c.h.b16 %v396
        %v1547 = vunpack.c.l.b16 %v397
        %v1548 = vunpack.c.h.b16 %v397
        %v1549 = vunpack.c.l.b16 %v398
        %v1550 = vunpack.c.h.b16 %v398
        %v1551 = vunpack.c.l.b16 %v399
        %v1552 = vunpack.c.h.b16 %v399
        %v1553 = vunpack.c.l.b16 %v400
        %v1554 = vunpack.c.h.b16 %v400
        %v1555 = vunpack.c.l.b16 %v401
        %v1556 = vunpack.c.h.b16 %v401
        %v1557 = vunpack.c.l.b16 %v402
        %v1558 = vunpack.c.h.b16 %v402
        %v1559 = vunpack.c.l.b16 %v403
        %v1560 = vunpack.c.h.b16 %v403
        %v1561 = vunpack.c.l.b16 %v404
        %v1562 = vunpack.c.h.b16 %v404
        %v1563 = vunpack.c.l.b16 %v405
        %v1564 = vunpack.c.h.b16 %v405
        %v1565 = vunpack.c.l.b16 %v406
        %v1566 = vunpack.c.h.b16 %v406
        %v1567 = vunpack.c.l.b16 %v407
        %v1568 = vunpack.c.h.b16 %v407
        %v1569 = vunpack.c.l.b16 %v408
        %v1570 = vunpack.c.h.b16 %v408
        %v1571 = vunpack.c.l.b16 %v409
        %v1572 = vunpack.c.h.b16 %v409
        %v1573 = vunpack.c.l.b16 %v410
        %v1574 = vunpack.c.h.b16 %v410
        %v1575 = vunpack.c.l.b16 %v411
        %v1576 = vunpack.c.h.b16 %v411
        %v1577 = vunpack.c.l.b16 %v412
        %v1578 = vunpack.c.h.b16 %v412
        %v1579 = vunpack.c.l.b16 %v413
        %v1580 = vunpack.c.h.b16 %v413
        %v1581 = vunpack.c.l.b16 %v414
        %v1582 = vunpack.c.h.b16 %v414
        %v1583 = vunpack.c.l.b16 %v415
        %v1584 = vunpack.c.h.b16 %v415
        %v1585 = vunpack.c.l.b16 %v416
        %v1586 = vunpack.c.h.b16 %v416
        %v1587 = vunpack.c.l.b16 %v417
        %v1588 = vunpack.c.h.b16 %v417
        %v1589 = vunpack.c.l.b16 %v418
        %v1590 = vunpack.c.h.b16 %v418
        %v1591 = vunpack.c.l.b16 %v419
        %v1592 = vunpack.c.h.b16 %v419
        %v1593 = vunpack.c.l.b16 %v420
        %v1594 = vunpack.c.h.b16 %v420
        %v1595 = vunpack.c.l.b16 %v421
        %v1596 = vunpack.c.h.b16 %v421
        %v1597 = vunpack.c.l.b16 %v422
        %v1598 = vunpack.c.h.b16 %v422
        %v1599 = vunpack.c.l.b16 %v423
        %v1600 = vunpack.c.h.b16 %v423
        %v1601 = vunpack.c.l.b16 %v424
        %v1602 = vunpack.c.h.b16 %v424
        %v1603 = vunpack.c.l.b16 %v425
        %v1604 = vunpack.c.h.b16 %v425
        %v1605 = vunpack.c.l.b16 %v426
        %v1606 = vunpack.c.h.b16 %v426
        %v1607 = vunpack.c.l.b16 %v427
        %v1608 = vunpack.c.h.b16 %v427
        %v1609 = vunpack.c.l.b16 %v428
        %v1610 = vunpack.c.h.b16 %v428
        %v1611 = vunpack.c.l.b16 %v429
        %v1612 = vunpack.c.h.b16 %v429
        %v1613 = vunpack.c.l.b16 %v430
        %v1614 = vunpack.c.h.b16 %v430
        %v1615 = vunpack.c.l.b16 %v431
        %v1616 = vunpack.c.h.b16 %v431
        %v1617 = vunpack.c.l.b16 %v432
        %v1618 = vunpack.c.h.b16 %v432
        %v1619 = vunpack.c.l.b16 %v433
        %v1620 = vunpack.c.h.b16 %v433
        %v1621 = vunpack.c.l.b16 %v434
        %v1622 = vunpack.c.h.b16 %v434
        %v1623 = vunpack.c.l.b16 %v435
        %v1624 = vunpack.c.h.b16 %v435
        %v1625 = vunpack.c.l.b16 %v436
        %v1626 = vunpack.c.h.b16 %v436
        %v1627 = vunpack.c.l.b16 %v437
        %v1628 = vunpack.c.h.b16 %v437
        %v1629 = vunpack.c.l.b16 %v438
        %v1630 = vunpack.c.h.b16 %v438
        %v1631 = vunpack.c.l.b16 %v439
        %v1632 = vunpack.c.h.b16 %v439
        %v1633 = vunpack.c.l.b16 %v440
        %v1634 = vunpack.c.h.b16 %v440
        %v1635 = vunpack.c.l.b16 %v441
        %v1636 = vunpack.c.h.b16 %v441
        %v1637 = vunpack.c.l.b16 %v442
        %v1638 = vunpack.c.h.b16 %v442
        %v1639 = vunpack.c.l.b16 %v443
        %v1640 = vunpack.c.h.b16 %v443
        %v1641 = vunpack.c.l.b16 %v444
        %v1642 = vunpack.c.h.b16 %v444
        %v1643 = vunpack.c.l.b16 %v445
        %v1644 = vunpack.c.h.b16 %v445
        %v1645 = vunpack.c.l.b16 %v446
        %v1646 = vunpack.c.h.b16 %v446
        %v1647 = vunpack.c.l.b16 %v447
        %v1648 = vunpack.c.h.b16 %v447
        %v1649 = vunpack.c.l.b16 %v448
        %v1650 = vunpack.c.h.b16 %v448
        %v1651 = vunpack.c.l.b16 %v449
        %v1652 = vunpack.c.h.b16 %v449
        %v1653 = vunpack.c.l.b16 %v450
        %v1654 = vunpack.c.h.b16 %v450
        %v1655 = vunpack.c.l.b16 %v451
        %v1656 = vunpack.c.h.b16 %v451
        %v1657 = vunpack.c.l.b16 %v452
        %v1658 = vunpack.c.h.b16 %v452
        %v1659 = vunpack.c.l.b16 %v453
        %v1660 = vunpack.c.h.b16 %v453
        %v1661 = vunpack.c.l.b16 %v454
        %v1662 = vunpack.c.h.b16 %v454
        %v1663 = vunpack.c.l.b16 %v455
        %v1664 = vunpack.c.h.b16 %v455
        %v1665 = vunpack.c.l.b16 %v456
        %v1666 = vunpack.c.h.b16 %v456
        %v1667 = vunpack.c.l.b16 %v457
        %v1668 = vunpack.c.h.b16 %v457
        %v1669 = vunpack.c.l.b16 %v458
        %v1670 = vunpack.c.h.b16 %v458
        %v1671 = vunpack.c.l.b16 %v459
        %v1672 = vunpack.c.h.b16 %v459
        %v1673 = vunpack.c.l.b16 %v460
        %v1674 = vunpack.c.h.b16 %v460
        %v1675 = vunpack.c.l.b16 %v461
        %v1676 = vunpack.c.h.b16 %v461
        %v1677 = vunpack.c.l.b16 %v462
        %v1678 = vunpack.c.h.b16 %v462
        %v1679 = vunpack.c.l.b16 %v463
        %v1680 = vunpack.c.h.b16 %v463
        %v1681 = vunpack.c.l.b16 %v464
        %v1682 = vunpack.c.h.b16 %v464
        %v1683 = vunpack.c.l.b16 %v465
        %v1684 = vunpack.c.h.b16 %v465
        %v1685 = vunpack.c.l.b16 %v466
        %v1686 = vunpack.c.h.b16 %v466
        %v1687 = vunpack.c.l.b16 %v467
        %v1688 = vunpack.c.h.b16 %v467
        %v1689 = vunpack.c.l.b16 %v468
        %v1690 = vunpack.c.h.b16 %v468
        %v1691 = vunpack.c.l.b16 %v469
        %v1692 = vunpack.c.h.b16 %v469
        %v1693 = vunpack.c.l.b16 %v470
        %v1694 = vunpack.c.h.b16 %v470
        %v1695 = vunpack.c.l.b16 %v471
        %v1696 = vunpack.c.h.b16 %v471
        %v1697 = vunpack.c.l.b16 %v472
        %v1698 = vunpack.c.h.b16 %v472
        %v1699 = vunpack.c.l.b16 %v473
        %v1700 = vunpack.c.h.b16 %v473
        %v1701 = vunpack.c.l.b16 %v474
        %v1702 = vunpack.c.h.b16 %v474
        %v1703 = vunpack.c.l.b16 %v475
        %v1704 = vunpack.c.h.b16 %v475
        %v1705 = vunpack.c.l.b16 %v476
        %v1706 = vunpack.c.h.b16 %v476
        %v1707 = vunpack.c.l.b16 %v477
        %v1708 = vunpack.c.h.b16 %v477
        %v1709 = vunpack.c.l.b16 %v478
        %v1710 = vunpack.c.h.b16 %v478
        %v1711 = vunpack.c.l.b16 %v479
        %v1712 = vunpack.c.h.b16 %v479
        %v1713 = vunpack.c.l.b16 %v480
        %v1714 = vunpack.c.h.b16 %v480
        %v1715 = vunpack.c.l.b16 %v481
        %v1716 = vunpack.c.h.b16 %v481
        %v1717 = vunpack.c.l.b16 %v482
        %v1718 = vunpack.c.h.b16 %v482
        %v1719 = vunpack.c.l.b16 %v483
        %v1720 = vunpack.c.h.b16 %v483
        %v1721 = vunpack.c.l.b16 %v484
        %v1722 = vunpack.c.h.b16 %v484
        %v1723 = vunpack.c.l.b16 %v485
        %v1724 = vunpack.c.h.b16 %v485
        %v1725 = vunpack.c.l.b16 %v486
        %v1726 = vunpack.c.h.b16 %v486
        %v1727 = vunpack.c.l.b16 %v487
        %v1728 = vunpack.c.h.b16 %v487
        %v1729 = vunpack.c.l.b16 %v488
        %v1730 = vunpack.c.h.b16 %v488
        %v1731 = vunpack.c.l.b16 %v489
        %v1732 = vunpack.c.h.b16 %v489
        %v1733 = vunpack.c.l.b16 %v490
        %v1734 = vunpack.c.h.b16 %v490
        %v1735 = vunpack.c.l.b16 %v491
        %v1736 = vunpack.c.h.b16 %v491
        %v1737 = vunpack.c.l.b16 %v492
        %v1738 = vunpack.c.h.b16 %v492
        %v1739 = vunpack.c.l.b16 %v493
        %v1740 = vunpack.c.h.b16 %v493
        %v1741 = vunpack.c.l.b16 %v494
        %v1742 = vunpack.c.h.b16 %v494
        %v1743 = vunpack.c.l.b16 %v495
        %v1744 = vunpack.c.h.b16 %v495
        %v1745 = vunpack.c.l.b16 %v496
        %v1746 = vunpack.c.h.b16 %v496
        %v1747 = vunpack.c.l.b16 %v497
        %v1748 = vunpack.c.h.b16 %v497
        %v1749 = vunpack.c.l.b16 %v498
        %v1750 = vunpack.c.h.b16 %v498
        %v1751 = vunpack.c.l.b16 %v499
        %v1752 = vunpack.c.h.b16 %v499
        %v1753 = vunpack.c.l.b16 %v500
        %v1754 = vunpack.c.h.b16 %v500
        %v1755 = vunpack.c.l.b16 %v501
        %v1756 = vunpack.c.h.b16 %v501
        %v1757 = vunpack.c.l.b16 %v502
        %v1758 = vunpack.c.h.b16 %v502
        %v1759 = vunpack.c.l.b16 %v503
        %v1760 = vunpack.c.h.b16 %v503
        %v1761 = vunpack.c.l.b16 %v504
        %v1762 = vunpack.c.h.b16 %v504
        %v1763 = vunpack.c.l.b16 %v505
        %v1764 = vunpack.c.h.b16 %v505
        %v1765 = vunpack.c.l.b16 %v506
        %v1766 = vunpack.c.h.b16 %v506
        %v1767 = vunpack.c.l.b16 %v507
        %v1768 = vunpack.c.h.b16 %v507
        %v1769 = vunpack.c.l.b16 %v508
        %v1770 = vunpack.c.h.b16 %v508
        %v1771 = vunpack.c.l.b16 %v509
        %v1772 = vunpack.c.h.b16 %v509
        %v1773 = vunpack.c.l.b16 %v510
        %v1774 = vunpack.c.h.b16 %v510
        %v1775 = vunpack.c.l.b16 %v511
        %v1776 = vunpack.c.h.b16 %v511
        %v1777 = vunpack.c.l.b16 %v512
        %v1778 = vunpack.c.h.b16 %v512
        %v1779 = vunpack.c.l.b16 %v513
        %v1780 = vunpack.c.h.b16 %v513
        %v1781 = vunpack.c.l.b16 %v514
        %v1782 = vunpack.c.h.b16 %v514
        %v1783 = vunpack.c.l.b16 %v515
        %v1784 = vunpack.c.h.b16 %v515
        %v1785 = vunpack.c.l.b16 %v516
        %v1786 = vunpack.c.h.b16 %v516
        %v1787 = vunpack.c.l.b16 %v517
        %v1788 = vunpack.c.h.b16 %v517
        %v1789 = vunpack.c.l.b16 %v518
        %v1790 = vunpack.c.h.b16 %v518
        %v1791 = vunpack.c.l.b16 %v519
        %v1792 = vunpack.c.h.b16 %v519
        %v1793 = vunpack.c.l.b16 %v520
        %v1794 = vunpack.c.h.b16 %v520
        %v1795 = vunpack.c.l.b16 %v521
        %v1796 = vunpack.c.h.b16 %v521
        %v1797 = vunpack.c.l.b16 %v522
        %v1798 = vunpack.c.h.b16 %v522
        %v1799 = vunpack.c.l.b16 %v523
        %v1800 = vunpack.c.h.b16 %v523
        %v1801 = vunpack.c.l.b16 %v524
        %v1802 = vunpack.c.h.b16 %v524
        %v1803 = vunpack.c.l.b16 %v525
        %v1804 = vunpack.c.h.b16 %v525
        %v1805 = vunpack.c.l.b16 %v526
        %v1806 = vunpack.c.h.b16 %v526
        %v1807 = vunpack.c.l.b16 %v527
        %v1808 = vunpack.c.h.b16 %v527
        %v1809 = vunpack.c.l.b16 %v528
        %v1810 = vunpack.c.h.b16 %v528
        %v1811 = vunpack.c.l.b16 %v529
        %v1812 = vunpack.c.h.b16 %v529
        %v1813 = vunpack.c.l.b16 %v530
        %v1814 = vunpack.c.h.b16 %v530
        %v1815 = vunpack.c.l.b16 %v531
        %v1816 = vunpack.c.h.b16 %v531
        %v1817 = vunpack.c.l.b16 %v532
        %v1818 = vunpack.c.h.b16 %v532
        %v1819 = vunpack.c.l.b16 %v533
        %v1820 = vunpack.c.h.b16 %v533
        %v1821 = vunpack.c.l.b16 %v534
        %v1822 = vunpack.c.h.b16 %v534
        %v1823 = vunpack.c.l.b16 %v535
        %v1824 = vunpack.c.h.b16 %v535
        %v1825 = vunpack.c.l.b16 %v536
        %v1826 = vunpack.c.h.b16 %v536
        %v1827 = vunpack.c.l.b16 %v537
        %v1828 = vunpack.c.h.b16 %v537
        %v1829 = vunpack.c.l.b16 %v538
        %v1830 = vunpack.c.h.b16 %v538
        %v1831 = vunpack.c.l.b16 %v539
        %v1832 = vunpack.c.h.b16 %v539
        %v1833 = vunpack.c.l.b16 %v540
        %v1834 = vunpack.c.h.b16 %v540
        %v1835 = vunpack.c.l.b16 %v541
        %v1836 = vunpack.c.h.b16 %v541
        %v1837 = vunpack.c.l.b16 %v542
        %v1838 = vunpack.c.h.b16 %v542
        %v1839 = vunpack.c.l.b16 %v543
        %v1840 = vunpack.c.h.b16 %v543
        %v1841 = vunpack.c.l.b16 %v544
        %v1842 = vunpack.c.h.b16 %v544
        %v1843 = vunpack.c.l.b16 %v545
        %v1844 = vunpack.c.h.b16 %v545
        %v1845 = vunpack.c.l.b16 %v546
        %v1846 = vunpack.c.h.b16 %v546
        %v1847 = vunpack.c.l.b16 %v547
        %v1848 = vunpack.c.h.b16 %v547
        %v1849 = vunpack.c.l.b16 %v548
        %v1850 = vunpack.c.h.b16 %v548
        %v1851 = vunpack.c.l.b16 %v549
        %v1852 = vunpack.c.h.b16 %v549
        %v1853 = vunpack.c.l.b16 %v550
        %v1854 = vunpack.c.h.b16 %v550
        %v1855 = vunpack.c.l.b16 %v551
        %v1856 = vunpack.c.h.b16 %v551
        %v1857 = vunpack.c.l.b16 %v552
        %v1858 = vunpack.c.h.b16 %v552
        %v1859 = vunpack.c.l.b16 %v553
        %v1860 = vunpack.c.h.b16 %v553
        %v1861 = vunpack.c.l.b16 %v554
        %v1862 = vunpack.c.h.b16 %v554
        %v1863 = vunpack.c.l.b16 %v555
        %v1864 = vunpack.c.h.b16 %v555
        %v1865 = vunpack.c.l.b16 %v556
        %v1866 = vunpack.c.h.b16 %v556
        %v1867 = vunpack.c.l.b16 %v557
        %v1868 = vunpack.c.h.b16 %v557
        %v1869 = vunpack.c.l.b16 %v558
        %v1870 = vunpack.c.h.b16 %v558
        %v1871 = vunpack.c.l.b16 %v559
        %v1872 = vunpack.c.h.b16 %v559
        %v1873 = vunpack.c.l.b16 %v560
        %v1874 = vunpack.c.h.b16 %v560
        %v1875 = vunpack.c.l.b16 %v561
        %v1876 = vunpack.c.h.b16 %v561
        %v1877 = vunpack.c.l.b16 %v562
        %v1878 = vunpack.c.h.b16 %v562
        %v1879 = vunpack.c.l.b16 %v563
        %v1880 = vunpack.c.h.b16 %v563
        %v1881 = vunpack.c.l.b16 %v564
        %v1882 = vunpack.c.h.b16 %v564
        %v1883 = vunpack.c.l.b16 %v565
        %v1884 = vunpack.c.h.b16 %v565
        %v1885 = vunpack.c.l.b16 %v566
        %v1886 = vunpack.c.h.b16 %v566
        %v1887 = vunpack.c.l.b16 %v567
        %v1888 = vunpack.c.h.b16 %v567
        %v1889 = vunpack.c.l.b16 %v568
        %v1890 = vunpack.c.h.b16 %v568
        %v1891 = vunpack.c.l.b16 %v569
        %v1892 = vunpack.c.h.b16 %v569
        %v1893 = vunpack.c.l.b16 %v570
        %v1894 = vunpack.c.h.b16 %v570
        %v1895 = vunpack.c.l.b16 %v571
        %v1896 = vunpack.c.h.b16 %v571
        %v1897 = vunpack.c.l.b16 %v572
        %v1898 = vunpack.c.h.b16 %v572
        %v1899 = vunpack.c.l.b16 %v573
        %v1900 = vunpack.c.h.b16 %v573
        %v1901 = vunpack.c.l.b16 %v574
        %v1902 = vunpack.c.h.b16 %v574
        %v1903 = vunpack.c.l.b16 %v575
        %v1904 = vunpack.c.h.b16 %v575
        %v1905 = vunpack.c.l.b16 %v576
        %v1906 = vunpack.c.h.b16 %v576
        %v1907 = vunpack.c.l.b16 %v577
        %v1908 = vunpack.c.h.b16 %v577
        %v1909 = vunpack.c.l.b16 %v578
        %v1910 = vunpack.c.h.b16 %v578
        %v1911 = vunpack.c.l.b16 %v579
        %v1912 = vunpack.c.h.b16 %v579
        %v1913 = vunpack.c.l.b16 %v580
        %v1914 = vunpack.c.h.b16 %v580
        %v1915 = vunpack.c.l.b16 %v581
        %v1916 = vunpack.c.h.b16 %v581
        %v1917 = vunpack.c.l.b16 %v582
        %v1918 = vunpack.c.h.b16 %v582
        %v1919 = vunpack.c.l.b16 %v583
        %v1920 = vunpack.c.h.b16 %v583
        %v1921 = vunpack.c.l.b16 %v584
        %v1922 = vunpack.c.h.b16 %v584
        %v1923 = vunpack.c.l.b16 %v585
        %v1924 = vunpack.c.h.b16 %v585
        %v1925 = vunpack.c.l.b16 %v586
        %v1926 = vunpack.c.h.b16 %v586
        %v1927 = vunpack.c.l.b16 %v587
        %v1928 = vunpack.c.h.b16 %v587
        %v1929 = vunpack.c.l.b16 %v588
        %v1930 = vunpack.c.h.b16 %v588
        %v1931 = vunpack.c.l.b16 %v589
        %v1932 = vunpack.c.h.b16 %v589
        %v1933 = vunpack.c.l.b16 %v590
        %v1934 = vunpack.c.h.b16 %v590
        %v1935 = vunpack.c.l.b16 %v591
        %v1936 = vunpack.c.h.b16 %v591
        %v1937 = vunpack.c.l.b16 %v592
        %v1938 = vunpack.c.h.b16 %v592
        %v1939 = vunpack.c.l.b16 %v593
        %v1940 = vunpack.c.h.b16 %v593
        %v1941 = vunpack.c.l.b16 %v594
        %v1942 = vunpack.c.h.b16 %v594
        %v1943 = vunpack.c.l.b16 %v595
        %v1944 = vunpack.c.h.b16 %v595
        %v1945 = vunpack.c.l.b16 %v596
        %v1946 = vunpack.c.h.b16 %v596
        %v1947 = vunpack.c.l.b16 %v597
        %v1948 = vunpack.c.h.b16 %v597
        %v1949 = vunpack.c.l.b16 %v598
        %v1950 = vunpack.c.h.b16 %v598
        %v1951 = vunpack.c.l.b16 %v599
        %v1952 = vunpack.c.h.b16 %v599
        %v1953 = vunpack.c.l.b16 %v600
        %v1954 = vunpack.c.h.b16 %v600
        %v1955 = vunpack.c.l.b16 %v601
        %v1956 = vunpack.c.h.b16 %v601
        %v1957 = vunpack.c.l.b16 %v602
        %v1958 = vunpack.c.h.b16 %v602
        %v1959 = vunpack.c.l.b16 %v603
        %v1960 = vunpack.c.h.b16 %v603
        %v1961 = vunpack.c.l.b16 %v604
        %v1962 = vunpack.c.h.b16 %v604
        %v1963 = vunpack.c.l.b16 %v605
        %v1964 = vunpack.c.h.b16 %v605
        %v1965 = vunpack.c.l.b16 %v606
        %v1966 = vunpack.c.h.b16 %v606
        %v1967 = vunpack.c.l.b16 %v607
        %v1968 = vunpack.c.h.b16 %v607
        %v1969 = vunpack.c.l.b16 %v608
        %v1970 = vunpack.c.h.b16 %v608
        %v1971 = vunpack.c.l.b16 %v609
        %v1972 = vunpack.c.h.b16 %v609
        %v1973 = vunpack.c.l.b16 %v610
        %v1974 = vunpack.c.h.b16 %v610
        %v1975 = vunpack.c.l.b16 %v611
        %v1976 = vunpack.c.h.b16 %v611
        %v1977 = vunpack.c.l.b16 %v612
        %v1978 = vunpack.c.h.b16 %v612
        %v1979 = vunpack.c.l.b16 %v613
        %v1980 = vunpack.c.h.b16 %v613
        %v1981 = vunpack.c.l.b16 %v614
        %v1982 = vunpack.c.h.b16 %v614
        %v1983 = vunpack.c.l.b16 %v615
        %v1984 = vunpack.c.h.b16 %v615
        %v1985 = vunpack.c.l.b16 %v616
        %v1986 = vunpack.c.h.b16 %v616
        %v1987 = vunpack.c.l.b16 %v617
        %v1988 = vunpack.c.h.b16 %v617
        %v1989 = vunpack.c.l.b16 %v618
        %v1990 = vunpack.c.h.b16 %v618
        %v1991 = vunpack.c.l.b16 %v619
        %v1992 = vunpack.c.h.b16 %v619
        %v1993 = vunpack.c.l.b16 %v620
        %v1994 = vunpack.c.h.b16 %v620
        %v1995 = vunpack.c.l.b16 %v621
        %v1996 = vunpack.c.h.b16 %v621
        %v1997 = vunpack.c.l.b16 %v622
        %v1998 = vunpack.c.h.b16 %v622
        %v1999 = vunpack.c.l.b16 %v623
        %v2000 = vunpack.c.h.b16 %v623
        %v2001 = vunpack.c.l.b16 %v624
        %v2002 = vunpack.c.h.b16 %v624
        %v2003 = vunpack.c.l.b16 %v625
        %v2004 = vunpack.c.h.b16 %v625
        %v2005 = vunpack.c.l.b16 %v626
        %v2006 = vunpack.c.h.b16 %v626
        %v2007 = vunpack.c.l.b16 %v627
        %v2008 = vunpack.c.h.b16 %v627
        %v2009 = vunpack.c.l.b16 %v628
        %v2010 = vunpack.c.h.b16 %v628
        %v2011 = vunpack.c.l.b16 %v629
        %v2012 = vunpack.c.h.b16 %v629
        %v2013 = vunpack.c.l.b16 %v630
        %v2014 = vunpack.c.h.b16 %v630
        %v2015 = vunpack.c.l.b16 %v631
        %v2016 = vunpack.c.h.b16 %v631
        %v2017 = vunpack.c.l.b16 %v632
        %v2018 = vunpack.c.h.b16 %v632
        %v2019 = vunpack.c.l.b16 %v633
        %v2020 = vunpack.c.h.b16 %v633
        %v2021 = vunpack.c.l.b16 %v634
        %v2022 = vunpack.c.h.b16 %v634
        %v2023 = vunpack.c.l.b16 %v635
        %v2024 = vunpack.c.h.b16 %v635
        %v2025 = vunpack.c.l.b16 %v636
        %v2026 = vunpack.c.h.b16 %v636
        %v2027 = vunpack.c.l.b16 %v637
        %v2028 = vunpack.c.h.b16 %v637
        %v2029 = vunpack.c.l.b16 %v638
        %v2030 = vunpack.c.h.b16 %v638
        %v2031 = vunpack.c.l.b16 %v639
        %v2032 = vunpack.c.h.b16 %v639
        %v2033 = vunpack.c.l.b16 %v640
        %v2034 = vunpack.c.h.b16 %v640
        %v2035 = vunpack.c.l.b16 %v641
        %v2036 = vunpack.c.h.b16 %v641
        %v2037 = vunpack.c.l.b16 %v642
        %v2038 = vunpack.c.h.b16 %v642
        %v2039 = vunpack.c.l.b16 %v643
        %v2040 = vunpack.c.h.b16 %v643
        %v2041 = vunpack.c.l.b16 %v644
        %v2042 = vunpack.c.h.b16 %v644
        %v2043 = vunpack.c.l.b16 %v645
        %v2044 = vunpack.c.h.b16 %v645
        %v2045 = vunpack.c.l.b16 %v646
        %v2046 = vunpack.c.h.b16 %v646
        %v2047 = vunpack.c.l.b16 %v647
        %v2048 = vunpack.c.h.b16 %v647
        %v2049 = vunpack.c.l.b16 %v648
        %v2050 = vunpack.c.h.b16 %v648
        %v2051 = vunpack.c.l.b16 %v649
        %v2052 = vunpack.c.h.b16 %v649
        %v2053 = vunpack.c.l.b16 %v650
        %v2054 = vunpack.c.h.b16 %v650
        %v2055 = vunpack.c.l.b16 %v651
        %v2056 = vunpack.c.h.b16 %v651
        %v2057 = vunpack.c.l.b16 %v652
        %v2058 = vunpack.c.h.b16 %v652
        %v2059 = vunpack.c.l.b16 %v653
        %v2060 = vunpack.c.h.b16 %v653
        %v2061 = vunpack.c.l.b16 %v654
        %v2062 = vunpack.c.h.b16 %v654
        %v2063 = vunpack.c.l.b16 %v655
        %v2064 = vunpack.c.h.b16 %v655
        %v2065 = vunpack.c.l.b16 %v656
        %v2066 = vunpack.c.h.b16 %v656
        %v2067 = vunpack.c.l.b16 %v657
        %v2068 = vunpack.c.h.b16 %v657
        %v2069 = vunpack.c.l.b16 %v658
        %v2070 = vunpack.c.h.b16 %v658
        %v2071 = vunpack.c.l.b16 %v659
        %v2072 = vunpack.c.h.b16 %v659
        %v2073 = vunpack.c.l.b16 %v660
        %v2074 = vunpack.c.h.b16 %v660
        %v2075 = vunpack.c.l.b16 %v661
        %v2076 = vunpack.c.h.b16 %v661
        %v2077 = vunpack.c.l.b16 %v662
        %v2078 = vunpack.c.h.b16 %v662
        %v2079 = vunpack.c.l.b16 %v663
        %v2080 = vunpack.c.h.b16 %v663
        %v2081 = vpack.c.b16 %v1313, %v1311
        %v2082 = vpack.c.b16 %v1314, %v1312
        %v2083 = vpack.c.b16 %v1317, %v1315
        %v2084 = vpack.c.b16 %v1318, %v1316
        %v2085 = vpack.c.b16 %v1321, %v1319
        %v2086 = vpack.c.b16 %v1322, %v1320
        %v2087 = vpack.c.b16 %v1325, %v1323
        %v2088 = vpack.c.b16 %v1326, %v1324
        %v2089 = vpack.c.b16 %v1329, %v1327
        %v2090 = vpack.c.b16 %v1330, %v1328
        %v2091 = vpack.c.b16 %v1333, %v1331
        %v2092 = vpack.c.b16 %v1334, %v1332
        %v2093 = vpack.c.b16 %v1337, %v1335
        %v2094 = vpack.c.b16 %v1338, %v1336
        %v2095 = vpack.c.b16 %v1341, %v1339
        %v2096 = vpack.c.b16 %v1342, %v1340
        %v2097 = vpack.c.b16 %v1345, %v1343
        %v2098 = vpack.c.b16 %v1346, %v1344
        %v2099 = vpack.c.b16 %v1349, %v1347
        %v2100 = vpack.c.b16 %v1350, %v1348
        %v2101 = vpack.c.b16 %v1353, %v1351
        %v2102 = vpack.c.b16 %v1354, %v1352
        %v2103 = vpack.c.b16 %v1357, %v1355
        %v2104 = vpack.c.b16 %v1358, %v1356
        %v2105 = vpack.c.b16 %v1361, %v1359
        %v2106 = vpack.c.b16 %v1362, %v1360
        %v2107 = vpack.c.b16 %v1365, %v1363
        %v2108 = vpack.c.b16 %v1366, %v1364
        %v2109 = vpack.c.b16 %v1369, %v1367
        %v2110 = vpack.c.b16 %v1370, %v1368
        %v2111 = vpack.c.b16 %v1373, %v1371
        %v2112 = vpack.c.b16 %v1374, %v1372
        %v2113 = vpack.c.b16 %v1377, %v1375
        %v2114 = vpack.c.b16 %v1378, %v1376
        %v2115 = vpack.c.b16 %v1381, %v1379
        %v2116 = vpack.c.b16 %v1382, %v1380
        %v2117 = vpack.c.b16 %v1385, %v1383
        %v2118 = vpack.c.b16 %v1386, %v1384
        %v2119 = vpack.c.b16 %v1389, %v1387
        %v2120 = vpack.c.b16 %v1390, %v1388
        %v2121 = vpack.c.b16 %v1393, %v1391
        %v2122 = vpack.c.b16 %v1394, %v1392
        %v2123 = vpack.c.b16 %v1397, %v1395
        %v2124 = vpack.c.b16 %v1398, %v1396
        %v2125 = vpack.c.b16 %v1401, %v1399
        %v2126 = vpack.c.b16 %v1402, %v1400
        %v2127 = vpack.c.b16 %v1405, %v1403
        %v2128 = vpack.c.b16 %v1406, %v1404
        %v2129 = vpack.c.b16 %v1409, %v1407
        %v2130 = vpack.c.b16 %v1410, %v1408
        %v2131 = vpack.c.b16 %v1413, %v1411
        %v2132 = vpack.c.b16 %v1414, %v1412
        %v2133 = vpack.c.b16 %v1417, %v1415
        %v2134 = vpack.c.b16 %v1418, %v1416
        %v2135 = vpack.c.b16 %v1421, %v1419
        %v2136 = vpack.c.b16 %v1422, %v1420
        %v2137 = vpack.c.b16 %v1425, %v1423
        %v2138 = vpack.c.b16 %v1426, %v1424
        %v2139 = vpack.c.b16 %v1429, %v1427
        %v2140 = vpack.c.b16 %v1430, %v1428
        %v2141 = vpack.c.b16 %v1433, %v1431
        %v2142 = vpack.c.b16 %v1434, %v1432
        %v2143 = vpack.c.b16 %v1437, %v1435
        %v2144 = vpack.c.b16 %v1438, %v1436
        %v2145 = vpack.c.b16 %v1441, %v1439
        %v2146 = vpack.c.b16 %v1442, %v1440
        %v2147 = vpack.c.b16 %v1445, %v1443
        %v2148 = vpack.c.b16 %v1446, %v1444
        %v2149 = vpack.c.b16 %v1449, %v1447
        %v2150 = vpack.c.b16 %v1450, %v1448
        %v2151 = vpack.c.b16 %v1453, %v1451
        %v2152 = vpack.c.b16 %v1454, %v1452
        %v2153 = vpack.c.b16 %v1457, %v1455
        %v2154 = vpack.c.b16 %v1458, %v1456
        %v2155 = vpack.c.b16 %v1461, %v1459
        %v2156 = vpack.c.b16 %v1462, %v1460
        %v2157 = vpack.c.b16 %v1465, %v1463
        %v2158 = vpack.c.b16 %v1466, %v1464
        %v2159 = vpack.c.b16 %v1469, %v1467
        %v2160 = vpack.c.b16 %v1470, %v1468
        %v2161 = vpack.c.b16 %v1473, %v1471
        %v2162 = vpack.c.b16 %v1474, %v1472
        %v2163 = vpack.c.b16 %v1477, %v1475
        %v2164 = vpack.c.b16 %v1478, %v1476
        %v2165 = vpack.c.b16 %v1481, %v1479
        %v2166 = vpack.c.b16 %v1482, %v1480
        %v2167 = vpack.c.b16 %v1485, %v1483
        %v2168 = vpack.c.b16 %v1486, %v1484
        %v2169 = vpack.c.b16 %v1489, %v1487
        %v2170 = vpack.c.b16 %v1490, %v1488
        %v2171 = vpack.c.b16 %v1493, %v1491
        %v2172 = vpack.c.b16 %v1494, %v1492
        %v2173 = vpack.c.b16 %v1497, %v1495
        %v2174 = vpack.c.b16 %v1498, %v1496
        %v2175 = vpack.c.b16 %v1501, %v1499
        %v2176 = vpack.c.b16 %v1502, %v1500
        %v2177 = vpack.c.b16 %v1505, %v1503
        %v2178 = vpack.c.b16 %v1506, %v1504
        %v2179 = vpack.c.b16 %v1509, %v1507
        %v2180 = vpack.c.b16 %v1510, %v1508
        %v2181 = vpack.c.b16 %v1513, %v1511
        %v2182 = vpack.c.b16 %v1514, %v1512
        %v2183 = vpack.c.b16 %v1517, %v1515
        %v2184 = vpack.c.b16 %v1518, %v1516
        %v2185 = vpack.c.b16 %v1521, %v1519
        %v2186 = vpack.c.b16 %v1522, %v1520
        %v2187 = vpack.c.b16 %v1525, %v1523
        %v2188 = vpack.c.b16 %v1526, %v1524
        %v2189 = vpack.c.b16 %v1529, %v1527
        %v2190 = vpack.c.b16 %v1530, %v1528
        %v2191 = vpack.c.b16 %v1533, %v1531
        %v2192 = vpack.c.b16 %v1534, %v1532
        %v2193 = vpack.c.b16 %v1537, %v1535
        %v2194 = vpack.c.b16 %v1538, %v1536
        %v2195 = vpack.c.b16 %v1541, %v1539
        %v2196 = vpack.c.b16 %v1542, %v1540
        %v2197 = vpack.c.b16 %v1545, %v1543
        %v2198 = vpack.c.b16 %v1546, %v1544
        %v2199 = vpack.c.b16 %v1549, %v1547
        %v2200 = vpack.c.b16 %v1550, %v1548
        %v2201 = vpack.c.b16 %v1553, %v1551
        %v2202 = vpack.c.b16 %v1554, %v1552
        %v2203 = vpack.c.b16 %v1557, %v1555
        %v2204 = vpack.c.b16 %v1558, %v1556
        %v2205 = vpack.c.b16 %v1561, %v1559
        %v2206 = vpack.c.b16 %v1562, %v1560
        %v2207 = vpack.c.b16 %v1565, %v1563
        %v2208 = vpack.c.b16 %v1566, %v1564
        %v2209 = vpack.c.b16 %v1569, %v1567
        %v2210 = vpack.c.b16 %v1570, %v1568
        %v2211 = vpack.c.b16 %v1573, %v1571
        %v2212 = vpack.c.b16 %v1574, %v1572
        %v2213 = vpack.c.b16 %v1577, %v1575
        %v2214 = vpack.c.b16 %v1578, %v1576
        %v2215 = vpack.c.b16 %v1581, %v1579
        %v2216 = vpack.c.b16 %v1582, %v1580
        %v2217 = vpack.c.b16 %v1585, %v1583
        %v2218 = vpack.c.b16 %v1586, %v1584
        %v2219 = vpack.c.b16 %v1589, %v1587
        %v2220 = vpack.c.b16 %v1590, %v1588
        %v2221 = vpack.c.b16 %v1593, %v1591
        %v2222 = vpack.c.b16 %v1594, %v1592
        %v2223 = vpack.c.b16 %v1597, %v1595
        %v2224 = vpack.c.b16 %v1598, %v1596
        %v2225 = vpack.c.b16 %v1601, %v1599
        %v2226 = vpack.c.b16 %v1602, %v1600
        %v2227 = vpack.c.b16 %v1605, %v1603
        %v2228 = vpack.c.b16 %v1606, %v1604
        %v2229 = vpack.c.b16 %v1609, %v1607
        %v2230 = vpack.c.b16 %v1610, %v1608
        %v2231 = vpack.c.b16 %v1613, %v1611
        %v2232 = vpack.c.b16 %v1614, %v1612
        %v2233 = vpack.c.b16 %v1617, %v1615
        %v2234 = vpack.c.b16 %v1618, %v1616
        %v2235 = vpack.c.b16 %v1621, %v1619
        %v2236 = vpack.c.b16 %v1622, %v1620
        %v2237 = vpack.c.b16 %v1625, %v1623
        %v2238 = vpack.c.b16 %v1626, %v1624
        %v2239 = vpack.c.b16 %v1629, %v1627
        %v2240 = vpack.c.b16 %v1630, %v1628
        %v2241 = vpack.c.b16 %v1633, %v1631
        %v2242 = vpack.c.b16 %v1634, %v1632
        %v2243 = vpack.c.b16 %v1637, %v1635
        %v2244 = vpack.c.b16 %v1638, %v1636
        %v2245 = vpack.c.b16 %v1641, %v1639
        %v2246 = vpack.c.b16 %v1642, %v1640
        %v2247 = vpack.c.b16 %v1645, %v1643
        %v2248 = vpack.c.b16 %v1646, %v1644
        %v2249 = vpack.c.b16 %v1649, %v1647
        %v2250 = vpack.c.b16 %v1650, %v1648
        %v2251 = vpack.c.b16 %v1653, %v1651
        %v2252 = vpack.c.b16 %v1654, %v1652
        %v2253 = vpack.c.b16 %v1657, %v1655
        %v2254 = vpack.c.b16 %v1658, %v1656
        %v2255 = vpack.c.b16 %v1661, %v1659
        %v2256 = vpack.c.b16 %v1662, %v1660
        %v2257 = vpack.c.b16 %v1665, %v1663
        %v2258 = vpack.c.b16 %v1666, %v1664
        %v2259 = vpack.c.b16 %v1669, %v1667
        %v2260 = vpack.c.b16 %v1670, %v1668
        %v2261 = vpack.c.b16 %v1673, %v1671
        %v2262 = vpack.c.b16 %v1674, %v1672
        %v2263 = vpack.c.b16 %v1677, %v1675
        %v2264 = vpack.c.b16 %v1678, %v1676
        %v2265 = vpack.c.b16 %v1681, %v1679
        %v2266 = vpack.c.b16 %v1682, %v1680
        %v2267 = vpack.c.b16 %v1685, %v1683
        %v2268 = vpack.c.b16 %v1686, %v1684
        %v2269 = vpack.c.b16 %v1689, %v1687
        %v2270 = vpack.c.b16 %v1690, %v1688
        %v2271 = vpack.c.b16 %v1693, %v1691
        %v2272 = vpack.c.b16 %v1694, %v1692
        %v2273 = vpack.c.b16 %v1697, %v1695
        %v2274 = vpack.c.b16 %v1698, %v1696
        %v2275 = vpack.c.b16 %v1701, %v1699
        %v2276 = vpack.c.b16 %v1702, %v1700
        %v2277 = vpack.c.b16 %v1705, %v1703
        %v2278 = vpack.c.b16 %v1706, %v1704
        %v2279 = vpack.c.b16 %v1709, %v1707
        %v2280 = vpack.c.b16 %v1710, %v1708
        %v2281 = vpack.c.b16 %v1713, %v1711
        %v2282 = vpack.c.b16 %v1714, %v1712
        %v2283 = vpack.c.b16 %v1717, %v1715
        %v2284 = vpack.c.b16 %v1718, %v1716
        %v2285 = vpack.c.b16 %v1721, %v1719
        %v2286 = vpack.c.b16 %v1722, %v1720
        %v2287 = vpack.c.b16 %v1725, %v1723
        %v2288 = vpack.c.b16 %v1726, %v1724
        %v2289 = vpack.c.b16 %v1729, %v1727
        %v2290 = vpack.c.b16 %v1730, %v1728
        %v2291 = vpack.c.b16 %v1733, %v1731
        %v2292 = vpack.c.b16 %v1734, %v1732
        %v2293 = vpack.c.b16 %v1737, %v1735
        %v2294 = vpack.c.b16 %v1738, %v1736
        %v2295 = vpack.c.b16 %v1741, %v1739
        %v2296 = vpack.c.b16 %v1742, %v1740
        %v2297 = vpack.c.b16 %v1745, %v1743
        %v2298 = vpack.c.b16 %v1746, %v1744
        %v2299 = vpack.c.b16 %v1749, %v1747
        %v2300 = vpack.c.b16 %v1750, %v1748
        %v2301 = vpack.c.b16 %v1753, %v1751
        %v2302 = vpack.c.b16 %v1754, %v1752
        %v2303 = vpack.c.b16 %v1757, %v1755
        %v2304 = vpack.c.b16 %v1758, %v1756
        %v2305 = vpack.c.b16 %v1761, %v1759
        %v2306 = vpack.c.b16 %v1762, %v1760
        %v2307 = vpack.c.b16 %v1765, %v1763
        %v2308 = vpack.c.b16 %v1766, %v1764
        %v2309 = vpack.c.b16 %v1769, %v1767
        %v2310 = vpack.c.b16 %v1770, %v1768
        %v2311 = vpack.c.b16 %v1773, %v1771
        %v2312 = vpack.c.b16 %v1774, %v1772
        %v2313 = vpack.c.b16 %v1777, %v1775
        %v2314 = vpack.c.b16 %v1778, %v1776
        %v2315 = vpack.c.b16 %v1781, %v1779
        %v2316 = vpack.c.b16 %v1782, %v1780
        %v2317 = vpack.c.b16 %v1785, %v1783
        %v2318 = vpack.c.b16 %v1786, %v1784
        %v2319 = vpack.c.b16 %v1789, %v1787
        %v2320 = vpack.c.b16 %v1790, %v1788
        %v2321 = vpack.c.b16 %v1793, %v1791
        %v2322 = vpack.c.b16 %v1794, %v1792
        %v2323 = vpack.c.b16 %v1797, %v1795
        %v2324 = vpack.c.b16 %v1798, %v1796
        %v2325 = vpack.c.b16 %v1801, %v1799
        %v2326 = vpack.c.b16 %v1802, %v1800
        %v2327 = vpack.c.b16 %v1805, %v1803
        %v2328 = vpack.c.b16 %v1806, %v1804
        %v2329 = vpack.c.b16 %v1809, %v1807
        %v2330 = vpack.c.b16 %v1810, %v1808
        %v2331 = vpack.c.b16 %v1813, %v1811
        %v2332 = vpack.c.b16 %v1814, %v1812
        %v2333 = vpack.c.b16 %v1817, %v1815
        %v2334 = vpack.c.b16 %v1818, %v1816
        %v2335 = vpack.c.b16 %v1821, %v1819
        %v2336 = vpack.c.b16 %v1822, %v1820
        %v2337 = vpack.c.b16 %v1825, %v1823
        %v2338 = vpack.c.b16 %v1826, %v1824
        %v2339 = vpack.c.b16 %v1829, %v1827
        %v2340 = vpack.c.b16 %v1830, %v1828
        %v2341 = vpack.c.b16 %v1833, %v1831
        %v2342 = vpack.c.b16 %v1834, %v1832
        %v2343 = vpack.c.b16 %v1837, %v1835
        %v2344 = vpack.c.b16 %v1838, %v1836
        %v2345 = vpack.c.b16 %v1841, %v1839
        %v2346 = vpack.c.b16 %v1842, %v1840
        %v2347 = vpack.c.b16 %v1845, %v1843
        %v2348 = vpack.c.b16 %v1846, %v1844
        %v2349 = vpack.c.b16 %v1849, %v1847
        %v2350 = vpack.c.b16 %v1850, %v1848
        %v2351 = vpack.c.b16 %v1853, %v1851
        %v2352 = vpack.c.b16 %v1854, %v1852
        %v2353 = vpack.c.b16 %v1857, %v1855
        %v2354 = vpack.c.b16 %v1858, %v1856
        %v2355 = vpack.c.b16 %v1861, %v1859
        %v2356 = vpack.c.b16 %v1862, %v1860
        %v2357 = vpack.c.b16 %v1865, %v1863
        %v2358 = vpack.c.b16 %v1866, %v1864
        %v2359 = vpack.c.b16 %v1869, %v1867
        %v2360 = vpack.c.b16 %v1870, %v1868
        %v2361 = vpack.c.b16 %v1873, %v1871
        %v2362 = vpack.c.b16 %v1874, %v1872
        %v2363 = vpack.c.b16 %v1877, %v1875
        %v2364 = vpack.c.b16 %v1878, %v1876
        %v2365 = vpack.c.b16 %v1881, %v1879
        %v2366 = vpack.c.b16 %v1882, %v1880
        %v2367 = vpack.c.b16 %v1885, %v1883
        %v2368 = vpack.c.b16 %v1886, %v1884
        %v2369 = vpack.c.b16 %v1889, %v1887
        %v2370 = vpack.c.b16 %v1890, %v1888
        %v2371 = vpack.c.b16 %v1893, %v1891
        %v2372 = vpack.c.b16 %v1894, %v1892
        %v2373 = vpack.c.b16 %v1897, %v1895
        %v2374 = vpack.c.b16 %v1898, %v1896
        %v2375 = vpack.c.b16 %v1901, %v1899
        %v2376 = vpack.c.b16 %v1902, %v1900
        %v2377 = vpack.c.b16 %v1905, %v1903
        %v2378 = vpack.c.b16 %v1906, %v1904
        %v2379 = vpack.c.b16 %v1909, %v1907
        %v2380 = vpack.c.b16 %v1910, %v1908
        %v2381 = vpack.c.b16 %v1913, %v1911
        %v2382 = vpack.c.b16 %v1914, %v1912
        %v2383 = vpack.c.b16 %v1917, %v1915
        %v2384 = vpack.c.b16 %v1918, %v1916
        %v2385 = vpack.c.b16 %v1921, %v1919
        %v2386 = vpack.c.b16 %v1922, %v1920
        %v2387 = vpack.c.b16 %v1925, %v1923
        %v2388 = vpack.c.b16 %v1926, %v1924
        %v2389 = vpack.c.b16 %v1929, %v1927
        %v2390 = vpack.c.b16 %v1930, %v1928
        %v2391 = vpack.c.b16 %v1933, %v1931
        %v2392 = vpack.c.b16 %v1934, %v1932
        %v2393 = vpack.c.b16 %v1937, %v1935
        %v2394 = vpack.c.b16 %v1938, %v1936
        %v2395 = vpack.c.b16 %v1941, %v1939
        %v2396 = vpack.c.b16 %v1942, %v1940
        %v2397 = vpack.c.b16 %v1945, %v1943
        %v2398 = vpack.c.b16 %v1946, %v1944
        %v2399 = vpack.c.b16 %v1949, %v1947
        %v2400 = vpack.c.b16 %v1950, %v1948
        %v2401 = vpack.c.b16 %v1953, %v1951
        %v2402 = vpack.c.b16 %v1954, %v1952
        %v2403 = vpack.c.b16 %v1957, %v1955
        %v2404 = vpack.c.b16 %v1958, %v1956
        %v2405 = vpack.c.b16 %v1961, %v1959
        %v2406 = vpack.c.b16 %v1962, %v1960
        %v2407 = vpack.c.b16 %v1965, %v1963
        %v2408 = vpack.c.b16 %v1966, %v1964
        %v2409 = vpack.c.b16 %v1969, %v1967
        %v2410 = vpack.c.b16 %v1970, %v1968
        %v2411 = vpack.c.b16 %v1973, %v1971
        %v2412 = vpack.c.b16 %v1974, %v1972
        %v2413 = vpack.c.b16 %v1977, %v1975
        %v2414 = vpack.c.b16 %v1978, %v1976
        %v2415 = vpack.c.b16 %v1981, %v1979
        %v2416 = vpack.c.b16 %v1982, %v1980
        %v2417 = vpack.c.b16 %v1985, %v1983
        %v2418 = vpack.c.b16 %v1986, %v1984
        %v2419 = vpack.c.b16 %v1989, %v1987
        %v2420 = vpack.c.b16 %v1990, %v1988
        %v2421 = vpack.c.b16 %v1993, %v1991
        %v2422 = vpack.c.b16 %v1994, %v1992
        %v2423 = vpack.c.b16 %v1997, %v1995
        %v2424 = vpack.c.b16 %v1998, %v1996
        %v2425 = vpack.c.b16 %v2001, %v1999
        %v2426 = vpack.c.b16 %v2002, %v2000
        %v2427 = vpack.c.b16 %v2005, %v2003
        %v2428 = vpack.c.b16 %v2006, %v2004
        %v2429 = vpack.c.b16 %v2009, %v2007
        %v2430 = vpack.c.b16 %v2010, %v2008
        %v2431 = vpack.c.b16 %v2013, %v2011
        %v2432 = vpack.c.b16 %v2014, %v2012
        %v2433 = vpack.c.b16 %v2017, %v2015
        %v2434 = vpack.c.b16 %v2018, %v2016
        %v2435 = vpack.c.b16 %v2021, %v2019
        %v2436 = vpack.c.b16 %v2022, %v2020
        %v2437 = vpack.c.b16 %v2025, %v2023
        %v2438 = vpack.c.b16 %v2026, %v2024
        %v2439 = vpack.c.b16 %v2029, %v2027
        %v2440 = vpack.c.b16 %v2030, %v2028
        %v2441 = vpack.c.b16 %v2033, %v2031
        %v2442 = vpack.c.b16 %v2034, %v2032
        %v2443 = vpack.c.b16 %v2037, %v2035
        %v2444 = vpack.c.b16 %v2038, %v2036
        %v2445 = vpack.c.b16 %v2041, %v2039
        %v2446 = vpack.c.b16 %v2042, %v2040
        %v2447 = vpack.c.b16 %v2045, %v2043
        %v2448 = vpack.c.b16 %v2046, %v2044
        %v2449 = vpack.c.b16 %v2049, %v2047
        %v2450 = vpack.c.b16 %v2050, %v2048
        %v2451 = vpack.c.b16 %v2053, %v2051
        %v2452 = vpack.c.b16 %v2054, %v2052
        %v2453 = vpack.c.b16 %v2057, %v2055
        %v2454 = vpack.c.b16 %v2058, %v2056
        %v2455 = vpack.c.b16 %v2061, %v2059
        %v2456 = vpack.c.b16 %v2062, %v2060
        %v2457 = vpack.c.b16 %v2065, %v2063
        %v2458 = vpack.c.b16 %v2066, %v2064
        %v2459 = vpack.c.b16 %v2069, %v2067
        %v2460 = vpack.c.b16 %v2070, %v2068
        %v2461 = vpack.c.b16 %v2073, %v2071
        %v2462 = vpack.c.b16 %v2074, %v2072
        %v2463 = vpack.c.b16 %v2077, %v2075
        %v2464 = vpack.c.b16 %v2078, %v2076
        %v2465 = vpack.c.b16 %v2079, %v2079
        %v2466 = vpack.c.b16 %v2080, %v2080
        %vm2851 = vcmask 23552
        %v2853 = vsel %vm2851, %v852, 0
        %v2856 = vsel %vm2851, %v877, 0
        %vm2858 = vcmask 1040384
        %vm2859 = vcmask 1041408
        %v2860 = vsel %vm2858, 4294967295, 65535
        %v2861 = vsel %vm2859, %v2860, 0
        %v2863 = vand.u32 %v2465, %v2861
        %v2866 = vand.u32 %v2466, %v2861
        %2868 = vmatprep.subr.bf16.mxu0 %v2082
        %2869 = vmatpush1.bf16.msra.mxu0 %v2081
        %2870 = vmatprep.subr.bf16.mxu0 %v2084
        %2871 = vmatpush1.bf16.msra.mxu0 %v2083
        %2872 = vmatprep.subr.bf16.mxu0 %v2086
        %2873 = vmatpush1.bf16.msra.mxu0 %v2085
        %2874 = vmatprep.subr.bf16.mxu0 %v2088
        %2875 = vmatpush1.bf16.msra.mxu0 %v2087
        %2876 = vmatprep.subr.bf16.mxu0 %v2090
        %2877 = vmatpush1.bf16.msra.mxu0 %v2089
        %2878 = vmatprep.subr.bf16.mxu0 %v2092
        %2879 = vmatpush1.bf16.msra.mxu0 %v2091
        %2880 = vmatprep.subr.bf16.mxu0 %v2094
        %2881 = vmatpush1.bf16.msra.mxu0 %v2093
        %2882 = vmatprep.subr.bf16.mxu0 %v2096
        %2883 = vmatpush1.bf16.msra.mxu0 %v2095
        %2884 = vmatprep.subr.bf16.mxu0 %v2098
        %2885 = vmatpush1.bf16.msra.mxu0 %v2097
        %2886 = vmatprep.subr.bf16.mxu0 %v2100
        %2887 = vmatpush1.bf16.msra.mxu0 %v2099
        %2888 = vmatprep.subr.bf16.mxu0 %v2102
        %2889 = vmatpush1.bf16.msra.mxu0 %v2101
        %2890 = vmatprep.subr.bf16.mxu0 %v2104
        %2891 = vmatpush1.bf16.msra.mxu0 %v2103
        %2892 = vmatprep.subr.bf16.mxu0 %v2106
        %2893 = vmatpush1.bf16.msra.mxu0 %v2105
        %2894 = vmatprep.subr.bf16.mxu0 %v2108
        %2895 = vmatpush1.bf16.msra.mxu0 %v2107
        %2896 = vmatprep.subr.bf16.mxu0 %v2110
        %2897 = vmatpush1.bf16.msra.mxu0 %v2109
        %2898 = vmatprep.subr.bf16.mxu0 %v2112
        %2899 = vmatpush1.bf16.msra.mxu0 %v2111
        %2900 = vmatprep.mubr.bf16.mxu0 %v829
        %2901 = vmatmul.mubr.bf16.gmra.mrb[0].mxu0 %v828
        %v2902 = vpop.f32.mrb[0].mxu0
        %v2903 = vadd.f32 %v669, %v2902
        %v2904 = vpop.f32.mrb[0].mxu0
        %v2905 = vadd.f32 %v673, %v2904
        %v2906 = vpop.f32.mrb[0].mxu0
        %v2907 = vadd.f32 %v669, %v2906
        %v2908 = vpop.f32.mrb[0].mxu0
        %v2909 = vadd.f32 %v673, %v2908
        %2910 = vmatprep.mubr.bf16.mxu0 %v854
        %2911 = vmatmul.mubr.bf16.gmra.mrb[0].mxu0 %v853
        %v2912 = vpop.f32.mrb[0].mxu0
        %v2913 = vadd.f32 %v669, %v2912
        %v2914 = vpop.f32.mrb[0].mxu0
        %v2915 = vadd.f32 %v673, %v2914
        %v2916 = vpop.f32.mrb[0].mxu0
        %v2917 = vadd.f32 %v669, %v2916
        %v2918 = vpop.f32.mrb[0].mxu0
        %v2919 = vadd.f32 %v673, %v2918
        %2920 = vdwg.mxu0
        %2921 = vmatprep.subr.bf16.mxu0 %v2114
        %2922 = vmatpush1.bf16.msra.mxu0 %v2113
        %2923 = vmatprep.subr.bf16.mxu0 %v2116
        %2924 = vmatpush1.bf16.msra.mxu0 %v2115
        %2925 = vmatprep.subr.bf16.mxu0 %v2118
        %2926 = vmatpush1.bf16.msra.mxu0 %v2117
        %2927 = vmatprep.subr.bf16.mxu0 %v2120
        %2928 = vmatpush1.bf16.msra.mxu0 %v2119
        %2929 = vmatprep.subr.bf16.mxu0 %v2122
        %2930 = vmatpush1.bf16.msra.mxu0 %v2121
        %2931 = vmatprep.subr.bf16.mxu0 %v2124
        %2932 = vmatpush1.bf16.msra.mxu0 %v2123
        %2933 = vmatprep.subr.bf16.mxu0 %v2126
        %2934 = vmatpush1.bf16.msra.mxu0 %v2125
        %2935 = vmatprep.subr.bf16.mxu0 %v2128
        %2936 = vmatpush1.bf16.msra.mxu0 %v2127
        %2937 = vmatprep.subr.bf16.mxu0 %v2130
        %2938 = vmatpush1.bf16.msra.mxu0 %v2129
        %2939 = vmatprep.subr.bf16.mxu0 %v2132
        %2940 = vmatpush1.bf16.msra.mxu0 %v2131
        %2941 = vmatprep.subr.bf16.mxu0 %v2134
        %2942 = vmatpush1.bf16.msra.mxu0 %v2133
        %2943 = vmatprep.subr.bf16.mxu0 %v2136
        %2944 = vmatpush1.bf16.msra.mxu0 %v2135
        %2945 = vmatprep.subr.bf16.mxu0 %v2138
        %2946 = vmatpush1.bf16.msra.mxu0 %v2137
        %2947 = vmatprep.subr.bf16.mxu0 %v2140
        %2948 = vmatpush1.bf16.msra.mxu0 %v2139
        %2949 = vmatprep.subr.bf16.mxu0 %v2142
        %2950 = vmatpush1.bf16.msra.mxu0 %v2141
        %2951 = vmatprep.subr.bf16.mxu0 %v2144
        %2952 = vmatpush1.bf16.msra.mxu0 %v2143
        %2953 = vmatprep.mubr.bf16.mxu0 %v831
        %2954 = vmatmul.mubr.bf16.gmra.mrb[0].mxu0 %v830
        %v2955 = vpop.f32.mrb[0].mxu0
        %v2956 = vadd.f32 %v2903, %v2955
        %v2957 = vpop.f32.mrb[0].mxu0
        %v2958 = vadd.f32 %v2905, %v2957
        %v2959 = vpop.f32.mrb[0].mxu0
        %v2960 = vadd.f32 %v2907, %v2959
        %v2961 = vpop.f32.mrb[0].mxu0
        %v2962 = vadd.f32 %v2909, %v2961
        %2963 = vmatprep.mubr.bf16.mxu0 %v856
        %2964 = vmatmul.mubr.bf16.gmra.mrb[0].mxu0 %v855
        %v2965 = vpop.f32.mrb[0].mxu0
        %v2966 = vadd.f32 %v2913, %v2965
        %v2967 = vpop.f32.mrb[0].mxu0
        %v2968 = vadd.f32 %v2915, %v2967
        %v2969 = vpop.f32.mrb[0].mxu0
        %v2970 = vadd.f32 %v2917, %v2969
        %v2971 = vpop.f32.mrb[0].mxu0
        %v2972 = vadd.f32 %v2919, %v2971
        %2973 = vdwg.mxu0
        %2974 = vmatprep.subr.bf16.mxu0 %v2146
        %2975 = vmatpush1.bf16.msra.mxu0 %v2145
        %2976 = vmatprep.subr.bf16.mxu0 %v2148
        %2977 = vmatpush1.bf16.msra.mxu0 %v2147
        %2978 = vmatprep.subr.bf16.mxu0 %v2150
        %2979 = vmatpush1.bf16.msra.mxu0 %v2149
        %2980 = vmatprep.subr.bf16.mxu0 %v2152
        %2981 = vmatpush1.bf16.msra.mxu0 %v2151
        %2982 = vmatprep.subr.bf16.mxu0 %v2154
        %2983 = vmatpush1.bf16.msra.mxu0 %v2153
        %2984 = vmatprep.subr.bf16.mxu0 %v2156
        %2985 = vmatpush1.bf16.msra.mxu0 %v2155
        %2986 = vmatprep.subr.bf16.mxu0 %v2158
        %2987 = vmatpush1.bf16.msra.mxu0 %v2157
        %2988 = vmatprep.subr.bf16.mxu0 %v2160
        %2989 = vmatpush1.bf16.msra.mxu0 %v2159
        %2990 = vmatprep.subr.bf16.mxu0 %v2162
        %2991 = vmatpush1.bf16.msra.mxu0 %v2161
        %2992 = vmatprep.subr.bf16.mxu0 %v2164
        %2993 = vmatpush1.bf16.msra.mxu0 %v2163
        %2994 = vmatprep.subr.bf16.mxu0 %v2166
        %2995 = vmatpush1.bf16.msra.mxu0 %v2165
        %2996 = vmatprep.subr.bf16.mxu0 %v2168
        %2997 = vmatpush1.bf16.msra.mxu0 %v2167
        %2998 = vmatprep.subr.bf16.mxu0 %v2170
        %2999 = vmatpush1.bf16.msra.mxu0 %v2169
        %3000 = vmatprep.subr.bf16.mxu0 %v2172
        %3001 = vmatpush1.bf16.msra.mxu0 %v2171
        %3002 = vmatprep.subr.bf16.mxu0 %v2174
        %3003 = vmatpush1.bf16.msra.mxu0 %v2173
        %3004 = vmatprep.subr.bf16.mxu0 %v2176
        %3005 = vmatpush1.bf16.msra.mxu0 %v2175
        %3006 = vmatprep.mubr.bf16.mxu0 %v833
        %3007 = vmatmul.mubr.bf16.gmra.mrb[0].mxu0 %v832
        %v3008 = vpop.f32.mrb[0].mxu0
        %v3009 = vadd.f32 %v2956, %v3008
        %v3010 = vpop.f32.mrb[0].mxu0
        %v3011 = vadd.f32 %v2958, %v3010
        %v3012 = vpop.f32.mrb[0].mxu0
        %v3013 = vadd.f32 %v2960, %v3012
        %v3014 = vpop.f32.mrb[0].mxu0
        %v3015 = vadd.f32 %v2962, %v3014
        %3016 = vmatprep.mubr.bf16.mxu0 %v858
        %3017 = vmatmul.mubr.bf16.gmra.mrb[0].mxu0 %v857
        %v3018 = vpop.f32.mrb[0].mxu0
        %v3019 = vadd.f32 %v2966, %v3018
        %v3020 = vpop.f32.mrb[0].mxu0
        %v3021 = vadd.f32 %v2968, %v3020
        %v3022 = vpop.f32.mrb[0].mxu0
        %v3023 = vadd.f32 %v2970, %v3022
        %v3024 = vpop.f32.mrb[0].mxu0
        %v3025 = vadd.f32 %v2972, %v3024
        %3026 = vdwg.mxu0
        %3027 = vmatprep.subr.bf16.mxu0 %v2178
        %3028 = vmatpush1.bf16.msra.mxu0 %v2177
        %3029 = vmatprep.subr.bf16.mxu0 %v2180
        %3030 = vmatpush1.bf16.msra.mxu0 %v2179
        %3031 = vmatprep.subr.bf16.mxu0 %v2182
        %3032 = vmatpush1.bf16.msra.mxu0 %v2181
        %3033 = vmatprep.subr.bf16.mxu0 %v2184
        %3034 = vmatpush1.bf16.msra.mxu0 %v2183
        %3035 = vmatprep.subr.bf16.mxu0 %v2186
        %3036 = vmatpush1.bf16.msra.mxu0 %v2185
        %3037 = vmatprep.subr.bf16.mxu0 %v2188
        %3038 = vmatpush1.bf16.msra.mxu0 %v2187
        %3039 = vmatprep.subr.bf16.mxu0 %v2190
        %3040 = vmatpush1.bf16.msra.mxu0 %v2189
        %3041 = vmatprep.subr.bf16.mxu0 %v2192
        %3042 = vmatpush1.bf16.msra.mxu0 %v2191
        %3043 = vmatprep.subr.bf16.mxu0 %v2194
        %3044 = vmatpush1.bf16.msra.mxu0 %v2193
        %3045 = vmatprep.subr.bf16.mxu0 %v2196
        %3046 = vmatpush1.bf16.msra.mxu0 %v2195
        %3047 = vmatprep.subr.bf16.mxu0 %v2198
        %3048 = vmatpush1.bf16.msra.mxu0 %v2197
        %3049 = vmatprep.subr.bf16.mxu0 %v2200
        %3050 = vmatpush1.bf16.msra.mxu0 %v2199
        %3051 = vmatprep.subr.bf16.mxu0 %v2202
        %3052 = vmatpush1.bf16.msra.mxu0 %v2201
        %3053 = vmatprep.subr.bf16.mxu0 %v2204
        %3054 = vmatpush1.bf16.msra.mxu0 %v2203
        %3055 = vmatprep.subr.bf16.mxu0 %v2206
        %3056 = vmatpush1.bf16.msra.mxu0 %v2205
        %3057 = vmatprep.subr.bf16.mxu0 %v2208
        %3058 = vmatpush1.bf16.msra.mxu0 %v2207
        %3059 = vmatprep.mubr.bf16.mxu0 %v835
        %3060 = vmatmul.mubr.bf16.gmra.mrb[0].mxu0 %v834
        %v3061 = vpop.f32.mrb[0].mxu0
        %v3062 = vadd.f32 %v3009, %v3061
        %v3063 = vpop.f32.mrb[0].mxu0
        %v3064 = vadd.f32 %v3011, %v3063
        %v3065 = vpop.f32.mrb[0].mxu0
        %v3066 = vadd.f32 %v3013, %v3065
        %v3067 = vpop.f32.mrb[0].mxu0
        %v3068 = vadd.f32 %v3015, %v3067
        %3069 = vmatprep.mubr.bf16.mxu0 %v860
        %3070 = vmatmul.mubr.bf16.gmra.mrb[0].mxu0 %v859
        %v3071 = vpop.f32.mrb[0].mxu0
        %v3072 = vadd.f32 %v3019, %v3071
        %v3073 = vpop.f32.mrb[0].mxu0
        %v3074 = vadd.f32 %v3021, %v3073
        %v3075 = vpop.f32.mrb[0].mxu0
        %v3076 = vadd.f32 %v3023, %v3075
        %v3077 = vpop.f32.mrb[0].mxu0
        %v3078 = vadd.f32 %v3025, %v3077
        %3079 = vdwg.mxu0
        %3080 = vmatprep.subr.bf16.mxu0 %v2210
        %3081 = vmatpush1.bf16.msra.mxu0 %v2209
        %3082 = vmatprep.subr.bf16.mxu0 %v2212
        %3083 = vmatpush1.bf16.msra.mxu0 %v2211
        %3084 = vmatprep.subr.bf16.mxu0 %v2214
        %3085 = vmatpush1.bf16.msra.mxu0 %v2213
        %3086 = vmatprep.subr.bf16.mxu0 %v2216
        %3087 = vmatpush1.bf16.msra.mxu0 %v2215
        %3088 = vmatprep.subr.bf16.mxu0 %v2218
        %3089 = vmatpush1.bf16.msra.mxu0 %v2217
        %3090 = vmatprep.subr.bf16.mxu0 %v2220
        %3091 = vmatpush1.bf16.msra.mxu0 %v2219
        %3092 = vmatprep.subr.bf16.mxu0 %v2222
        %3093 = vmatpush1.bf16.msra.mxu0 %v2221
        %3094 = vmatprep.subr.bf16.mxu0 %v2224
        %3095 = vmatpush1.bf16.msra.mxu0 %v2223
        %3096 = vmatprep.subr.bf16.mxu0 %v2226
        %3097 = vmatpush1.bf16.msra.mxu0 %v2225
        %3098 = vmatprep.subr.bf16.mxu0 %v2228
        %3099 = vmatpush1.bf16.msra.mxu0 %v2227
        %3100 = vmatprep.subr.bf16.mxu0 %v2230
        %3101 = vmatpush1.bf16.msra.mxu0 %v2229
        %3102 = vmatprep.subr.bf16.mxu0 %v2232
        %3103 = vmatpush1.bf16.msra.mxu0 %v2231
        %3104 = vmatprep.subr.bf16.mxu0 %v2234
        %3105 = vmatpush1.bf16.msra.mxu0 %v2233
        %3106 = vmatprep.subr.bf16.mxu0 %v2236
        %3107 = vmatpush1.bf16.msra.mxu0 %v2235
        %3108 = vmatprep.subr.bf16.mxu0 %v2238
        %3109 = vmatpush1.bf16.msra.mxu0 %v2237
        %3110 = vmatprep.subr.bf16.mxu0 %v2240
        %3111 = vmatpush1.bf16.msra.mxu0 %v2239
        %3112 = vmatprep.mubr.bf16.mxu0 %v837
        %3113 = vmatmul.mubr.bf16.gmra.mrb[0].mxu0 %v836
        %v3114 = vpop.f32.mrb[0].mxu0
        %v3115 = vadd.f32 %v3062, %v3114
        %v3116 = vpop.f32.mrb[0].mxu0
        %v3117 = vadd.f32 %v3064, %v3116
        %v3118 = vpop.f32.mrb[0].mxu0
        %v3119 = vadd.f32 %v3066, %v3118
        %v3120 = vpop.f32.mrb[0].mxu0
        %v3121 = vadd.f32 %v3068, %v3120
        %3122 = vmatprep.mubr.bf16.mxu0 %v862
        %3123 = vmatmul.mubr.bf16.gmra.mrb[0].mxu0 %v861
        %v3124 = vpop.f32.mrb[0].mxu0
        %v3125 = vadd.f32 %v3072, %v3124
        %v3126 = vpop.f32.mrb[0].mxu0
        %v3127 = vadd.f32 %v3074, %v3126
        %v3128 = vpop.f32.mrb[0].mxu0
        %v3129 = vadd.f32 %v3076, %v3128
        %v3130 = vpop.f32.mrb[0].mxu0
        %v3131 = vadd.f32 %v3078, %v3130
        %3132 = vdwg.mxu0
        %3133 = vmatprep.subr.bf16.mxu0 %v2242
        %3134 = vmatpush1.bf16.msra.mxu0 %v2241
        %3135 = vmatprep.subr.bf16.mxu0 %v2244
        %3136 = vmatpush1.bf16.msra.mxu0 %v2243
        %3137 = vmatprep.subr.bf16.mxu0 %v2246
        %3138 = vmatpush1.bf16.msra.mxu0 %v2245
        %3139 = vmatprep.subr.bf16.mxu0 %v2248
        %3140 = vmatpush1.bf16.msra.mxu0 %v2247
        %3141 = vmatprep.subr.bf16.mxu0 %v2250
        %3142 = vmatpush1.bf16.msra.mxu0 %v2249
        %3143 = vmatprep.subr.bf16.mxu0 %v2252
        %3144 = vmatpush1.bf16.msra.mxu0 %v2251
        %3145 = vmatprep.subr.bf16.mxu0 %v2254
        %3146 = vmatpush1.bf16.msra.mxu0 %v2253
        %3147 = vmatprep.subr.bf16.mxu0 %v2256
        %3148 = vmatpush1.bf16.msra.mxu0 %v2255
        %3149 = vmatprep.subr.bf16.mxu0 %v2258
        %3150 = vmatpush1.bf16.msra.mxu0 %v2257
        %3151 = vmatprep.subr.bf16.mxu0 %v2260
        %3152 = vmatpush1.bf16.msra.mxu0 %v2259
        %3153 = vmatprep.subr.bf16.mxu0 %v2262
        %3154 = vmatpush1.bf16.msra.mxu0 %v2261
        %3155 = vmatprep.subr.bf16.mxu0 %v2264
        %3156 = vmatpush1.bf16.msra.mxu0 %v2263
        %3157 = vmatprep.subr.bf16.mxu0 %v2266
        %3158 = vmatpush1.bf16.msra.mxu0 %v2265
        %3159 = vmatprep.subr.bf16.mxu0 %v2268
        %3160 = vmatpush1.bf16.msra.mxu0 %v2267
        %3161 = vmatprep.subr.bf16.mxu0 %v2270
        %3162 = vmatpush1.bf16.msra.mxu0 %v2269
        %3163 = vmatprep.subr.bf16.mxu0 %v2272
        %3164 = vmatpush1.bf16.msra.mxu0 %v2271
        %3165 = vmatprep.mubr.bf16.mxu0 %v839
        %3166 = vmatmul.mubr.bf16.gmra.mrb[0].mxu0 %v838
        %v3167 = vpop.f32.mrb[0].mxu0
        %v3168 = vadd.f32 %v3115, %v3167
        %v3169 = vpop.f32.mrb[0].mxu0
        %v3170 = vadd.f32 %v3117, %v3169
        %v3171 = vpop.f32.mrb[0].mxu0
        %v3172 = vadd.f32 %v3119, %v3171
        %v3173 = vpop.f32.mrb[0].mxu0
        %v3174 = vadd.f32 %v3121, %v3173
        %3175 = vmatprep.mubr.bf16.mxu0 %v864
        %3176 = vmatmul.mubr.bf16.gmra.mrb[0].mxu0 %v863
        %v3177 = vpop.f32.mrb[0].mxu0
        %v3178 = vadd.f32 %v3125, %v3177
        %v3179 = vpop.f32.mrb[0].mxu0
        %v3180 = vadd.f32 %v3127, %v3179
        %v3181 = vpop.f32.mrb[0].mxu0
        %v3182 = vadd.f32 %v3129, %v3181
        %v3183 = vpop.f32.mrb[0].mxu0
        %v3184 = vadd.f32 %v3131, %v3183
        %3185 = vdwg.mxu0
        %3186 = vmatprep.subr.bf16.mxu0 %v2274
        %3187 = vmatpush1.bf16.msra.mxu0 %v2273
        %3188 = vmatprep.subr.bf16.mxu0 %v2276
        %3189 = vmatpush1.bf16.msra.mxu0 %v2275
        %3190 = vmatprep.subr.bf16.mxu0 %v2278
        %3191 = vmatpush1.bf16.msra.mxu0 %v2277
        %3192 = vmatprep.subr.bf16.mxu0 %v2280
        %3193 = vmatpush1.bf16.msra.mxu0 %v2279
        %3194 = vmatprep.subr.bf16.mxu0 %v2282
        %3195 = vmatpush1.bf16.msra.mxu0 %v2281
        %3196 = vmatprep.subr.bf16.mxu0 %v2284
        %3197 = vmatpush1.bf16.msra.mxu0 %v2283
        %3198 = vmatprep.subr.bf16.mxu0 %v2286
        %3199 = vmatpush1.bf16.msra.mxu0 %v2285
        %3200 = vmatprep.subr.bf16.mxu0 %v2288
        %3201 = vmatpush1.bf16.msra.mxu0 %v2287
        %3202 = vmatprep.subr.bf16.mxu0 %v2290
        %3203 = vmatpush1.bf16.msra.mxu0 %v2289
        %3204 = vmatprep.subr.bf16.mxu0 %v2292
        %3205 = vmatpush1.bf16.msra.mxu0 %v2291
        %3206 = vmatprep.subr.bf16.mxu0 %v2294
        %3207 = vmatpush1.bf16.msra.mxu0 %v2293
        %3208 = vmatprep.subr.bf16.mxu0 %v2296
        %3209 = vmatpush1.bf16.msra.mxu0 %v2295
        %3210 = vmatprep.subr.bf16.mxu0 %v2298
        %3211 = vmatpush1.bf16.msra.mxu0 %v2297
        %3212 = vmatprep.subr.bf16.mxu0 %v2300
        %3213 = vmatpush1.bf16.msra.mxu0 %v2299
        %3214 = vmatprep.subr.bf16.mxu0 %v2302
        %3215 = vmatpush1.bf16.msra.mxu0 %v2301
        %3216 = vmatprep.subr.bf16.mxu0 %v2304
        %3217 = vmatpush1.bf16.msra.mxu0 %v2303
        %3218 = vmatprep.mubr.bf16.mxu0 %v841
        %3219 = vmatmul.mubr.bf16.gmra.mrb[0].mxu0 %v840
        %v3220 = vpop.f32.mrb[0].mxu0
        %v3221 = vadd.f32 %v3168, %v3220
        %v3222 = vpop.f32.mrb[0].mxu0
        %v3223 = vadd.f32 %v3170, %v3222
        %v3224 = vpop.f32.mrb[0].mxu0
        %v3225 = vadd.f32 %v3172, %v3224
        %v3226 = vpop.f32.mrb[0].mxu0
        %v3227 = vadd.f32 %v3174, %v3226
        %3228 = vmatprep.mubr.bf16.mxu0 %v866
        %3229 = vmatmul.mubr.bf16.gmra.mrb[0].mxu0 %v865
        %v3230 = vpop.f32.mrb[0].mxu0
        %v3231 = vadd.f32 %v3178, %v3230
        %v3232 = vpop.f32.mrb[0].mxu0
        %v3233 = vadd.f32 %v3180, %v3232
        %v3234 = vpop.f32.mrb[0].mxu0
        %v3235 = vadd.f32 %v3182, %v3234
        %v3236 = vpop.f32.mrb[0].mxu0
        %v3237 = vadd.f32 %v3184, %v3236
        %3238 = vdwg.mxu0
        %3239 = vmatprep.subr.bf16.mxu0 %v2306
        %3240 = vmatpush1.bf16.msra.mxu0 %v2305
        %3241 = vmatprep.subr.bf16.mxu0 %v2308
        %3242 = vmatpush1.bf16.msra.mxu0 %v2307
        %3243 = vmatprep.subr.bf16.mxu0 %v2310
        %3244 = vmatpush1.bf16.msra.mxu0 %v2309
        %3245 = vmatprep.subr.bf16.mxu0 %v2312
        %3246 = vmatpush1.bf16.msra.mxu0 %v2311
        %3247 = vmatprep.subr.bf16.mxu0 %v2314
        %3248 = vmatpush1.bf16.msra.mxu0 %v2313
        %3249 = vmatprep.subr.bf16.mxu0 %v2316
        %3250 = vmatpush1.bf16.msra.mxu0 %v2315
        %3251 = vmatprep.subr.bf16.mxu0 %v2318
        %3252 = vmatpush1.bf16.msra.mxu0 %v2317
        %3253 = vmatprep.subr.bf16.mxu0 %v2320
        %3254 = vmatpush1.bf16.msra.mxu0 %v2319
        %3255 = vmatprep.subr.bf16.mxu0 %v2322
        %3256 = vmatpush1.bf16.msra.mxu0 %v2321
        %3257 = vmatprep.subr.bf16.mxu0 %v2324
        %3258 = vmatpush1.bf16.msra.mxu0 %v2323
        %3259 = vmatprep.subr.bf16.mxu0 %v2326
        %3260 = vmatpush1.bf16.msra.mxu0 %v2325
        %3261 = vmatprep.subr.bf16.mxu0 %v2328
        %3262 = vmatpush1.bf16.msra.mxu0 %v2327
        %3263 = vmatprep.subr.bf16.mxu0 %v2330
        %3264 = vmatpush1.bf16.msra.mxu0 %v2329
        %3265 = vmatprep.subr.bf16.mxu0 %v2332
        %3266 = vmatpush1.bf16.msra.mxu0 %v2331
        %3267 = vmatprep.subr.bf16.mxu0 %v2334
        %3268 = vmatpush1.bf16.msra.mxu0 %v2333
        %3269 = vmatprep.subr.bf16.mxu0 %v2336
        %3270 = vmatpush1.bf16.msra.mxu0 %v2335
        %3271 = vmatprep.mubr.bf16.mxu0 %v843
        %3272 = vmatmul.mubr.bf16.gmra.mrb[0].mxu0 %v842
        %v3273 = vpop.f32.mrb[0].mxu0
        %v3274 = vadd.f32 %v3221, %v3273
        %v3275 = vpop.f32.mrb[0].mxu0
        %v3276 = vadd.f32 %v3223, %v3275
        %v3277 = vpop.f32.mrb[0].mxu0
        %v3278 = vadd.f32 %v3225, %v3277
        %v3279 = vpop.f32.mrb[0].mxu0
        %v3280 = vadd.f32 %v3227, %v3279
        %3281 = vmatprep.mubr.bf16.mxu0 %v868
        %3282 = vmatmul.mubr.bf16.gmra.mrb[0].mxu0 %v867
        %v3283 = vpop.f32.mrb[0].mxu0
        %v3284 = vadd.f32 %v3231, %v3283
        %v3285 = vpop.f32.mrb[0].mxu0
        %v3286 = vadd.f32 %v3233, %v3285
        %v3287 = vpop.f32.mrb[0].mxu0
        %v3288 = vadd.f32 %v3235, %v3287
        %v3289 = vpop.f32.mrb[0].mxu0
        %v3290 = vadd.f32 %v3237, %v3289
        %3291 = vdwg.mxu0
        %3292 = vmatprep.subr.bf16.mxu0 %v2338
        %3293 = vmatpush1.bf16.msra.mxu0 %v2337
        %3294 = vmatprep.subr.bf16.mxu0 %v2340
        %3295 = vmatpush1.bf16.msra.mxu0 %v2339
        %3296 = vmatprep.subr.bf16.mxu0 %v2342
        %3297 = vmatpush1.bf16.msra.mxu0 %v2341
        %3298 = vmatprep.subr.bf16.mxu0 %v2344
        %3299 = vmatpush1.bf16.msra.mxu0 %v2343
        %3300 = vmatprep.subr.bf16.mxu0 %v2346
        %3301 = vmatpush1.bf16.msra.mxu0 %v2345
        %3302 = vmatprep.subr.bf16.mxu0 %v2348
        %3303 = vmatpush1.bf16.msra.mxu0 %v2347
        %3304 = vmatprep.subr.bf16.mxu0 %v2350
        %3305 = vmatpush1.bf16.msra.mxu0 %v2349
        %3306 = vmatprep.subr.bf16.mxu0 %v2352
        %3307 = vmatpush1.bf16.msra.mxu0 %v2351
        %3308 = vmatprep.subr.bf16.mxu0 %v2354
        %3309 = vmatpush1.bf16.msra.mxu0 %v2353
        %3310 = vmatprep.subr.bf16.mxu0 %v2356
        %3311 = vmatpush1.bf16.msra.mxu0 %v2355
        %3312 = vmatprep.subr.bf16.mxu0 %v2358
        %3313 = vmatpush1.bf16.msra.mxu0 %v2357
        %3314 = vmatprep.subr.bf16.mxu0 %v2360
        %3315 = vmatpush1.bf16.msra.mxu0 %v2359
        %3316 = vmatprep.subr.bf16.mxu0 %v2362
        %3317 = vmatpush1.bf16.msra.mxu0 %v2361
        %3318 = vmatprep.subr.bf16.mxu0 %v2364
        %3319 = vmatpush1.bf16.msra.mxu0 %v2363
        %3320 = vmatprep.subr.bf16.mxu0 %v2366
        %3321 = vmatpush1.bf16.msra.mxu0 %v2365
        %3322 = vmatprep.subr.bf16.mxu0 %v2368
        %3323 = vmatpush1.bf16.msra.mxu0 %v2367
        %3324 = vmatprep.mubr.bf16.mxu0 %v845
        %3325 = vmatmul.mubr.bf16.gmra.mrb[0].mxu0 %v844
        %v3326 = vpop.f32.mrb[0].mxu0
        %v3327 = vadd.f32 %v3274, %v3326
        %v3328 = vpop.f32.mrb[0].mxu0
        %v3329 = vadd.f32 %v3276, %v3328
        %v3330 = vpop.f32.mrb[0].mxu0
        %v3331 = vadd.f32 %v3278, %v3330
        %v3332 = vpop.f32.mrb[0].mxu0
        %v3333 = vadd.f32 %v3280, %v3332
        %3334 = vmatprep.mubr.bf16.mxu0 %v870
        %3335 = vmatmul.mubr.bf16.gmra.mrb[0].mxu0 %v869
        %v3336 = vpop.f32.mrb[0].mxu0
        %v3337 = vadd.f32 %v3284, %v3336
        %v3338 = vpop.f32.mrb[0].mxu0
        %v3339 = vadd.f32 %v3286, %v3338
        %v3340 = vpop.f32.mrb[0].mxu0
        %v3341 = vadd.f32 %v3288, %v3340
        %v3342 = vpop.f32.mrb[0].mxu0
        %v3343 = vadd.f32 %v3290, %v3342
        %3344 = vdwg.mxu0
        %3345 = vmatprep.subr.bf16.mxu0 %v2370
        %3346 = vmatpush1.bf16.msra.mxu0 %v2369
        %3347 = vmatprep.subr.bf16.mxu0 %v2372
        %3348 = vmatpush1.bf16.msra.mxu0 %v2371
        %3349 = vmatprep.subr.bf16.mxu0 %v2374
        %3350 = vmatpush1.bf16.msra.mxu0 %v2373
        %3351 = vmatprep.subr.bf16.mxu0 %v2376
        %3352 = vmatpush1.bf16.msra.mxu0 %v2375
        %3353 = vmatprep.subr.bf16.mxu0 %v2378
        %3354 = vmatpush1.bf16.msra.mxu0 %v2377
        %3355 = vmatprep.subr.bf16.mxu0 %v2380
        %3356 = vmatpush1.bf16.msra.mxu0 %v2379
        %3357 = vmatprep.subr.bf16.mxu0 %v2382
        %3358 = vmatpush1.bf16.msra.mxu0 %v2381
        %3359 = vmatprep.subr.bf16.mxu0 %v2384
        %3360 = vmatpush1.bf16.msra.mxu0 %v2383
        %3361 = vmatprep.subr.bf16.mxu0 %v2386
        %3362 = vmatpush1.bf16.msra.mxu0 %v2385
        %3363 = vmatprep.subr.bf16.mxu0 %v2388
        %3364 = vmatpush1.bf16.msra.mxu0 %v2387
        %3365 = vmatprep.subr.bf16.mxu0 %v2390
        %3366 = vmatpush1.bf16.msra.mxu0 %v2389
        %3367 = vmatprep.subr.bf16.mxu0 %v2392
        %3368 = vmatpush1.bf16.msra.mxu0 %v2391
        %3369 = vmatprep.subr.bf16.mxu0 %v2394
        %3370 = vmatpush1.bf16.msra.mxu0 %v2393
        %3371 = vmatprep.subr.bf16.mxu0 %v2396
        %3372 = vmatpush1.bf16.msra.mxu0 %v2395
        %3373 = vmatprep.subr.bf16.mxu0 %v2398
        %3374 = vmatpush1.bf16.msra.mxu0 %v2397
        %3375 = vmatprep.subr.bf16.mxu0 %v2400
        %3376 = vmatpush1.bf16.msra.mxu0 %v2399
        %3377 = vmatprep.mubr.bf16.mxu0 %v847
        %3378 = vmatmul.mubr.bf16.gmra.mrb[0].mxu0 %v846
        %v3379 = vpop.f32.mrb[0].mxu0
        %v3380 = vadd.f32 %v3327, %v3379
        %v3381 = vpop.f32.mrb[0].mxu0
        %v3382 = vadd.f32 %v3329, %v3381
        %v3383 = vpop.f32.mrb[0].mxu0
        %v3384 = vadd.f32 %v3331, %v3383
        %v3385 = vpop.f32.mrb[0].mxu0
        %v3386 = vadd.f32 %v3333, %v3385
        %3387 = vmatprep.mubr.bf16.mxu0 %v872
        %3388 = vmatmul.mubr.bf16.gmra.mrb[0].mxu0 %v871
        %v3389 = vpop.f32.mrb[0].mxu0
        %v3390 = vadd.f32 %v3337, %v3389
        %v3391 = vpop.f32.mrb[0].mxu0
        %v3392 = vadd.f32 %v3339, %v3391
        %v3393 = vpop.f32.mrb[0].mxu0
        %v3394 = vadd.f32 %v3341, %v3393
        %v3395 = vpop.f32.mrb[0].mxu0
        %v3396 = vadd.f32 %v3343, %v3395
        %3397 = vdwg.mxu0
        %3398 = vmatprep.subr.bf16.mxu0 %v2402
        %3399 = vmatpush1.bf16.msra.mxu0 %v2401
        %3400 = vmatprep.subr.bf16.mxu0 %v2404
        %3401 = vmatpush1.bf16.msra.mxu0 %v2403
        %3402 = vmatprep.subr.bf16.mxu0 %v2406
        %3403 = vmatpush1.bf16.msra.mxu0 %v2405
        %3404 = vmatprep.subr.bf16.mxu0 %v2408
        %3405 = vmatpush1.bf16.msra.mxu0 %v2407
        %3406 = vmatprep.subr.bf16.mxu0 %v2410
        %3407 = vmatpush1.bf16.msra.mxu0 %v2409
        %3408 = vmatprep.subr.bf16.mxu0 %v2412
        %3409 = vmatpush1.bf16.msra.mxu0 %v2411
        %3410 = vmatprep.subr.bf16.mxu0 %v2414
        %3411 = vmatpush1.bf16.msra.mxu0 %v2413
        %3412 = vmatprep.subr.bf16.mxu0 %v2416
        %3413 = vmatpush1.bf16.msra.mxu0 %v2415
        %3414 = vmatprep.subr.bf16.mxu0 %v2418
        %3415 = vmatpush1.bf16.msra.mxu0 %v2417
        %3416 = vmatprep.subr.bf16.mxu0 %v2420
        %3417 = vmatpush1.bf16.msra.mxu0 %v2419
        %3418 = vmatprep.subr.bf16.mxu0 %v2422
        %3419 = vmatpush1.bf16.msra.mxu0 %v2421
        %3420 = vmatprep.subr.bf16.mxu0 %v2424
        %3421 = vmatpush1.bf16.msra.mxu0 %v2423
        %3422 = vmatprep.subr.bf16.mxu0 %v2426
        %3423 = vmatpush1.bf16.msra.mxu0 %v2425
        %3424 = vmatprep.subr.bf16.mxu0 %v2428
        %3425 = vmatpush1.bf16.msra.mxu0 %v2427
        %3426 = vmatprep.subr.bf16.mxu0 %v2430
        %3427 = vmatpush1.bf16.msra.mxu0 %v2429
        %3428 = vmatprep.subr.bf16.mxu0 %v2432
        %3429 = vmatpush1.bf16.msra.mxu0 %v2431
        %3430 = vmatprep.mubr.bf16.mxu0 %v849
        %3431 = vmatmul.mubr.bf16.gmra.mrb[0].mxu0 %v848
        %v3432 = vpop.f32.mrb[0].mxu0
        %v3433 = vadd.f32 %v3380, %v3432
        %v3434 = vpop.f32.mrb[0].mxu0
        %v3435 = vadd.f32 %v3382, %v3434
        %v3436 = vpop.f32.mrb[0].mxu0
        %v3437 = vadd.f32 %v3384, %v3436
        %v3438 = vpop.f32.mrb[0].mxu0
        %v3439 = vadd.f32 %v3386, %v3438
        %3440 = vmatprep.mubr.bf16.mxu0 %v874
        %3441 = vmatmul.mubr.bf16.gmra.mrb[0].mxu0 %v873
        %v3442 = vpop.f32.mrb[0].mxu0
        %v3443 = vadd.f32 %v3390, %v3442
        %v3444 = vpop.f32.mrb[0].mxu0
        %v3445 = vadd.f32 %v3392, %v3444
        %v3446 = vpop.f32.mrb[0].mxu0
        %v3447 = vadd.f32 %v3394, %v3446
        %v3448 = vpop.f32.mrb[0].mxu0
        %v3449 = vadd.f32 %v3396, %v3448
        %3450 = vdwg.mxu0
        %3451 = vmatprep.subr.bf16.mxu0 %v2434
        %3452 = vmatpush1.bf16.msra.mxu0 %v2433
        %3453 = vmatprep.subr.bf16.mxu0 %v2436
        %3454 = vmatpush1.bf16.msra.mxu0 %v2435
        %3455 = vmatprep.subr.bf16.mxu0 %v2438
        %3456 = vmatpush1.bf16.msra.mxu0 %v2437
        %3457 = vmatprep.subr.bf16.mxu0 %v2440
        %3458 = vmatpush1.bf16.msra.mxu0 %v2439
        %3459 = vmatprep.subr.bf16.mxu0 %v2442
        %3460 = vmatpush1.bf16.msra.mxu0 %v2441
        %3461 = vmatprep.subr.bf16.mxu0 %v2444
        %3462 = vmatpush1.bf16.msra.mxu0 %v2443
        %3463 = vmatprep.subr.bf16.mxu0 %v2446
        %3464 = vmatpush1.bf16.msra.mxu0 %v2445
        %3465 = vmatprep.subr.bf16.mxu0 %v2448
        %3466 = vmatpush1.bf16.msra.mxu0 %v2447
        %3467 = vmatprep.subr.bf16.mxu0 %v2450
        %3468 = vmatpush1.bf16.msra.mxu0 %v2449
        %3469 = vmatprep.subr.bf16.mxu0 %v2452
        %3470 = vmatpush1.bf16.msra.mxu0 %v2451
        %3471 = vmatprep.subr.bf16.mxu0 %v2454
        %3472 = vmatpush1.bf16.msra.mxu0 %v2453
        %3473 = vmatprep.subr.bf16.mxu0 %v2456
        %3474 = vmatpush1.bf16.msra.mxu0 %v2455
        %3475 = vmatprep.subr.bf16.mxu0 %v2458
        %3476 = vmatpush1.bf16.msra.mxu0 %v2457
        %3477 = vmatprep.subr.bf16.mxu0 %v2460
        %3478 = vmatpush1.bf16.msra.mxu0 %v2459
        %3479 = vmatprep.subr.bf16.mxu0 %v2462
        %3480 = vmatpush1.bf16.msra.mxu0 %v2461
        %3481 = vmatprep.subr.bf16.mxu0 %v2464
        %3482 = vmatpush1.bf16.msra.mxu0 %v2463
        %3483 = vmatprep.mubr.bf16.mxu0 %v851
        %3484 = vmatmul.mubr.bf16.gmra.mrb[0].mxu0 %v850
        %v3485 = vpop.f32.mrb[0].mxu0
        %v3486 = vadd.f32 %v3433, %v3485
        %v3487 = vpop.f32.mrb[0].mxu0
        %v3488 = vadd.f32 %v3435, %v3487
        %v3489 = vpop.f32.mrb[0].mxu0
        %v3490 = vadd.f32 %v3437, %v3489
        %v3491 = vpop.f32.mrb[0].mxu0
        %v3492 = vadd.f32 %v3439, %v3491
        %3493 = vmatprep.mubr.bf16.mxu0 %v876
        %3494 = vmatmul.mubr.bf16.gmra.mrb[0].mxu0 %v875
        %v3495 = vpop.f32.mrb[0].mxu0
        %v3496 = vadd.f32 %v3443, %v3495
        %v3497 = vpop.f32.mrb[0].mxu0
        %v3498 = vadd.f32 %v3445, %v3497
        %v3499 = vpop.f32.mrb[0].mxu0
        %v3500 = vadd.f32 %v3447, %v3499
        %v3501 = vpop.f32.mrb[0].mxu0
        %v3502 = vadd.f32 %v3449, %v3501
        %3503 = vdwg.mxu0
        %3504 = vmatprep.subr.bf16.mxu0 %v2866
        %3505 = vmatpush1.bf16.msra.mxu0 %v2863
        %3506 = vmatprep.subr.bf16.mxu0 0
        %3507 = vmatpush1.bf16.msra.mxu0 0
        %3508 = vmatprep.subr.bf16.mxu0 0
        %3509 = vmatpush1.bf16.msra.mxu0 0
        %3510 = vmatprep.subr.bf16.mxu0 0
        %3511 = vmatpush1.bf16.msra.mxu0 0
        %3512 = vmatprep.subr.bf16.mxu0 0
        %3513 = vmatpush1.bf16.msra.mxu0 0
        %3514 = vmatprep.subr.bf16.mxu0 0
        %3515 = vmatpush1.bf16.msra.mxu0 0
        %3516 = vmatprep.subr.bf16.mxu0 0
        %3517 = vmatpush1.bf16.msra.mxu0 0
        %3518 = vmatprep.subr.bf16.mxu0 0
        %3519 = vmatpush1.bf16.msra.mxu0 0
        %3520 = vmatprep.subr.bf16.mxu0 0
        %3521 = vmatpush1.bf16.msra.mxu0 0
        %3522 = vmatprep.subr.bf16.mxu0 0
        %3523 = vmatpush1.bf16.msra.mxu0 0
        %3524 = vmatprep.subr.bf16.mxu0 0
        %3525 = vmatpush1.bf16.msra.mxu0 0
        %3526 = vmatprep.subr.bf16.mxu0 0
        %3527 = vmatpush1.bf16.msra.mxu0 0
        %3528 = vmatprep.subr.bf16.mxu0 0
        %3529 = vmatpush1.bf16.msra.mxu0 0
        %3530 = vmatprep.subr.bf16.mxu0 0
        %3531 = vmatpush1.bf16.msra.mxu0 0
        %3532 = vmatprep.subr.bf16.mxu0 0
        %3533 = vmatpush1.bf16.msra.mxu0 0
        %3534 = vmatprep.subr.bf16.mxu0 0
        %3535 = vmatpush1.bf16.msra.mxu0 0
        %3536 = vmatprep.mubr.bf16.mxu0 0
        %3537 = vmatmul.mubr.bf16.gmra.mrb[0].mxu0 %v2853
        %v3538 = vpop.f32.mrb[0].mxu0
        %v3539 = vadd.f32 %v3486, %v3538
        %v3540 = vpop.f32.mrb[0].mxu0
        %v3541 = vadd.f32 %v3488, %v3540
        %v3542 = vpop.f32.mrb[0].mxu0
        %v3543 = vadd.f32 %v3490, %v3542
        %v3544 = vpop.f32.mrb[0].mxu0
        %v3545 = vadd.f32 %v3492, %v3544
        %3546 = vmatprep.mubr.bf16.mxu0 0
        %3547 = vmatmul.mubr.bf16.gmra.mrb[0].mxu0 %v2856
        %v3548 = vpop.f32.mrb[0].mxu0
        %v3549 = vadd.f32 %v3496, %v3548
        %v3550 = vpop.f32.mrb[0].mxu0
        %v3551 = vadd.f32 %v3498, %v3550
        %v3552 = vpop.f32.mrb[0].mxu0
        %v3553 = vadd.f32 %v3500, %v3552
        %v3554 = vpop.f32.mrb[0].mxu0
        %v3555 = vadd.f32 %v3502, %v3554
        %3556 = vdwg.mxu0
        %vm3557 = vcmp.ge.f32.partialorder %v3539, 0.0
        %vm3558 = vcmp.ge.f32.partialorder %v3541, 0.0
        %vm3559 = vcmp.ge.f32.partialorder %v3543, 0.0
        %vm3560 = vcmp.ge.f32.partialorder %v3545, 0.0
        %vm3561 = vcmp.ge.f32.partialorder %v3549, 0.0
        %vm3562 = vcmp.ge.f32.partialorder %v3551, 0.0
        %vm3563 = vcmp.ge.f32.partialorder %v3553, 0.0
        %vm3564 = vcmp.ge.f32.partialorder %v3555, 0.0
        %v3565 = vmul.f32 %v3539, 0.01
        %v3566 = vmul.f32 %v3541, 0.01
        %v3567 = vmul.f32 %v3543, 0.01
        %v3568 = vmul.f32 %v3545, 0.01
        %v3569 = vmul.f32 %v3549, 0.01
        %v3570 = vmul.f32 %v3551, 0.01
        %v3571 = vmul.f32 %v3553, 0.01
        %v3572 = vmul.f32 %v3555, 0.01
        %v3573 = vsel %vm3557, %v3539, %v3565
        %v3574 = vsel %vm3558, %v3541, %v3566
        %v3575 = vsel %vm3559, %v3543, %v3567
        %v3576 = vsel %vm3560, %v3545, %v3568
        %v3577 = vsel %vm3561, %v3549, %v3569
        %v3578 = vsel %vm3562, %v3551, %v3570
        %v3579 = vsel %vm3563, %v3553, %v3571
        %v3580 = vsel %vm3564, %v3555, %v3572
        %3581 = vst [vmem:[%s222] sm:$0xff] %v3573
        %3582 = vst [vmem:[%s222 + $0x8] sm:$0xff] %v3574
        %3583 = vst [vmem:[%s222 + $0x10] sm:$0xff] %v3575
        %3584 = vst [vmem:[%s222 + $0x18] sm:$0xff] %v3576
        %3585 = vst [vmem:[%s222 + $0x20] sm:$0xff] %v3577
        %3586 = vst [vmem:[%s222 + $0x28] sm:$0xff] %v3578
        %3587 = vst [vmem:[%s222 + $0x30] sm:$0xff] %v3579
        %3588 = vst [vmem:[%s222 + $0x38] sm:$0xff] %v3580
        %s3589 = sand.u32 %s101, 1
        %s3590 = sand.u32 %s101, 1
        %s3591 = smul.addr %s3590, 64
        %s3592 = scalar_lea.vmem [#allocation6], %s3591
        // Predicated region
        $region41: #{_encoder_convs.3} parent=31 // pred_check
          %p3593 = pneg %p111
        $region42: #{_encoder_convs.3} parent=31 // pred_check_branch
          %3595 = sbr.rel (%p3593) target = $region44
        $region43: #{_encoder_convs.3} parent=31 // pred_region
          %s3596 = smul.u32 2, %s20
          %s3597 = smul.addr %s3596, 8
          %s3598 = scalar_lea.vmem %s3, %s3597
          // Predicated region
          $region45: #{_encoder_convs.3} parent=43 // pred_check
            _
          $region46: #{_encoder_convs.3} parent=43 // pred_check_branch
            %3600 = sbr.rel (0) target = $region48
          $region47: #{_encoder_convs.3} parent=43 // pred_region
            // Predicated region
            $region49: #{_encoder_convs.3} parent=47 // pred_check
              _
            $region50: #{_encoder_convs.3} parent=47 // pred_check_branch
              %3602 = sbr.rel (0) target = $region52
            $region51: #{_encoder_convs.3} parent=47 // pred_region
              loop: start=0, step=1, limit=1
              $region53: #{_encoder_convs.3} parent=51 // loop_pre_header
                _
              $region54: #{_encoder_convs.3} parent=51 // loop_header
                %s3604 = sphi 0, %s3608
                %p3605 = scmp.ge.s32.totalorder %s3604, 1
                %s3609 = sphi %s3592, %s3592
                %s3610 = sphi %s3598, %s3598
              $region55: #{_encoder_convs.3} parent=51 // loop_header_branch
                %3607 = sbr.rel (%p3605) target = $region59
              $region56: #{_encoder_convs.3} parent=51 // loop_body
                %v3611 = vld [vmem:[%s3609] sm:$0xff]
                %3612 = vst [vmem:[%s3610] sm:$0xff] %v3611
                %v3613 = vld [vmem:[%s3609 + $0x8] sm:$0xff]
                %3614 = vst [vmem:[%s3610 + $0x8] sm:$0xff] %v3613
                %v3615 = vld [vmem:[%s3609 + $0x10] sm:$0xff]
                %3616 = vst [vmem:[%s3610 + $0x40] sm:$0xff] %v3615
                %v3617 = vld [vmem:[%s3609 + $0x18] sm:$0xff]
                %3618 = vst [vmem:[%s3610 + $0x48] sm:$0xff] %v3617
                %v3619 = vld [vmem:[%s3609 + $0x20] sm:$0xff]
                %3620 = vst [vmem:[%s3610 + $0x80] sm:$0xff] %v3619
                %v3621 = vld [vmem:[%s3609 + $0x28] sm:$0xff]
                %3622 = vst [vmem:[%s3610 + $0x88] sm:$0xff] %v3621
                %v3623 = vld [vmem:[%s3609 + $0x30] sm:$0xff]
                %3624 = vst [vmem:[%s3610 + $0xc0] sm:$0xff] %v3623
                %v3625 = vld [vmem:[%s3609 + $0x38] sm:$0xff]
                %3626 = vst [vmem:[%s3610 + $0xc8] sm:$0xff] %v3625
              $region57: #{_encoder_convs.3} parent=51 // loop_footer
                %s3608 = sadd.s32 1, %s3604
              $region58: #{_encoder_convs.3} parent=51 // loop_footer_branch
                %3603 = sbr.rel target = $region54
              $region59: #{_encoder_convs.3} parent=51 // loop_exit
                _
            $region52: #{_encoder_convs.3} parent=47 // pred_fallthru
              _
            // Predicated region
            $region60: #{_encoder_convs.3} parent=47 // pred_check
              _
            $region61: #{_encoder_convs.3} parent=47 // pred_check_branch
              %3628 = sbr.rel target = $region63
            $region62: #{_encoder_convs.3} parent=47 // pred_region
              _
            $region63: #{_encoder_convs.3} parent=47 // pred_fallthru
              _
          $region48: #{_encoder_convs.3} parent=43 // pred_fallthru
            _
          %3629 = vnop
        $region44: #{_encoder_convs.3} parent=31 // pred_fallthru
          _
      $region32: #{_encoder_convs.3} parent=5 // pred_fallthru
        _
      %p3630 = scmp.le.s32.totalorder 2, %s15
      // Predicated region
      $region64: #{_encoder_convs.3} parent=5 // pred_check
        %p3631 = pneg %p3630
      $region65: #{_encoder_convs.3} parent=5 // pred_check_branch
        %3633 = sbr.rel (%p3631) target = $region67
      $region66: #{_encoder_convs.3} parent=5 // pred_region
        %s3634 = ssub.s32 %s15, 2
        // Predicated region
        $region68: #{_encoder_convs.3} parent=66 // pred_check
          %p3635 = pneg %p117
        $region69: #{_encoder_convs.3} parent=66 // pred_check_branch
          %3637 = sbr.rel (%p3635) target = $region71
        $region70: #{_encoder_convs.3} parent=66 // pred_region
          %s3638 = sand.u32 %s102, 1
          %s3639 = sand.u32 %s102, 1
          %s3640 = smul.addr %s3639, 64
          %s3641 = scalar_lea.vmem [#allocation6], %s3640
        $region71: #{_encoder_convs.3} parent=66 // pred_fallthru
          _
      $region67: #{_encoder_convs.3} parent=5 // pred_fallthru
        _
    $region6: #{_encoder_convs.3} parent=1 // loop_footer
      %s19 = sadd.s32 1, %s15
    $region7: #{_encoder_convs.3} parent=1 // loop_footer_branch
      %14 = sbr.rel target = $region3
    $region8: #{_encoder_convs.3} parent=1 // loop_exit
      _
    %3642 = vsyncpa [#allocation3], 1
    %s3643 = scalar_lea.sflag [#allocation3], 1
    %3644 = vsyncpa %s3643, 1
    %3645 = vsyncpa [#allocation5], 1
    %s3646 = scalar_lea.sflag [#allocation5], 1
    %3647 = vsyncpa %s3646, 1

// kernel: _encoder_convs.4
$region0: #{_encoder_convs.4}
  #allocation0 [shape = 'u32[]', space=smem, size = 0x4, offset = 0x4, fixed_abs, tag = 'smem constant byte address 0x4 - core index']
  #allocation1 [shape = 'u32[144,128]{1,0:T(1,128)}', space=vmem, size = 0x12000, scoped, tag = 'internal scratch']
  %s0 = inlined_call_operand.vmem [shape: bf16[16,3072], index: 0, kind: input, shape index: {}]
  %s1 = inlined_call_operand.vmem [shape: bf16[3072,512], index: 1, kind: input, shape index: {}]
  %s2 = inlined_call_operand.vmem [shape: f32[1,512], index: 2, kind: input, shape index: {}]
  %s3 = inlined_call_operand.vmem [shape: f32[16,512], index: 3, kind: output, shape index: {}]
  %s4 = sld [smem:[#allocation0]]
  $region102: #{_encoder_convs.4} parent=0
    _
  %s6 = ssub.s32 1, %s4
  %s7 = scalar_select 0, %s6, %s4
  $region1: #{_encoder_convs.4} parent=0
    #allocation2 [shape = 'u8[3145728]{0}', space=vmem, size = 0x300000, scoped, tag = 'input window, operand 1']
    #allocation3 [shape = 'u8[32768]{0}', space=vmem, size = 0x8000, scoped, tag = 'output window, operand 0']
    loop: start=0, step=1, limit=4
    $region2: #{_encoder_convs.4} parent=1 // loop_pre_header
      _
    $region3: #{_encoder_convs.4} parent=1 // loop_header
      %s9 = sphi 0, %s13
      %p10 = scmp.ge.s32.totalorder %s9, 4
      %s17 = sphi 0, %s17
      %s19 = sphi 0, %s17
      %s20 = sphi 0, %s19
      %s34 = sphi 0, %s20
      %s40 = sphi 0, %s42
      %s43 = sphi 0, %s40
      %s44 = sphi 0, %s43
      %s60 = sphi 0, %s44
      %s66 = sphi 0, %s68
      %s69 = sphi 0, %s66
      %s70 = sphi 0, %s69
      %s86 = sphi 0, %s70
      %s92 = sphi 0, %s94
      %s95 = sphi 0, %s92
      %s96 = sphi 0, %s95
      %s112 = sphi 0, %s96
    $region4: #{_encoder_convs.4} parent=1 // loop_header_branch
      %12 = sbr.rel (%p10) target = $region8
    $region5: #{_encoder_convs.4} parent=1 // loop_body
      %s14 = ssub.s32 %s9, 1
      %s15 = ssub.s32 %s9, 2
      %s16 = sadd.s32 %s9, 1
      %s18 = sadd.s32 %s17, 1
      %p21 = scmp.eq.s32.totalorder %s9, 1
      %p22 = scmp.ne.s32.totalorder %s17, %s19
      %p23 = scmp.eq.s32.totalorder %s9, 0
      %p24 = por %p22, %p23
      %p25 = scmp.ne.s32.totalorder %s17, %s19
      %p26 = scmp.eq.s32.totalorder %s14, 1
      %p27 = por %p25, %p26
      %p28 = scmp.ne.s32.totalorder %s19, %s20
      %p29 = scmp.eq.s32.totalorder %s14, 0
      %p30 = por %p28, %p29
      %p31 = scmp.ne.s32.totalorder %s19, %s20
      %p32 = scmp.eq.s32.totalorder %s15, 1
      %p33 = por %p31, %p32
      %p35 = scmp.ne.s32.totalorder %s20, %s34
      %p36 = scmp.eq.s32.totalorder %s15, 0
      %p37 = por %p35, %p36
      %s38 = ssub.s32 %s9, %s16
      %p39 = scmp.eq.s32.totalorder %s38, 0
      %s41 = sadd.s32 %s40, 1
      %s42 = scalar_select %p39, %s40, %s41
      %p45 = pneg %p39
      %p46 = scmp.eq.s32.totalorder %s9, 1
      %p47 = por %p45, %p46
      %p48 = scmp.ne.s32.totalorder %s40, %s43
      %p49 = scmp.eq.s32.totalorder %s9, 0
      %p50 = por %p48, %p49
      %p51 = scmp.ne.s32.totalorder %s40, %s43
      %p52 = scmp.eq.s32.totalorder %s14, 1
      %p53 = por %p51, %p52
      %p54 = scmp.ne.s32.totalorder %s43, %s44
      %p55 = scmp.eq.s32.totalorder %s14, 0
      %p56 = por %p54, %p55
      %p57 = scmp.ne.s32.totalorder %s43, %s44
      %p58 = scmp.eq.s32.totalorder %s15, 1
      %p59 = por %p57, %p58
      %p61 = scmp.ne.s32.totalorder %s44, %s60
      %p62 = scmp.eq.s32.totalorder %s15, 0
      %p63 = por %p61, %p62
      %s64 = ssub.s32 %s9, %s16
      %p65 = scmp.eq.s32.totalorder %s64, 0
      %s67 = sadd.s32 %s66, 1
      %s68 = scalar_select %p65, %s66, %s67
      %p71 = pneg %p65
      %p72 = scmp.eq.s32.totalorder %s9, 1
      %p73 = por %p71, %p72
      %p74 = scmp.ne.s32.totalorder %s66, %s69
      %p75 = scmp.eq.s32.totalorder %s9, 0
      %p76 = por %p74, %p75
      %p77 = scmp.ne.s32.totalorder %s66, %s69
      %p78 = scmp.eq.s32.totalorder %s14, 1
      %p79 = por %p77, %p78
      %p80 = scmp.ne.s32.totalorder %s69, %s70
      %p81 = scmp.eq.s32.totalorder %s14, 0
      %p82 = por %p80, %p81
      %p83 = scmp.ne.s32.totalorder %s69, %s70
      %p84 = scmp.eq.s32.totalorder %s15, 1
      %p85 = por %p83, %p84
      %p87 = scmp.ne.s32.totalorder %s70, %s86
      %p88 = scmp.eq.s32.totalorder %s15, 0
      %p89 = por %p87, %p88
      %s90 = ssub.s32 %s9, %s16
      %p91 = scmp.eq.s32.totalorder %s90, 0
      %s93 = sadd.s32 %s92, 1
      %s94 = scalar_select %p91, %s92, %s93
      %p97 = pneg %p91
      %p98 = scmp.eq.s32.totalorder %s9, 1
      %p99 = por %p97, %p98
      %p100 = scmp.ne.s32.totalorder %s92, %s95
      %p101 = scmp.eq.s32.totalorder %s9, 0
      %p102 = por %p100, %p101
      %p103 = scmp.ne.s32.totalorder %s92, %s95
      %p104 = scmp.eq.s32.totalorder %s14, 1
      %p105 = por %p103, %p104
      %p106 = scmp.ne.s32.totalorder %s95, %s96
      %p107 = scmp.eq.s32.totalorder %s14, 0
      %p108 = por %p106, %p107
      %p109 = scmp.ne.s32.totalorder %s95, %s96
      %p110 = scmp.eq.s32.totalorder %s15, 1
      %p111 = por %p109, %p110
      %p113 = scmp.ne.s32.totalorder %s96, %s112
      %p114 = scmp.eq.s32.totalorder %s15, 0
      %p115 = por %p113, %p114
      %p116 = scmp.le.s32.totalorder 1, %s9
      %p117 = scmp.lt.s32.totalorder %s9, 3
      %p118 = pnand %p116, %p117
      %p119 = pneg %p118
      // Predicated region
      $region9: #{_encoder_convs.4} parent=5 // pred_check
        _
      $region10: #{_encoder_convs.4} parent=5 // pred_check_branch
        %121 = sbr.rel (%p118) target = $region12
      $region11: #{_encoder_convs.4} parent=5 // pred_region
        %s122 = ssub.s32 %s9, 1
        // Predicated region
        $region13: #{_encoder_convs.4} parent=11 // pred_check
          %p123 = pneg %p30
        $region14: #{_encoder_convs.4} parent=11 // pred_check_branch
          %125 = sbr.rel (%p123) target = $region16
        $region15: #{_encoder_convs.4} parent=11 // pred_region
          _
        $region16: #{_encoder_convs.4} parent=11 // pred_fallthru
          _
      $region12: #{_encoder_convs.4} parent=5 // pred_fallthru
        _
      %p126 = scmp.lt.s32.totalorder %s9, 2
      // Predicated region
      $region17: #{_encoder_convs.4} parent=5 // pred_check
        %p127 = pneg %p126
      $region18: #{_encoder_convs.4} parent=5 // pred_check_branch
        %129 = sbr.rel (%p127) target = $region20
      $region19: #{_encoder_convs.4} parent=5 // pred_region
        // Predicated region
        $region21: #{_encoder_convs.4} parent=19 // pred_check
          %p130 = pneg %p50
        $region22: #{_encoder_convs.4} parent=19 // pred_check_branch
          %132 = sbr.rel (%p130) target = $region24
        $region23: #{_encoder_convs.4} parent=19 // pred_region
          %s133 = sand.u32 %s40, 1
          %s134 = sand.u32 %s40, 1
          %s135 = smul.addr %s134, 3072
          %s136 = scalar_lea.vmem [#allocation2], %s135
          %s137 = smul.u32 2, %s9
          %s138 = smul.addr %s137, 4
          %s139 = scalar_lea.vmem %s1, %s138
          // Predicated region
          $region25: #{_encoder_convs.4} parent=23 // pred_check
            _
          $region26: #{_encoder_convs.4} parent=23 // pred_check_branch
            %141 = sbr.rel (0) target = $region28
          $region27: #{_encoder_convs.4} parent=23 // pred_region
            // Predicated region
            $region29: #{_encoder_convs.4} parent=27 // pred_check
              _
            $region30: #{_encoder_convs.4} parent=27 // pred_check_branch
              %143 = sbr.rel (0) target = $region32
            $region31: #{_encoder_convs.4} parent=27 // pred_region
              // Predicated region
              $region44: #{_encoder_convs.4} parent=31 // pred_check
                _
              $region45: #{_encoder_convs.4} parent=31 // pred_check_branch
                %924 = sbr.rel (0) target = $region47
              $region46: #{_encoder_convs.4} parent=31 // pred_region
                loop: start=0, step=1, limit=1
                $region48: #{_encoder_convs.4} parent=46 // loop_pre_header
                  _
                $region49: #{_encoder_convs.4} parent=46 // loop_header
                  %s926 = sphi 0, %s930
                  %p927 = scmp.ge.s32.totalorder %s926, 1
                  %s931 = sphi %s139, %s139
                  %s932 = sphi %s136, %s136
                $region50: #{_encoder_convs.4} parent=46 // loop_header_branch
                  %929 = sbr.rel (%p927) target = $region54
                $region51: #{_encoder_convs.4} parent=46 // loop_body
                  %v933 = vld [vmem:[%s931] sm:$0xff]
                  %934 = vst [vmem:[%s932] sm:$0xff] %v933
                  %v935 = vld [vmem:[%s931 + $0x10] sm:$0xff]
                  %936 = vst [vmem:[%s932 + $0x8] sm:$0xff] %v935
                  %v937 = vld [vmem:[%s931 + $0x20] sm:$0xff]
                  %938 = vst [vmem:[%s932 + $0x10] sm:$0xff] %v937
                  %v939 = vld [vmem:[%s931 + $0x30] sm:$0xff]
                  %940 = vst [vmem:[%s932 + $0x18] sm:$0xff] %v939
                  %v941 = vld [vmem:[%s931 + $0x40] sm:$0xff]
                  %942 = vst [vmem:[%s932 + $0x20] sm:$0xff] %v941
                  %v943 = vld [vmem:[%s931 + $0x50] sm:$0xff]
                  %944 = vst [vmem:[%s932 + $0x28] sm:$0xff] %v943
                  %v945 = vld [vmem:[%s931 + $0x60] sm:$0xff]
                  %946 = vst [vmem:[%s932 + $0x30] sm:$0xff] %v945
                  %v947 = vld [vmem:[%s931 + $0x70] sm:$0xff]
                  %948 = vst [vmem:[%s932 + $0x38] sm:$0xff] %v947
                  %v949 = vld [vmem:[%s931 + $0x80] sm:$0xff]
                  %950 = vst [vmem:[%s932 + $0x40] sm:$0xff] %v949
                  %v951 = vld [vmem:[%s931 + $0x90] sm:$0xff]
                  %952 = vst [vmem:[%s932 + $0x48] sm:$0xff] %v951
                  %v953 = vld [vmem:[%s931 + $0xa0] sm:$0xff]
                  %954 = vst [vmem:[%s932 + $0x50] sm:$0xff] %v953
                  %v955 = vld [vmem:[%s931 + $0xb0] sm:$0xff]
                  %956 = vst [vmem:[%s932 + $0x58] sm:$0xff] %v955
                  %v957 = vld [vmem:[%s931 + $0xc0] sm:$0xff]
                  %958 = vst [vmem:[%s932 + $0x60] sm:$0xff] %v957
                  %v959 = vld [vmem:[%s931 + $0xd0] sm:$0xff]
                  %960 = vst [vmem:[%s932 + $0x68] sm:$0xff] %v959
                  %v961 = vld [vmem:[%s931 + $0xe0] sm:$0xff]
                  %962 = vst [vmem:[%s932 + $0x70] sm:$0xff] %v961
                  %v963 = vld [vmem:[%s931 + $0xf0] sm:$0xff]
                  %964 = vst [vmem:[%s932 + $0x78] sm:$0xff] %v963
                  %v965 = vld [vmem:[%s931 + $0x100] sm:$0xff]
                  %966 = vst [vmem:[%s932 + $0x80] sm:$0xff] %v965
                  %v967 = vld [vmem:[%s931 + $0x110] sm:$0xff]
                  %968 = vst [vmem:[%s932 + $0x88] sm:$0xff] %v967
                  %v969 = vld [vmem:[%s931 + $0x120] sm:$0xff]
                  %970 = vst [vmem:[%s932 + $0x90] sm:$0xff] %v969
                  %v971 = vld [vmem:[%s931 + $0x130] sm:$0xff]
                  %972 = vst [vmem:[%s932 + $0x98] sm:$0xff] %v971
                  %v973 = vld [vmem:[%s931 + $0x140] sm:$0xff]
                  %974 = vst [vmem:[%s932 + $0xa0] sm:$0xff] %v973
                  %v975 = vld [vmem:[%s931 + $0x150] sm:$0xff]
                  %976 = vst [vmem:[%s932 + $0xa8] sm:$0xff] %v975
                  %v977 = vld [vmem:[%s931 + $0x160] sm:$0xff]
                  %978 = vst [vmem:[%s932 + $0xb0] sm:$0xff] %v977
                  %v979 = vld [vmem:[%s931 + $0x170] sm:$0xff]
                  %980 = vst [vmem:[%s932 + $0xb8] sm:$0xff] %v979
                  %v981 = vld [vmem:[%s931 + $0x180] sm:$0xff]
                  %982 = vst [vmem:[%s932 + $0xc0] sm:$0xff] %v981
                  %v983 = vld [vmem:[%s931 + $0x190] sm:$0xff]
                  %984 = vst [vmem:[%s932 + $0xc8] sm:$0xff] %v983
                  %v985 = vld [vmem:[%s931 + $0x1a0] sm:$0xff]
                  %986 = vst [vmem:[%s932 + $0xd0] sm:$0xff] %v985
                  %v987 = vld [vmem:[%s931 + $0x1b0] sm:$0xff]
                  %988 = vst [vmem:[%s932 + $0xd8] sm:$0xff] %v987
                  %v989 = vld [vmem:[%s931 + $0x1c0] sm:$0xff]
                  %990 = vst [vmem:[%s932 + $0xe0] sm:$0xff] %v989
                  %v991 = vld [vmem:[%s931 + $0x1d0] sm:$0xff]
                  %992 = vst [vmem:[%s932 + $0xe8] sm:$0xff] %v991
                  %v993 = vld [vmem:[%s931 + $0x1e0] sm:$0xff]
                  %994 = vst [vmem:[%s932 + $0xf0] sm:$0xff] %v993
                  %v995 = vld [vmem:[%s931 + $0x1f0] sm:$0xff]
                  %996 = vst [vmem:[%s932 + $0xf8] sm:$0xff] %v995
                  %v997 = vld [vmem:[%s931 + $0x200] sm:$0xff]
                  %998 = vst [vmem:[%s932 + $0x100] sm:$0xff] %v997
                  %v999 = vld [vmem:[%s931 + $0x210] sm:$0xff]
                  %1000 = vst [vmem:[%s932 + $0x108] sm:$0xff] %v999
                  %v1001 = vld [vmem:[%s931 + $0x220] sm:$0xff]
                  %1002 = vst [vmem:[%s932 + $0x110] sm:$0xff] %v1001
                  %v1003 = vld [vmem:[%s931 + $0x230] sm:$0xff]
                  %1004 = vst [vmem:[%s932 + $0x118] sm:$0xff] %v1003
                  %v1005 = vld [vmem:[%s931 + $0x240] sm:$0xff]
                  %1006 = vst [vmem:[%s932 + $0x120] sm:$0xff] %v1005
                  %v1007 = vld [vmem:[%s931 + $0x250] sm:$0xff]
                  %1008 = vst [vmem:[%s932 + $0x128] sm:$0xff] %v1007
                  %v1009 = vld [vmem:[%s931 + $0x260] sm:$0xff]
                  %1010 = vst [vmem:[%s932 + $0x130] sm:$0xff] %v1009
                  %v1011 = vld [vmem:[%s931 + $0x270] sm:$0xff]
                  %1012 = vst [vmem:[%s932 + $0x138] sm:$0xff] %v1011
                  %v1013 = vld [vmem:[%s931 + $0x280] sm:$0xff]
                  %1014 = vst [vmem:[%s932 + $0x140] sm:$0xff] %v1013
                  %v1015 = vld [vmem:[%s931 + $0x290] sm:$0xff]
                  %1016 = vst [vmem:[%s932 + $0x148] sm:$0xff] %v1015
                  %v1017 = vld [vmem:[%s931 + $0x2a0] sm:$0xff]
                  %1018 = vst [vmem:[%s932 + $0x150] sm:$0xff] %v1017
                  %v1019 = vld [vmem:[%s931 + $0x2b0] sm:$0xff]
                  %1020 = vst [vmem:[%s932 + $0x158] sm:$0xff] %v1019
                  %v1021 = vld [vmem:[%s931 + $0x2c0] sm:$0xff]
                  %1022 = vst [vmem:[%s932 + $0x160] sm:$0xff] %v1021
                  %v1023 = vld [vmem:[%s931 + $0x2d0] sm:$0xff]
                  %1024 = vst [vmem:[%s932 + $0x168] sm:$0xff] %v1023
                  %v1025 = vld [vmem:[%s931 + $0x2e0] sm:$0xff]
                  %1026 = vst [vmem:[%s932 + $0x170] sm:$0xff] %v1025
                  %v1027 = vld [vmem:[%s931 + $0x2f0] sm:$0xff]
                  %1028 = vst [vmem:[%s932 + $0x178] sm:$0xff] %v1027
                  %v1029 = vld [vmem:[%s931 + $0x300] sm:$0xff]
                  %1030 = vst [vmem:[%s932 + $0x180] sm:$0xff] %v1029
                  %v1031 = vld [vmem:[%s931 + $0x310] sm:$0xff]
                  %1032 = vst [vmem:[%s932 + $0x188] sm:$0xff] %v1031
                  %v1033 = vld [vmem:[%s931 + $0x320] sm:$0xff]
                  %1034 = vst [vmem:[%s932 + $0x190] sm:$0xff] %v1033
                  %v1035 = vld [vmem:[%s931 + $0x330] sm:$0xff]
                  %1036 = vst [vmem:[%s932 + $0x198] sm:$0xff] %v1035
                  %v1037 = vld [vmem:[%s931 + $0x340] sm:$0xff]
                  %1038 = vst [vmem:[%s932 + $0x1a0] sm:$0xff] %v1037
                  %v1039 = vld [vmem:[%s931 + $0x350] sm:$0xff]
                  %1040 = vst [vmem:[%s932 + $0x1a8] sm:$0xff] %v1039
                  %v1041 = vld [vmem:[%s931 + $0x360] sm:$0xff]
                  %1042 = vst [vmem:[%s932 + $0x1b0] sm:$0xff] %v1041
                  %v1043 = vld [vmem:[%s931 + $0x370] sm:$0xff]
                  %1044 = vst [vmem:[%s932 + $0x1b8] sm:$0xff] %v1043
                  %v1045 = vld [vmem:[%s931 + $0x380] sm:$0xff]
                  %1046 = vst [vmem:[%s932 + $0x1c0] sm:$0xff] %v1045
                  %v1047 = vld [vmem:[%s931 + $0x390] sm:$0xff]
                  %1048 = vst [vmem:[%s932 + $0x1c8] sm:$0xff] %v1047
                  %v1049 = vld [vmem:[%s931 + $0x3a0] sm:$0xff]
                  %1050 = vst [vmem:[%s932 + $0x1d0] sm:$0xff] %v1049
                  %v1051 = vld [vmem:[%s931 + $0x3b0] sm:$0xff]
                  %1052 = vst [vmem:[%s932 + $0x1d8] sm:$0xff] %v1051
                  %v1053 = vld [vmem:[%s931 + $0x3c0] sm:$0xff]
                  %1054 = vst [vmem:[%s932 + $0x1e0] sm:$0xff] %v1053
                  %v1055 = vld [vmem:[%s931 + $0x3d0] sm:$0xff]
                  %1056 = vst [vmem:[%s932 + $0x1e8] sm:$0xff] %v1055
                  %v1057 = vld [vmem:[%s931 + $0x3e0] sm:$0xff]
                  %1058 = vst [vmem:[%s932 + $0x1f0] sm:$0xff] %v1057
                  %v1059 = vld [vmem:[%s931 + $0x3f0] sm:$0xff]
                  %1060 = vst [vmem:[%s932 + $0x1f8] sm:$0xff] %v1059
                  %v1061 = vld [vmem:[%s931 + $0x400] sm:$0xff]
                  %1062 = vst [vmem:[%s932 + $0x200] sm:$0xff] %v1061
                  %v1063 = vld [vmem:[%s931 + $0x410] sm:$0xff]
                  %1064 = vst [vmem:[%s932 + $0x208] sm:$0xff] %v1063
                  %v1065 = vld [vmem:[%s931 + $0x420] sm:$0xff]
                  %1066 = vst [vmem:[%s932 + $0x210] sm:$0xff] %v1065
                  %v1067 = vld [vmem:[%s931 + $0x430] sm:$0xff]
                  %1068 = vst [vmem:[%s932 + $0x218] sm:$0xff] %v1067
                  %v1069 = vld [vmem:[%s931 + $0x440] sm:$0xff]
                  %1070 = vst [vmem:[%s932 + $0x220] sm:$0xff] %v1069
                  %v1071 = vld [vmem:[%s931 + $0x450] sm:$0xff]
                  %1072 = vst [vmem:[%s932 + $0x228] sm:$0xff] %v1071
                  %v1073 = vld [vmem:[%s931 + $0x460] sm:$0xff]
                  %1074 = vst [vmem:[%s932 + $0x230] sm:$0xff] %v1073
                  %v1075 = vld [vmem:[%s931 + $0x470] sm:$0xff]
                  %1076 = vst [vmem:[%s932 + $0x238] sm:$0xff] %v1075
                  %v1077 = vld [vmem:[%s931 + $0x480] sm:$0xff]
                  %1078 = vst [vmem:[%s932 + $0x240] sm:$0xff] %v1077
                  %v1079 = vld [vmem:[%s931 + $0x490] sm:$0xff]
                  %1080 = vst [vmem:[%s932 + $0x248] sm:$0xff] %v1079
                  %v1081 = vld [vmem:[%s931 + $0x4a0] sm:$0xff]
                  %1082 = vst [vmem:[%s932 + $0x250] sm:$0xff] %v1081
                  %v1083 = vld [vmem:[%s931 + $0x4b0] sm:$0xff]
                  %1084 = vst [vmem:[%s932 + $0x258] sm:$0xff] %v1083
                  %v1085 = vld [vmem:[%s931 + $0x4c0] sm:$0xff]
                  %1086 = vst [vmem:[%s932 + $0x260] sm:$0xff] %v1085
                  %v1087 = vld [vmem:[%s931 + $0x4d0] sm:$0xff]
                  %1088 = vst [vmem:[%s932 + $0x268] sm:$0xff] %v1087
                  %v1089 = vld [vmem:[%s931 + $0x4e0] sm:$0xff]
                  %1090 = vst [vmem:[%s932 + $0x270] sm:$0xff] %v1089
                  %v1091 = vld [vmem:[%s931 + $0x4f0] sm:$0xff]
                  %1092 = vst [vmem:[%s932 + $0x278] sm:$0xff] %v1091
                  %v1093 = vld [vmem:[%s931 + $0x500] sm:$0xff]
                  %1094 = vst [vmem:[%s932 + $0x280] sm:$0xff] %v1093
                  %v1095 = vld [vmem:[%s931 + $0x510] sm:$0xff]
                  %1096 = vst [vmem:[%s932 + $0x288] sm:$0xff] %v1095
                  %v1097 = vld [vmem:[%s931 + $0x520] sm:$0xff]
                  %1098 = vst [vmem:[%s932 + $0x290] sm:$0xff] %v1097
                  %v1099 = vld [vmem:[%s931 + $0x530] sm:$0xff]
                  %1100 = vst [vmem:[%s932 + $0x298] sm:$0xff] %v1099
                  %v1101 = vld [vmem:[%s931 + $0x540] sm:$0xff]
                  %1102 = vst [vmem:[%s932 + $0x2a0] sm:$0xff] %v1101
                  %v1103 = vld [vmem:[%s931 + $0x550] sm:$0xff]
                  %1104 = vst [vmem:[%s932 + $0x2a8] sm:$0xff] %v1103
                  %v1105 = vld [vmem:[%s931 + $0x560] sm:$0xff]
                  %1106 = vst [vmem:[%s932 + $0x2b0] sm:$0xff] %v1105
                  %v1107 = vld [vmem:[%s931 + $0x570] sm:$0xff]
                  %1108 = vst [vmem:[%s932 + $0x2b8] sm:$0xff] %v1107
                  %v1109 = vld [vmem:[%s931 + $0x580] sm:$0xff]
                  %1110 = vst [vmem:[%s932 + $0x2c0] sm:$0xff] %v1109
                  %v1111 = vld [vmem:[%s931 + $0x590] sm:$0xff]
                  %1112 = vst [vmem:[%s932 + $0x2c8] sm:$0xff] %v1111
                  %v1113 = vld [vmem:[%s931 + $0x5a0] sm:$0xff]
                  %1114 = vst [vmem:[%s932 + $0x2d0] sm:$0xff] %v1113
                  %v1115 = vld [vmem:[%s931 + $0x5b0] sm:$0xff]
                  %1116 = vst [vmem:[%s932 + $0x2d8] sm:$0xff] %v1115
                  %v1117 = vld [vmem:[%s931 + $0x5c0] sm:$0xff]
                  %1118 = vst [vmem:[%s932 + $0x2e0] sm:$0xff] %v1117
                  %v1119 = vld [vmem:[%s931 + $0x5d0] sm:$0xff]
                  %1120 = vst [vmem:[%s932 + $0x2e8] sm:$0xff] %v1119
                  %v1121 = vld [vmem:[%s931 + $0x5e0] sm:$0xff]
                  %1122 = vst [vmem:[%s932 + $0x2f0] sm:$0xff] %v1121
                  %v1123 = vld [vmem:[%s931 + $0x5f0] sm:$0xff]
                  %1124 = vst [vmem:[%s932 + $0x2f8] sm:$0xff] %v1123
                  %v1125 = vld [vmem:[%s931 + $0x600] sm:$0xff]
                  %1126 = vst [vmem:[%s932 + $0x300] sm:$0xff] %v1125
                  %v1127 = vld [vmem:[%s931 + $0x610] sm:$0xff]
                  %1128 = vst [vmem:[%s932 + $0x308] sm:$0xff] %v1127
                  %v1129 = vld [vmem:[%s931 + $0x620] sm:$0xff]
                  %1130 = vst [vmem:[%s932 + $0x310] sm:$0xff] %v1129
                  %v1131 = vld [vmem:[%s931 + $0x630] sm:$0xff]
                  %1132 = vst [vmem:[%s932 + $0x318] sm:$0xff] %v1131
                  %v1133 = vld [vmem:[%s931 + $0x640] sm:$0xff]
                  %1134 = vst [vmem:[%s932 + $0x320] sm:$0xff] %v1133
                  %v1135 = vld [vmem:[%s931 + $0x650] sm:$0xff]
                  %1136 = vst [vmem:[%s932 + $0x328] sm:$0xff] %v1135
                  %v1137 = vld [vmem:[%s931 + $0x660] sm:$0xff]
                  %1138 = vst [vmem:[%s932 + $0x330] sm:$0xff] %v1137
                  %v1139 = vld [vmem:[%s931 + $0x670] sm:$0xff]
                  %1140 = vst [vmem:[%s932 + $0x338] sm:$0xff] %v1139
                  %v1141 = vld [vmem:[%s931 + $0x680] sm:$0xff]
                  %1142 = vst [vmem:[%s932 + $0x340] sm:$0xff] %v1141
                  %v1143 = vld [vmem:[%s931 + $0x690] sm:$0xff]
                  %1144 = vst [vmem:[%s932 + $0x348] sm:$0xff] %v1143
                  %v1145 = vld [vmem:[%s931 + $0x6a0] sm:$0xff]
                  %1146 = vst [vmem:[%s932 + $0x350] sm:$0xff] %v1145
                  %v1147 = vld [vmem:[%s931 + $0x6b0] sm:$0xff]
                  %1148 = vst [vmem:[%s932 + $0x358] sm:$0xff] %v1147
                  %v1149 = vld [vmem:[%s931 + $0x6c0] sm:$0xff]
                  %1150 = vst [vmem:[%s932 + $0x360] sm:$0xff] %v1149
                  %v1151 = vld [vmem:[%s931 + $0x6d0] sm:$0xff]
                  %1152 = vst [vmem:[%s932 + $0x368] sm:$0xff] %v1151
                  %v1153 = vld [vmem:[%s931 + $0x6e0] sm:$0xff]
                  %1154 = vst [vmem:[%s932 + $0x370] sm:$0xff] %v1153
                  %v1155 = vld [vmem:[%s931 + $0x6f0] sm:$0xff]
                  %1156 = vst [vmem:[%s932 + $0x378] sm:$0xff] %v1155
                  %v1157 = vld [vmem:[%s931 + $0x700] sm:$0xff]
                  %1158 = vst [vmem:[%s932 + $0x380] sm:$0xff] %v1157
                  %v1159 = vld [vmem:[%s931 + $0x710] sm:$0xff]
                  %1160 = vst [vmem:[%s932 + $0x388] sm:$0xff] %v1159
                  %v1161 = vld [vmem:[%s931 + $0x720] sm:$0xff]
                  %1162 = vst [vmem:[%s932 + $0x390] sm:$0xff] %v1161
                  %v1163 = vld [vmem:[%s931 + $0x730] sm:$0xff]
                  %1164 = vst [vmem:[%s932 + $0x398] sm:$0xff] %v1163
                  %v1165 = vld [vmem:[%s931 + $0x740] sm:$0xff]
                  %1166 = vst [vmem:[%s932 + $0x3a0] sm:$0xff] %v1165
                  %v1167 = vld [vmem:[%s931 + $0x750] sm:$0xff]
                  %1168 = vst [vmem:[%s932 + $0x3a8] sm:$0xff] %v1167
                  %v1169 = vld [vmem:[%s931 + $0x760] sm:$0xff]
                  %1170 = vst [vmem:[%s932 + $0x3b0] sm:$0xff] %v1169
                  %v1171 = vld [vmem:[%s931 + $0x770] sm:$0xff]
                  %1172 = vst [vmem:[%s932 + $0x3b8] sm:$0xff] %v1171
                  %v1173 = vld [vmem:[%s931 + $0x780] sm:$0xff]
                  %1174 = vst [vmem:[%s932 + $0x3c0] sm:$0xff] %v1173
                  %v1175 = vld [vmem:[%s931 + $0x790] sm:$0xff]
                  %1176 = vst [vmem:[%s932 + $0x3c8] sm:$0xff] %v1175
                  %v1177 = vld [vmem:[%s931 + $0x7a0] sm:$0xff]
                  %1178 = vst [vmem:[%s932 + $0x3d0] sm:$0xff] %v1177
                  %v1179 = vld [vmem:[%s931 + $0x7b0] sm:$0xff]
                  %1180 = vst [vmem:[%s932 + $0x3d8] sm:$0xff] %v1179
                  %v1181 = vld [vmem:[%s931 + $0x7c0] sm:$0xff]
                  %1182 = vst [vmem:[%s932 + $0x3e0] sm:$0xff] %v1181
                  %v1183 = vld [vmem:[%s931 + $0x7d0] sm:$0xff]
                  %1184 = vst [vmem:[%s932 + $0x3e8] sm:$0xff] %v1183
                  %v1185 = vld [vmem:[%s931 + $0x7e0] sm:$0xff]
                  %1186 = vst [vmem:[%s932 + $0x3f0] sm:$0xff] %v1185
                  %v1187 = vld [vmem:[%s931 + $0x7f0] sm:$0xff]
                  %1188 = vst [vmem:[%s932 + $0x3f8] sm:$0xff] %v1187
                  %v1189 = vld [vmem:[%s931 + $0x800] sm:$0xff]
                  %1190 = vst [vmem:[%s932 + $0x400] sm:$0xff] %v1189
                  %v1191 = vld [vmem:[%s931 + $0x810] sm:$0xff]
                  %1192 = vst [vmem:[%s932 + $0x408] sm:$0xff] %v1191
                  %v1193 = vld [vmem:[%s931 + $0x820] sm:$0xff]
                  %1194 = vst [vmem:[%s932 + $0x410] sm:$0xff] %v1193
                  %v1195 = vld [vmem:[%s931 + $0x830] sm:$0xff]
                  %1196 = vst [vmem:[%s932 + $0x418] sm:$0xff] %v1195
                  %v1197 = vld [vmem:[%s931 + $0x840] sm:$0xff]
                  %1198 = vst [vmem:[%s932 + $0x420] sm:$0xff] %v1197
                  %v1199 = vld [vmem:[%s931 + $0x850] sm:$0xff]
                  %1200 = vst [vmem:[%s932 + $0x428] sm:$0xff] %v1199
                  %v1201 = vld [vmem:[%s931 + $0x860] sm:$0xff]
                  %1202 = vst [vmem:[%s932 + $0x430] sm:$0xff] %v1201
                  %v1203 = vld [vmem:[%s931 + $0x870] sm:$0xff]
                  %1204 = vst [vmem:[%s932 + $0x438] sm:$0xff] %v1203
                  %v1205 = vld [vmem:[%s931 + $0x880] sm:$0xff]
                  %1206 = vst [vmem:[%s932 + $0x440] sm:$0xff] %v1205
                  %v1207 = vld [vmem:[%s931 + $0x890] sm:$0xff]
                  %1208 = vst [vmem:[%s932 + $0x448] sm:$0xff] %v1207
                  %v1209 = vld [vmem:[%s931 + $0x8a0] sm:$0xff]
                  %1210 = vst [vmem:[%s932 + $0x450] sm:$0xff] %v1209
                  %v1211 = vld [vmem:[%s931 + $0x8b0] sm:$0xff]
                  %1212 = vst [vmem:[%s932 + $0x458] sm:$0xff] %v1211
                  %v1213 = vld [vmem:[%s931 + $0x8c0] sm:$0xff]
                  %1214 = vst [vmem:[%s932 + $0x460] sm:$0xff] %v1213
                  %v1215 = vld [vmem:[%s931 + $0x8d0] sm:$0xff]
                  %1216 = vst [vmem:[%s932 + $0x468] sm:$0xff] %v1215
                  %v1217 = vld [vmem:[%s931 + $0x8e0] sm:$0xff]
                  %1218 = vst [vmem:[%s932 + $0x470] sm:$0xff] %v1217
                  %v1219 = vld [vmem:[%s931 + $0x8f0] sm:$0xff]
                  %1220 = vst [vmem:[%s932 + $0x478] sm:$0xff] %v1219
                  %v1221 = vld [vmem:[%s931 + $0x900] sm:$0xff]
                  %1222 = vst [vmem:[%s932 + $0x480] sm:$0xff] %v1221
                  %v1223 = vld [vmem:[%s931 + $0x910] sm:$0xff]
                  %1224 = vst [vmem:[%s932 + $0x488] sm:$0xff] %v1223
                  %v1225 = vld [vmem:[%s931 + $0x920] sm:$0xff]
                  %1226 = vst [vmem:[%s932 + $0x490] sm:$0xff] %v1225
                  %v1227 = vld [vmem:[%s931 + $0x930] sm:$0xff]
                  %1228 = vst [vmem:[%s932 + $0x498] sm:$0xff] %v1227
                  %v1229 = vld [vmem:[%s931 + $0x940] sm:$0xff]
                  %1230 = vst [vmem:[%s932 + $0x4a0] sm:$0xff] %v1229
                  %v1231 = vld [vmem:[%s931 + $0x950] sm:$0xff]
                  %1232 = vst [vmem:[%s932 + $0x4a8] sm:$0xff] %v1231
                  %v1233 = vld [vmem:[%s931 + $0x960] sm:$0xff]
                  %1234 = vst [vmem:[%s932 + $0x4b0] sm:$0xff] %v1233
                  %v1235 = vld [vmem:[%s931 + $0x970] sm:$0xff]
                  %1236 = vst [vmem:[%s932 + $0x4b8] sm:$0xff] %v1235
                  %v1237 = vld [vmem:[%s931 + $0x980] sm:$0xff]
                  %1238 = vst [vmem:[%s932 + $0x4c0] sm:$0xff] %v1237
                  %v1239 = vld [vmem:[%s931 + $0x990] sm:$0xff]
                  %1240 = vst [vmem:[%s932 + $0x4c8] sm:$0xff] %v1239
                  %v1241 = vld [vmem:[%s931 + $0x9a0] sm:$0xff]
                  %1242 = vst [vmem:[%s932 + $0x4d0] sm:$0xff] %v1241
                  %v1243 = vld [vmem:[%s931 + $0x9b0] sm:$0xff]
                  %1244 = vst [vmem:[%s932 + $0x4d8] sm:$0xff] %v1243
                  %v1245 = vld [vmem:[%s931 + $0x9c0] sm:$0xff]
                  %1246 = vst [vmem:[%s932 + $0x4e0] sm:$0xff] %v1245
                  %v1247 = vld [vmem:[%s931 + $0x9d0] sm:$0xff]
                  %1248 = vst [vmem:[%s932 + $0x4e8] sm:$0xff] %v1247
                  %v1249 = vld [vmem:[%s931 + $0x9e0] sm:$0xff]
                  %1250 = vst [vmem:[%s932 + $0x4f0] sm:$0xff] %v1249
                  %v1251 = vld [vmem:[%s931 + $0x9f0] sm:$0xff]
                  %1252 = vst [vmem:[%s932 + $0x4f8] sm:$0xff] %v1251
                  %v1253 = vld [vmem:[%s931 + $0xa00] sm:$0xff]
                  %1254 = vst [vmem:[%s932 + $0x500] sm:$0xff] %v1253
                  %v1255 = vld [vmem:[%s931 + $0xa10] sm:$0xff]
                  %1256 = vst [vmem:[%s932 + $0x508] sm:$0xff] %v1255
                  %v1257 = vld [vmem:[%s931 + $0xa20] sm:$0xff]
                  %1258 = vst [vmem:[%s932 + $0x510] sm:$0xff] %v1257
                  %v1259 = vld [vmem:[%s931 + $0xa30] sm:$0xff]
                  %1260 = vst [vmem:[%s932 + $0x518] sm:$0xff] %v1259
                  %v1261 = vld [vmem:[%s931 + $0xa40] sm:$0xff]
                  %1262 = vst [vmem:[%s932 + $0x520] sm:$0xff] %v1261
                  %v1263 = vld [vmem:[%s931 + $0xa50] sm:$0xff]
                  %1264 = vst [vmem:[%s932 + $0x528] sm:$0xff] %v1263
                  %v1265 = vld [vmem:[%s931 + $0xa60] sm:$0xff]
                  %1266 = vst [vmem:[%s932 + $0x530] sm:$0xff] %v1265
                  %v1267 = vld [vmem:[%s931 + $0xa70] sm:$0xff]
                  %1268 = vst [vmem:[%s932 + $0x538] sm:$0xff] %v1267
                  %v1269 = vld [vmem:[%s931 + $0xa80] sm:$0xff]
                  %1270 = vst [vmem:[%s932 + $0x540] sm:$0xff] %v1269
                  %v1271 = vld [vmem:[%s931 + $0xa90] sm:$0xff]
                  %1272 = vst [vmem:[%s932 + $0x548] sm:$0xff] %v1271
                  %v1273 = vld [vmem:[%s931 + $0xaa0] sm:$0xff]
                  %1274 = vst [vmem:[%s932 + $0x550] sm:$0xff] %v1273
                  %v1275 = vld [vmem:[%s931 + $0xab0] sm:$0xff]
                  %1276 = vst [vmem:[%s932 + $0x558] sm:$0xff] %v1275
                  %v1277 = vld [vmem:[%s931 + $0xac0] sm:$0xff]
                  %1278 = vst [vmem:[%s932 + $0x560] sm:$0xff] %v1277
                  %v1279 = vld [vmem:[%s931 + $0xad0] sm:$0xff]
                  %1280 = vst [vmem:[%s932 + $0x568] sm:$0xff] %v1279
                  %v1281 = vld [vmem:[%s931 + $0xae0] sm:$0xff]
                  %1282 = vst [vmem:[%s932 + $0x570] sm:$0xff] %v1281
                  %v1283 = vld [vmem:[%s931 + $0xaf0] sm:$0xff]
                  %1284 = vst [vmem:[%s932 + $0x578] sm:$0xff] %v1283
                  %v1285 = vld [vmem:[%s931 + $0xb00] sm:$0xff]
                  %1286 = vst [vmem:[%s932 + $0x580] sm:$0xff] %v1285
                  %v1287 = vld [vmem:[%s931 + $0xb10] sm:$0xff]
                  %1288 = vst [vmem:[%s932 + $0x588] sm:$0xff] %v1287
                  %v1289 = vld [vmem:[%s931 + $0xb20] sm:$0xff]
                  %1290 = vst [vmem:[%s932 + $0x590] sm:$0xff] %v1289
                  %v1291 = vld [vmem:[%s931 + $0xb30] sm:$0xff]
                  %1292 = vst [vmem:[%s932 + $0x598] sm:$0xff] %v1291
                  %v1293 = vld [vmem:[%s931 + $0xb40] sm:$0xff]
                  %1294 = vst [vmem:[%s932 + $0x5a0] sm:$0xff] %v1293
                  %v1295 = vld [vmem:[%s931 + $0xb50] sm:$0xff]
                  %1296 = vst [vmem:[%s932 + $0x5a8] sm:$0xff] %v1295
                  %v1297 = vld [vmem:[%s931 + $0xb60] sm:$0xff]
                  %1298 = vst [vmem:[%s932 + $0x5b0] sm:$0xff] %v1297
                  %v1299 = vld [vmem:[%s931 + $0xb70] sm:$0xff]
                  %1300 = vst [vmem:[%s932 + $0x5b8] sm:$0xff] %v1299
                  %v1301 = vld [vmem:[%s931 + $0xb80] sm:$0xff]
                  %1302 = vst [vmem:[%s932 + $0x5c0] sm:$0xff] %v1301
                  %v1303 = vld [vmem:[%s931 + $0xb90] sm:$0xff]
                  %1304 = vst [vmem:[%s932 + $0x5c8] sm:$0xff] %v1303
                  %v1305 = vld [vmem:[%s931 + $0xba0] sm:$0xff]
                  %1306 = vst [vmem:[%s932 + $0x5d0] sm:$0xff] %v1305
                  %v1307 = vld [vmem:[%s931 + $0xbb0] sm:$0xff]
                  %1308 = vst [vmem:[%s932 + $0x5d8] sm:$0xff] %v1307
                  %v1309 = vld [vmem:[%s931 + $0xbc0] sm:$0xff]
                  %1310 = vst [vmem:[%s932 + $0x5e0] sm:$0xff] %v1309
                  %v1311 = vld [vmem:[%s931 + $0xbd0] sm:$0xff]
                  %1312 = vst [vmem:[%s932 + $0x5e8] sm:$0xff] %v1311
                  %v1313 = vld [vmem:[%s931 + $0xbe0] sm:$0xff]
                  %1314 = vst [vmem:[%s932 + $0x5f0] sm:$0xff] %v1313
                  %v1315 = vld [vmem:[%s931 + $0xbf0] sm:$0xff]
                  %1316 = vst [vmem:[%s932 + $0x5f8] sm:$0xff] %v1315
                  %v1317 = vld [vmem:[%s931 + $0xc00] sm:$0xff]
                  %1318 = vst [vmem:[%s932 + $0x600] sm:$0xff] %v1317
                  %v1319 = vld [vmem:[%s931 + $0xc10] sm:$0xff]
                  %1320 = vst [vmem:[%s932 + $0x608] sm:$0xff] %v1319
                  %v1321 = vld [vmem:[%s931 + $0xc20] sm:$0xff]
                  %1322 = vst [vmem:[%s932 + $0x610] sm:$0xff] %v1321
                  %v1323 = vld [vmem:[%s931 + $0xc30] sm:$0xff]
                  %1324 = vst [vmem:[%s932 + $0x618] sm:$0xff] %v1323
                  %v1325 = vld [vmem:[%s931 + $0xc40] sm:$0xff]
                  %1326 = vst [vmem:[%s932 + $0x620] sm:$0xff] %v1325
                  %v1327 = vld [vmem:[%s931 + $0xc50] sm:$0xff]
                  %1328 = vst [vmem:[%s932 + $0x628] sm:$0xff] %v1327
                  %v1329 = vld [vmem:[%s931 + $0xc60] sm:$0xff]
                  %1330 = vst [vmem:[%s932 + $0x630] sm:$0xff] %v1329
                  %v1331 = vld [vmem:[%s931 + $0xc70] sm:$0xff]
                  %1332 = vst [vmem:[%s932 + $0x638] sm:$0xff] %v1331
                  %v1333 = vld [vmem:[%s931 + $0xc80] sm:$0xff]
                  %1334 = vst [vmem:[%s932 + $0x640] sm:$0xff] %v1333
                  %v1335 = vld [vmem:[%s931 + $0xc90] sm:$0xff]
                  %1336 = vst [vmem:[%s932 + $0x648] sm:$0xff] %v1335
                  %v1337 = vld [vmem:[%s931 + $0xca0] sm:$0xff]
                  %1338 = vst [vmem:[%s932 + $0x650] sm:$0xff] %v1337
                  %v1339 = vld [vmem:[%s931 + $0xcb0] sm:$0xff]
                  %1340 = vst [vmem:[%s932 + $0x658] sm:$0xff] %v1339
                  %v1341 = vld [vmem:[%s931 + $0xcc0] sm:$0xff]
                  %1342 = vst [vmem:[%s932 + $0x660] sm:$0xff] %v1341
                  %v1343 = vld [vmem:[%s931 + $0xcd0] sm:$0xff]
                  %1344 = vst [vmem:[%s932 + $0x668] sm:$0xff] %v1343
                  %v1345 = vld [vmem:[%s931 + $0xce0] sm:$0xff]
                  %1346 = vst [vmem:[%s932 + $0x670] sm:$0xff] %v1345
                  %v1347 = vld [vmem:[%s931 + $0xcf0] sm:$0xff]
                  %1348 = vst [vmem:[%s932 + $0x678] sm:$0xff] %v1347
                  %v1349 = vld [vmem:[%s931 + $0xd00] sm:$0xff]
                  %1350 = vst [vmem:[%s932 + $0x680] sm:$0xff] %v1349
                  %v1351 = vld [vmem:[%s931 + $0xd10] sm:$0xff]
                  %1352 = vst [vmem:[%s932 + $0x688] sm:$0xff] %v1351
                  %v1353 = vld [vmem:[%s931 + $0xd20] sm:$0xff]
                  %1354 = vst [vmem:[%s932 + $0x690] sm:$0xff] %v1353
                  %v1355 = vld [vmem:[%s931 + $0xd30] sm:$0xff]
                  %1356 = vst [vmem:[%s932 + $0x698] sm:$0xff] %v1355
                  %v1357 = vld [vmem:[%s931 + $0xd40] sm:$0xff]
                  %1358 = vst [vmem:[%s932 + $0x6a0] sm:$0xff] %v1357
                  %v1359 = vld [vmem:[%s931 + $0xd50] sm:$0xff]
                  %1360 = vst [vmem:[%s932 + $0x6a8] sm:$0xff] %v1359
                  %v1361 = vld [vmem:[%s931 + $0xd60] sm:$0xff]
                  %1362 = vst [vmem:[%s932 + $0x6b0] sm:$0xff] %v1361
                  %v1363 = vld [vmem:[%s931 + $0xd70] sm:$0xff]
                  %1364 = vst [vmem:[%s932 + $0x6b8] sm:$0xff] %v1363
                  %v1365 = vld [vmem:[%s931 + $0xd80] sm:$0xff]
                  %1366 = vst [vmem:[%s932 + $0x6c0] sm:$0xff] %v1365
                  %v1367 = vld [vmem:[%s931 + $0xd90] sm:$0xff]
                  %1368 = vst [vmem:[%s932 + $0x6c8] sm:$0xff] %v1367
                  %v1369 = vld [vmem:[%s931 + $0xda0] sm:$0xff]
                  %1370 = vst [vmem:[%s932 + $0x6d0] sm:$0xff] %v1369
                  %v1371 = vld [vmem:[%s931 + $0xdb0] sm:$0xff]
                  %1372 = vst [vmem:[%s932 + $0x6d8] sm:$0xff] %v1371
                  %v1373 = vld [vmem:[%s931 + $0xdc0] sm:$0xff]
                  %1374 = vst [vmem:[%s932 + $0x6e0] sm:$0xff] %v1373
                  %v1375 = vld [vmem:[%s931 + $0xdd0] sm:$0xff]
                  %1376 = vst [vmem:[%s932 + $0x6e8] sm:$0xff] %v1375
                  %v1377 = vld [vmem:[%s931 + $0xde0] sm:$0xff]
                  %1378 = vst [vmem:[%s932 + $0x6f0] sm:$0xff] %v1377
                  %v1379 = vld [vmem:[%s931 + $0xdf0] sm:$0xff]
                  %1380 = vst [vmem:[%s932 + $0x6f8] sm:$0xff] %v1379
                  %v1381 = vld [vmem:[%s931 + $0xe00] sm:$0xff]
                  %1382 = vst [vmem:[%s932 + $0x700] sm:$0xff] %v1381
                  %v1383 = vld [vmem:[%s931 + $0xe10] sm:$0xff]
                  %1384 = vst [vmem:[%s932 + $0x708] sm:$0xff] %v1383
                  %v1385 = vld [vmem:[%s931 + $0xe20] sm:$0xff]
                  %1386 = vst [vmem:[%s932 + $0x710] sm:$0xff] %v1385
                  %v1387 = vld [vmem:[%s931 + $0xe30] sm:$0xff]
                  %1388 = vst [vmem:[%s932 + $0x718] sm:$0xff] %v1387
                  %v1389 = vld [vmem:[%s931 + $0xe40] sm:$0xff]
                  %1390 = vst [vmem:[%s932 + $0x720] sm:$0xff] %v1389
                  %v1391 = vld [vmem:[%s931 + $0xe50] sm:$0xff]
                  %1392 = vst [vmem:[%s932 + $0x728] sm:$0xff] %v1391
                  %v1393 = vld [vmem:[%s931 + $0xe60] sm:$0xff]
                  %1394 = vst [vmem:[%s932 + $0x730] sm:$0xff] %v1393
                  %v1395 = vld [vmem:[%s931 + $0xe70] sm:$0xff]
                  %1396 = vst [vmem:[%s932 + $0x738] sm:$0xff] %v1395
                  %v1397 = vld [vmem:[%s931 + $0xe80] sm:$0xff]
                  %1398 = vst [vmem:[%s932 + $0x740] sm:$0xff] %v1397
                  %v1399 = vld [vmem:[%s931 + $0xe90] sm:$0xff]
                  %1400 = vst [vmem:[%s932 + $0x748] sm:$0xff] %v1399
                  %v1401 = vld [vmem:[%s931 + $0xea0] sm:$0xff]
                  %1402 = vst [vmem:[%s932 + $0x750] sm:$0xff] %v1401
                  %v1403 = vld [vmem:[%s931 + $0xeb0] sm:$0xff]
                  %1404 = vst [vmem:[%s932 + $0x758] sm:$0xff] %v1403
                  %v1405 = vld [vmem:[%s931 + $0xec0] sm:$0xff]
                  %1406 = vst [vmem:[%s932 + $0x760] sm:$0xff] %v1405
                  %v1407 = vld [vmem:[%s931 + $0xed0] sm:$0xff]
                  %1408 = vst [vmem:[%s932 + $0x768] sm:$0xff] %v1407
                  %v1409 = vld [vmem:[%s931 + $0xee0] sm:$0xff]
                  %1410 = vst [vmem:[%s932 + $0x770] sm:$0xff] %v1409
                  %v1411 = vld [vmem:[%s931 + $0xef0] sm:$0xff]
                  %1412 = vst [vmem:[%s932 + $0x778] sm:$0xff] %v1411
                  %v1413 = vld [vmem:[%s931 + $0xf00] sm:$0xff]
                  %1414 = vst [vmem:[%s932 + $0x780] sm:$0xff] %v1413
                  %v1415 = vld [vmem:[%s931 + $0xf10] sm:$0xff]
                  %1416 = vst [vmem:[%s932 + $0x788] sm:$0xff] %v1415
                  %v1417 = vld [vmem:[%s931 + $0xf20] sm:$0xff]
                  %1418 = vst [vmem:[%s932 + $0x790] sm:$0xff] %v1417
                  %v1419 = vld [vmem:[%s931 + $0xf30] sm:$0xff]
                  %1420 = vst [vmem:[%s932 + $0x798] sm:$0xff] %v1419
                  %v1421 = vld [vmem:[%s931 + $0xf40] sm:$0xff]
                  %1422 = vst [vmem:[%s932 + $0x7a0] sm:$0xff] %v1421
                  %v1423 = vld [vmem:[%s931 + $0xf50] sm:$0xff]
                  %1424 = vst [vmem:[%s932 + $0x7a8] sm:$0xff] %v1423
                  %v1425 = vld [vmem:[%s931 + $0xf60] sm:$0xff]
                  %1426 = vst [vmem:[%s932 + $0x7b0] sm:$0xff] %v1425
                  %v1427 = vld [vmem:[%s931 + $0xf70] sm:$0xff]
                  %1428 = vst [vmem:[%s932 + $0x7b8] sm:$0xff] %v1427
                  %v1429 = vld [vmem:[%s931 + $0xf80] sm:$0xff]
                  %1430 = vst [vmem:[%s932 + $0x7c0] sm:$0xff] %v1429
                  %v1431 = vld [vmem:[%s931 + $0xf90] sm:$0xff]
                  %1432 = vst [vmem:[%s932 + $0x7c8] sm:$0xff] %v1431
                  %v1433 = vld [vmem:[%s931 + $0xfa0] sm:$0xff]
                  %1434 = vst [vmem:[%s932 + $0x7d0] sm:$0xff] %v1433
                  %v1435 = vld [vmem:[%s931 + $0xfb0] sm:$0xff]
                  %1436 = vst [vmem:[%s932 + $0x7d8] sm:$0xff] %v1435
                  %v1437 = vld [vmem:[%s931 + $0xfc0] sm:$0xff]
                  %1438 = vst [vmem:[%s932 + $0x7e0] sm:$0xff] %v1437
                  %v1439 = vld [vmem:[%s931 + $0xfd0] sm:$0xff]
                  %1440 = vst [vmem:[%s932 + $0x7e8] sm:$0xff] %v1439
                  %v1441 = vld [vmem:[%s931 + $0xfe0] sm:$0xff]
                  %1442 = vst [vmem:[%s932 + $0x7f0] sm:$0xff] %v1441
                  %v1443 = vld [vmem:[%s931 + $0xff0] sm:$0xff]
                  %1444 = vst [vmem:[%s932 + $0x7f8] sm:$0xff] %v1443
                  %v1445 = vld [vmem:[%s931 + $0x1000] sm:$0xff]
                  %1446 = vst [vmem:[%s932 + $0x800] sm:$0xff] %v1445
                  %v1447 = vld [vmem:[%s931 + $0x1010] sm:$0xff]
                  %1448 = vst [vmem:[%s932 + $0x808] sm:$0xff] %v1447
                  %v1449 = vld [vmem:[%s931 + $0x1020] sm:$0xff]
                  %1450 = vst [vmem:[%s932 + $0x810] sm:$0xff] %v1449
                  %v1451 = vld [vmem:[%s931 + $0x1030] sm:$0xff]
                  %1452 = vst [vmem:[%s932 + $0x818] sm:$0xff] %v1451
                  %v1453 = vld [vmem:[%s931 + $0x1040] sm:$0xff]
                  %1454 = vst [vmem:[%s932 + $0x820] sm:$0xff] %v1453
                  %v1455 = vld [vmem:[%s931 + $0x1050] sm:$0xff]
                  %1456 = vst [vmem:[%s932 + $0x828] sm:$0xff] %v1455
                  %v1457 = vld [vmem:[%s931 + $0x1060] sm:$0xff]
                  %1458 = vst [vmem:[%s932 + $0x830] sm:$0xff] %v1457
                  %v1459 = vld [vmem:[%s931 + $0x1070] sm:$0xff]
                  %1460 = vst [vmem:[%s932 + $0x838] sm:$0xff] %v1459
                  %v1461 = vld [vmem:[%s931 + $0x1080] sm:$0xff]
                  %1462 = vst [vmem:[%s932 + $0x840] sm:$0xff] %v1461
                  %v1463 = vld [vmem:[%s931 + $0x1090] sm:$0xff]
                  %1464 = vst [vmem:[%s932 + $0x848] sm:$0xff] %v1463
                  %v1465 = vld [vmem:[%s931 + $0x10a0] sm:$0xff]
                  %1466 = vst [vmem:[%s932 + $0x850] sm:$0xff] %v1465
                  %v1467 = vld [vmem:[%s931 + $0x10b0] sm:$0xff]
                  %1468 = vst [vmem:[%s932 + $0x858] sm:$0xff] %v1467
                  %v1469 = vld [vmem:[%s931 + $0x10c0] sm:$0xff]
                  %1470 = vst [vmem:[%s932 + $0x860] sm:$0xff] %v1469
                  %v1471 = vld [vmem:[%s931 + $0x10d0] sm:$0xff]
                  %1472 = vst [vmem:[%s932 + $0x868] sm:$0xff] %v1471
                  %v1473 = vld [vmem:[%s931 + $0x10e0] sm:$0xff]
                  %1474 = vst [vmem:[%s932 + $0x870] sm:$0xff] %v1473
                  %v1475 = vld [vmem:[%s931 + $0x10f0] sm:$0xff]
                  %1476 = vst [vmem:[%s932 + $0x878] sm:$0xff] %v1475
                  %v1477 = vld [vmem:[%s931 + $0x1100] sm:$0xff]
                  %1478 = vst [vmem:[%s932 + $0x880] sm:$0xff] %v1477
                  %v1479 = vld [vmem:[%s931 + $0x1110] sm:$0xff]
                  %1480 = vst [vmem:[%s932 + $0x888] sm:$0xff] %v1479
                  %v1481 = vld [vmem:[%s931 + $0x1120] sm:$0xff]
                  %1482 = vst [vmem:[%s932 + $0x890] sm:$0xff] %v1481
                  %v1483 = vld [vmem:[%s931 + $0x1130] sm:$0xff]
                  %1484 = vst [vmem:[%s932 + $0x898] sm:$0xff] %v1483
                  %v1485 = vld [vmem:[%s931 + $0x1140] sm:$0xff]
                  %1486 = vst [vmem:[%s932 + $0x8a0] sm:$0xff] %v1485
                  %v1487 = vld [vmem:[%s931 + $0x1150] sm:$0xff]
                  %1488 = vst [vmem:[%s932 + $0x8a8] sm:$0xff] %v1487
                  %v1489 = vld [vmem:[%s931 + $0x1160] sm:$0xff]
                  %1490 = vst [vmem:[%s932 + $0x8b0] sm:$0xff] %v1489
                  %v1491 = vld [vmem:[%s931 + $0x1170] sm:$0xff]
                  %1492 = vst [vmem:[%s932 + $0x8b8] sm:$0xff] %v1491
                  %v1493 = vld [vmem:[%s931 + $0x1180] sm:$0xff]
                  %1494 = vst [vmem:[%s932 + $0x8c0] sm:$0xff] %v1493
                  %v1495 = vld [vmem:[%s931 + $0x1190] sm:$0xff]
                  %1496 = vst [vmem:[%s932 + $0x8c8] sm:$0xff] %v1495
                  %v1497 = vld [vmem:[%s931 + $0x11a0] sm:$0xff]
                  %1498 = vst [vmem:[%s932 + $0x8d0] sm:$0xff] %v1497
                  %v1499 = vld [vmem:[%s931 + $0x11b0] sm:$0xff]
                  %1500 = vst [vmem:[%s932 + $0x8d8] sm:$0xff] %v1499
                  %v1501 = vld [vmem:[%s931 + $0x11c0] sm:$0xff]
                  %1502 = vst [vmem:[%s932 + $0x8e0] sm:$0xff] %v1501
                  %v1503 = vld [vmem:[%s931 + $0x11d0] sm:$0xff]
                  %1504 = vst [vmem:[%s932 + $0x8e8] sm:$0xff] %v1503
                  %v1505 = vld [vmem:[%s931 + $0x11e0] sm:$0xff]
                  %1506 = vst [vmem:[%s932 + $0x8f0] sm:$0xff] %v1505
                  %v1507 = vld [vmem:[%s931 + $0x11f0] sm:$0xff]
                  %1508 = vst [vmem:[%s932 + $0x8f8] sm:$0xff] %v1507
                  %v1509 = vld [vmem:[%s931 + $0x1200] sm:$0xff]
                  %1510 = vst [vmem:[%s932 + $0x900] sm:$0xff] %v1509
                  %v1511 = vld [vmem:[%s931 + $0x1210] sm:$0xff]
                  %1512 = vst [vmem:[%s932 + $0x908] sm:$0xff] %v1511
                  %v1513 = vld [vmem:[%s931 + $0x1220] sm:$0xff]
                  %1514 = vst [vmem:[%s932 + $0x910] sm:$0xff] %v1513
                  %v1515 = vld [vmem:[%s931 + $0x1230] sm:$0xff]
                  %1516 = vst [vmem:[%s932 + $0x918] sm:$0xff] %v1515
                  %v1517 = vld [vmem:[%s931 + $0x1240] sm:$0xff]
                  %1518 = vst [vmem:[%s932 + $0x920] sm:$0xff] %v1517
                  %v1519 = vld [vmem:[%s931 + $0x1250] sm:$0xff]
                  %1520 = vst [vmem:[%s932 + $0x928] sm:$0xff] %v1519
                  %v1521 = vld [vmem:[%s931 + $0x1260] sm:$0xff]
                  %1522 = vst [vmem:[%s932 + $0x930] sm:$0xff] %v1521
                  %v1523 = vld [vmem:[%s931 + $0x1270] sm:$0xff]
                  %1524 = vst [vmem:[%s932 + $0x938] sm:$0xff] %v1523
                  %v1525 = vld [vmem:[%s931 + $0x1280] sm:$0xff]
                  %1526 = vst [vmem:[%s932 + $0x940] sm:$0xff] %v1525
                  %v1527 = vld [vmem:[%s931 + $0x1290] sm:$0xff]
                  %1528 = vst [vmem:[%s932 + $0x948] sm:$0xff] %v1527
                  %v1529 = vld [vmem:[%s931 + $0x12a0] sm:$0xff]
                  %1530 = vst [vmem:[%s932 + $0x950] sm:$0xff] %v1529
                  %v1531 = vld [vmem:[%s931 + $0x12b0] sm:$0xff]
                  %1532 = vst [vmem:[%s932 + $0x958] sm:$0xff] %v1531
                  %v1533 = vld [vmem:[%s931 + $0x12c0] sm:$0xff]
                  %1534 = vst [vmem:[%s932 + $0x960] sm:$0xff] %v1533
                  %v1535 = vld [vmem:[%s931 + $0x12d0] sm:$0xff]
                  %1536 = vst [vmem:[%s932 + $0x968] sm:$0xff] %v1535
                  %v1537 = vld [vmem:[%s931 + $0x12e0] sm:$0xff]
                  %1538 = vst [vmem:[%s932 + $0x970] sm:$0xff] %v1537
                  %v1539 = vld [vmem:[%s931 + $0x12f0] sm:$0xff]
                  %1540 = vst [vmem:[%s932 + $0x978] sm:$0xff] %v1539
                  %v1541 = vld [vmem:[%s931 + $0x1300] sm:$0xff]
                  %1542 = vst [vmem:[%s932 + $0x980] sm:$0xff] %v1541
                  %v1543 = vld [vmem:[%s931 + $0x1310] sm:$0xff]
                  %1544 = vst [vmem:[%s932 + $0x988] sm:$0xff] %v1543
                  %v1545 = vld [vmem:[%s931 + $0x1320] sm:$0xff]
                  %1546 = vst [vmem:[%s932 + $0x990] sm:$0xff] %v1545
                  %v1547 = vld [vmem:[%s931 + $0x1330] sm:$0xff]
                  %1548 = vst [vmem:[%s932 + $0x998] sm:$0xff] %v1547
                  %v1549 = vld [vmem:[%s931 + $0x1340] sm:$0xff]
                  %1550 = vst [vmem:[%s932 + $0x9a0] sm:$0xff] %v1549
                  %v1551 = vld [vmem:[%s931 + $0x1350] sm:$0xff]
                  %1552 = vst [vmem:[%s932 + $0x9a8] sm:$0xff] %v1551
                  %v1553 = vld [vmem:[%s931 + $0x1360] sm:$0xff]
                  %1554 = vst [vmem:[%s932 + $0x9b0] sm:$0xff] %v1553
                  %v1555 = vld [vmem:[%s931 + $0x1370] sm:$0xff]
                  %1556 = vst [vmem:[%s932 + $0x9b8] sm:$0xff] %v1555
                  %v1557 = vld [vmem:[%s931 + $0x1380] sm:$0xff]
                  %1558 = vst [vmem:[%s932 + $0x9c0] sm:$0xff] %v1557
                  %v1559 = vld [vmem:[%s931 + $0x1390] sm:$0xff]
                  %1560 = vst [vmem:[%s932 + $0x9c8] sm:$0xff] %v1559
                  %v1561 = vld [vmem:[%s931 + $0x13a0] sm:$0xff]
                  %1562 = vst [vmem:[%s932 + $0x9d0] sm:$0xff] %v1561
                  %v1563 = vld [vmem:[%s931 + $0x13b0] sm:$0xff]
                  %1564 = vst [vmem:[%s932 + $0x9d8] sm:$0xff] %v1563
                  %v1565 = vld [vmem:[%s931 + $0x13c0] sm:$0xff]
                  %1566 = vst [vmem:[%s932 + $0x9e0] sm:$0xff] %v1565
                  %v1567 = vld [vmem:[%s931 + $0x13d0] sm:$0xff]
                  %1568 = vst [vmem:[%s932 + $0x9e8] sm:$0xff] %v1567
                  %v1569 = vld [vmem:[%s931 + $0x13e0] sm:$0xff]
                  %1570 = vst [vmem:[%s932 + $0x9f0] sm:$0xff] %v1569
                  %v1571 = vld [vmem:[%s931 + $0x13f0] sm:$0xff]
                  %1572 = vst [vmem:[%s932 + $0x9f8] sm:$0xff] %v1571
                  %v1573 = vld [vmem:[%s931 + $0x1400] sm:$0xff]
                  %1574 = vst [vmem:[%s932 + $0xa00] sm:$0xff] %v1573
                  %v1575 = vld [vmem:[%s931 + $0x1410] sm:$0xff]
                  %1576 = vst [vmem:[%s932 + $0xa08] sm:$0xff] %v1575
                  %v1577 = vld [vmem:[%s931 + $0x1420] sm:$0xff]
                  %1578 = vst [vmem:[%s932 + $0xa10] sm:$0xff] %v1577
                  %v1579 = vld [vmem:[%s931 + $0x1430] sm:$0xff]
                  %1580 = vst [vmem:[%s932 + $0xa18] sm:$0xff] %v1579
                  %v1581 = vld [vmem:[%s931 + $0x1440] sm:$0xff]
                  %1582 = vst [vmem:[%s932 + $0xa20] sm:$0xff] %v1581
                  %v1583 = vld [vmem:[%s931 + $0x1450] sm:$0xff]
                  %1584 = vst [vmem:[%s932 + $0xa28] sm:$0xff] %v1583
                  %v1585 = vld [vmem:[%s931 + $0x1460] sm:$0xff]
                  %1586 = vst [vmem:[%s932 + $0xa30] sm:$0xff] %v1585
                  %v1587 = vld [vmem:[%s931 + $0x1470] sm:$0xff]
                  %1588 = vst [vmem:[%s932 + $0xa38] sm:$0xff] %v1587
                  %v1589 = vld [vmem:[%s931 + $0x1480] sm:$0xff]
                  %1590 = vst [vmem:[%s932 + $0xa40] sm:$0xff] %v1589
                  %v1591 = vld [vmem:[%s931 + $0x1490] sm:$0xff]
                  %1592 = vst [vmem:[%s932 + $0xa48] sm:$0xff] %v1591
                  %v1593 = vld [vmem:[%s931 + $0x14a0] sm:$0xff]
                  %1594 = vst [vmem:[%s932 + $0xa50] sm:$0xff] %v1593
                  %v1595 = vld [vmem:[%s931 + $0x14b0] sm:$0xff]
                  %1596 = vst [vmem:[%s932 + $0xa58] sm:$0xff] %v1595
                  %v1597 = vld [vmem:[%s931 + $0x14c0] sm:$0xff]
                  %1598 = vst [vmem:[%s932 + $0xa60] sm:$0xff] %v1597
                  %v1599 = vld [vmem:[%s931 + $0x14d0] sm:$0xff]
                  %1600 = vst [vmem:[%s932 + $0xa68] sm:$0xff] %v1599
                  %v1601 = vld [vmem:[%s931 + $0x14e0] sm:$0xff]
                  %1602 = vst [vmem:[%s932 + $0xa70] sm:$0xff] %v1601
                  %v1603 = vld [vmem:[%s931 + $0x14f0] sm:$0xff]
                  %1604 = vst [vmem:[%s932 + $0xa78] sm:$0xff] %v1603
                  %v1605 = vld [vmem:[%s931 + $0x1500] sm:$0xff]
                  %1606 = vst [vmem:[%s932 + $0xa80] sm:$0xff] %v1605
                  %v1607 = vld [vmem:[%s931 + $0x1510] sm:$0xff]
                  %1608 = vst [vmem:[%s932 + $0xa88] sm:$0xff] %v1607
                  %v1609 = vld [vmem:[%s931 + $0x1520] sm:$0xff]
                  %1610 = vst [vmem:[%s932 + $0xa90] sm:$0xff] %v1609
                  %v1611 = vld [vmem:[%s931 + $0x1530] sm:$0xff]
                  %1612 = vst [vmem:[%s932 + $0xa98] sm:$0xff] %v1611
                  %v1613 = vld [vmem:[%s931 + $0x1540] sm:$0xff]
                  %1614 = vst [vmem:[%s932 + $0xaa0] sm:$0xff] %v1613
                  %v1615 = vld [vmem:[%s931 + $0x1550] sm:$0xff]
                  %1616 = vst [vmem:[%s932 + $0xaa8] sm:$0xff] %v1615
                  %v1617 = vld [vmem:[%s931 + $0x1560] sm:$0xff]
                  %1618 = vst [vmem:[%s932 + $0xab0] sm:$0xff] %v1617
                  %v1619 = vld [vmem:[%s931 + $0x1570] sm:$0xff]
                  %1620 = vst [vmem:[%s932 + $0xab8] sm:$0xff] %v1619
                  %v1621 = vld [vmem:[%s931 + $0x1580] sm:$0xff]
                  %1622 = vst [vmem:[%s932 + $0xac0] sm:$0xff] %v1621
                  %v1623 = vld [vmem:[%s931 + $0x1590] sm:$0xff]
                  %1624 = vst [vmem:[%s932 + $0xac8] sm:$0xff] %v1623
                  %v1625 = vld [vmem:[%s931 + $0x15a0] sm:$0xff]
                  %1626 = vst [vmem:[%s932 + $0xad0] sm:$0xff] %v1625
                  %v1627 = vld [vmem:[%s931 + $0x15b0] sm:$0xff]
                  %1628 = vst [vmem:[%s932 + $0xad8] sm:$0xff] %v1627
                  %v1629 = vld [vmem:[%s931 + $0x15c0] sm:$0xff]
                  %1630 = vst [vmem:[%s932 + $0xae0] sm:$0xff] %v1629
                  %v1631 = vld [vmem:[%s931 + $0x15d0] sm:$0xff]
                  %1632 = vst [vmem:[%s932 + $0xae8] sm:$0xff] %v1631
                  %v1633 = vld [vmem:[%s931 + $0x15e0] sm:$0xff]
                  %1634 = vst [vmem:[%s932 + $0xaf0] sm:$0xff] %v1633
                  %v1635 = vld [vmem:[%s931 + $0x15f0] sm:$0xff]
                  %1636 = vst [vmem:[%s932 + $0xaf8] sm:$0xff] %v1635
                  %v1637 = vld [vmem:[%s931 + $0x1600] sm:$0xff]
                  %1638 = vst [vmem:[%s932 + $0xb00] sm:$0xff] %v1637
                  %v1639 = vld [vmem:[%s931 + $0x1610] sm:$0xff]
                  %1640 = vst [vmem:[%s932 + $0xb08] sm:$0xff] %v1639
                  %v1641 = vld [vmem:[%s931 + $0x1620] sm:$0xff]
                  %1642 = vst [vmem:[%s932 + $0xb10] sm:$0xff] %v1641
                  %v1643 = vld [vmem:[%s931 + $0x1630] sm:$0xff]
                  %1644 = vst [vmem:[%s932 + $0xb18] sm:$0xff] %v1643
                  %v1645 = vld [vmem:[%s931 + $0x1640] sm:$0xff]
                  %1646 = vst [vmem:[%s932 + $0xb20] sm:$0xff] %v1645
                  %v1647 = vld [vmem:[%s931 + $0x1650] sm:$0xff]
                  %1648 = vst [vmem:[%s932 + $0xb28] sm:$0xff] %v1647
                  %v1649 = vld [vmem:[%s931 + $0x1660] sm:$0xff]
                  %1650 = vst [vmem:[%s932 + $0xb30] sm:$0xff] %v1649
                  %v1651 = vld [vmem:[%s931 + $0x1670] sm:$0xff]
                  %1652 = vst [vmem:[%s932 + $0xb38] sm:$0xff] %v1651
                  %v1653 = vld [vmem:[%s931 + $0x1680] sm:$0xff]
                  %1654 = vst [vmem:[%s932 + $0xb40] sm:$0xff] %v1653
                  %v1655 = vld [vmem:[%s931 + $0x1690] sm:$0xff]
                  %1656 = vst [vmem:[%s932 + $0xb48] sm:$0xff] %v1655
                  %v1657 = vld [vmem:[%s931 + $0x16a0] sm:$0xff]
                  %1658 = vst [vmem:[%s932 + $0xb50] sm:$0xff] %v1657
                  %v1659 = vld [vmem:[%s931 + $0x16b0] sm:$0xff]
                  %1660 = vst [vmem:[%s932 + $0xb58] sm:$0xff] %v1659
                  %v1661 = vld [vmem:[%s931 + $0x16c0] sm:$0xff]
                  %1662 = vst [vmem:[%s932 + $0xb60] sm:$0xff] %v1661
                  %v1663 = vld [vmem:[%s931 + $0x16d0] sm:$0xff]
                  %1664 = vst [vmem:[%s932 + $0xb68] sm:$0xff] %v1663
                  %v1665 = vld [vmem:[%s931 + $0x16e0] sm:$0xff]
                  %1666 = vst [vmem:[%s932 + $0xb70] sm:$0xff] %v1665
                  %v1667 = vld [vmem:[%s931 + $0x16f0] sm:$0xff]
                  %1668 = vst [vmem:[%s932 + $0xb78] sm:$0xff] %v1667
                  %v1669 = vld [vmem:[%s931 + $0x1700] sm:$0xff]
                  %1670 = vst [vmem:[%s932 + $0xb80] sm:$0xff] %v1669
                  %v1671 = vld [vmem:[%s931 + $0x1710] sm:$0xff]
                  %1672 = vst [vmem:[%s932 + $0xb88] sm:$0xff] %v1671
                  %v1673 = vld [vmem:[%s931 + $0x1720] sm:$0xff]
                  %1674 = vst [vmem:[%s932 + $0xb90] sm:$0xff] %v1673
                  %v1675 = vld [vmem:[%s931 + $0x1730] sm:$0xff]
                  %1676 = vst [vmem:[%s932 + $0xb98] sm:$0xff] %v1675
                  %v1677 = vld [vmem:[%s931 + $0x1740] sm:$0xff]
                  %1678 = vst [vmem:[%s932 + $0xba0] sm:$0xff] %v1677
                  %v1679 = vld [vmem:[%s931 + $0x1750] sm:$0xff]
                  %1680 = vst [vmem:[%s932 + $0xba8] sm:$0xff] %v1679
                  %v1681 = vld [vmem:[%s931 + $0x1760] sm:$0xff]
                  %1682 = vst [vmem:[%s932 + $0xbb0] sm:$0xff] %v1681
                  %v1683 = vld [vmem:[%s931 + $0x1770] sm:$0xff]
                  %1684 = vst [vmem:[%s932 + $0xbb8] sm:$0xff] %v1683
                  %v1685 = vld [vmem:[%s931 + $0x1780] sm:$0xff]
                  %1686 = vst [vmem:[%s932 + $0xbc0] sm:$0xff] %v1685
                  %v1687 = vld [vmem:[%s931 + $0x1790] sm:$0xff]
                  %1688 = vst [vmem:[%s932 + $0xbc8] sm:$0xff] %v1687
                  %v1689 = vld [vmem:[%s931 + $0x17a0] sm:$0xff]
                  %1690 = vst [vmem:[%s932 + $0xbd0] sm:$0xff] %v1689
                  %v1691 = vld [vmem:[%s931 + $0x17b0] sm:$0xff]
                  %1692 = vst [vmem:[%s932 + $0xbd8] sm:$0xff] %v1691
                  %v1693 = vld [vmem:[%s931 + $0x17c0] sm:$0xff]
                  %1694 = vst [vmem:[%s932 + $0xbe0] sm:$0xff] %v1693
                  %v1695 = vld [vmem:[%s931 + $0x17d0] sm:$0xff]
                  %1696 = vst [vmem:[%s932 + $0xbe8] sm:$0xff] %v1695
                  %v1697 = vld [vmem:[%s931 + $0x17e0] sm:$0xff]
                  %1698 = vst [vmem:[%s932 + $0xbf0] sm:$0xff] %v1697
                  %v1699 = vld [vmem:[%s931 + $0x17f0] sm:$0xff]
                  %1700 = vst [vmem:[%s932 + $0xbf8] sm:$0xff] %v1699
                $region52: #{_encoder_convs.4} parent=46 // loop_footer
                  %s930 = sadd.s32 1, %s926
                $region53: #{_encoder_convs.4} parent=46 // loop_footer_branch
                  %925 = sbr.rel target = $region49
                $region54: #{_encoder_convs.4} parent=46 // loop_exit
                  _
              $region47: #{_encoder_convs.4} parent=31 // pred_fallthru
                _
              // Predicated region
              $region55: #{_encoder_convs.4} parent=31 // pred_check
                _
              $region56: #{_encoder_convs.4} parent=31 // pred_check_branch
                %1702 = sbr.rel target = $region58
              $region57: #{_encoder_convs.4} parent=31 // pred_region
                _
              $region58: #{_encoder_convs.4} parent=31 // pred_fallthru
                _
            $region32: #{_encoder_convs.4} parent=27 // pred_fallthru
              _
            // Predicated region
            $region33: #{_encoder_convs.4} parent=27 // pred_check
              _
            $region34: #{_encoder_convs.4} parent=27 // pred_check_branch
              %145 = sbr.rel target = $region36
            $region35: #{_encoder_convs.4} parent=27 // pred_region
              loop: start=0, step=1, limit=1
              $region37: #{_encoder_convs.4} parent=35 // loop_pre_header
                _
              $region38: #{_encoder_convs.4} parent=35 // loop_header
                %s148 = sphi 0, %s152
                %p149 = scmp.ge.s32.totalorder %s148, 1
                %s153 = sphi %s139, %s139
                %s154 = sphi %s136, %s136
              $region39: #{_encoder_convs.4} parent=35 // loop_header_branch
                %151 = sbr.rel (%p149) target = $region43
              $region40: #{_encoder_convs.4} parent=35 // loop_body
                %v155 = vld [vmem:[%s153] sm:$0xff]
                %156 = vst [vmem:[%s154] sm:$0xff] %v155
                %v157 = vld [vmem:[%s153 + $0x10] sm:$0xff]
                %158 = vst [vmem:[%s154 + $0x8] sm:$0xff] %v157
                %v159 = vld [vmem:[%s153 + $0x20] sm:$0xff]
                %160 = vst [vmem:[%s154 + $0x10] sm:$0xff] %v159
                %v161 = vld [vmem:[%s153 + $0x30] sm:$0xff]
                %162 = vst [vmem:[%s154 + $0x18] sm:$0xff] %v161
                %v163 = vld [vmem:[%s153 + $0x40] sm:$0xff]
                %164 = vst [vmem:[%s154 + $0x20] sm:$0xff] %v163
                %v165 = vld [vmem:[%s153 + $0x50] sm:$0xff]
                %166 = vst [vmem:[%s154 + $0x28] sm:$0xff] %v165
                %v167 = vld [vmem:[%s153 + $0x60] sm:$0xff]
                %168 = vst [vmem:[%s154 + $0x30] sm:$0xff] %v167
                %v169 = vld [vmem:[%s153 + $0x70] sm:$0xff]
                %170 = vst [vmem:[%s154 + $0x38] sm:$0xff] %v169
                %v171 = vld [vmem:[%s153 + $0x80] sm:$0xff]
                %172 = vst [vmem:[%s154 + $0x40] sm:$0xff] %v171
                %v173 = vld [vmem:[%s153 + $0x90] sm:$0xff]
                %174 = vst [vmem:[%s154 + $0x48] sm:$0xff] %v173
                %v175 = vld [vmem:[%s153 + $0xa0] sm:$0xff]
                %176 = vst [vmem:[%s154 + $0x50] sm:$0xff] %v175
                %v177 = vld [vmem:[%s153 + $0xb0] sm:$0xff]
                %178 = vst [vmem:[%s154 + $0x58] sm:$0xff] %v177
                %v179 = vld [vmem:[%s153 + $0xc0] sm:$0xff]
                %180 = vst [vmem:[%s154 + $0x60] sm:$0xff] %v179
                %v181 = vld [vmem:[%s153 + $0xd0] sm:$0xff]
                %182 = vst [vmem:[%s154 + $0x68] sm:$0xff] %v181
                %v183 = vld [vmem:[%s153 + $0xe0] sm:$0xff]
                %184 = vst [vmem:[%s154 + $0x70] sm:$0xff] %v183
                %v185 = vld [vmem:[%s153 + $0xf0] sm:$0xff]
                %186 = vst [vmem:[%s154 + $0x78] sm:$0xff] %v185
                %v187 = vld [vmem:[%s153 + $0x100] sm:$0xff]
                %188 = vst [vmem:[%s154 + $0x80] sm:$0xff] %v187
                %v189 = vld [vmem:[%s153 + $0x110] sm:$0xff]
                %190 = vst [vmem:[%s154 + $0x88] sm:$0xff] %v189
                %v191 = vld [vmem:[%s153 + $0x120] sm:$0xff]
                %192 = vst [vmem:[%s154 + $0x90] sm:$0xff] %v191
                %v193 = vld [vmem:[%s153 + $0x130] sm:$0xff]
                %194 = vst [vmem:[%s154 + $0x98] sm:$0xff] %v193
                %v195 = vld [vmem:[%s153 + $0x140] sm:$0xff]
                %196 = vst [vmem:[%s154 + $0xa0] sm:$0xff] %v195
                %v197 = vld [vmem:[%s153 + $0x150] sm:$0xff]
                %198 = vst [vmem:[%s154 + $0xa8] sm:$0xff] %v197
                %v199 = vld [vmem:[%s153 + $0x160] sm:$0xff]
                %200 = vst [vmem:[%s154 + $0xb0] sm:$0xff] %v199
                %v201 = vld [vmem:[%s153 + $0x170] sm:$0xff]
                %202 = vst [vmem:[%s154 + $0xb8] sm:$0xff] %v201
                %v203 = vld [vmem:[%s153 + $0x180] sm:$0xff]
                %204 = vst [vmem:[%s154 + $0xc0] sm:$0xff] %v203
                %v205 = vld [vmem:[%s153 + $0x190] sm:$0xff]
                %206 = vst [vmem:[%s154 + $0xc8] sm:$0xff] %v205
                %v207 = vld [vmem:[%s153 + $0x1a0] sm:$0xff]
                %208 = vst [vmem:[%s154 + $0xd0] sm:$0xff] %v207
                %v209 = vld [vmem:[%s153 + $0x1b0] sm:$0xff]
                %210 = vst [vmem:[%s154 + $0xd8] sm:$0xff] %v209
                %v211 = vld [vmem:[%s153 + $0x1c0] sm:$0xff]
                %212 = vst [vmem:[%s154 + $0xe0] sm:$0xff] %v211
                %v213 = vld [vmem:[%s153 + $0x1d0] sm:$0xff]
                %214 = vst [vmem:[%s154 + $0xe8] sm:$0xff] %v213
                %v215 = vld [vmem:[%s153 + $0x1e0] sm:$0xff]
                %216 = vst [vmem:[%s154 + $0xf0] sm:$0xff] %v215
                %v217 = vld [vmem:[%s153 + $0x1f0] sm:$0xff]
                %218 = vst [vmem:[%s154 + $0xf8] sm:$0xff] %v217
                %v219 = vld [vmem:[%s153 + $0x200] sm:$0xff]
                %220 = vst [vmem:[%s154 + $0x100] sm:$0xff] %v219
                %v221 = vld [vmem:[%s153 + $0x210] sm:$0xff]
                %222 = vst [vmem:[%s154 + $0x108] sm:$0xff] %v221
                %v223 = vld [vmem:[%s153 + $0x220] sm:$0xff]
                %224 = vst [vmem:[%s154 + $0x110] sm:$0xff] %v223
                %v225 = vld [vmem:[%s153 + $0x230] sm:$0xff]
                %226 = vst [vmem:[%s154 + $0x118] sm:$0xff] %v225
                %v227 = vld [vmem:[%s153 + $0x240] sm:$0xff]
                %228 = vst [vmem:[%s154 + $0x120] sm:$0xff] %v227
                %v229 = vld [vmem:[%s153 + $0x250] sm:$0xff]
                %230 = vst [vmem:[%s154 + $0x128] sm:$0xff] %v229
                %v231 = vld [vmem:[%s153 + $0x260] sm:$0xff]
                %232 = vst [vmem:[%s154 + $0x130] sm:$0xff] %v231
                %v233 = vld [vmem:[%s153 + $0x270] sm:$0xff]
                %234 = vst [vmem:[%s154 + $0x138] sm:$0xff] %v233
                %v235 = vld [vmem:[%s153 + $0x280] sm:$0xff]
                %236 = vst [vmem:[%s154 + $0x140] sm:$0xff] %v235
                %v237 = vld [vmem:[%s153 + $0x290] sm:$0xff]
                %238 = vst [vmem:[%s154 + $0x148] sm:$0xff] %v237
                %v239 = vld [vmem:[%s153 + $0x2a0] sm:$0xff]
                %240 = vst [vmem:[%s154 + $0x150] sm:$0xff] %v239
                %v241 = vld [vmem:[%s153 + $0x2b0] sm:$0xff]
                %242 = vst [vmem:[%s154 + $0x158] sm:$0xff] %v241
                %v243 = vld [vmem:[%s153 + $0x2c0] sm:$0xff]
                %244 = vst [vmem:[%s154 + $0x160] sm:$0xff] %v243
                %v245 = vld [vmem:[%s153 + $0x2d0] sm:$0xff]
                %246 = vst [vmem:[%s154 + $0x168] sm:$0xff] %v245
                %v247 = vld [vmem:[%s153 + $0x2e0] sm:$0xff]
                %248 = vst [vmem:[%s154 + $0x170] sm:$0xff] %v247
                %v249 = vld [vmem:[%s153 + $0x2f0] sm:$0xff]
                %250 = vst [vmem:[%s154 + $0x178] sm:$0xff] %v249
                %v251 = vld [vmem:[%s153 + $0x300] sm:$0xff]
                %252 = vst [vmem:[%s154 + $0x180] sm:$0xff] %v251
                %v253 = vld [vmem:[%s153 + $0x310] sm:$0xff]
                %254 = vst [vmem:[%s154 + $0x188] sm:$0xff] %v253
                %v255 = vld [vmem:[%s153 + $0x320] sm:$0xff]
                %256 = vst [vmem:[%s154 + $0x190] sm:$0xff] %v255
                %v257 = vld [vmem:[%s153 + $0x330] sm:$0xff]
                %258 = vst [vmem:[%s154 + $0x198] sm:$0xff] %v257
                %v259 = vld [vmem:[%s153 + $0x340] sm:$0xff]
                %260 = vst [vmem:[%s154 + $0x1a0] sm:$0xff] %v259
                %v261 = vld [vmem:[%s153 + $0x350] sm:$0xff]
                %262 = vst [vmem:[%s154 + $0x1a8] sm:$0xff] %v261
                %v263 = vld [vmem:[%s153 + $0x360] sm:$0xff]
                %264 = vst [vmem:[%s154 + $0x1b0] sm:$0xff] %v263
                %v265 = vld [vmem:[%s153 + $0x370] sm:$0xff]
                %266 = vst [vmem:[%s154 + $0x1b8] sm:$0xff] %v265
                %v267 = vld [vmem:[%s153 + $0x380] sm:$0xff]
                %268 = vst [vmem:[%s154 + $0x1c0] sm:$0xff] %v267
                %v269 = vld [vmem:[%s153 + $0x390] sm:$0xff]
                %270 = vst [vmem:[%s154 + $0x1c8] sm:$0xff] %v269
                %v271 = vld [vmem:[%s153 + $0x3a0] sm:$0xff]
                %272 = vst [vmem:[%s154 + $0x1d0] sm:$0xff] %v271
                %v273 = vld [vmem:[%s153 + $0x3b0] sm:$0xff]
                %274 = vst [vmem:[%s154 + $0x1d8] sm:$0xff] %v273
                %v275 = vld [vmem:[%s153 + $0x3c0] sm:$0xff]
                %276 = vst [vmem:[%s154 + $0x1e0] sm:$0xff] %v275
                %v277 = vld [vmem:[%s153 + $0x3d0] sm:$0xff]
                %278 = vst [vmem:[%s154 + $0x1e8] sm:$0xff] %v277
                %v279 = vld [vmem:[%s153 + $0x3e0] sm:$0xff]
                %280 = vst [vmem:[%s154 + $0x1f0] sm:$0xff] %v279
                %v281 = vld [vmem:[%s153 + $0x3f0] sm:$0xff]
                %282 = vst [vmem:[%s154 + $0x1f8] sm:$0xff] %v281
                %v283 = vld [vmem:[%s153 + $0x400] sm:$0xff]
                %284 = vst [vmem:[%s154 + $0x200] sm:$0xff] %v283
                %v285 = vld [vmem:[%s153 + $0x410] sm:$0xff]
                %286 = vst [vmem:[%s154 + $0x208] sm:$0xff] %v285
                %v287 = vld [vmem:[%s153 + $0x420] sm:$0xff]
                %288 = vst [vmem:[%s154 + $0x210] sm:$0xff] %v287
                %v289 = vld [vmem:[%s153 + $0x430] sm:$0xff]
                %290 = vst [vmem:[%s154 + $0x218] sm:$0xff] %v289
                %v291 = vld [vmem:[%s153 + $0x440] sm:$0xff]
                %292 = vst [vmem:[%s154 + $0x220] sm:$0xff] %v291
                %v293 = vld [vmem:[%s153 + $0x450] sm:$0xff]
                %294 = vst [vmem:[%s154 + $0x228] sm:$0xff] %v293
                %v295 = vld [vmem:[%s153 + $0x460] sm:$0xff]
                %296 = vst [vmem:[%s154 + $0x230] sm:$0xff] %v295
                %v297 = vld [vmem:[%s153 + $0x470] sm:$0xff]
                %298 = vst [vmem:[%s154 + $0x238] sm:$0xff] %v297
                %v299 = vld [vmem:[%s153 + $0x480] sm:$0xff]
                %300 = vst [vmem:[%s154 + $0x240] sm:$0xff] %v299
                %v301 = vld [vmem:[%s153 + $0x490] sm:$0xff]
                %302 = vst [vmem:[%s154 + $0x248] sm:$0xff] %v301
                %v303 = vld [vmem:[%s153 + $0x4a0] sm:$0xff]
                %304 = vst [vmem:[%s154 + $0x250] sm:$0xff] %v303
                %v305 = vld [vmem:[%s153 + $0x4b0] sm:$0xff]
                %306 = vst [vmem:[%s154 + $0x258] sm:$0xff] %v305
                %v307 = vld [vmem:[%s153 + $0x4c0] sm:$0xff]
                %308 = vst [vmem:[%s154 + $0x260] sm:$0xff] %v307
                %v309 = vld [vmem:[%s153 + $0x4d0] sm:$0xff]
                %310 = vst [vmem:[%s154 + $0x268] sm:$0xff] %v309
                %v311 = vld [vmem:[%s153 + $0x4e0] sm:$0xff]
                %312 = vst [vmem:[%s154 + $0x270] sm:$0xff] %v311
                %v313 = vld [vmem:[%s153 + $0x4f0] sm:$0xff]
                %314 = vst [vmem:[%s154 + $0x278] sm:$0xff] %v313
                %v315 = vld [vmem:[%s153 + $0x500] sm:$0xff]
                %316 = vst [vmem:[%s154 + $0x280] sm:$0xff] %v315
                %v317 = vld [vmem:[%s153 + $0x510] sm:$0xff]
                %318 = vst [vmem:[%s154 + $0x288] sm:$0xff] %v317
                %v319 = vld [vmem:[%s153 + $0x520] sm:$0xff]
                %320 = vst [vmem:[%s154 + $0x290] sm:$0xff] %v319
                %v321 = vld [vmem:[%s153 + $0x530] sm:$0xff]
                %322 = vst [vmem:[%s154 + $0x298] sm:$0xff] %v321
                %v323 = vld [vmem:[%s153 + $0x540] sm:$0xff]
                %324 = vst [vmem:[%s154 + $0x2a0] sm:$0xff] %v323
                %v325 = vld [vmem:[%s153 + $0x550] sm:$0xff]
                %326 = vst [vmem:[%s154 + $0x2a8] sm:$0xff] %v325
                %v327 = vld [vmem:[%s153 + $0x560] sm:$0xff]
                %328 = vst [vmem:[%s154 + $0x2b0] sm:$0xff] %v327
                %v329 = vld [vmem:[%s153 + $0x570] sm:$0xff]
                %330 = vst [vmem:[%s154 + $0x2b8] sm:$0xff] %v329
                %v331 = vld [vmem:[%s153 + $0x580] sm:$0xff]
                %332 = vst [vmem:[%s154 + $0x2c0] sm:$0xff] %v331
                %v333 = vld [vmem:[%s153 + $0x590] sm:$0xff]
                %334 = vst [vmem:[%s154 + $0x2c8] sm:$0xff] %v333
                %v335 = vld [vmem:[%s153 + $0x5a0] sm:$0xff]
                %336 = vst [vmem:[%s154 + $0x2d0] sm:$0xff] %v335
                %v337 = vld [vmem:[%s153 + $0x5b0] sm:$0xff]
                %338 = vst [vmem:[%s154 + $0x2d8] sm:$0xff] %v337
                %v339 = vld [vmem:[%s153 + $0x5c0] sm:$0xff]
                %340 = vst [vmem:[%s154 + $0x2e0] sm:$0xff] %v339
                %v341 = vld [vmem:[%s153 + $0x5d0] sm:$0xff]
                %342 = vst [vmem:[%s154 + $0x2e8] sm:$0xff] %v341
                %v343 = vld [vmem:[%s153 + $0x5e0] sm:$0xff]
                %344 = vst [vmem:[%s154 + $0x2f0] sm:$0xff] %v343
                %v345 = vld [vmem:[%s153 + $0x5f0] sm:$0xff]
                %346 = vst [vmem:[%s154 + $0x2f8] sm:$0xff] %v345
                %v347 = vld [vmem:[%s153 + $0x600] sm:$0xff]
                %348 = vst [vmem:[%s154 + $0x300] sm:$0xff] %v347
                %v349 = vld [vmem:[%s153 + $0x610] sm:$0xff]
                %350 = vst [vmem:[%s154 + $0x308] sm:$0xff] %v349
                %v351 = vld [vmem:[%s153 + $0x620] sm:$0xff]
                %352 = vst [vmem:[%s154 + $0x310] sm:$0xff] %v351
                %v353 = vld [vmem:[%s153 + $0x630] sm:$0xff]
                %354 = vst [vmem:[%s154 + $0x318] sm:$0xff] %v353
                %v355 = vld [vmem:[%s153 + $0x640] sm:$0xff]
                %356 = vst [vmem:[%s154 + $0x320] sm:$0xff] %v355
                %v357 = vld [vmem:[%s153 + $0x650] sm:$0xff]
                %358 = vst [vmem:[%s154 + $0x328] sm:$0xff] %v357
                %v359 = vld [vmem:[%s153 + $0x660] sm:$0xff]
                %360 = vst [vmem:[%s154 + $0x330] sm:$0xff] %v359
                %v361 = vld [vmem:[%s153 + $0x670] sm:$0xff]
                %362 = vst [vmem:[%s154 + $0x338] sm:$0xff] %v361
                %v363 = vld [vmem:[%s153 + $0x680] sm:$0xff]
                %364 = vst [vmem:[%s154 + $0x340] sm:$0xff] %v363
                %v365 = vld [vmem:[%s153 + $0x690] sm:$0xff]
                %366 = vst [vmem:[%s154 + $0x348] sm:$0xff] %v365
                %v367 = vld [vmem:[%s153 + $0x6a0] sm:$0xff]
                %368 = vst [vmem:[%s154 + $0x350] sm:$0xff] %v367
                %v369 = vld [vmem:[%s153 + $0x6b0] sm:$0xff]
                %370 = vst [vmem:[%s154 + $0x358] sm:$0xff] %v369
                %v371 = vld [vmem:[%s153 + $0x6c0] sm:$0xff]
                %372 = vst [vmem:[%s154 + $0x360] sm:$0xff] %v371
                %v373 = vld [vmem:[%s153 + $0x6d0] sm:$0xff]
                %374 = vst [vmem:[%s154 + $0x368] sm:$0xff] %v373
                %v375 = vld [vmem:[%s153 + $0x6e0] sm:$0xff]
                %376 = vst [vmem:[%s154 + $0x370] sm:$0xff] %v375
                %v377 = vld [vmem:[%s153 + $0x6f0] sm:$0xff]
                %378 = vst [vmem:[%s154 + $0x378] sm:$0xff] %v377
                %v379 = vld [vmem:[%s153 + $0x700] sm:$0xff]
                %380 = vst [vmem:[%s154 + $0x380] sm:$0xff] %v379
                %v381 = vld [vmem:[%s153 + $0x710] sm:$0xff]
                %382 = vst [vmem:[%s154 + $0x388] sm:$0xff] %v381
                %v383 = vld [vmem:[%s153 + $0x720] sm:$0xff]
                %384 = vst [vmem:[%s154 + $0x390] sm:$0xff] %v383
                %v385 = vld [vmem:[%s153 + $0x730] sm:$0xff]
                %386 = vst [vmem:[%s154 + $0x398] sm:$0xff] %v385
                %v387 = vld [vmem:[%s153 + $0x740] sm:$0xff]
                %388 = vst [vmem:[%s154 + $0x3a0] sm:$0xff] %v387
                %v389 = vld [vmem:[%s153 + $0x750] sm:$0xff]
                %390 = vst [vmem:[%s154 + $0x3a8] sm:$0xff] %v389
                %v391 = vld [vmem:[%s153 + $0x760] sm:$0xff]
                %392 = vst [vmem:[%s154 + $0x3b0] sm:$0xff] %v391
                %v393 = vld [vmem:[%s153 + $0x770] sm:$0xff]
                %394 = vst [vmem:[%s154 + $0x3b8] sm:$0xff] %v393
                %v395 = vld [vmem:[%s153 + $0x780] sm:$0xff]
                %396 = vst [vmem:[%s154 + $0x3c0] sm:$0xff] %v395
                %v397 = vld [vmem:[%s153 + $0x790] sm:$0xff]
                %398 = vst [vmem:[%s154 + $0x3c8] sm:$0xff] %v397
                %v399 = vld [vmem:[%s153 + $0x7a0] sm:$0xff]
                %400 = vst [vmem:[%s154 + $0x3d0] sm:$0xff] %v399
                %v401 = vld [vmem:[%s153 + $0x7b0] sm:$0xff]
                %402 = vst [vmem:[%s154 + $0x3d8] sm:$0xff] %v401
                %v403 = vld [vmem:[%s153 + $0x7c0] sm:$0xff]
                %404 = vst [vmem:[%s154 + $0x3e0] sm:$0xff] %v403
                %v405 = vld [vmem:[%s153 + $0x7d0] sm:$0xff]
                %406 = vst [vmem:[%s154 + $0x3e8] sm:$0xff] %v405
                %v407 = vld [vmem:[%s153 + $0x7e0] sm:$0xff]
                %408 = vst [vmem:[%s154 + $0x3f0] sm:$0xff] %v407
                %v409 = vld [vmem:[%s153 + $0x7f0] sm:$0xff]
                %410 = vst [vmem:[%s154 + $0x3f8] sm:$0xff] %v409
                %v411 = vld [vmem:[%s153 + $0x800] sm:$0xff]
                %412 = vst [vmem:[%s154 + $0x400] sm:$0xff] %v411
                %v413 = vld [vmem:[%s153 + $0x810] sm:$0xff]
                %414 = vst [vmem:[%s154 + $0x408] sm:$0xff] %v413
                %v415 = vld [vmem:[%s153 + $0x820] sm:$0xff]
                %416 = vst [vmem:[%s154 + $0x410] sm:$0xff] %v415
                %v417 = vld [vmem:[%s153 + $0x830] sm:$0xff]
                %418 = vst [vmem:[%s154 + $0x418] sm:$0xff] %v417
                %v419 = vld [vmem:[%s153 + $0x840] sm:$0xff]
                %420 = vst [vmem:[%s154 + $0x420] sm:$0xff] %v419
                %v421 = vld [vmem:[%s153 + $0x850] sm:$0xff]
                %422 = vst [vmem:[%s154 + $0x428] sm:$0xff] %v421
                %v423 = vld [vmem:[%s153 + $0x860] sm:$0xff]
                %424 = vst [vmem:[%s154 + $0x430] sm:$0xff] %v423
                %v425 = vld [vmem:[%s153 + $0x870] sm:$0xff]
                %426 = vst [vmem:[%s154 + $0x438] sm:$0xff] %v425
                %v427 = vld [vmem:[%s153 + $0x880] sm:$0xff]
                %428 = vst [vmem:[%s154 + $0x440] sm:$0xff] %v427
                %v429 = vld [vmem:[%s153 + $0x890] sm:$0xff]
                %430 = vst [vmem:[%s154 + $0x448] sm:$0xff] %v429
                %v431 = vld [vmem:[%s153 + $0x8a0] sm:$0xff]
                %432 = vst [vmem:[%s154 + $0x450] sm:$0xff] %v431
                %v433 = vld [vmem:[%s153 + $0x8b0] sm:$0xff]
                %434 = vst [vmem:[%s154 + $0x458] sm:$0xff] %v433
                %v435 = vld [vmem:[%s153 + $0x8c0] sm:$0xff]
                %436 = vst [vmem:[%s154 + $0x460] sm:$0xff] %v435
                %v437 = vld [vmem:[%s153 + $0x8d0] sm:$0xff]
                %438 = vst [vmem:[%s154 + $0x468] sm:$0xff] %v437
                %v439 = vld [vmem:[%s153 + $0x8e0] sm:$0xff]
                %440 = vst [vmem:[%s154 + $0x470] sm:$0xff] %v439
                %v441 = vld [vmem:[%s153 + $0x8f0] sm:$0xff]
                %442 = vst [vmem:[%s154 + $0x478] sm:$0xff] %v441
                %v443 = vld [vmem:[%s153 + $0x900] sm:$0xff]
                %444 = vst [vmem:[%s154 + $0x480] sm:$0xff] %v443
                %v445 = vld [vmem:[%s153 + $0x910] sm:$0xff]
                %446 = vst [vmem:[%s154 + $0x488] sm:$0xff] %v445
                %v447 = vld [vmem:[%s153 + $0x920] sm:$0xff]
                %448 = vst [vmem:[%s154 + $0x490] sm:$0xff] %v447
                %v449 = vld [vmem:[%s153 + $0x930] sm:$0xff]
                %450 = vst [vmem:[%s154 + $0x498] sm:$0xff] %v449
                %v451 = vld [vmem:[%s153 + $0x940] sm:$0xff]
                %452 = vst [vmem:[%s154 + $0x4a0] sm:$0xff] %v451
                %v453 = vld [vmem:[%s153 + $0x950] sm:$0xff]
                %454 = vst [vmem:[%s154 + $0x4a8] sm:$0xff] %v453
                %v455 = vld [vmem:[%s153 + $0x960] sm:$0xff]
                %456 = vst [vmem:[%s154 + $0x4b0] sm:$0xff] %v455
                %v457 = vld [vmem:[%s153 + $0x970] sm:$0xff]
                %458 = vst [vmem:[%s154 + $0x4b8] sm:$0xff] %v457
                %v459 = vld [vmem:[%s153 + $0x980] sm:$0xff]
                %460 = vst [vmem:[%s154 + $0x4c0] sm:$0xff] %v459
                %v461 = vld [vmem:[%s153 + $0x990] sm:$0xff]
                %462 = vst [vmem:[%s154 + $0x4c8] sm:$0xff] %v461
                %v463 = vld [vmem:[%s153 + $0x9a0] sm:$0xff]
                %464 = vst [vmem:[%s154 + $0x4d0] sm:$0xff] %v463
                %v465 = vld [vmem:[%s153 + $0x9b0] sm:$0xff]
                %466 = vst [vmem:[%s154 + $0x4d8] sm:$0xff] %v465
                %v467 = vld [vmem:[%s153 + $0x9c0] sm:$0xff]
                %468 = vst [vmem:[%s154 + $0x4e0] sm:$0xff] %v467
                %v469 = vld [vmem:[%s153 + $0x9d0] sm:$0xff]
                %470 = vst [vmem:[%s154 + $0x4e8] sm:$0xff] %v469
                %v471 = vld [vmem:[%s153 + $0x9e0] sm:$0xff]
                %472 = vst [vmem:[%s154 + $0x4f0] sm:$0xff] %v471
                %v473 = vld [vmem:[%s153 + $0x9f0] sm:$0xff]
                %474 = vst [vmem:[%s154 + $0x4f8] sm:$0xff] %v473
                %v475 = vld [vmem:[%s153 + $0xa00] sm:$0xff]
                %476 = vst [vmem:[%s154 + $0x500] sm:$0xff] %v475
                %v477 = vld [vmem:[%s153 + $0xa10] sm:$0xff]
                %478 = vst [vmem:[%s154 + $0x508] sm:$0xff] %v477
                %v479 = vld [vmem:[%s153 + $0xa20] sm:$0xff]
                %480 = vst [vmem:[%s154 + $0x510] sm:$0xff] %v479
                %v481 = vld [vmem:[%s153 + $0xa30] sm:$0xff]
                %482 = vst [vmem:[%s154 + $0x518] sm:$0xff] %v481
                %v483 = vld [vmem:[%s153 + $0xa40] sm:$0xff]
                %484 = vst [vmem:[%s154 + $0x520] sm:$0xff] %v483
                %v485 = vld [vmem:[%s153 + $0xa50] sm:$0xff]
                %486 = vst [vmem:[%s154 + $0x528] sm:$0xff] %v485
                %v487 = vld [vmem:[%s153 + $0xa60] sm:$0xff]
                %488 = vst [vmem:[%s154 + $0x530] sm:$0xff] %v487
                %v489 = vld [vmem:[%s153 + $0xa70] sm:$0xff]
                %490 = vst [vmem:[%s154 + $0x538] sm:$0xff] %v489
                %v491 = vld [vmem:[%s153 + $0xa80] sm:$0xff]
                %492 = vst [vmem:[%s154 + $0x540] sm:$0xff] %v491
                %v493 = vld [vmem:[%s153 + $0xa90] sm:$0xff]
                %494 = vst [vmem:[%s154 + $0x548] sm:$0xff] %v493
                %v495 = vld [vmem:[%s153 + $0xaa0] sm:$0xff]
                %496 = vst [vmem:[%s154 + $0x550] sm:$0xff] %v495
                %v497 = vld [vmem:[%s153 + $0xab0] sm:$0xff]
                %498 = vst [vmem:[%s154 + $0x558] sm:$0xff] %v497
                %v499 = vld [vmem:[%s153 + $0xac0] sm:$0xff]
                %500 = vst [vmem:[%s154 + $0x560] sm:$0xff] %v499
                %v501 = vld [vmem:[%s153 + $0xad0] sm:$0xff]
                %502 = vst [vmem:[%s154 + $0x568] sm:$0xff] %v501
                %v503 = vld [vmem:[%s153 + $0xae0] sm:$0xff]
                %504 = vst [vmem:[%s154 + $0x570] sm:$0xff] %v503
                %v505 = vld [vmem:[%s153 + $0xaf0] sm:$0xff]
                %506 = vst [vmem:[%s154 + $0x578] sm:$0xff] %v505
                %v507 = vld [vmem:[%s153 + $0xb00] sm:$0xff]
                %508 = vst [vmem:[%s154 + $0x580] sm:$0xff] %v507
                %v509 = vld [vmem:[%s153 + $0xb10] sm:$0xff]
                %510 = vst [vmem:[%s154 + $0x588] sm:$0xff] %v509
                %v511 = vld [vmem:[%s153 + $0xb20] sm:$0xff]
                %512 = vst [vmem:[%s154 + $0x590] sm:$0xff] %v511
                %v513 = vld [vmem:[%s153 + $0xb30] sm:$0xff]
                %514 = vst [vmem:[%s154 + $0x598] sm:$0xff] %v513
                %v515 = vld [vmem:[%s153 + $0xb40] sm:$0xff]
                %516 = vst [vmem:[%s154 + $0x5a0] sm:$0xff] %v515
                %v517 = vld [vmem:[%s153 + $0xb50] sm:$0xff]
                %518 = vst [vmem:[%s154 + $0x5a8] sm:$0xff] %v517
                %v519 = vld [vmem:[%s153 + $0xb60] sm:$0xff]
                %520 = vst [vmem:[%s154 + $0x5b0] sm:$0xff] %v519
                %v521 = vld [vmem:[%s153 + $0xb70] sm:$0xff]
                %522 = vst [vmem:[%s154 + $0x5b8] sm:$0xff] %v521
                %v523 = vld [vmem:[%s153 + $0xb80] sm:$0xff]
                %524 = vst [vmem:[%s154 + $0x5c0] sm:$0xff] %v523
                %v525 = vld [vmem:[%s153 + $0xb90] sm:$0xff]
                %526 = vst [vmem:[%s154 + $0x5c8] sm:$0xff] %v525
                %v527 = vld [vmem:[%s153 + $0xba0] sm:$0xff]
                %528 = vst [vmem:[%s154 + $0x5d0] sm:$0xff] %v527
                %v529 = vld [vmem:[%s153 + $0xbb0] sm:$0xff]
                %530 = vst [vmem:[%s154 + $0x5d8] sm:$0xff] %v529
                %v531 = vld [vmem:[%s153 + $0xbc0] sm:$0xff]
                %532 = vst [vmem:[%s154 + $0x5e0] sm:$0xff] %v531
                %v533 = vld [vmem:[%s153 + $0xbd0] sm:$0xff]
                %534 = vst [vmem:[%s154 + $0x5e8] sm:$0xff] %v533
                %v535 = vld [vmem:[%s153 + $0xbe0] sm:$0xff]
                %536 = vst [vmem:[%s154 + $0x5f0] sm:$0xff] %v535
                %v537 = vld [vmem:[%s153 + $0xbf0] sm:$0xff]
                %538 = vst [vmem:[%s154 + $0x5f8] sm:$0xff] %v537
                %v539 = vld [vmem:[%s153 + $0xc00] sm:$0xff]
                %540 = vst [vmem:[%s154 + $0x600] sm:$0xff] %v539
                %v541 = vld [vmem:[%s153 + $0xc10] sm:$0xff]
                %542 = vst [vmem:[%s154 + $0x608] sm:$0xff] %v541
                %v543 = vld [vmem:[%s153 + $0xc20] sm:$0xff]
                %544 = vst [vmem:[%s154 + $0x610] sm:$0xff] %v543
                %v545 = vld [vmem:[%s153 + $0xc30] sm:$0xff]
                %546 = vst [vmem:[%s154 + $0x618] sm:$0xff] %v545
                %v547 = vld [vmem:[%s153 + $0xc40] sm:$0xff]
                %548 = vst [vmem:[%s154 + $0x620] sm:$0xff] %v547
                %v549 = vld [vmem:[%s153 + $0xc50] sm:$0xff]
                %550 = vst [vmem:[%s154 + $0x628] sm:$0xff] %v549
                %v551 = vld [vmem:[%s153 + $0xc60] sm:$0xff]
                %552 = vst [vmem:[%s154 + $0x630] sm:$0xff] %v551
                %v553 = vld [vmem:[%s153 + $0xc70] sm:$0xff]
                %554 = vst [vmem:[%s154 + $0x638] sm:$0xff] %v553
                %v555 = vld [vmem:[%s153 + $0xc80] sm:$0xff]
                %556 = vst [vmem:[%s154 + $0x640] sm:$0xff] %v555
                %v557 = vld [vmem:[%s153 + $0xc90] sm:$0xff]
                %558 = vst [vmem:[%s154 + $0x648] sm:$0xff] %v557
                %v559 = vld [vmem:[%s153 + $0xca0] sm:$0xff]
                %560 = vst [vmem:[%s154 + $0x650] sm:$0xff] %v559
                %v561 = vld [vmem:[%s153 + $0xcb0] sm:$0xff]
                %562 = vst [vmem:[%s154 + $0x658] sm:$0xff] %v561
                %v563 = vld [vmem:[%s153 + $0xcc0] sm:$0xff]
                %564 = vst [vmem:[%s154 + $0x660] sm:$0xff] %v563
                %v565 = vld [vmem:[%s153 + $0xcd0] sm:$0xff]
                %566 = vst [vmem:[%s154 + $0x668] sm:$0xff] %v565
                %v567 = vld [vmem:[%s153 + $0xce0] sm:$0xff]
                %568 = vst [vmem:[%s154 + $0x670] sm:$0xff] %v567
                %v569 = vld [vmem:[%s153 + $0xcf0] sm:$0xff]
                %570 = vst [vmem:[%s154 + $0x678] sm:$0xff] %v569
                %v571 = vld [vmem:[%s153 + $0xd00] sm:$0xff]
                %572 = vst [vmem:[%s154 + $0x680] sm:$0xff] %v571
                %v573 = vld [vmem:[%s153 + $0xd10] sm:$0xff]
                %574 = vst [vmem:[%s154 + $0x688] sm:$0xff] %v573
                %v575 = vld [vmem:[%s153 + $0xd20] sm:$0xff]
                %576 = vst [vmem:[%s154 + $0x690] sm:$0xff] %v575
                %v577 = vld [vmem:[%s153 + $0xd30] sm:$0xff]
                %578 = vst [vmem:[%s154 + $0x698] sm:$0xff] %v577
                %v579 = vld [vmem:[%s153 + $0xd40] sm:$0xff]
                %580 = vst [vmem:[%s154 + $0x6a0] sm:$0xff] %v579
                %v581 = vld [vmem:[%s153 + $0xd50] sm:$0xff]
                %582 = vst [vmem:[%s154 + $0x6a8] sm:$0xff] %v581
                %v583 = vld [vmem:[%s153 + $0xd60] sm:$0xff]
                %584 = vst [vmem:[%s154 + $0x6b0] sm:$0xff] %v583
                %v585 = vld [vmem:[%s153 + $0xd70] sm:$0xff]
                %586 = vst [vmem:[%s154 + $0x6b8] sm:$0xff] %v585
                %v587 = vld [vmem:[%s153 + $0xd80] sm:$0xff]
                %588 = vst [vmem:[%s154 + $0x6c0] sm:$0xff] %v587
                %v589 = vld [vmem:[%s153 + $0xd90] sm:$0xff]
                %590 = vst [vmem:[%s154 + $0x6c8] sm:$0xff] %v589
                %v591 = vld [vmem:[%s153 + $0xda0] sm:$0xff]
                %592 = vst [vmem:[%s154 + $0x6d0] sm:$0xff] %v591
                %v593 = vld [vmem:[%s153 + $0xdb0] sm:$0xff]
                %594 = vst [vmem:[%s154 + $0x6d8] sm:$0xff] %v593
                %v595 = vld [vmem:[%s153 + $0xdc0] sm:$0xff]
                %596 = vst [vmem:[%s154 + $0x6e0] sm:$0xff] %v595
                %v597 = vld [vmem:[%s153 + $0xdd0] sm:$0xff]
                %598 = vst [vmem:[%s154 + $0x6e8] sm:$0xff] %v597
                %v599 = vld [vmem:[%s153 + $0xde0] sm:$0xff]
                %600 = vst [vmem:[%s154 + $0x6f0] sm:$0xff] %v599
                %v601 = vld [vmem:[%s153 + $0xdf0] sm:$0xff]
                %602 = vst [vmem:[%s154 + $0x6f8] sm:$0xff] %v601
                %v603 = vld [vmem:[%s153 + $0xe00] sm:$0xff]
                %604 = vst [vmem:[%s154 + $0x700] sm:$0xff] %v603
                %v605 = vld [vmem:[%s153 + $0xe10] sm:$0xff]
                %606 = vst [vmem:[%s154 + $0x708] sm:$0xff] %v605
                %v607 = vld [vmem:[%s153 + $0xe20] sm:$0xff]
                %608 = vst [vmem:[%s154 + $0x710] sm:$0xff] %v607
                %v609 = vld [vmem:[%s153 + $0xe30] sm:$0xff]
                %610 = vst [vmem:[%s154 + $0x718] sm:$0xff] %v609
                %v611 = vld [vmem:[%s153 + $0xe40] sm:$0xff]
                %612 = vst [vmem:[%s154 + $0x720] sm:$0xff] %v611
                %v613 = vld [vmem:[%s153 + $0xe50] sm:$0xff]
                %614 = vst [vmem:[%s154 + $0x728] sm:$0xff] %v613
                %v615 = vld [vmem:[%s153 + $0xe60] sm:$0xff]
                %616 = vst [vmem:[%s154 + $0x730] sm:$0xff] %v615
                %v617 = vld [vmem:[%s153 + $0xe70] sm:$0xff]
                %618 = vst [vmem:[%s154 + $0x738] sm:$0xff] %v617
                %v619 = vld [vmem:[%s153 + $0xe80] sm:$0xff]
                %620 = vst [vmem:[%s154 + $0x740] sm:$0xff] %v619
                %v621 = vld [vmem:[%s153 + $0xe90] sm:$0xff]
                %622 = vst [vmem:[%s154 + $0x748] sm:$0xff] %v621
                %v623 = vld [vmem:[%s153 + $0xea0] sm:$0xff]
                %624 = vst [vmem:[%s154 + $0x750] sm:$0xff] %v623
                %v625 = vld [vmem:[%s153 + $0xeb0] sm:$0xff]
                %626 = vst [vmem:[%s154 + $0x758] sm:$0xff] %v625
                %v627 = vld [vmem:[%s153 + $0xec0] sm:$0xff]
                %628 = vst [vmem:[%s154 + $0x760] sm:$0xff] %v627
                %v629 = vld [vmem:[%s153 + $0xed0] sm:$0xff]
                %630 = vst [vmem:[%s154 + $0x768] sm:$0xff] %v629
                %v631 = vld [vmem:[%s153 + $0xee0] sm:$0xff]
                %632 = vst [vmem:[%s154 + $0x770] sm:$0xff] %v631
                %v633 = vld [vmem:[%s153 + $0xef0] sm:$0xff]
                %634 = vst [vmem:[%s154 + $0x778] sm:$0xff] %v633
                %v635 = vld [vmem:[%s153 + $0xf00] sm:$0xff]
                %636 = vst [vmem:[%s154 + $0x780] sm:$0xff] %v635
                %v637 = vld [vmem:[%s153 + $0xf10] sm:$0xff]
                %638 = vst [vmem:[%s154 + $0x788] sm:$0xff] %v637
                %v639 = vld [vmem:[%s153 + $0xf20] sm:$0xff]
                %640 = vst [vmem:[%s154 + $0x790] sm:$0xff] %v639
                %v641 = vld [vmem:[%s153 + $0xf30] sm:$0xff]
                %642 = vst [vmem:[%s154 + $0x798] sm:$0xff] %v641
                %v643 = vld [vmem:[%s153 + $0xf40] sm:$0xff]
                %644 = vst [vmem:[%s154 + $0x7a0] sm:$0xff] %v643
                %v645 = vld [vmem:[%s153 + $0xf50] sm:$0xff]
                %646 = vst [vmem:[%s154 + $0x7a8] sm:$0xff] %v645
                %v647 = vld [vmem:[%s153 + $0xf60] sm:$0xff]
                %648 = vst [vmem:[%s154 + $0x7b0] sm:$0xff] %v647
                %v649 = vld [vmem:[%s153 + $0xf70] sm:$0xff]
                %650 = vst [vmem:[%s154 + $0x7b8] sm:$0xff] %v649
                %v651 = vld [vmem:[%s153 + $0xf80] sm:$0xff]
                %652 = vst [vmem:[%s154 + $0x7c0] sm:$0xff] %v651
                %v653 = vld [vmem:[%s153 + $0xf90] sm:$0xff]
                %654 = vst [vmem:[%s154 + $0x7c8] sm:$0xff] %v653
                %v655 = vld [vmem:[%s153 + $0xfa0] sm:$0xff]
                %656 = vst [vmem:[%s154 + $0x7d0] sm:$0xff] %v655
                %v657 = vld [vmem:[%s153 + $0xfb0] sm:$0xff]
                %658 = vst [vmem:[%s154 + $0x7d8] sm:$0xff] %v657
                %v659 = vld [vmem:[%s153 + $0xfc0] sm:$0xff]
                %660 = vst [vmem:[%s154 + $0x7e0] sm:$0xff] %v659
                %v661 = vld [vmem:[%s153 + $0xfd0] sm:$0xff]
                %662 = vst [vmem:[%s154 + $0x7e8] sm:$0xff] %v661
                %v663 = vld [vmem:[%s153 + $0xfe0] sm:$0xff]
                %664 = vst [vmem:[%s154 + $0x7f0] sm:$0xff] %v663
                %v665 = vld [vmem:[%s153 + $0xff0] sm:$0xff]
                %666 = vst [vmem:[%s154 + $0x7f8] sm:$0xff] %v665
                %v667 = vld [vmem:[%s153 + $0x1000] sm:$0xff]
                %668 = vst [vmem:[%s154 + $0x800] sm:$0xff] %v667
                %v669 = vld [vmem:[%s153 + $0x1010] sm:$0xff]
                %670 = vst [vmem:[%s154 + $0x808] sm:$0xff] %v669
                %v671 = vld [vmem:[%s153 + $0x1020] sm:$0xff]
                %672 = vst [vmem:[%s154 + $0x810] sm:$0xff] %v671
                %v673 = vld [vmem:[%s153 + $0x1030] sm:$0xff]
                %674 = vst [vmem:[%s154 + $0x818] sm:$0xff] %v673
                %v675 = vld [vmem:[%s153 + $0x1040] sm:$0xff]
                %676 = vst [vmem:[%s154 + $0x820] sm:$0xff] %v675
                %v677 = vld [vmem:[%s153 + $0x1050] sm:$0xff]
                %678 = vst [vmem:[%s154 + $0x828] sm:$0xff] %v677
                %v679 = vld [vmem:[%s153 + $0x1060] sm:$0xff]
                %680 = vst [vmem:[%s154 + $0x830] sm:$0xff] %v679
                %v681 = vld [vmem:[%s153 + $0x1070] sm:$0xff]
                %682 = vst [vmem:[%s154 + $0x838] sm:$0xff] %v681
                %v683 = vld [vmem:[%s153 + $0x1080] sm:$0xff]
                %684 = vst [vmem:[%s154 + $0x840] sm:$0xff] %v683
                %v685 = vld [vmem:[%s153 + $0x1090] sm:$0xff]
                %686 = vst [vmem:[%s154 + $0x848] sm:$0xff] %v685
                %v687 = vld [vmem:[%s153 + $0x10a0] sm:$0xff]
                %688 = vst [vmem:[%s154 + $0x850] sm:$0xff] %v687
                %v689 = vld [vmem:[%s153 + $0x10b0] sm:$0xff]
                %690 = vst [vmem:[%s154 + $0x858] sm:$0xff] %v689
                %v691 = vld [vmem:[%s153 + $0x10c0] sm:$0xff]
                %692 = vst [vmem:[%s154 + $0x860] sm:$0xff] %v691
                %v693 = vld [vmem:[%s153 + $0x10d0] sm:$0xff]
                %694 = vst [vmem:[%s154 + $0x868] sm:$0xff] %v693
                %v695 = vld [vmem:[%s153 + $0x10e0] sm:$0xff]
                %696 = vst [vmem:[%s154 + $0x870] sm:$0xff] %v695
                %v697 = vld [vmem:[%s153 + $0x10f0] sm:$0xff]
                %698 = vst [vmem:[%s154 + $0x878] sm:$0xff] %v697
                %v699 = vld [vmem:[%s153 + $0x1100] sm:$0xff]
                %700 = vst [vmem:[%s154 + $0x880] sm:$0xff] %v699
                %v701 = vld [vmem:[%s153 + $0x1110] sm:$0xff]
                %702 = vst [vmem:[%s154 + $0x888] sm:$0xff] %v701
                %v703 = vld [vmem:[%s153 + $0x1120] sm:$0xff]
                %704 = vst [vmem:[%s154 + $0x890] sm:$0xff] %v703
                %v705 = vld [vmem:[%s153 + $0x1130] sm:$0xff]
                %706 = vst [vmem:[%s154 + $0x898] sm:$0xff] %v705
                %v707 = vld [vmem:[%s153 + $0x1140] sm:$0xff]
                %708 = vst [vmem:[%s154 + $0x8a0] sm:$0xff] %v707
                %v709 = vld [vmem:[%s153 + $0x1150] sm:$0xff]
                %710 = vst [vmem:[%s154 + $0x8a8] sm:$0xff] %v709
                %v711 = vld [vmem:[%s153 + $0x1160] sm:$0xff]
                %712 = vst [vmem:[%s154 + $0x8b0] sm:$0xff] %v711
                %v713 = vld [vmem:[%s153 + $0x1170] sm:$0xff]
                %714 = vst [vmem:[%s154 + $0x8b8] sm:$0xff] %v713
                %v715 = vld [vmem:[%s153 + $0x1180] sm:$0xff]
                %716 = vst [vmem:[%s154 + $0x8c0] sm:$0xff] %v715
                %v717 = vld [vmem:[%s153 + $0x1190] sm:$0xff]
                %718 = vst [vmem:[%s154 + $0x8c8] sm:$0xff] %v717
                %v719 = vld [vmem:[%s153 + $0x11a0] sm:$0xff]
                %720 = vst [vmem:[%s154 + $0x8d0] sm:$0xff] %v719
                %v721 = vld [vmem:[%s153 + $0x11b0] sm:$0xff]
                %722 = vst [vmem:[%s154 + $0x8d8] sm:$0xff] %v721
                %v723 = vld [vmem:[%s153 + $0x11c0] sm:$0xff]
                %724 = vst [vmem:[%s154 + $0x8e0] sm:$0xff] %v723
                %v725 = vld [vmem:[%s153 + $0x11d0] sm:$0xff]
                %726 = vst [vmem:[%s154 + $0x8e8] sm:$0xff] %v725
                %v727 = vld [vmem:[%s153 + $0x11e0] sm:$0xff]
                %728 = vst [vmem:[%s154 + $0x8f0] sm:$0xff] %v727
                %v729 = vld [vmem:[%s153 + $0x11f0] sm:$0xff]
                %730 = vst [vmem:[%s154 + $0x8f8] sm:$0xff] %v729
                %v731 = vld [vmem:[%s153 + $0x1200] sm:$0xff]
                %732 = vst [vmem:[%s154 + $0x900] sm:$0xff] %v731
                %v733 = vld [vmem:[%s153 + $0x1210] sm:$0xff]
                %734 = vst [vmem:[%s154 + $0x908] sm:$0xff] %v733
                %v735 = vld [vmem:[%s153 + $0x1220] sm:$0xff]
                %736 = vst [vmem:[%s154 + $0x910] sm:$0xff] %v735
                %v737 = vld [vmem:[%s153 + $0x1230] sm:$0xff]
                %738 = vst [vmem:[%s154 + $0x918] sm:$0xff] %v737
                %v739 = vld [vmem:[%s153 + $0x1240] sm:$0xff]
                %740 = vst [vmem:[%s154 + $0x920] sm:$0xff] %v739
                %v741 = vld [vmem:[%s153 + $0x1250] sm:$0xff]
                %742 = vst [vmem:[%s154 + $0x928] sm:$0xff] %v741
                %v743 = vld [vmem:[%s153 + $0x1260] sm:$0xff]
                %744 = vst [vmem:[%s154 + $0x930] sm:$0xff] %v743
                %v745 = vld [vmem:[%s153 + $0x1270] sm:$0xff]
                %746 = vst [vmem:[%s154 + $0x938] sm:$0xff] %v745
                %v747 = vld [vmem:[%s153 + $0x1280] sm:$0xff]
                %748 = vst [vmem:[%s154 + $0x940] sm:$0xff] %v747
                %v749 = vld [vmem:[%s153 + $0x1290] sm:$0xff]
                %750 = vst [vmem:[%s154 + $0x948] sm:$0xff] %v749
                %v751 = vld [vmem:[%s153 + $0x12a0] sm:$0xff]
                %752 = vst [vmem:[%s154 + $0x950] sm:$0xff] %v751
                %v753 = vld [vmem:[%s153 + $0x12b0] sm:$0xff]
                %754 = vst [vmem:[%s154 + $0x958] sm:$0xff] %v753
                %v755 = vld [vmem:[%s153 + $0x12c0] sm:$0xff]
                %756 = vst [vmem:[%s154 + $0x960] sm:$0xff] %v755
                %v757 = vld [vmem:[%s153 + $0x12d0] sm:$0xff]
                %758 = vst [vmem:[%s154 + $0x968] sm:$0xff] %v757
                %v759 = vld [vmem:[%s153 + $0x12e0] sm:$0xff]
                %760 = vst [vmem:[%s154 + $0x970] sm:$0xff] %v759
                %v761 = vld [vmem:[%s153 + $0x12f0] sm:$0xff]
                %762 = vst [vmem:[%s154 + $0x978] sm:$0xff] %v761
                %v763 = vld [vmem:[%s153 + $0x1300] sm:$0xff]
                %764 = vst [vmem:[%s154 + $0x980] sm:$0xff] %v763
                %v765 = vld [vmem:[%s153 + $0x1310] sm:$0xff]
                %766 = vst [vmem:[%s154 + $0x988] sm:$0xff] %v765
                %v767 = vld [vmem:[%s153 + $0x1320] sm:$0xff]
                %768 = vst [vmem:[%s154 + $0x990] sm:$0xff] %v767
                %v769 = vld [vmem:[%s153 + $0x1330] sm:$0xff]
                %770 = vst [vmem:[%s154 + $0x998] sm:$0xff] %v769
                %v771 = vld [vmem:[%s153 + $0x1340] sm:$0xff]
                %772 = vst [vmem:[%s154 + $0x9a0] sm:$0xff] %v771
                %v773 = vld [vmem:[%s153 + $0x1350] sm:$0xff]
                %774 = vst [vmem:[%s154 + $0x9a8] sm:$0xff] %v773
                %v775 = vld [vmem:[%s153 + $0x1360] sm:$0xff]
                %776 = vst [vmem:[%s154 + $0x9b0] sm:$0xff] %v775
                %v777 = vld [vmem:[%s153 + $0x1370] sm:$0xff]
                %778 = vst [vmem:[%s154 + $0x9b8] sm:$0xff] %v777
                %v779 = vld [vmem:[%s153 + $0x1380] sm:$0xff]
                %780 = vst [vmem:[%s154 + $0x9c0] sm:$0xff] %v779
                %v781 = vld [vmem:[%s153 + $0x1390] sm:$0xff]
                %782 = vst [vmem:[%s154 + $0x9c8] sm:$0xff] %v781
                %v783 = vld [vmem:[%s153 + $0x13a0] sm:$0xff]
                %784 = vst [vmem:[%s154 + $0x9d0] sm:$0xff] %v783
                %v785 = vld [vmem:[%s153 + $0x13b0] sm:$0xff]
                %786 = vst [vmem:[%s154 + $0x9d8] sm:$0xff] %v785
                %v787 = vld [vmem:[%s153 + $0x13c0] sm:$0xff]
                %788 = vst [vmem:[%s154 + $0x9e0] sm:$0xff] %v787
                %v789 = vld [vmem:[%s153 + $0x13d0] sm:$0xff]
                %790 = vst [vmem:[%s154 + $0x9e8] sm:$0xff] %v789
                %v791 = vld [vmem:[%s153 + $0x13e0] sm:$0xff]
                %792 = vst [vmem:[%s154 + $0x9f0] sm:$0xff] %v791
                %v793 = vld [vmem:[%s153 + $0x13f0] sm:$0xff]
                %794 = vst [vmem:[%s154 + $0x9f8] sm:$0xff] %v793
                %v795 = vld [vmem:[%s153 + $0x1400] sm:$0xff]
                %796 = vst [vmem:[%s154 + $0xa00] sm:$0xff] %v795
                %v797 = vld [vmem:[%s153 + $0x1410] sm:$0xff]
                %798 = vst [vmem:[%s154 + $0xa08] sm:$0xff] %v797
                %v799 = vld [vmem:[%s153 + $0x1420] sm:$0xff]
                %800 = vst [vmem:[%s154 + $0xa10] sm:$0xff] %v799
                %v801 = vld [vmem:[%s153 + $0x1430] sm:$0xff]
                %802 = vst [vmem:[%s154 + $0xa18] sm:$0xff] %v801
                %v803 = vld [vmem:[%s153 + $0x1440] sm:$0xff]
                %804 = vst [vmem:[%s154 + $0xa20] sm:$0xff] %v803
                %v805 = vld [vmem:[%s153 + $0x1450] sm:$0xff]
                %806 = vst [vmem:[%s154 + $0xa28] sm:$0xff] %v805
                %v807 = vld [vmem:[%s153 + $0x1460] sm:$0xff]
                %808 = vst [vmem:[%s154 + $0xa30] sm:$0xff] %v807
                %v809 = vld [vmem:[%s153 + $0x1470] sm:$0xff]
                %810 = vst [vmem:[%s154 + $0xa38] sm:$0xff] %v809
                %v811 = vld [vmem:[%s153 + $0x1480] sm:$0xff]
                %812 = vst [vmem:[%s154 + $0xa40] sm:$0xff] %v811
                %v813 = vld [vmem:[%s153 + $0x1490] sm:$0xff]
                %814 = vst [vmem:[%s154 + $0xa48] sm:$0xff] %v813
                %v815 = vld [vmem:[%s153 + $0x14a0] sm:$0xff]
                %816 = vst [vmem:[%s154 + $0xa50] sm:$0xff] %v815
                %v817 = vld [vmem:[%s153 + $0x14b0] sm:$0xff]
                %818 = vst [vmem:[%s154 + $0xa58] sm:$0xff] %v817
                %v819 = vld [vmem:[%s153 + $0x14c0] sm:$0xff]
                %820 = vst [vmem:[%s154 + $0xa60] sm:$0xff] %v819
                %v821 = vld [vmem:[%s153 + $0x14d0] sm:$0xff]
                %822 = vst [vmem:[%s154 + $0xa68] sm:$0xff] %v821
                %v823 = vld [vmem:[%s153 + $0x14e0] sm:$0xff]
                %824 = vst [vmem:[%s154 + $0xa70] sm:$0xff] %v823
                %v825 = vld [vmem:[%s153 + $0x14f0] sm:$0xff]
                %826 = vst [vmem:[%s154 + $0xa78] sm:$0xff] %v825
                %v827 = vld [vmem:[%s153 + $0x1500] sm:$0xff]
                %828 = vst [vmem:[%s154 + $0xa80] sm:$0xff] %v827
                %v829 = vld [vmem:[%s153 + $0x1510] sm:$0xff]
                %830 = vst [vmem:[%s154 + $0xa88] sm:$0xff] %v829
                %v831 = vld [vmem:[%s153 + $0x1520] sm:$0xff]
                %832 = vst [vmem:[%s154 + $0xa90] sm:$0xff] %v831
                %v833 = vld [vmem:[%s153 + $0x1530] sm:$0xff]
                %834 = vst [vmem:[%s154 + $0xa98] sm:$0xff] %v833
                %v835 = vld [vmem:[%s153 + $0x1540] sm:$0xff]
                %836 = vst [vmem:[%s154 + $0xaa0] sm:$0xff] %v835
                %v837 = vld [vmem:[%s153 + $0x1550] sm:$0xff]
                %838 = vst [vmem:[%s154 + $0xaa8] sm:$0xff] %v837
                %v839 = vld [vmem:[%s153 + $0x1560] sm:$0xff]
                %840 = vst [vmem:[%s154 + $0xab0] sm:$0xff] %v839
                %v841 = vld [vmem:[%s153 + $0x1570] sm:$0xff]
                %842 = vst [vmem:[%s154 + $0xab8] sm:$0xff] %v841
                %v843 = vld [vmem:[%s153 + $0x1580] sm:$0xff]
                %844 = vst [vmem:[%s154 + $0xac0] sm:$0xff] %v843
                %v845 = vld [vmem:[%s153 + $0x1590] sm:$0xff]
                %846 = vst [vmem:[%s154 + $0xac8] sm:$0xff] %v845
                %v847 = vld [vmem:[%s153 + $0x15a0] sm:$0xff]
                %848 = vst [vmem:[%s154 + $0xad0] sm:$0xff] %v847
                %v849 = vld [vmem:[%s153 + $0x15b0] sm:$0xff]
                %850 = vst [vmem:[%s154 + $0xad8] sm:$0xff] %v849
                %v851 = vld [vmem:[%s153 + $0x15c0] sm:$0xff]
                %852 = vst [vmem:[%s154 + $0xae0] sm:$0xff] %v851
                %v853 = vld [vmem:[%s153 + $0x15d0] sm:$0xff]
                %854 = vst [vmem:[%s154 + $0xae8] sm:$0xff] %v853
                %v855 = vld [vmem:[%s153 + $0x15e0] sm:$0xff]
                %856 = vst [vmem:[%s154 + $0xaf0] sm:$0xff] %v855
                %v857 = vld [vmem:[%s153 + $0x15f0] sm:$0xff]
                %858 = vst [vmem:[%s154 + $0xaf8] sm:$0xff] %v857
                %v859 = vld [vmem:[%s153 + $0x1600] sm:$0xff]
                %860 = vst [vmem:[%s154 + $0xb00] sm:$0xff] %v859
                %v861 = vld [vmem:[%s153 + $0x1610] sm:$0xff]
                %862 = vst [vmem:[%s154 + $0xb08] sm:$0xff] %v861
                %v863 = vld [vmem:[%s153 + $0x1620] sm:$0xff]
                %864 = vst [vmem:[%s154 + $0xb10] sm:$0xff] %v863
                %v865 = vld [vmem:[%s153 + $0x1630] sm:$0xff]
                %866 = vst [vmem:[%s154 + $0xb18] sm:$0xff] %v865
                %v867 = vld [vmem:[%s153 + $0x1640] sm:$0xff]
                %868 = vst [vmem:[%s154 + $0xb20] sm:$0xff] %v867
                %v869 = vld [vmem:[%s153 + $0x1650] sm:$0xff]
                %870 = vst [vmem:[%s154 + $0xb28] sm:$0xff] %v869
                %v871 = vld [vmem:[%s153 + $0x1660] sm:$0xff]
                %872 = vst [vmem:[%s154 + $0xb30] sm:$0xff] %v871
                %v873 = vld [vmem:[%s153 + $0x1670] sm:$0xff]
                %874 = vst [vmem:[%s154 + $0xb38] sm:$0xff] %v873
                %v875 = vld [vmem:[%s153 + $0x1680] sm:$0xff]
                %876 = vst [vmem:[%s154 + $0xb40] sm:$0xff] %v875
                %v877 = vld [vmem:[%s153 + $0x1690] sm:$0xff]
                %878 = vst [vmem:[%s154 + $0xb48] sm:$0xff] %v877
                %v879 = vld [vmem:[%s153 + $0x16a0] sm:$0xff]
                %880 = vst [vmem:[%s154 + $0xb50] sm:$0xff] %v879
                %v881 = vld [vmem:[%s153 + $0x16b0] sm:$0xff]
                %882 = vst [vmem:[%s154 + $0xb58] sm:$0xff] %v881
                %v883 = vld [vmem:[%s153 + $0x16c0] sm:$0xff]
                %884 = vst [vmem:[%s154 + $0xb60] sm:$0xff] %v883
                %v885 = vld [vmem:[%s153 + $0x16d0] sm:$0xff]
                %886 = vst [vmem:[%s154 + $0xb68] sm:$0xff] %v885
                %v887 = vld [vmem:[%s153 + $0x16e0] sm:$0xff]
                %888 = vst [vmem:[%s154 + $0xb70] sm:$0xff] %v887
                %v889 = vld [vmem:[%s153 + $0x16f0] sm:$0xff]
                %890 = vst [vmem:[%s154 + $0xb78] sm:$0xff] %v889
                %v891 = vld [vmem:[%s153 + $0x1700] sm:$0xff]
                %892 = vst [vmem:[%s154 + $0xb80] sm:$0xff] %v891
                %v893 = vld [vmem:[%s153 + $0x1710] sm:$0xff]
                %894 = vst [vmem:[%s154 + $0xb88] sm:$0xff] %v893
                %v895 = vld [vmem:[%s153 + $0x1720] sm:$0xff]
                %896 = vst [vmem:[%s154 + $0xb90] sm:$0xff] %v895
                %v897 = vld [vmem:[%s153 + $0x1730] sm:$0xff]
                %898 = vst [vmem:[%s154 + $0xb98] sm:$0xff] %v897
                %v899 = vld [vmem:[%s153 + $0x1740] sm:$0xff]
                %900 = vst [vmem:[%s154 + $0xba0] sm:$0xff] %v899
                %v901 = vld [vmem:[%s153 + $0x1750] sm:$0xff]
                %902 = vst [vmem:[%s154 + $0xba8] sm:$0xff] %v901
                %v903 = vld [vmem:[%s153 + $0x1760] sm:$0xff]
                %904 = vst [vmem:[%s154 + $0xbb0] sm:$0xff] %v903
                %v905 = vld [vmem:[%s153 + $0x1770] sm:$0xff]
                %906 = vst [vmem:[%s154 + $0xbb8] sm:$0xff] %v905
                %v907 = vld [vmem:[%s153 + $0x1780] sm:$0xff]
                %908 = vst [vmem:[%s154 + $0xbc0] sm:$0xff] %v907
                %v909 = vld [vmem:[%s153 + $0x1790] sm:$0xff]
                %910 = vst [vmem:[%s154 + $0xbc8] sm:$0xff] %v909
                %v911 = vld [vmem:[%s153 + $0x17a0] sm:$0xff]
                %912 = vst [vmem:[%s154 + $0xbd0] sm:$0xff] %v911
                %v913 = vld [vmem:[%s153 + $0x17b0] sm:$0xff]
                %914 = vst [vmem:[%s154 + $0xbd8] sm:$0xff] %v913
                %v915 = vld [vmem:[%s153 + $0x17c0] sm:$0xff]
                %916 = vst [vmem:[%s154 + $0xbe0] sm:$0xff] %v915
                %v917 = vld [vmem:[%s153 + $0x17d0] sm:$0xff]
                %918 = vst [vmem:[%s154 + $0xbe8] sm:$0xff] %v917
                %v919 = vld [vmem:[%s153 + $0x17e0] sm:$0xff]
                %920 = vst [vmem:[%s154 + $0xbf0] sm:$0xff] %v919
                %v921 = vld [vmem:[%s153 + $0x17f0] sm:$0xff]
                %922 = vst [vmem:[%s154 + $0xbf8] sm:$0xff] %v921
              $region41: #{_encoder_convs.4} parent=35 // loop_footer
                %s152 = sadd.s32 1, %s148
              $region42: #{_encoder_convs.4} parent=35 // loop_footer_branch
                %147 = sbr.rel target = $region38
              $region43: #{_encoder_convs.4} parent=35 // loop_exit
                _
            $region36: #{_encoder_convs.4} parent=27 // pred_fallthru
              _
          $region28: #{_encoder_convs.4} parent=23 // pred_fallthru
            _
          %1703 = vnop
        $region24: #{_encoder_convs.4} parent=19 // pred_fallthru
          _
        // Predicated region
        $region59: #{_encoder_convs.4} parent=19 // pred_check
          %p1704 = pneg %p76
        $region60: #{_encoder_convs.4} parent=19 // pred_check_branch
          %1706 = sbr.rel (%p1704) target = $region62
        $region61: #{_encoder_convs.4} parent=19 // pred_region
          %s1707 = smul.u32 2, %s9
          %p1708 = scmp.lt.s32.totalorder %s1707, 3
          %s1709 = scalar_select %p1708, %s1707, 3
          %s1710 = scalar_lea.vmem %s2, %s1709
          %s1711 = smul.u32 2, %s9
        $region62: #{_encoder_convs.4} parent=19 // pred_fallthru
          _
      $region20: #{_encoder_convs.4} parent=5 // pred_fallthru
        _
      %p1712 = scmp.le.s32.totalorder 1, %s9
      %p1713 = scmp.lt.s32.totalorder %s9, 3
      %p1714 = pnand %p1712, %p1713
      %p1715 = pneg %p1714
      // Predicated region
      $region63: #{_encoder_convs.4} parent=5 // pred_check
        _
      $region64: #{_encoder_convs.4} parent=5 // pred_check_branch
        %1717 = sbr.rel (%p1714) target = $region66
      $region65: #{_encoder_convs.4} parent=5 // pred_region
        %s1718 = ssub.s32 %s9, 1
        %s1719 = sand.u32 %s43, 1
        %s1720 = sand.u32 %s43, 1
        %s1721 = smul.addr %s1720, 3072
        %s1722 = scalar_lea.vmem [#allocation2], %s1721
        // Predicated region
        $region67: #{_encoder_convs.4} parent=65 // pred_check
          %p1723 = pneg %p56
        $region68: #{_encoder_convs.4} parent=65 // pred_check_branch
          %1725 = sbr.rel (%p1723) target = $region70
        $region69: #{_encoder_convs.4} parent=65 // pred_region
          _
        $region70: #{_encoder_convs.4} parent=65 // pred_fallthru
          _
        %p1726 = pneg %p30
        %p1727 = pneg %p27
        %s1728 = sand.u32 %s43, 1
        %s1729 = sand.u32 %s43, 1
        %s1730 = smul.addr %s1729, 3072
        %s1731 = scalar_lea.vmem [#allocation2], %s1730
        %p1732 = pneg %p56
        %p1733 = pneg %p53
        %s1734 = smul.u32 2, %s14
        %p1735 = scmp.lt.s32.totalorder %s1734, 3
        %s1736 = scalar_select %p1735, %s1734, 3
        %s1737 = scalar_lea.vmem %s2, %s1736
        %p1738 = pneg %p82
        %p1739 = pneg %p79
        %p1740 = pneg %p108
        %p1741 = pneg %p105
        %s1742 = sand.u32 %s95, 1
        %s1743 = sand.u32 %s95, 1
        %s1744 = smul.addr %s1743, 32
        %s1745 = scalar_lea.vmem [#allocation3], %s1744
        %s1746 = smul.u32 2, %s14
        %s1747 = smul.u32 2, %s14
        %p1748 = scmp.lt.s32.totalorder %s1747, 3
        %s1749 = scalar_select %p1748, %s1747, 3
        %s1750 = scalar_lea.vmem %s2, %s1749
        %s1751 = smul.u32 2, %s14
        %s1752 = smul.u32 2, %s14
        %v1753 = vld [vmem:[%s0] sm:$0xff]
        %v1754 = vld [vmem:[%s0 + $0x8] sm:$0xff]
        %v1755 = vld [vmem:[%s0 + $0x10] sm:$0xff]
        %v1756 = vld [vmem:[%s0 + $0x18] sm:$0xff]
        %v1757 = vld [vmem:[%s0 + $0x20] sm:$0xff]
        %v1758 = vld [vmem:[%s0 + $0x28] sm:$0xff]
        %v1759 = vld [vmem:[%s0 + $0x30] sm:$0xff]
        %v1760 = vld [vmem:[%s0 + $0x38] sm:$0xff]
        %v1761 = vld [vmem:[%s0 + $0x40] sm:$0xff]
        %v1762 = vld [vmem:[%s0 + $0x48] sm:$0xff]
        %v1763 = vld [vmem:[%s0 + $0x50] sm:$0xff]
        %v1764 = vld [vmem:[%s0 + $0x58] sm:$0xff]
        %v1765 = vld [vmem:[%s0 + $0x60] sm:$0xff]
        %v1766 = vld [vmem:[%s0 + $0x68] sm:$0xff]
        %v1767 = vld [vmem:[%s0 + $0x70] sm:$0xff]
        %v1768 = vld [vmem:[%s0 + $0x78] sm:$0xff]
        %v1769 = vld [vmem:[%s0 + $0x80] sm:$0xff]
        %v1770 = vld [vmem:[%s0 + $0x88] sm:$0xff]
        %v1771 = vld [vmem:[%s0 + $0x90] sm:$0xff]
        %v1772 = vld [vmem:[%s0 + $0x98] sm:$0xff]
        %v1773 = vld [vmem:[%s0 + $0xa0] sm:$0xff]
        %v1774 = vld [vmem:[%s0 + $0xa8] sm:$0xff]
        %v1775 = vld [vmem:[%s0 + $0xb0] sm:$0xff]
        %v1776 = vld [vmem:[%s0 + $0xb8] sm:$0xff]
        %v1777 = vld [vmem:[%s1722] sm:$0xff]
        %v1778 = vld [vmem:[%s1722 + $0x8] sm:$0xff]
        %v1779 = vld [vmem:[%s1722 + $0x10] sm:$0xff]
        %v1780 = vld [vmem:[%s1722 + $0x18] sm:$0xff]
        %v1781 = vld [vmem:[%s1722 + $0x20] sm:$0xff]
        %v1782 = vld [vmem:[%s1722 + $0x28] sm:$0xff]
        %v1783 = vld [vmem:[%s1722 + $0x30] sm:$0xff]
        %v1784 = vld [vmem:[%s1722 + $0x38] sm:$0xff]
        %v1785 = vld [vmem:[%s1722 + $0x40] sm:$0xff]
        %v1786 = vld [vmem:[%s1722 + $0x48] sm:$0xff]
        %v1787 = vld [vmem:[%s1722 + $0x50] sm:$0xff]
        %v1788 = vld [vmem:[%s1722 + $0x58] sm:$0xff]
        %v1789 = vld [vmem:[%s1722 + $0x60] sm:$0xff]
        %v1790 = vld [vmem:[%s1722 + $0x68] sm:$0xff]
        %v1791 = vld [vmem:[%s1722 + $0x70] sm:$0xff]
        %v1792 = vld [vmem:[%s1722 + $0x78] sm:$0xff]
        %v1793 = vld [vmem:[%s1722 + $0x80] sm:$0xff]
        %v1794 = vld [vmem:[%s1722 + $0x88] sm:$0xff]
        %v1795 = vld [vmem:[%s1722 + $0x90] sm:$0xff]
        %v1796 = vld [vmem:[%s1722 + $0x98] sm:$0xff]
        %v1797 = vld [vmem:[%s1722 + $0xa0] sm:$0xff]
        %v1798 = vld [vmem:[%s1722 + $0xa8] sm:$0xff]
        %v1799 = vld [vmem:[%s1722 + $0xb0] sm:$0xff]
        %v1800 = vld [vmem:[%s1722 + $0xb8] sm:$0xff]
        %v1801 = vld [vmem:[%s1722 + $0xc0] sm:$0xff]
        %v1802 = vld [vmem:[%s1722 + $0xc8] sm:$0xff]
        %v1803 = vld [vmem:[%s1722 + $0xd0] sm:$0xff]
        %v1804 = vld [vmem:[%s1722 + $0xd8] sm:$0xff]
        %v1805 = vld [vmem:[%s1722 + $0xe0] sm:$0xff]
        %v1806 = vld [vmem:[%s1722 + $0xe8] sm:$0xff]
        %v1807 = vld [vmem:[%s1722 + $0xf0] sm:$0xff]
        %v1808 = vld [vmem:[%s1722 + $0xf8] sm:$0xff]
        %v1809 = vld [vmem:[%s1722 + $0x100] sm:$0xff]
        %v1810 = vld [vmem:[%s1722 + $0x108] sm:$0xff]
        %v1811 = vld [vmem:[%s1722 + $0x110] sm:$0xff]
        %v1812 = vld [vmem:[%s1722 + $0x118] sm:$0xff]
        %v1813 = vld [vmem:[%s1722 + $0x120] sm:$0xff]
        %v1814 = vld [vmem:[%s1722 + $0x128] sm:$0xff]
        %v1815 = vld [vmem:[%s1722 + $0x130] sm:$0xff]
        %v1816 = vld [vmem:[%s1722 + $0x138] sm:$0xff]
        %v1817 = vld [vmem:[%s1722 + $0x140] sm:$0xff]
        %v1818 = vld [vmem:[%s1722 + $0x148] sm:$0xff]
        %v1819 = vld [vmem:[%s1722 + $0x150] sm:$0xff]
        %v1820 = vld [vmem:[%s1722 + $0x158] sm:$0xff]
        %v1821 = vld [vmem:[%s1722 + $0x160] sm:$0xff]
        %v1822 = vld [vmem:[%s1722 + $0x168] sm:$0xff]
        %v1823 = vld [vmem:[%s1722 + $0x170] sm:$0xff]
        %v1824 = vld [vmem:[%s1722 + $0x178] sm:$0xff]
        %v1825 = vld [vmem:[%s1722 + $0x180] sm:$0xff]
        %v1826 = vld [vmem:[%s1722 + $0x188] sm:$0xff]
        %v1827 = vld [vmem:[%s1722 + $0x190] sm:$0xff]
        %v1828 = vld [vmem:[%s1722 + $0x198] sm:$0xff]
        %v1829 = vld [vmem:[%s1722 + $0x1a0] sm:$0xff]
        %v1830 = vld [vmem:[%s1722 + $0x1a8] sm:$0xff]
        %v1831 = vld [vmem:[%s1722 + $0x1b0] sm:$0xff]
        %v1832 = vld [vmem:[%s1722 + $0x1b8] sm:$0xff]
        %v1833 = vld [vmem:[%s1722 + $0x1c0] sm:$0xff]
        %v1834 = vld [vmem:[%s1722 + $0x1c8] sm:$0xff]
        %v1835 = vld [vmem:[%s1722 + $0x1d0] sm:$0xff]
        %v1836 = vld [vmem:[%s1722 + $0x1d8] sm:$0xff]
        %v1837 = vld [vmem:[%s1722 + $0x1e0] sm:$0xff]
        %v1838 = vld [vmem:[%s1722 + $0x1e8] sm:$0xff]
        %v1839 = vld [vmem:[%s1722 + $0x1f0] sm:$0xff]
        %v1840 = vld [vmem:[%s1722 + $0x1f8] sm:$0xff]
        %v1841 = vld [vmem:[%s1722 + $0x200] sm:$0xff]
        %v1842 = vld [vmem:[%s1722 + $0x208] sm:$0xff]
        %v1843 = vld [vmem:[%s1722 + $0x210] sm:$0xff]
        %v1844 = vld [vmem:[%s1722 + $0x218] sm:$0xff]
        %v1845 = vld [vmem:[%s1722 + $0x220] sm:$0xff]
        %v1846 = vld [vmem:[%s1722 + $0x228] sm:$0xff]
        %v1847 = vld [vmem:[%s1722 + $0x230] sm:$0xff]
        %v1848 = vld [vmem:[%s1722 + $0x238] sm:$0xff]
        %v1849 = vld [vmem:[%s1722 + $0x240] sm:$0xff]
        %v1850 = vld [vmem:[%s1722 + $0x248] sm:$0xff]
        %v1851 = vld [vmem:[%s1722 + $0x250] sm:$0xff]
        %v1852 = vld [vmem:[%s1722 + $0x258] sm:$0xff]
        %v1853 = vld [vmem:[%s1722 + $0x260] sm:$0xff]
        %v1854 = vld [vmem:[%s1722 + $0x268] sm:$0xff]
        %v1855 = vld [vmem:[%s1722 + $0x270] sm:$0xff]
        %v1856 = vld [vmem:[%s1722 + $0x278] sm:$0xff]
        %v1857 = vld [vmem:[%s1722 + $0x280] sm:$0xff]
        %v1858 = vld [vmem:[%s1722 + $0x288] sm:$0xff]
        %v1859 = vld [vmem:[%s1722 + $0x290] sm:$0xff]
        %v1860 = vld [vmem:[%s1722 + $0x298] sm:$0xff]
        %v1861 = vld [vmem:[%s1722 + $0x2a0] sm:$0xff]
        %v1862 = vld [vmem:[%s1722 + $0x2a8] sm:$0xff]
        %v1863 = vld [vmem:[%s1722 + $0x2b0] sm:$0xff]
        %v1864 = vld [vmem:[%s1722 + $0x2b8] sm:$0xff]
        %v1865 = vld [vmem:[%s1722 + $0x2c0] sm:$0xff]
        %v1866 = vld [vmem:[%s1722 + $0x2c8] sm:$0xff]
        %v1867 = vld [vmem:[%s1722 + $0x2d0] sm:$0xff]
        %v1868 = vld [vmem:[%s1722 + $0x2d8] sm:$0xff]
        %v1869 = vld [vmem:[%s1722 + $0x2e0] sm:$0xff]
        %v1870 = vld [vmem:[%s1722 + $0x2e8] sm:$0xff]
        %v1871 = vld [vmem:[%s1722 + $0x2f0] sm:$0xff]
        %v1872 = vld [vmem:[%s1722 + $0x2f8] sm:$0xff]
        %v1873 = vld [vmem:[%s1722 + $0x300] sm:$0xff]
        %v1874 = vld [vmem:[%s1722 + $0x308] sm:$0xff]
        %v1875 = vld [vmem:[%s1722 + $0x310] sm:$0xff]
        %v1876 = vld [vmem:[%s1722 + $0x318] sm:$0xff]
        %v1877 = vld [vmem:[%s1722 + $0x320] sm:$0xff]
        %v1878 = vld [vmem:[%s1722 + $0x328] sm:$0xff]
        %v1879 = vld [vmem:[%s1722 + $0x330] sm:$0xff]
        %v1880 = vld [vmem:[%s1722 + $0x338] sm:$0xff]
        %v1881 = vld [vmem:[%s1722 + $0x340] sm:$0xff]
        %v1882 = vld [vmem:[%s1722 + $0x348] sm:$0xff]
        %v1883 = vld [vmem:[%s1722 + $0x350] sm:$0xff]
        %v1884 = vld [vmem:[%s1722 + $0x358] sm:$0xff]
        %v1885 = vld [vmem:[%s1722 + $0x360] sm:$0xff]
        %v1886 = vld [vmem:[%s1722 + $0x368] sm:$0xff]
        %v1887 = vld [vmem:[%s1722 + $0x370] sm:$0xff]
        %v1888 = vld [vmem:[%s1722 + $0x378] sm:$0xff]
        %v1889 = vld [vmem:[%s1722 + $0x380] sm:$0xff]
        %v1890 = vld [vmem:[%s1722 + $0x388] sm:$0xff]
        %v1891 = vld [vmem:[%s1722 + $0x390] sm:$0xff]
        %v1892 = vld [vmem:[%s1722 + $0x398] sm:$0xff]
        %v1893 = vld [vmem:[%s1722 + $0x3a0] sm:$0xff]
        %v1894 = vld [vmem:[%s1722 + $0x3a8] sm:$0xff]
        %v1895 = vld [vmem:[%s1722 + $0x3b0] sm:$0xff]
        %v1896 = vld [vmem:[%s1722 + $0x3b8] sm:$0xff]
        %v1897 = vld [vmem:[%s1722 + $0x3c0] sm:$0xff]
        %v1898 = vld [vmem:[%s1722 + $0x3c8] sm:$0xff]
        %v1899 = vld [vmem:[%s1722 + $0x3d0] sm:$0xff]
        %v1900 = vld [vmem:[%s1722 + $0x3d8] sm:$0xff]
        %v1901 = vld [vmem:[%s1722 + $0x3e0] sm:$0xff]
        %v1902 = vld [vmem:[%s1722 + $0x3e8] sm:$0xff]
        %v1903 = vld [vmem:[%s1722 + $0x3f0] sm:$0xff]
        %v1904 = vld [vmem:[%s1722 + $0x3f8] sm:$0xff]
        %v1905 = vld [vmem:[%s1722 + $0x400] sm:$0xff]
        %v1906 = vld [vmem:[%s1722 + $0x408] sm:$0xff]
        %v1907 = vld [vmem:[%s1722 + $0x410] sm:$0xff]
        %v1908 = vld [vmem:[%s1722 + $0x418] sm:$0xff]
        %v1909 = vld [vmem:[%s1722 + $0x420] sm:$0xff]
        %v1910 = vld [vmem:[%s1722 + $0x428] sm:$0xff]
        %v1911 = vld [vmem:[%s1722 + $0x430] sm:$0xff]
        %v1912 = vld [vmem:[%s1722 + $0x438] sm:$0xff]
        %v1913 = vld [vmem:[%s1722 + $0x440] sm:$0xff]
        %v1914 = vld [vmem:[%s1722 + $0x448] sm:$0xff]
        %v1915 = vld [vmem:[%s1722 + $0x450] sm:$0xff]
        %v1916 = vld [vmem:[%s1722 + $0x458] sm:$0xff]
        %v1917 = vld [vmem:[%s1722 + $0x460] sm:$0xff]
        %v1918 = vld [vmem:[%s1722 + $0x468] sm:$0xff]
        %v1919 = vld [vmem:[%s1722 + $0x470] sm:$0xff]
        %v1920 = vld [vmem:[%s1722 + $0x478] sm:$0xff]
        %v1921 = vld [vmem:[%s1722 + $0x480] sm:$0xff]
        %v1922 = vld [vmem:[%s1722 + $0x488] sm:$0xff]
        %v1923 = vld [vmem:[%s1722 + $0x490] sm:$0xff]
        %v1924 = vld [vmem:[%s1722 + $0x498] sm:$0xff]
        %v1925 = vld [vmem:[%s1722 + $0x4a0] sm:$0xff]
        %v1926 = vld [vmem:[%s1722 + $0x4a8] sm:$0xff]
        %v1927 = vld [vmem:[%s1722 + $0x4b0] sm:$0xff]
        %v1928 = vld [vmem:[%s1722 + $0x4b8] sm:$0xff]
        %v1929 = vld [vmem:[%s1722 + $0x4c0] sm:$0xff]
        %v1930 = vld [vmem:[%s1722 + $0x4c8] sm:$0xff]
        %v1931 = vld [vmem:[%s1722 + $0x4d0] sm:$0xff]
        %v1932 = vld [vmem:[%s1722 + $0x4d8] sm:$0xff]
        %v1933 = vld [vmem:[%s1722 + $0x4e0] sm:$0xff]
        %v1934 = vld [vmem:[%s1722 + $0x4e8] sm:$0xff]
        %v1935 = vld [vmem:[%s1722 + $0x4f0] sm:$0xff]
        %v1936 = vld [vmem:[%s1722 + $0x4f8] sm:$0xff]
        %v1937 = vld [vmem:[%s1722 + $0x500] sm:$0xff]
        %v1938 = vld [vmem:[%s1722 + $0x508] sm:$0xff]
        %v1939 = vld [vmem:[%s1722 + $0x510] sm:$0xff]
        %v1940 = vld [vmem:[%s1722 + $0x518] sm:$0xff]
        %v1941 = vld [vmem:[%s1722 + $0x520] sm:$0xff]
        %v1942 = vld [vmem:[%s1722 + $0x528] sm:$0xff]
        %v1943 = vld [vmem:[%s1722 + $0x530] sm:$0xff]
        %v1944 = vld [vmem:[%s1722 + $0x538] sm:$0xff]
        %v1945 = vld [vmem:[%s1722 + $0x540] sm:$0xff]
        %v1946 = vld [vmem:[%s1722 + $0x548] sm:$0xff]
        %v1947 = vld [vmem:[%s1722 + $0x550] sm:$0xff]
        %v1948 = vld [vmem:[%s1722 + $0x558] sm:$0xff]
        %v1949 = vld [vmem:[%s1722 + $0x560] sm:$0xff]
        %v1950 = vld [vmem:[%s1722 + $0x568] sm:$0xff]
        %v1951 = vld [vmem:[%s1722 + $0x570] sm:$0xff]
        %v1952 = vld [vmem:[%s1722 + $0x578] sm:$0xff]
        %v1953 = vld [vmem:[%s1722 + $0x580] sm:$0xff]
        %v1954 = vld [vmem:[%s1722 + $0x588] sm:$0xff]
        %v1955 = vld [vmem:[%s1722 + $0x590] sm:$0xff]
        %v1956 = vld [vmem:[%s1722 + $0x598] sm:$0xff]
        %v1957 = vld [vmem:[%s1722 + $0x5a0] sm:$0xff]
        %v1958 = vld [vmem:[%s1722 + $0x5a8] sm:$0xff]
        %v1959 = vld [vmem:[%s1722 + $0x5b0] sm:$0xff]
        %v1960 = vld [vmem:[%s1722 + $0x5b8] sm:$0xff]
        %v1961 = vld [vmem:[%s1722 + $0x5c0] sm:$0xff]
        %v1962 = vld [vmem:[%s1722 + $0x5c8] sm:$0xff]
        %v1963 = vld [vmem:[%s1722 + $0x5d0] sm:$0xff]
        %v1964 = vld [vmem:[%s1722 + $0x5d8] sm:$0xff]
        %v1965 = vld [vmem:[%s1722 + $0x5e0] sm:$0xff]
        %v1966 = vld [vmem:[%s1722 + $0x5e8] sm:$0xff]
        %v1967 = vld [vmem:[%s1722 + $0x5f0] sm:$0xff]
        %v1968 = vld [vmem:[%s1722 + $0x5f8] sm:$0xff]
        %v1969 = vld [vmem:[%s1722 + $0x600] sm:$0xff]
        %v1970 = vld [vmem:[%s1722 + $0x608] sm:$0xff]
        %v1971 = vld [vmem:[%s1722 + $0x610] sm:$0xff]
        %v1972 = vld [vmem:[%s1722 + $0x618] sm:$0xff]
        %v1973 = vld [vmem:[%s1722 + $0x620] sm:$0xff]
        %v1974 = vld [vmem:[%s1722 + $0x628] sm:$0xff]
        %v1975 = vld [vmem:[%s1722 + $0x630] sm:$0xff]
        %v1976 = vld [vmem:[%s1722 + $0x638] sm:$0xff]
        %v1977 = vld [vmem:[%s1722 + $0x640] sm:$0xff]
        %v1978 = vld [vmem:[%s1722 + $0x648] sm:$0xff]
        %v1979 = vld [vmem:[%s1722 + $0x650] sm:$0xff]
        %v1980 = vld [vmem:[%s1722 + $0x658] sm:$0xff]
        %v1981 = vld [vmem:[%s1722 + $0x660] sm:$0xff]
        %v1982 = vld [vmem:[%s1722 + $0x668] sm:$0xff]
        %v1983 = vld [vmem:[%s1722 + $0x670] sm:$0xff]
        %v1984 = vld [vmem:[%s1722 + $0x678] sm:$0xff]
        %v1985 = vld [vmem:[%s1722 + $0x680] sm:$0xff]
        %v1986 = vld [vmem:[%s1722 + $0x688] sm:$0xff]
        %v1987 = vld [vmem:[%s1722 + $0x690] sm:$0xff]
        %v1988 = vld [vmem:[%s1722 + $0x698] sm:$0xff]
        %v1989 = vld [vmem:[%s1722 + $0x6a0] sm:$0xff]
        %v1990 = vld [vmem:[%s1722 + $0x6a8] sm:$0xff]
        %v1991 = vld [vmem:[%s1722 + $0x6b0] sm:$0xff]
        %v1992 = vld [vmem:[%s1722 + $0x6b8] sm:$0xff]
        %v1993 = vld [vmem:[%s1722 + $0x6c0] sm:$0xff]
        %v1994 = vld [vmem:[%s1722 + $0x6c8] sm:$0xff]
        %v1995 = vld [vmem:[%s1722 + $0x6d0] sm:$0xff]
        %v1996 = vld [vmem:[%s1722 + $0x6d8] sm:$0xff]
        %v1997 = vld [vmem:[%s1722 + $0x6e0] sm:$0xff]
        %v1998 = vld [vmem:[%s1722 + $0x6e8] sm:$0xff]
        %v1999 = vld [vmem:[%s1722 + $0x6f0] sm:$0xff]
        %v2000 = vld [vmem:[%s1722 + $0x6f8] sm:$0xff]
        %v2001 = vld [vmem:[%s1722 + $0x700] sm:$0xff]
        %v2002 = vld [vmem:[%s1722 + $0x708] sm:$0xff]
        %v2003 = vld [vmem:[%s1722 + $0x710] sm:$0xff]
        %v2004 = vld [vmem:[%s1722 + $0x718] sm:$0xff]
        %v2005 = vld [vmem:[%s1722 + $0x720] sm:$0xff]
        %v2006 = vld [vmem:[%s1722 + $0x728] sm:$0xff]
        %v2007 = vld [vmem:[%s1722 + $0x730] sm:$0xff]
        %v2008 = vld [vmem:[%s1722 + $0x738] sm:$0xff]
        %v2009 = vld [vmem:[%s1722 + $0x740] sm:$0xff]
        %v2010 = vld [vmem:[%s1722 + $0x748] sm:$0xff]
        %v2011 = vld [vmem:[%s1722 + $0x750] sm:$0xff]
        %v2012 = vld [vmem:[%s1722 + $0x758] sm:$0xff]
        %v2013 = vld [vmem:[%s1722 + $0x760] sm:$0xff]
        %v2014 = vld [vmem:[%s1722 + $0x768] sm:$0xff]
        %v2015 = vld [vmem:[%s1722 + $0x770] sm:$0xff]
        %v2016 = vld [vmem:[%s1722 + $0x778] sm:$0xff]
        %v2017 = vld [vmem:[%s1722 + $0x780] sm:$0xff]
        %v2018 = vld [vmem:[%s1722 + $0x788] sm:$0xff]
        %v2019 = vld [vmem:[%s1722 + $0x790] sm:$0xff]
        %v2020 = vld [vmem:[%s1722 + $0x798] sm:$0xff]
        %v2021 = vld [vmem:[%s1722 + $0x7a0] sm:$0xff]
        %v2022 = vld [vmem:[%s1722 + $0x7a8] sm:$0xff]
        %v2023 = vld [vmem:[%s1722 + $0x7b0] sm:$0xff]
        %v2024 = vld [vmem:[%s1722 + $0x7b8] sm:$0xff]
        %v2025 = vld [vmem:[%s1722 + $0x7c0] sm:$0xff]
        %v2026 = vld [vmem:[%s1722 + $0x7c8] sm:$0xff]
        %v2027 = vld [vmem:[%s1722 + $0x7d0] sm:$0xff]
        %v2028 = vld [vmem:[%s1722 + $0x7d8] sm:$0xff]
        %v2029 = vld [vmem:[%s1722 + $0x7e0] sm:$0xff]
        %v2030 = vld [vmem:[%s1722 + $0x7e8] sm:$0xff]
        %v2031 = vld [vmem:[%s1722 + $0x7f0] sm:$0xff]
        %v2032 = vld [vmem:[%s1722 + $0x7f8] sm:$0xff]
        %v2033 = vld [vmem:[%s1722 + $0x800] sm:$0xff]
        %v2034 = vld [vmem:[%s1722 + $0x808] sm:$0xff]
        %v2035 = vld [vmem:[%s1722 + $0x810] sm:$0xff]
        %v2036 = vld [vmem:[%s1722 + $0x818] sm:$0xff]
        %v2037 = vld [vmem:[%s1722 + $0x820] sm:$0xff]
        %v2038 = vld [vmem:[%s1722 + $0x828] sm:$0xff]
        %v2039 = vld [vmem:[%s1722 + $0x830] sm:$0xff]
        %v2040 = vld [vmem:[%s1722 + $0x838] sm:$0xff]
        %v2041 = vld [vmem:[%s1722 + $0x840] sm:$0xff]
        %v2042 = vld [vmem:[%s1722 + $0x848] sm:$0xff]
        %v2043 = vld [vmem:[%s1722 + $0x850] sm:$0xff]
        %v2044 = vld [vmem:[%s1722 + $0x858] sm:$0xff]
        %v2045 = vld [vmem:[%s1722 + $0x860] sm:$0xff]
        %v2046 = vld [vmem:[%s1722 + $0x868] sm:$0xff]
        %v2047 = vld [vmem:[%s1722 + $0x870] sm:$0xff]
        %v2048 = vld [vmem:[%s1722 + $0x878] sm:$0xff]
        %v2049 = vld [vmem:[%s1722 + $0x880] sm:$0xff]
        %v2050 = vld [vmem:[%s1722 + $0x888] sm:$0xff]
        %v2051 = vld [vmem:[%s1722 + $0x890] sm:$0xff]
        %v2052 = vld [vmem:[%s1722 + $0x898] sm:$0xff]
        %v2053 = vld [vmem:[%s1722 + $0x8a0] sm:$0xff]
        %v2054 = vld [vmem:[%s1722 + $0x8a8] sm:$0xff]
        %v2055 = vld [vmem:[%s1722 + $0x8b0] sm:$0xff]
        %v2056 = vld [vmem:[%s1722 + $0x8b8] sm:$0xff]
        %v2057 = vld [vmem:[%s1722 + $0x8c0] sm:$0xff]
        %v2058 = vld [vmem:[%s1722 + $0x8c8] sm:$0xff]
        %v2059 = vld [vmem:[%s1722 + $0x8d0] sm:$0xff]
        %v2060 = vld [vmem:[%s1722 + $0x8d8] sm:$0xff]
        %v2061 = vld [vmem:[%s1722 + $0x8e0] sm:$0xff]
        %v2062 = vld [vmem:[%s1722 + $0x8e8] sm:$0xff]
        %v2063 = vld [vmem:[%s1722 + $0x8f0] sm:$0xff]
        %v2064 = vld [vmem:[%s1722 + $0x8f8] sm:$0xff]
        %v2065 = vld [vmem:[%s1722 + $0x900] sm:$0xff]
        %v2066 = vld [vmem:[%s1722 + $0x908] sm:$0xff]
        %v2067 = vld [vmem:[%s1722 + $0x910] sm:$0xff]
        %v2068 = vld [vmem:[%s1722 + $0x918] sm:$0xff]
        %v2069 = vld [vmem:[%s1722 + $0x920] sm:$0xff]
        %v2070 = vld [vmem:[%s1722 + $0x928] sm:$0xff]
        %v2071 = vld [vmem:[%s1722 + $0x930] sm:$0xff]
        %v2072 = vld [vmem:[%s1722 + $0x938] sm:$0xff]
        %v2073 = vld [vmem:[%s1722 + $0x940] sm:$0xff]
        %v2074 = vld [vmem:[%s1722 + $0x948] sm:$0xff]
        %v2075 = vld [vmem:[%s1722 + $0x950] sm:$0xff]
        %v2076 = vld [vmem:[%s1722 + $0x958] sm:$0xff]
        %v2077 = vld [vmem:[%s1722 + $0x960] sm:$0xff]
        %v2078 = vld [vmem:[%s1722 + $0x968] sm:$0xff]
        %v2079 = vld [vmem:[%s1722 + $0x970] sm:$0xff]
        %v2080 = vld [vmem:[%s1722 + $0x978] sm:$0xff]
        %v2081 = vld [vmem:[%s1722 + $0x980] sm:$0xff]
        %v2082 = vld [vmem:[%s1722 + $0x988] sm:$0xff]
        %v2083 = vld [vmem:[%s1722 + $0x990] sm:$0xff]
        %v2084 = vld [vmem:[%s1722 + $0x998] sm:$0xff]
        %v2085 = vld [vmem:[%s1722 + $0x9a0] sm:$0xff]
        %v2086 = vld [vmem:[%s1722 + $0x9a8] sm:$0xff]
        %v2087 = vld [vmem:[%s1722 + $0x9b0] sm:$0xff]
        %v2088 = vld [vmem:[%s1722 + $0x9b8] sm:$0xff]
        %v2089 = vld [vmem:[%s1722 + $0x9c0] sm:$0xff]
        %v2090 = vld [vmem:[%s1722 + $0x9c8] sm:$0xff]
        %v2091 = vld [vmem:[%s1722 + $0x9d0] sm:$0xff]
        %v2092 = vld [vmem:[%s1722 + $0x9d8] sm:$0xff]
        %v2093 = vld [vmem:[%s1722 + $0x9e0] sm:$0xff]
        %v2094 = vld [vmem:[%s1722 + $0x9e8] sm:$0xff]
        %v2095 = vld [vmem:[%s1722 + $0x9f0] sm:$0xff]
        %v2096 = vld [vmem:[%s1722 + $0x9f8] sm:$0xff]
        %v2097 = vld [vmem:[%s1722 + $0xa00] sm:$0xff]
        %v2098 = vld [vmem:[%s1722 + $0xa08] sm:$0xff]
        %v2099 = vld [vmem:[%s1722 + $0xa10] sm:$0xff]
        %v2100 = vld [vmem:[%s1722 + $0xa18] sm:$0xff]
        %v2101 = vld [vmem:[%s1722 + $0xa20] sm:$0xff]
        %v2102 = vld [vmem:[%s1722 + $0xa28] sm:$0xff]
        %v2103 = vld [vmem:[%s1722 + $0xa30] sm:$0xff]
        %v2104 = vld [vmem:[%s1722 + $0xa38] sm:$0xff]
        %v2105 = vld [vmem:[%s1722 + $0xa40] sm:$0xff]
        %v2106 = vld [vmem:[%s1722 + $0xa48] sm:$0xff]
        %v2107 = vld [vmem:[%s1722 + $0xa50] sm:$0xff]
        %v2108 = vld [vmem:[%s1722 + $0xa58] sm:$0xff]
        %v2109 = vld [vmem:[%s1722 + $0xa60] sm:$0xff]
        %v2110 = vld [vmem:[%s1722 + $0xa68] sm:$0xff]
        %v2111 = vld [vmem:[%s1722 + $0xa70] sm:$0xff]
        %v2112 = vld [vmem:[%s1722 + $0xa78] sm:$0xff]
        %v2113 = vld [vmem:[%s1722 + $0xa80] sm:$0xff]
        %v2114 = vld [vmem:[%s1722 + $0xa88] sm:$0xff]
        %v2115 = vld [vmem:[%s1722 + $0xa90] sm:$0xff]
        %v2116 = vld [vmem:[%s1722 + $0xa98] sm:$0xff]
        %v2117 = vld [vmem:[%s1722 + $0xaa0] sm:$0xff]
        %v2118 = vld [vmem:[%s1722 + $0xaa8] sm:$0xff]
        %v2119 = vld [vmem:[%s1722 + $0xab0] sm:$0xff]
        %v2120 = vld [vmem:[%s1722 + $0xab8] sm:$0xff]
        %v2121 = vld [vmem:[%s1722 + $0xac0] sm:$0xff]
        %v2122 = vld [vmem:[%s1722 + $0xac8] sm:$0xff]
        %v2123 = vld [vmem:[%s1722 + $0xad0] sm:$0xff]
        %v2124 = vld [vmem:[%s1722 + $0xad8] sm:$0xff]
        %v2125 = vld [vmem:[%s1722 + $0xae0] sm:$0xff]
        %v2126 = vld [vmem:[%s1722 + $0xae8] sm:$0xff]
        %v2127 = vld [vmem:[%s1722 + $0xaf0] sm:$0xff]
        %v2128 = vld [vmem:[%s1722 + $0xaf8] sm:$0xff]
        %v2129 = vld [vmem:[%s1722 + $0xb00] sm:$0xff]
        %v2130 = vld [vmem:[%s1722 + $0xb08] sm:$0xff]
        %v2131 = vld [vmem:[%s1722 + $0xb10] sm:$0xff]
        %v2132 = vld [vmem:[%s1722 + $0xb18] sm:$0xff]
        %v2133 = vld [vmem:[%s1722 + $0xb20] sm:$0xff]
        %v2134 = vld [vmem:[%s1722 + $0xb28] sm:$0xff]
        %v2135 = vld [vmem:[%s1722 + $0xb30] sm:$0xff]
        %v2136 = vld [vmem:[%s1722 + $0xb38] sm:$0xff]
        %v2137 = vld [vmem:[%s1722 + $0xb40] sm:$0xff]
        %v2138 = vld [vmem:[%s1722 + $0xb48] sm:$0xff]
        %v2139 = vld [vmem:[%s1722 + $0xb50] sm:$0xff]
        %v2140 = vld [vmem:[%s1722 + $0xb58] sm:$0xff]
        %v2141 = vld [vmem:[%s1722 + $0xb60] sm:$0xff]
        %v2142 = vld [vmem:[%s1722 + $0xb68] sm:$0xff]
        %v2143 = vld [vmem:[%s1722 + $0xb70] sm:$0xff]
        %v2144 = vld [vmem:[%s1722 + $0xb78] sm:$0xff]
        %v2145 = vld [vmem:[%s1722 + $0xb80] sm:$0xff]
        %v2146 = vld [vmem:[%s1722 + $0xb88] sm:$0xff]
        %v2147 = vld [vmem:[%s1722 + $0xb90] sm:$0xff]
        %v2148 = vld [vmem:[%s1722 + $0xb98] sm:$0xff]
        %v2149 = vld [vmem:[%s1722 + $0xba0] sm:$0xff]
        %v2150 = vld [vmem:[%s1722 + $0xba8] sm:$0xff]
        %v2151 = vld [vmem:[%s1722 + $0xbb0] sm:$0xff]
        %v2152 = vld [vmem:[%s1722 + $0xbb8] sm:$0xff]
        %v2153 = vld [vmem:[%s1722 + $0xbc0] sm:$0xff]
        %v2154 = vld [vmem:[%s1722 + $0xbc8] sm:$0xff]
        %v2155 = vld [vmem:[%s1722 + $0xbd0] sm:$0xff]
        %v2156 = vld [vmem:[%s1722 + $0xbd8] sm:$0xff]
        %v2157 = vld [vmem:[%s1722 + $0xbe0] sm:$0xff]
        %v2158 = vld [vmem:[%s1722 + $0xbe8] sm:$0xff]
        %v2159 = vld [vmem:[%s1722 + $0xbf0] sm:$0xff]
        %v2160 = vld [vmem:[%s1722 + $0xbf8] sm:$0xff]
        %v2161 = vld [vmem:[%s1750] sm:$0x3]
        %v2163 = vlaneseq
        %v2164 = vshrl.u32 %v2163, 7
        %v2165 = vsub.s32 0, %v2164
        %v2166 = vrot.slane %v2161, %v2165
        %v2167 = vlaneseq
        %v2168 = vshrl.u32 %v2167, 7
        %v2169 = vsub.s32 1, %v2168
        %v2170 = vrot.slane %v2161, %v2169
        %v2197 = vunpack.c.l.b16 %v1753
        %v2198 = vunpack.c.h.b16 %v1753
        %v2199 = vunpack.c.l.b16 %v1754
        %v2200 = vunpack.c.h.b16 %v1754
        %v2201 = vunpack.c.l.b16 %v1755
        %v2202 = vunpack.c.h.b16 %v1755
        %v2203 = vunpack.c.l.b16 %v1756
        %v2204 = vunpack.c.h.b16 %v1756
        %v2205 = vunpack.c.l.b16 %v1757
        %v2206 = vunpack.c.h.b16 %v1757
        %v2207 = vunpack.c.l.b16 %v1758
        %v2208 = vunpack.c.h.b16 %v1758
        %v2209 = vunpack.c.l.b16 %v1759
        %v2210 = vunpack.c.h.b16 %v1759
        %v2211 = vunpack.c.l.b16 %v1760
        %v2212 = vunpack.c.h.b16 %v1760
        %v2213 = vunpack.c.l.b16 %v1761
        %v2214 = vunpack.c.h.b16 %v1761
        %v2215 = vunpack.c.l.b16 %v1762
        %v2216 = vunpack.c.h.b16 %v1762
        %v2217 = vunpack.c.l.b16 %v1763
        %v2218 = vunpack.c.h.b16 %v1763
        %v2219 = vunpack.c.l.b16 %v1764
        %v2220 = vunpack.c.h.b16 %v1764
        %v2221 = vunpack.c.l.b16 %v1765
        %v2222 = vunpack.c.h.b16 %v1765
        %v2223 = vunpack.c.l.b16 %v1766
        %v2224 = vunpack.c.h.b16 %v1766
        %v2225 = vunpack.c.l.b16 %v1767
        %v2226 = vunpack.c.h.b16 %v1767
        %v2227 = vunpack.c.l.b16 %v1768
        %v2228 = vunpack.c.h.b16 %v1768
        %v2229 = vunpack.c.l.b16 %v1769
        %v2230 = vunpack.c.h.b16 %v1769
        %v2231 = vunpack.c.l.b16 %v1770
        %v2232 = vunpack.c.h.b16 %v1770
        %v2233 = vunpack.c.l.b16 %v1771
        %v2234 = vunpack.c.h.b16 %v1771
        %v2235 = vunpack.c.l.b16 %v1772
        %v2236 = vunpack.c.h.b16 %v1772
        %v2237 = vunpack.c.l.b16 %v1773
        %v2238 = vunpack.c.h.b16 %v1773
        %v2239 = vunpack.c.l.b16 %v1774
        %v2240 = vunpack.c.h.b16 %v1774
        %v2241 = vunpack.c.l.b16 %v1775
        %v2242 = vunpack.c.h.b16 %v1775
        %v2243 = vunpack.c.l.b16 %v1776
        %v2244 = vunpack.c.h.b16 %v1776
        %v2245 = vpack.c.b16 %v2221, %v2197
        %v2246 = vpack.c.b16 %v2222, %v2198
        %v2247 = vpack.c.b16 %v2223, %v2199
        %v2248 = vpack.c.b16 %v2224, %v2200
        %v2249 = vpack.c.b16 %v2225, %v2201
        %v2250 = vpack.c.b16 %v2226, %v2202
        %v2251 = vpack.c.b16 %v2227, %v2203
        %v2252 = vpack.c.b16 %v2228, %v2204
        %v2253 = vpack.c.b16 %v2229, %v2205
        %v2254 = vpack.c.b16 %v2230, %v2206
        %v2255 = vpack.c.b16 %v2231, %v2207
        %v2256 = vpack.c.b16 %v2232, %v2208
        %v2257 = vpack.c.b16 %v2233, %v2209
        %v2258 = vpack.c.b16 %v2234, %v2210
        %v2259 = vpack.c.b16 %v2235, %v2211
        %v2260 = vpack.c.b16 %v2236, %v2212
        %v2261 = vpack.c.b16 %v2237, %v2213
        %v2262 = vpack.c.b16 %v2238, %v2214
        %v2263 = vpack.c.b16 %v2239, %v2215
        %v2264 = vpack.c.b16 %v2240, %v2216
        %v2265 = vpack.c.b16 %v2241, %v2217
        %v2266 = vpack.c.b16 %v2242, %v2218
        %v2267 = vpack.c.b16 %v2243, %v2219
        %v2268 = vpack.c.b16 %v2244, %v2220
        %v2677 = vunpack.c.l.b16 %v1777
        %v2678 = vunpack.c.h.b16 %v1777
        %v2679 = vunpack.c.l.b16 %v1778
        %v2680 = vunpack.c.h.b16 %v1778
        %v2681 = vunpack.c.l.b16 %v1779
        %v2682 = vunpack.c.h.b16 %v1779
        %v2683 = vunpack.c.l.b16 %v1780
        %v2684 = vunpack.c.h.b16 %v1780
        %v2685 = vunpack.c.l.b16 %v1781
        %v2686 = vunpack.c.h.b16 %v1781
        %v2687 = vunpack.c.l.b16 %v1782
        %v2688 = vunpack.c.h.b16 %v1782
        %v2689 = vunpack.c.l.b16 %v1783
        %v2690 = vunpack.c.h.b16 %v1783
        %v2691 = vunpack.c.l.b16 %v1784
        %v2692 = vunpack.c.h.b16 %v1784
        %v2693 = vunpack.c.l.b16 %v1785
        %v2694 = vunpack.c.h.b16 %v1785
        %v2695 = vunpack.c.l.b16 %v1786
        %v2696 = vunpack.c.h.b16 %v1786
        %v2697 = vunpack.c.l.b16 %v1787
        %v2698 = vunpack.c.h.b16 %v1787
        %v2699 = vunpack.c.l.b16 %v1788
        %v2700 = vunpack.c.h.b16 %v1788
        %v2701 = vunpack.c.l.b16 %v1789
        %v2702 = vunpack.c.h.b16 %v1789
        %v2703 = vunpack.c.l.b16 %v1790
        %v2704 = vunpack.c.h.b16 %v1790
        %v2705 = vunpack.c.l.b16 %v1791
        %v2706 = vunpack.c.h.b16 %v1791
        %v2707 = vunpack.c.l.b16 %v1792
        %v2708 = vunpack.c.h.b16 %v1792
        %v2709 = vunpack.c.l.b16 %v1793
        %v2710 = vunpack.c.h.b16 %v1793
        %v2711 = vunpack.c.l.b16 %v1794
        %v2712 = vunpack.c.h.b16 %v1794
        %v2713 = vunpack.c.l.b16 %v1795
        %v2714 = vunpack.c.h.b16 %v1795
        %v2715 = vunpack.c.l.b16 %v1796
        %v2716 = vunpack.c.h.b16 %v1796
        %v2717 = vunpack.c.l.b16 %v1797
        %v2718 = vunpack.c.h.b16 %v1797
        %v2719 = vunpack.c.l.b16 %v1798
        %v2720 = vunpack.c.h.b16 %v1798
        %v2721 = vunpack.c.l.b16 %v1799
        %v2722 = vunpack.c.h.b16 %v1799
        %v2723 = vunpack.c.l.b16 %v1800
        %v2724 = vunpack.c.h.b16 %v1800
        %v2725 = vunpack.c.l.b16 %v1801
        %v2726 = vunpack.c.h.b16 %v1801
        %v2727 = vunpack.c.l.b16 %v1802
        %v2728 = vunpack.c.h.b16 %v1802
        %v2729 = vunpack.c.l.b16 %v1803
        %v2730 = vunpack.c.h.b16 %v1803
        %v2731 = vunpack.c.l.b16 %v1804
        %v2732 = vunpack.c.h.b16 %v1804
        %v2733 = vunpack.c.l.b16 %v1805
        %v2734 = vunpack.c.h.b16 %v1805
        %v2735 = vunpack.c.l.b16 %v1806
        %v2736 = vunpack.c.h.b16 %v1806
        %v2737 = vunpack.c.l.b16 %v1807
        %v2738 = vunpack.c.h.b16 %v1807
        %v2739 = vunpack.c.l.b16 %v1808
        %v2740 = vunpack.c.h.b16 %v1808
        %v2741 = vunpack.c.l.b16 %v1809
        %v2742 = vunpack.c.h.b16 %v1809
        %v2743 = vunpack.c.l.b16 %v1810
        %v2744 = vunpack.c.h.b16 %v1810
        %v2745 = vunpack.c.l.b16 %v1811
        %v2746 = vunpack.c.h.b16 %v1811
        %v2747 = vunpack.c.l.b16 %v1812
        %v2748 = vunpack.c.h.b16 %v1812
        %v2749 = vunpack.c.l.b16 %v1813
        %v2750 = vunpack.c.h.b16 %v1813
        %v2751 = vunpack.c.l.b16 %v1814
        %v2752 = vunpack.c.h.b16 %v1814
        %v2753 = vunpack.c.l.b16 %v1815
        %v2754 = vunpack.c.h.b16 %v1815
        %v2755 = vunpack.c.l.b16 %v1816
        %v2756 = vunpack.c.h.b16 %v1816
        %v2757 = vunpack.c.l.b16 %v1817
        %v2758 = vunpack.c.h.b16 %v1817
        %v2759 = vunpack.c.l.b16 %v1818
        %v2760 = vunpack.c.h.b16 %v1818
        %v2761 = vunpack.c.l.b16 %v1819
        %v2762 = vunpack.c.h.b16 %v1819
        %v2763 = vunpack.c.l.b16 %v1820
        %v2764 = vunpack.c.h.b16 %v1820
        %v2765 = vunpack.c.l.b16 %v1821
        %v2766 = vunpack.c.h.b16 %v1821
        %v2767 = vunpack.c.l.b16 %v1822
        %v2768 = vunpack.c.h.b16 %v1822
        %v2769 = vunpack.c.l.b16 %v1823
        %v2770 = vunpack.c.h.b16 %v1823
        %v2771 = vunpack.c.l.b16 %v1824
        %v2772 = vunpack.c.h.b16 %v1824
        %v2773 = vunpack.c.l.b16 %v1825
        %v2774 = vunpack.c.h.b16 %v1825
        %v2775 = vunpack.c.l.b16 %v1826
        %v2776 = vunpack.c.h.b16 %v1826
        %v2777 = vunpack.c.l.b16 %v1827
        %v2778 = vunpack.c.h.b16 %v1827
        %v2779 = vunpack.c.l.b16 %v1828
        %v2780 = vunpack.c.h.b16 %v1828
        %v2781 = vunpack.c.l.b16 %v1829
        %v2782 = vunpack.c.h.b16 %v1829
        %v2783 = vunpack.c.l.b16 %v1830
        %v2784 = vunpack.c.h.b16 %v1830
        %v2785 = vunpack.c.l.b16 %v1831
        %v2786 = vunpack.c.h.b16 %v1831
        %v2787 = vunpack.c.l.b16 %v1832
        %v2788 = vunpack.c.h.b16 %v1832
        %v2789 = vunpack.c.l.b16 %v1833
        %v2790 = vunpack.c.h.b16 %v1833
        %v2791 = vunpack.c.l.b16 %v1834
        %v2792 = vunpack.c.h.b16 %v1834
        %v2793 = vunpack.c.l.b16 %v1835
        %v2794 = vunpack.c.h.b16 %v1835
        %v2795 = vunpack.c.l.b16 %v1836
        %v2796 = vunpack.c.h.b16 %v1836
        %v2797 = vunpack.c.l.b16 %v1837
        %v2798 = vunpack.c.h.b16 %v1837
        %v2799 = vunpack.c.l.b16 %v1838
        %v2800 = vunpack.c.h.b16 %v1838
        %v2801 = vunpack.c.l.b16 %v1839
        %v2802 = vunpack.c.h.b16 %v1839
        %v2803 = vunpack.c.l.b16 %v1840
        %v2804 = vunpack.c.h.b16 %v1840
        %v2805 = vunpack.c.l.b16 %v1841
        %v2806 = vunpack.c.h.b16 %v1841
        %v2807 = vunpack.c.l.b16 %v1842
        %v2808 = vunpack.c.h.b16 %v1842
        %v2809 = vunpack.c.l.b16 %v1843
        %v2810 = vunpack.c.h.b16 %v1843
        %v2811 = vunpack.c.l.b16 %v1844
        %v2812 = vunpack.c.h.b16 %v1844
        %v2813 = vunpack.c.l.b16 %v1845
        %v2814 = vunpack.c.h.b16 %v1845
        %v2815 = vunpack.c.l.b16 %v1846
        %v2816 = vunpack.c.h.b16 %v1846
        %v2817 = vunpack.c.l.b16 %v1847
        %v2818 = vunpack.c.h.b16 %v1847
        %v2819 = vunpack.c.l.b16 %v1848
        %v2820 = vunpack.c.h.b16 %v1848
        %v2821 = vunpack.c.l.b16 %v1849
        %v2822 = vunpack.c.h.b16 %v1849
        %v2823 = vunpack.c.l.b16 %v1850
        %v2824 = vunpack.c.h.b16 %v1850
        %v2825 = vunpack.c.l.b16 %v1851
        %v2826 = vunpack.c.h.b16 %v1851
        %v2827 = vunpack.c.l.b16 %v1852
        %v2828 = vunpack.c.h.b16 %v1852
        %v2829 = vunpack.c.l.b16 %v1853
        %v2830 = vunpack.c.h.b16 %v1853
        %v2831 = vunpack.c.l.b16 %v1854
        %v2832 = vunpack.c.h.b16 %v1854
        %v2833 = vunpack.c.l.b16 %v1855
        %v2834 = vunpack.c.h.b16 %v1855
        %v2835 = vunpack.c.l.b16 %v1856
        %v2836 = vunpack.c.h.b16 %v1856
        %v2837 = vunpack.c.l.b16 %v1857
        %v2838 = vunpack.c.h.b16 %v1857
        %v2839 = vunpack.c.l.b16 %v1858
        %v2840 = vunpack.c.h.b16 %v1858
        %v2841 = vunpack.c.l.b16 %v1859
        %v2842 = vunpack.c.h.b16 %v1859
        %v2843 = vunpack.c.l.b16 %v1860
        %v2844 = vunpack.c.h.b16 %v1860
        %v2845 = vunpack.c.l.b16 %v1861
        %v2846 = vunpack.c.h.b16 %v1861
        %v2847 = vunpack.c.l.b16 %v1862
        %v2848 = vunpack.c.h.b16 %v1862
        %v2849 = vunpack.c.l.b16 %v1863
        %v2850 = vunpack.c.h.b16 %v1863
        %v2851 = vunpack.c.l.b16 %v1864
        %v2852 = vunpack.c.h.b16 %v1864
        %v2853 = vunpack.c.l.b16 %v1865
        %v2854 = vunpack.c.h.b16 %v1865
        %v2855 = vunpack.c.l.b16 %v1866
        %v2856 = vunpack.c.h.b16 %v1866
        %v2857 = vunpack.c.l.b16 %v1867
        %v2858 = vunpack.c.h.b16 %v1867
        %v2859 = vunpack.c.l.b16 %v1868
        %v2860 = vunpack.c.h.b16 %v1868
        %v2861 = vunpack.c.l.b16 %v1869
        %v2862 = vunpack.c.h.b16 %v1869
        %v2863 = vunpack.c.l.b16 %v1870
        %v2864 = vunpack.c.h.b16 %v1870
        %v2865 = vunpack.c.l.b16 %v1871
        %v2866 = vunpack.c.h.b16 %v1871
        %v2867 = vunpack.c.l.b16 %v1872
        %v2868 = vunpack.c.h.b16 %v1872
        %v2869 = vunpack.c.l.b16 %v1873
        %v2870 = vunpack.c.h.b16 %v1873
        %v2871 = vunpack.c.l.b16 %v1874
        %v2872 = vunpack.c.h.b16 %v1874
        %v2873 = vunpack.c.l.b16 %v1875
        %v2874 = vunpack.c.h.b16 %v1875
        %v2875 = vunpack.c.l.b16 %v1876
        %v2876 = vunpack.c.h.b16 %v1876
        %v2877 = vunpack.c.l.b16 %v1877
        %v2878 = vunpack.c.h.b16 %v1877
        %v2879 = vunpack.c.l.b16 %v1878
        %v2880 = vunpack.c.h.b16 %v1878
        %v2881 = vunpack.c.l.b16 %v1879
        %v2882 = vunpack.c.h.b16 %v1879
        %v2883 = vunpack.c.l.b16 %v1880
        %v2884 = vunpack.c.h.b16 %v1880
        %v2885 = vunpack.c.l.b16 %v1881
        %v2886 = vunpack.c.h.b16 %v1881
        %v2887 = vunpack.c.l.b16 %v1882
        %v2888 = vunpack.c.h.b16 %v1882
        %v2889 = vunpack.c.l.b16 %v1883
        %v2890 = vunpack.c.h.b16 %v1883
        %v2891 = vunpack.c.l.b16 %v1884
        %v2892 = vunpack.c.h.b16 %v1884
        %v2893 = vunpack.c.l.b16 %v1885
        %v2894 = vunpack.c.h.b16 %v1885
        %v2895 = vunpack.c.l.b16 %v1886
        %v2896 = vunpack.c.h.b16 %v1886
        %v2897 = vunpack.c.l.b16 %v1887
        %v2898 = vunpack.c.h.b16 %v1887
        %v2899 = vunpack.c.l.b16 %v1888
        %v2900 = vunpack.c.h.b16 %v1888
        %v2901 = vunpack.c.l.b16 %v1889
        %v2902 = vunpack.c.h.b16 %v1889
        %v2903 = vunpack.c.l.b16 %v1890
        %v2904 = vunpack.c.h.b16 %v1890
        %v2905 = vunpack.c.l.b16 %v1891
        %v2906 = vunpack.c.h.b16 %v1891
        %v2907 = vunpack.c.l.b16 %v1892
        %v2908 = vunpack.c.h.b16 %v1892
        %v2909 = vunpack.c.l.b16 %v1893
        %v2910 = vunpack.c.h.b16 %v1893
        %v2911 = vunpack.c.l.b16 %v1894
        %v2912 = vunpack.c.h.b16 %v1894
        %v2913 = vunpack.c.l.b16 %v1895
        %v2914 = vunpack.c.h.b16 %v1895
        %v2915 = vunpack.c.l.b16 %v1896
        %v2916 = vunpack.c.h.b16 %v1896
        %v2917 = vunpack.c.l.b16 %v1897
        %v2918 = vunpack.c.h.b16 %v1897
        %v2919 = vunpack.c.l.b16 %v1898
        %v2920 = vunpack.c.h.b16 %v1898
        %v2921 = vunpack.c.l.b16 %v1899
        %v2922 = vunpack.c.h.b16 %v1899
        %v2923 = vunpack.c.l.b16 %v1900
        %v2924 = vunpack.c.h.b16 %v1900
        %v2925 = vunpack.c.l.b16 %v1901
        %v2926 = vunpack.c.h.b16 %v1901
        %v2927 = vunpack.c.l.b16 %v1902
        %v2928 = vunpack.c.h.b16 %v1902
        %v2929 = vunpack.c.l.b16 %v1903
        %v2930 = vunpack.c.h.b16 %v1903
        %v2931 = vunpack.c.l.b16 %v1904
        %v2932 = vunpack.c.h.b16 %v1904
        %v2933 = vunpack.c.l.b16 %v1905
        %v2934 = vunpack.c.h.b16 %v1905
        %v2935 = vunpack.c.l.b16 %v1906
        %v2936 = vunpack.c.h.b16 %v1906
        %v2937 = vunpack.c.l.b16 %v1907
        %v2938 = vunpack.c.h.b16 %v1907
        %v2939 = vunpack.c.l.b16 %v1908
        %v2940 = vunpack.c.h.b16 %v1908
        %v2941 = vunpack.c.l.b16 %v1909
        %v2942 = vunpack.c.h.b16 %v1909
        %v2943 = vunpack.c.l.b16 %v1910
        %v2944 = vunpack.c.h.b16 %v1910
        %v2945 = vunpack.c.l.b16 %v1911
        %v2946 = vunpack.c.h.b16 %v1911
        %v2947 = vunpack.c.l.b16 %v1912
        %v2948 = vunpack.c.h.b16 %v1912
        %v2949 = vunpack.c.l.b16 %v1913
        %v2950 = vunpack.c.h.b16 %v1913
        %v2951 = vunpack.c.l.b16 %v1914
        %v2952 = vunpack.c.h.b16 %v1914
        %v2953 = vunpack.c.l.b16 %v1915
        %v2954 = vunpack.c.h.b16 %v1915
        %v2955 = vunpack.c.l.b16 %v1916
        %v2956 = vunpack.c.h.b16 %v1916
        %v2957 = vunpack.c.l.b16 %v1917
        %v2958 = vunpack.c.h.b16 %v1917
        %v2959 = vunpack.c.l.b16 %v1918
        %v2960 = vunpack.c.h.b16 %v1918
        %v2961 = vunpack.c.l.b16 %v1919
        %v2962 = vunpack.c.h.b16 %v1919
        %v2963 = vunpack.c.l.b16 %v1920
        %v2964 = vunpack.c.h.b16 %v1920
        %v2965 = vunpack.c.l.b16 %v1921
        %v2966 = vunpack.c.h.b16 %v1921
        %v2967 = vunpack.c.l.b16 %v1922
        %v2968 = vunpack.c.h.b16 %v1922
        %v2969 = vunpack.c.l.b16 %v1923
        %v2970 = vunpack.c.h.b16 %v1923
        %v2971 = vunpack.c.l.b16 %v1924
        %v2972 = vunpack.c.h.b16 %v1924
        %v2973 = vunpack.c.l.b16 %v1925
        %v2974 = vunpack.c.h.b16 %v1925
        %v2975 = vunpack.c.l.b16 %v1926
        %v2976 = vunpack.c.h.b16 %v1926
        %v2977 = vunpack.c.l.b16 %v1927
        %v2978 = vunpack.c.h.b16 %v1927
        %v2979 = vunpack.c.l.b16 %v1928
        %v2980 = vunpack.c.h.b16 %v1928
        %v2981 = vunpack.c.l.b16 %v1929
        %v2982 = vunpack.c.h.b16 %v1929
        %v2983 = vunpack.c.l.b16 %v1930
        %v2984 = vunpack.c.h.b16 %v1930
        %v2985 = vunpack.c.l.b16 %v1931
        %v2986 = vunpack.c.h.b16 %v1931
        %v2987 = vunpack.c.l.b16 %v1932
        %v2988 = vunpack.c.h.b16 %v1932
        %v2989 = vunpack.c.l.b16 %v1933
        %v2990 = vunpack.c.h.b16 %v1933
        %v2991 = vunpack.c.l.b16 %v1934
        %v2992 = vunpack.c.h.b16 %v1934
        %v2993 = vunpack.c.l.b16 %v1935
        %v2994 = vunpack.c.h.b16 %v1935
        %v2995 = vunpack.c.l.b16 %v1936
        %v2996 = vunpack.c.h.b16 %v1936
        %v2997 = vunpack.c.l.b16 %v1937
        %v2998 = vunpack.c.h.b16 %v1937
        %v2999 = vunpack.c.l.b16 %v1938
        %v3000 = vunpack.c.h.b16 %v1938
        %v3001 = vunpack.c.l.b16 %v1939
        %v3002 = vunpack.c.h.b16 %v1939
        %v3003 = vunpack.c.l.b16 %v1940
        %v3004 = vunpack.c.h.b16 %v1940
        %v3005 = vunpack.c.l.b16 %v1941
        %v3006 = vunpack.c.h.b16 %v1941
        %v3007 = vunpack.c.l.b16 %v1942
        %v3008 = vunpack.c.h.b16 %v1942
        %v3009 = vunpack.c.l.b16 %v1943
        %v3010 = vunpack.c.h.b16 %v1943
        %v3011 = vunpack.c.l.b16 %v1944
        %v3012 = vunpack.c.h.b16 %v1944
        %v3013 = vunpack.c.l.b16 %v1945
        %v3014 = vunpack.c.h.b16 %v1945
        %v3015 = vunpack.c.l.b16 %v1946
        %v3016 = vunpack.c.h.b16 %v1946
        %v3017 = vunpack.c.l.b16 %v1947
        %v3018 = vunpack.c.h.b16 %v1947
        %v3019 = vunpack.c.l.b16 %v1948
        %v3020 = vunpack.c.h.b16 %v1948
        %v3021 = vunpack.c.l.b16 %v1949
        %v3022 = vunpack.c.h.b16 %v1949
        %v3023 = vunpack.c.l.b16 %v1950
        %v3024 = vunpack.c.h.b16 %v1950
        %v3025 = vunpack.c.l.b16 %v1951
        %v3026 = vunpack.c.h.b16 %v1951
        %v3027 = vunpack.c.l.b16 %v1952
        %v3028 = vunpack.c.h.b16 %v1952
        %v3029 = vunpack.c.l.b16 %v1953
        %v3030 = vunpack.c.h.b16 %v1953
        %v3031 = vunpack.c.l.b16 %v1954
        %v3032 = vunpack.c.h.b16 %v1954
        %v3033 = vunpack.c.l.b16 %v1955
        %v3034 = vunpack.c.h.b16 %v1955
        %v3035 = vunpack.c.l.b16 %v1956
        %v3036 = vunpack.c.h.b16 %v1956
        %v3037 = vunpack.c.l.b16 %v1957
        %v3038 = vunpack.c.h.b16 %v1957
        %v3039 = vunpack.c.l.b16 %v1958
        %v3040 = vunpack.c.h.b16 %v1958
        %v3041 = vunpack.c.l.b16 %v1959
        %v3042 = vunpack.c.h.b16 %v1959
        %v3043 = vunpack.c.l.b16 %v1960
        %v3044 = vunpack.c.h.b16 %v1960
        %v3045 = vunpack.c.l.b16 %v1961
        %v3046 = vunpack.c.h.b16 %v1961
        %v3047 = vunpack.c.l.b16 %v1962
        %v3048 = vunpack.c.h.b16 %v1962
        %v3049 = vunpack.c.l.b16 %v1963
        %v3050 = vunpack.c.h.b16 %v1963
        %v3051 = vunpack.c.l.b16 %v1964
        %v3052 = vunpack.c.h.b16 %v1964
        %v3053 = vunpack.c.l.b16 %v1965
        %v3054 = vunpack.c.h.b16 %v1965
        %v3055 = vunpack.c.l.b16 %v1966
        %v3056 = vunpack.c.h.b16 %v1966
        %v3057 = vunpack.c.l.b16 %v1967
        %v3058 = vunpack.c.h.b16 %v1967
        %v3059 = vunpack.c.l.b16 %v1968
        %v3060 = vunpack.c.h.b16 %v1968
        %v3061 = vunpack.c.l.b16 %v1969
        %v3062 = vunpack.c.h.b16 %v1969
        %v3063 = vunpack.c.l.b16 %v1970
        %v3064 = vunpack.c.h.b16 %v1970
        %v3065 = vunpack.c.l.b16 %v1971
        %v3066 = vunpack.c.h.b16 %v1971
        %v3067 = vunpack.c.l.b16 %v1972
        %v3068 = vunpack.c.h.b16 %v1972
        %v3069 = vunpack.c.l.b16 %v1973
        %v3070 = vunpack.c.h.b16 %v1973
        %v3071 = vunpack.c.l.b16 %v1974
        %v3072 = vunpack.c.h.b16 %v1974
        %v3073 = vunpack.c.l.b16 %v1975
        %v3074 = vunpack.c.h.b16 %v1975
        %v3075 = vunpack.c.l.b16 %v1976
        %v3076 = vunpack.c.h.b16 %v1976
        %v3077 = vunpack.c.l.b16 %v1977
        %v3078 = vunpack.c.h.b16 %v1977
        %v3079 = vunpack.c.l.b16 %v1978
        %v3080 = vunpack.c.h.b16 %v1978
        %v3081 = vunpack.c.l.b16 %v1979
        %v3082 = vunpack.c.h.b16 %v1979
        %v3083 = vunpack.c.l.b16 %v1980
        %v3084 = vunpack.c.h.b16 %v1980
        %v3085 = vunpack.c.l.b16 %v1981
        %v3086 = vunpack.c.h.b16 %v1981
        %v3087 = vunpack.c.l.b16 %v1982
        %v3088 = vunpack.c.h.b16 %v1982
        %v3089 = vunpack.c.l.b16 %v1983
        %v3090 = vunpack.c.h.b16 %v1983
        %v3091 = vunpack.c.l.b16 %v1984
        %v3092 = vunpack.c.h.b16 %v1984
        %v3093 = vunpack.c.l.b16 %v1985
        %v3094 = vunpack.c.h.b16 %v1985
        %v3095 = vunpack.c.l.b16 %v1986
        %v3096 = vunpack.c.h.b16 %v1986
        %v3097 = vunpack.c.l.b16 %v1987
        %v3098 = vunpack.c.h.b16 %v1987
        %v3099 = vunpack.c.l.b16 %v1988
        %v3100 = vunpack.c.h.b16 %v1988
        %v3101 = vunpack.c.l.b16 %v1989
        %v3102 = vunpack.c.h.b16 %v1989
        %v3103 = vunpack.c.l.b16 %v1990
        %v3104 = vunpack.c.h.b16 %v1990
        %v3105 = vunpack.c.l.b16 %v1991
        %v3106 = vunpack.c.h.b16 %v1991
        %v3107 = vunpack.c.l.b16 %v1992
        %v3108 = vunpack.c.h.b16 %v1992
        %v3109 = vunpack.c.l.b16 %v1993
        %v3110 = vunpack.c.h.b16 %v1993
        %v3111 = vunpack.c.l.b16 %v1994
        %v3112 = vunpack.c.h.b16 %v1994
        %v3113 = vunpack.c.l.b16 %v1995
        %v3114 = vunpack.c.h.b16 %v1995
        %v3115 = vunpack.c.l.b16 %v1996
        %v3116 = vunpack.c.h.b16 %v1996
        %v3117 = vunpack.c.l.b16 %v1997
        %v3118 = vunpack.c.h.b16 %v1997
        %v3119 = vunpack.c.l.b16 %v1998
        %v3120 = vunpack.c.h.b16 %v1998
        %v3121 = vunpack.c.l.b16 %v1999
        %v3122 = vunpack.c.h.b16 %v1999
        %v3123 = vunpack.c.l.b16 %v2000
        %v3124 = vunpack.c.h.b16 %v2000
        %v3125 = vunpack.c.l.b16 %v2001
        %v3126 = vunpack.c.h.b16 %v2001
        %v3127 = vunpack.c.l.b16 %v2002
        %v3128 = vunpack.c.h.b16 %v2002
        %v3129 = vunpack.c.l.b16 %v2003
        %v3130 = vunpack.c.h.b16 %v2003
        %v3131 = vunpack.c.l.b16 %v2004
        %v3132 = vunpack.c.h.b16 %v2004
        %v3133 = vunpack.c.l.b16 %v2005
        %v3134 = vunpack.c.h.b16 %v2005
        %v3135 = vunpack.c.l.b16 %v2006
        %v3136 = vunpack.c.h.b16 %v2006
        %v3137 = vunpack.c.l.b16 %v2007
        %v3138 = vunpack.c.h.b16 %v2007
        %v3139 = vunpack.c.l.b16 %v2008
        %v3140 = vunpack.c.h.b16 %v2008
        %v3141 = vunpack.c.l.b16 %v2009
        %v3142 = vunpack.c.h.b16 %v2009
        %v3143 = vunpack.c.l.b16 %v2010
        %v3144 = vunpack.c.h.b16 %v2010
        %v3145 = vunpack.c.l.b16 %v2011
        %v3146 = vunpack.c.h.b16 %v2011
        %v3147 = vunpack.c.l.b16 %v2012
        %v3148 = vunpack.c.h.b16 %v2012
        %v3149 = vunpack.c.l.b16 %v2013
        %v3150 = vunpack.c.h.b16 %v2013
        %v3151 = vunpack.c.l.b16 %v2014
        %v3152 = vunpack.c.h.b16 %v2014
        %v3153 = vunpack.c.l.b16 %v2015
        %v3154 = vunpack.c.h.b16 %v2015
        %v3155 = vunpack.c.l.b16 %v2016
        %v3156 = vunpack.c.h.b16 %v2016
        %v3157 = vunpack.c.l.b16 %v2017
        %v3158 = vunpack.c.h.b16 %v2017
        %v3159 = vunpack.c.l.b16 %v2018
        %v3160 = vunpack.c.h.b16 %v2018
        %v3161 = vunpack.c.l.b16 %v2019
        %v3162 = vunpack.c.h.b16 %v2019
        %v3163 = vunpack.c.l.b16 %v2020
        %v3164 = vunpack.c.h.b16 %v2020
        %v3165 = vunpack.c.l.b16 %v2021
        %v3166 = vunpack.c.h.b16 %v2021
        %v3167 = vunpack.c.l.b16 %v2022
        %v3168 = vunpack.c.h.b16 %v2022
        %v3169 = vunpack.c.l.b16 %v2023
        %v3170 = vunpack.c.h.b16 %v2023
        %v3171 = vunpack.c.l.b16 %v2024
        %v3172 = vunpack.c.h.b16 %v2024
        %v3173 = vunpack.c.l.b16 %v2025
        %v3174 = vunpack.c.h.b16 %v2025
        %v3175 = vunpack.c.l.b16 %v2026
        %v3176 = vunpack.c.h.b16 %v2026
        %v3177 = vunpack.c.l.b16 %v2027
        %v3178 = vunpack.c.h.b16 %v2027
        %v3179 = vunpack.c.l.b16 %v2028
        %v3180 = vunpack.c.h.b16 %v2028
        %v3181 = vunpack.c.l.b16 %v2029
        %v3182 = vunpack.c.h.b16 %v2029
        %v3183 = vunpack.c.l.b16 %v2030
        %v3184 = vunpack.c.h.b16 %v2030
        %v3185 = vunpack.c.l.b16 %v2031
        %v3186 = vunpack.c.h.b16 %v2031
        %v3187 = vunpack.c.l.b16 %v2032
        %v3188 = vunpack.c.h.b16 %v2032
        %v3189 = vunpack.c.l.b16 %v2033
        %v3190 = vunpack.c.h.b16 %v2033
        %v3191 = vunpack.c.l.b16 %v2034
        %v3192 = vunpack.c.h.b16 %v2034
        %v3193 = vunpack.c.l.b16 %v2035
        %v3194 = vunpack.c.h.b16 %v2035
        %v3195 = vunpack.c.l.b16 %v2036
        %v3196 = vunpack.c.h.b16 %v2036
        %v3197 = vunpack.c.l.b16 %v2037
        %v3198 = vunpack.c.h.b16 %v2037
        %v3199 = vunpack.c.l.b16 %v2038
        %v3200 = vunpack.c.h.b16 %v2038
        %v3201 = vunpack.c.l.b16 %v2039
        %v3202 = vunpack.c.h.b16 %v2039
        %v3203 = vunpack.c.l.b16 %v2040
        %v3204 = vunpack.c.h.b16 %v2040
        %v3205 = vunpack.c.l.b16 %v2041
        %v3206 = vunpack.c.h.b16 %v2041
        %v3207 = vunpack.c.l.b16 %v2042
        %v3208 = vunpack.c.h.b16 %v2042
        %v3209 = vunpack.c.l.b16 %v2043
        %v3210 = vunpack.c.h.b16 %v2043
        %v3211 = vunpack.c.l.b16 %v2044
        %v3212 = vunpack.c.h.b16 %v2044
        %v3213 = vunpack.c.l.b16 %v2045
        %v3214 = vunpack.c.h.b16 %v2045
        %v3215 = vunpack.c.l.b16 %v2046
        %v3216 = vunpack.c.h.b16 %v2046
        %v3217 = vunpack.c.l.b16 %v2047
        %v3218 = vunpack.c.h.b16 %v2047
        %v3219 = vunpack.c.l.b16 %v2048
        %v3220 = vunpack.c.h.b16 %v2048
        %v3221 = vunpack.c.l.b16 %v2049
        %v3222 = vunpack.c.h.b16 %v2049
        %v3223 = vunpack.c.l.b16 %v2050
        %v3224 = vunpack.c.h.b16 %v2050
        %v3225 = vunpack.c.l.b16 %v2051
        %v3226 = vunpack.c.h.b16 %v2051
        %v3227 = vunpack.c.l.b16 %v2052
        %v3228 = vunpack.c.h.b16 %v2052
        %v3229 = vunpack.c.l.b16 %v2053
        %v3230 = vunpack.c.h.b16 %v2053
        %v3231 = vunpack.c.l.b16 %v2054
        %v3232 = vunpack.c.h.b16 %v2054
        %v3233 = vunpack.c.l.b16 %v2055
        %v3234 = vunpack.c.h.b16 %v2055
        %v3235 = vunpack.c.l.b16 %v2056
        %v3236 = vunpack.c.h.b16 %v2056
        %v3237 = vunpack.c.l.b16 %v2057
        %v3238 = vunpack.c.h.b16 %v2057
        %v3239 = vunpack.c.l.b16 %v2058
        %v3240 = vunpack.c.h.b16 %v2058
        %v3241 = vunpack.c.l.b16 %v2059
        %v3242 = vunpack.c.h.b16 %v2059
        %v3243 = vunpack.c.l.b16 %v2060
        %v3244 = vunpack.c.h.b16 %v2060
        %v3245 = vunpack.c.l.b16 %v2061
        %v3246 = vunpack.c.h.b16 %v2061
        %v3247 = vunpack.c.l.b16 %v2062
        %v3248 = vunpack.c.h.b16 %v2062
        %v3249 = vunpack.c.l.b16 %v2063
        %v3250 = vunpack.c.h.b16 %v2063
        %v3251 = vunpack.c.l.b16 %v2064
        %v3252 = vunpack.c.h.b16 %v2064
        %v3253 = vunpack.c.l.b16 %v2065
        %v3254 = vunpack.c.h.b16 %v2065
        %v3255 = vunpack.c.l.b16 %v2066
        %v3256 = vunpack.c.h.b16 %v2066
        %v3257 = vunpack.c.l.b16 %v2067
        %v3258 = vunpack.c.h.b16 %v2067
        %v3259 = vunpack.c.l.b16 %v2068
        %v3260 = vunpack.c.h.b16 %v2068
        %v3261 = vunpack.c.l.b16 %v2069
        %v3262 = vunpack.c.h.b16 %v2069
        %v3263 = vunpack.c.l.b16 %v2070
        %v3264 = vunpack.c.h.b16 %v2070
        %v3265 = vunpack.c.l.b16 %v2071
        %v3266 = vunpack.c.h.b16 %v2071
        %v3267 = vunpack.c.l.b16 %v2072
        %v3268 = vunpack.c.h.b16 %v2072
        %v3269 = vunpack.c.l.b16 %v2073
        %v3270 = vunpack.c.h.b16 %v2073
        %v3271 = vunpack.c.l.b16 %v2074
        %v3272 = vunpack.c.h.b16 %v2074
        %v3273 = vunpack.c.l.b16 %v2075
        %v3274 = vunpack.c.h.b16 %v2075
        %v3275 = vunpack.c.l.b16 %v2076
        %v3276 = vunpack.c.h.b16 %v2076
        %v3277 = vunpack.c.l.b16 %v2077
        %v3278 = vunpack.c.h.b16 %v2077
        %v3279 = vunpack.c.l.b16 %v2078
        %v3280 = vunpack.c.h.b16 %v2078
        %v3281 = vunpack.c.l.b16 %v2079
        %v3282 = vunpack.c.h.b16 %v2079
        %v3283 = vunpack.c.l.b16 %v2080
        %v3284 = vunpack.c.h.b16 %v2080
        %v3285 = vunpack.c.l.b16 %v2081
        %v3286 = vunpack.c.h.b16 %v2081
        %v3287 = vunpack.c.l.b16 %v2082
        %v3288 = vunpack.c.h.b16 %v2082
        %v3289 = vunpack.c.l.b16 %v2083
        %v3290 = vunpack.c.h.b16 %v2083
        %v3291 = vunpack.c.l.b16 %v2084
        %v3292 = vunpack.c.h.b16 %v2084
        %v3293 = vunpack.c.l.b16 %v2085
        %v3294 = vunpack.c.h.b16 %v2085
        %v3295 = vunpack.c.l.b16 %v2086
        %v3296 = vunpack.c.h.b16 %v2086
        %v3297 = vunpack.c.l.b16 %v2087
        %v3298 = vunpack.c.h.b16 %v2087
        %v3299 = vunpack.c.l.b16 %v2088
        %v3300 = vunpack.c.h.b16 %v2088
        %v3301 = vunpack.c.l.b16 %v2089
        %v3302 = vunpack.c.h.b16 %v2089
        %v3303 = vunpack.c.l.b16 %v2090
        %v3304 = vunpack.c.h.b16 %v2090
        %v3305 = vunpack.c.l.b16 %v2091
        %v3306 = vunpack.c.h.b16 %v2091
        %v3307 = vunpack.c.l.b16 %v2092
        %v3308 = vunpack.c.h.b16 %v2092
        %v3309 = vunpack.c.l.b16 %v2093
        %v3310 = vunpack.c.h.b16 %v2093
        %v3311 = vunpack.c.l.b16 %v2094
        %v3312 = vunpack.c.h.b16 %v2094
        %v3313 = vunpack.c.l.b16 %v2095
        %v3314 = vunpack.c.h.b16 %v2095
        %v3315 = vunpack.c.l.b16 %v2096
        %v3316 = vunpack.c.h.b16 %v2096
        %v3317 = vunpack.c.l.b16 %v2097
        %v3318 = vunpack.c.h.b16 %v2097
        %v3319 = vunpack.c.l.b16 %v2098
        %v3320 = vunpack.c.h.b16 %v2098
        %v3321 = vunpack.c.l.b16 %v2099
        %v3322 = vunpack.c.h.b16 %v2099
        %v3323 = vunpack.c.l.b16 %v2100
        %v3324 = vunpack.c.h.b16 %v2100
        %v3325 = vunpack.c.l.b16 %v2101
        %v3326 = vunpack.c.h.b16 %v2101
        %v3327 = vunpack.c.l.b16 %v2102
        %v3328 = vunpack.c.h.b16 %v2102
        %v3329 = vunpack.c.l.b16 %v2103
        %v3330 = vunpack.c.h.b16 %v2103
        %v3331 = vunpack.c.l.b16 %v2104
        %v3332 = vunpack.c.h.b16 %v2104
        %v3333 = vunpack.c.l.b16 %v2105
        %v3334 = vunpack.c.h.b16 %v2105
        %v3335 = vunpack.c.l.b16 %v2106
        %v3336 = vunpack.c.h.b16 %v2106
        %v3337 = vunpack.c.l.b16 %v2107
        %v3338 = vunpack.c.h.b16 %v2107
        %v3339 = vunpack.c.l.b16 %v2108
        %v3340 = vunpack.c.h.b16 %v2108
        %v3341 = vunpack.c.l.b16 %v2109
        %v3342 = vunpack.c.h.b16 %v2109
        %v3343 = vunpack.c.l.b16 %v2110
        %v3344 = vunpack.c.h.b16 %v2110
        %v3345 = vunpack.c.l.b16 %v2111
        %v3346 = vunpack.c.h.b16 %v2111
        %v3347 = vunpack.c.l.b16 %v2112
        %v3348 = vunpack.c.h.b16 %v2112
        %v3349 = vunpack.c.l.b16 %v2113
        %v3350 = vunpack.c.h.b16 %v2113
        %v3351 = vunpack.c.l.b16 %v2114
        %v3352 = vunpack.c.h.b16 %v2114
        %v3353 = vunpack.c.l.b16 %v2115
        %v3354 = vunpack.c.h.b16 %v2115
        %v3355 = vunpack.c.l.b16 %v2116
        %v3356 = vunpack.c.h.b16 %v2116
        %v3357 = vunpack.c.l.b16 %v2117
        %v3358 = vunpack.c.h.b16 %v2117
        %v3359 = vunpack.c.l.b16 %v2118
        %v3360 = vunpack.c.h.b16 %v2118
        %v3361 = vunpack.c.l.b16 %v2119
        %v3362 = vunpack.c.h.b16 %v2119
        %v3363 = vunpack.c.l.b16 %v2120
        %v3364 = vunpack.c.h.b16 %v2120
        %v3365 = vunpack.c.l.b16 %v2121
        %v3366 = vunpack.c.h.b16 %v2121
        %v3367 = vunpack.c.l.b16 %v2122
        %v3368 = vunpack.c.h.b16 %v2122
        %v3369 = vunpack.c.l.b16 %v2123
        %v3370 = vunpack.c.h.b16 %v2123
        %v3371 = vunpack.c.l.b16 %v2124
        %v3372 = vunpack.c.h.b16 %v2124
        %v3373 = vunpack.c.l.b16 %v2125
        %v3374 = vunpack.c.h.b16 %v2125
        %v3375 = vunpack.c.l.b16 %v2126
        %v3376 = vunpack.c.h.b16 %v2126
        %v3377 = vunpack.c.l.b16 %v2127
        %v3378 = vunpack.c.h.b16 %v2127
        %v3379 = vunpack.c.l.b16 %v2128
        %v3380 = vunpack.c.h.b16 %v2128
        %v3381 = vunpack.c.l.b16 %v2129
        %v3382 = vunpack.c.h.b16 %v2129
        %v3383 = vunpack.c.l.b16 %v2130
        %v3384 = vunpack.c.h.b16 %v2130
        %v3385 = vunpack.c.l.b16 %v2131
        %v3386 = vunpack.c.h.b16 %v2131
        %v3387 = vunpack.c.l.b16 %v2132
        %v3388 = vunpack.c.h.b16 %v2132
        %v3389 = vunpack.c.l.b16 %v2133
        %v3390 = vunpack.c.h.b16 %v2133
        %v3391 = vunpack.c.l.b16 %v2134
        %v3392 = vunpack.c.h.b16 %v2134
        %v3393 = vunpack.c.l.b16 %v2135
        %v3394 = vunpack.c.h.b16 %v2135
        %v3395 = vunpack.c.l.b16 %v2136
        %v3396 = vunpack.c.h.b16 %v2136
        %v3397 = vunpack.c.l.b16 %v2137
        %v3398 = vunpack.c.h.b16 %v2137
        %v3399 = vunpack.c.l.b16 %v2138
        %v3400 = vunpack.c.h.b16 %v2138
        %v3401 = vunpack.c.l.b16 %v2139
        %v3402 = vunpack.c.h.b16 %v2139
        %v3403 = vunpack.c.l.b16 %v2140
        %v3404 = vunpack.c.h.b16 %v2140
        %v3405 = vunpack.c.l.b16 %v2141
        %v3406 = vunpack.c.h.b16 %v2141
        %v3407 = vunpack.c.l.b16 %v2142
        %v3408 = vunpack.c.h.b16 %v2142
        %v3409 = vunpack.c.l.b16 %v2143
        %v3410 = vunpack.c.h.b16 %v2143
        %v3411 = vunpack.c.l.b16 %v2144
        %v3412 = vunpack.c.h.b16 %v2144
        %v3413 = vunpack.c.l.b16 %v2145
        %v3414 = vunpack.c.h.b16 %v2145
        %v3415 = vunpack.c.l.b16 %v2146
        %v3416 = vunpack.c.h.b16 %v2146
        %v3417 = vunpack.c.l.b16 %v2147
        %v3418 = vunpack.c.h.b16 %v2147
        %v3419 = vunpack.c.l.b16 %v2148
        %v3420 = vunpack.c.h.b16 %v2148
        %v3421 = vunpack.c.l.b16 %v2149
        %v3422 = vunpack.c.h.b16 %v2149
        %v3423 = vunpack.c.l.b16 %v2150
        %v3424 = vunpack.c.h.b16 %v2150
        %v3425 = vunpack.c.l.b16 %v2151
        %v3426 = vunpack.c.h.b16 %v2151
        %v3427 = vunpack.c.l.b16 %v2152
        %v3428 = vunpack.c.h.b16 %v2152
        %v3429 = vunpack.c.l.b16 %v2153
        %v3430 = vunpack.c.h.b16 %v2153
        %v3431 = vunpack.c.l.b16 %v2154
        %v3432 = vunpack.c.h.b16 %v2154
        %v3433 = vunpack.c.l.b16 %v2155
        %v3434 = vunpack.c.h.b16 %v2155
        %v3435 = vunpack.c.l.b16 %v2156
        %v3436 = vunpack.c.h.b16 %v2156
        %v3437 = vunpack.c.l.b16 %v2157
        %v3438 = vunpack.c.h.b16 %v2157
        %v3439 = vunpack.c.l.b16 %v2158
        %v3440 = vunpack.c.h.b16 %v2158
        %v3441 = vunpack.c.l.b16 %v2159
        %v3442 = vunpack.c.h.b16 %v2159
        %v3443 = vunpack.c.l.b16 %v2160
        %v3444 = vunpack.c.h.b16 %v2160
        %v3445 = vpack.c.b16 %v2679, %v2677
        %v3446 = vpack.c.b16 %v2680, %v2678
        %v3447 = vpack.c.b16 %v2683, %v2681
        %v3448 = vpack.c.b16 %v2684, %v2682
        %v3449 = vpack.c.b16 %v2687, %v2685
        %v3450 = vpack.c.b16 %v2688, %v2686
        %v3451 = vpack.c.b16 %v2691, %v2689
        %v3452 = vpack.c.b16 %v2692, %v2690
        %v3453 = vpack.c.b16 %v2695, %v2693
        %v3454 = vpack.c.b16 %v2696, %v2694
        %v3455 = vpack.c.b16 %v2699, %v2697
        %v3456 = vpack.c.b16 %v2700, %v2698
        %v3457 = vpack.c.b16 %v2703, %v2701
        %v3458 = vpack.c.b16 %v2704, %v2702
        %v3459 = vpack.c.b16 %v2707, %v2705
        %v3460 = vpack.c.b16 %v2708, %v2706
        %v3461 = vpack.c.b16 %v2711, %v2709
        %v3462 = vpack.c.b16 %v2712, %v2710
        %v3463 = vpack.c.b16 %v2715, %v2713
        %v3464 = vpack.c.b16 %v2716, %v2714
        %v3465 = vpack.c.b16 %v2719, %v2717
        %v3466 = vpack.c.b16 %v2720, %v2718
        %v3467 = vpack.c.b16 %v2723, %v2721
        %v3468 = vpack.c.b16 %v2724, %v2722
        %v3469 = vpack.c.b16 %v2727, %v2725
        %v3470 = vpack.c.b16 %v2728, %v2726
        %v3471 = vpack.c.b16 %v2731, %v2729
        %v3472 = vpack.c.b16 %v2732, %v2730
        %v3473 = vpack.c.b16 %v2735, %v2733
        %v3474 = vpack.c.b16 %v2736, %v2734
        %v3475 = vpack.c.b16 %v2739, %v2737
        %v3476 = vpack.c.b16 %v2740, %v2738
        %v3477 = vpack.c.b16 %v2743, %v2741
        %v3478 = vpack.c.b16 %v2744, %v2742
        %v3479 = vpack.c.b16 %v2747, %v2745
        %v3480 = vpack.c.b16 %v2748, %v2746
        %v3481 = vpack.c.b16 %v2751, %v2749
        %v3482 = vpack.c.b16 %v2752, %v2750
        %v3483 = vpack.c.b16 %v2755, %v2753
        %v3484 = vpack.c.b16 %v2756, %v2754
        %v3485 = vpack.c.b16 %v2759, %v2757
        %v3486 = vpack.c.b16 %v2760, %v2758
        %v3487 = vpack.c.b16 %v2763, %v2761
        %v3488 = vpack.c.b16 %v2764, %v2762
        %v3489 = vpack.c.b16 %v2767, %v2765
        %v3490 = vpack.c.b16 %v2768, %v2766
        %v3491 = vpack.c.b16 %v2771, %v2769
        %v3492 = vpack.c.b16 %v2772, %v2770
        %v3493 = vpack.c.b16 %v2775, %v2773
        %v3494 = vpack.c.b16 %v2776, %v2774
        %v3495 = vpack.c.b16 %v2779, %v2777
        %v3496 = vpack.c.b16 %v2780, %v2778
        %v3497 = vpack.c.b16 %v2783, %v2781
        %v3498 = vpack.c.b16 %v2784, %v2782
        %v3499 = vpack.c.b16 %v2787, %v2785
        %v3500 = vpack.c.b16 %v2788, %v2786
        %v3501 = vpack.c.b16 %v2791, %v2789
        %v3502 = vpack.c.b16 %v2792, %v2790
        %v3503 = vpack.c.b16 %v2795, %v2793
        %v3504 = vpack.c.b16 %v2796, %v2794
        %v3505 = vpack.c.b16 %v2799, %v2797
        %v3506 = vpack.c.b16 %v2800, %v2798
        %v3507 = vpack.c.b16 %v2803, %v2801
        %v3508 = vpack.c.b16 %v2804, %v2802
        %v3509 = vpack.c.b16 %v2807, %v2805
        %v3510 = vpack.c.b16 %v2808, %v2806
        %v3511 = vpack.c.b16 %v2811, %v2809
        %v3512 = vpack.c.b16 %v2812, %v2810
        %v3513 = vpack.c.b16 %v2815, %v2813
        %v3514 = vpack.c.b16 %v2816, %v2814
        %v3515 = vpack.c.b16 %v2819, %v2817
        %v3516 = vpack.c.b16 %v2820, %v2818
        %v3517 = vpack.c.b16 %v2823, %v2821
        %v3518 = vpack.c.b16 %v2824, %v2822
        %v3519 = vpack.c.b16 %v2827, %v2825
        %v3520 = vpack.c.b16 %v2828, %v2826
        %v3521 = vpack.c.b16 %v2831, %v2829
        %v3522 = vpack.c.b16 %v2832, %v2830
        %v3523 = vpack.c.b16 %v2835, %v2833
        %v3524 = vpack.c.b16 %v2836, %v2834
        %v3525 = vpack.c.b16 %v2839, %v2837
        %v3526 = vpack.c.b16 %v2840, %v2838
        %v3527 = vpack.c.b16 %v2843, %v2841
        %v3528 = vpack.c.b16 %v2844, %v2842
        %v3529 = vpack.c.b16 %v2847, %v2845
        %v3530 = vpack.c.b16 %v2848, %v2846
        %v3531 = vpack.c.b16 %v2851, %v2849
        %v3532 = vpack.c.b16 %v2852, %v2850
        %v3533 = vpack.c.b16 %v2855, %v2853
        %v3534 = vpack.c.b16 %v2856, %v2854
        %v3535 = vpack.c.b16 %v2859, %v2857
        %v3536 = vpack.c.b16 %v2860, %v2858
        %v3537 = vpack.c.b16 %v2863, %v2861
        %v3538 = vpack.c.b16 %v2864, %v2862
        %v3539 = vpack.c.b16 %v2867, %v2865
        %v3540 = vpack.c.b16 %v2868, %v2866
        %v3541 = vpack.c.b16 %v2871, %v2869
        %v3542 = vpack.c.b16 %v2872, %v2870
        %v3543 = vpack.c.b16 %v2875, %v2873
        %v3544 = vpack.c.b16 %v2876, %v2874
        %v3545 = vpack.c.b16 %v2879, %v2877
        %v3546 = vpack.c.b16 %v2880, %v2878
        %v3547 = vpack.c.b16 %v2883, %v2881
        %v3548 = vpack.c.b16 %v2884, %v2882
        %v3549 = vpack.c.b16 %v2887, %v2885
        %v3550 = vpack.c.b16 %v2888, %v2886
        %v3551 = vpack.c.b16 %v2891, %v2889
        %v3552 = vpack.c.b16 %v2892, %v2890
        %v3553 = vpack.c.b16 %v2895, %v2893
        %v3554 = vpack.c.b16 %v2896, %v2894
        %v3555 = vpack.c.b16 %v2899, %v2897
        %v3556 = vpack.c.b16 %v2900, %v2898
        %v3557 = vpack.c.b16 %v2903, %v2901
        %v3558 = vpack.c.b16 %v2904, %v2902
        %v3559 = vpack.c.b16 %v2907, %v2905
        %v3560 = vpack.c.b16 %v2908, %v2906
        %v3561 = vpack.c.b16 %v2911, %v2909
        %v3562 = vpack.c.b16 %v2912, %v2910
        %v3563 = vpack.c.b16 %v2915, %v2913
        %v3564 = vpack.c.b16 %v2916, %v2914
        %v3565 = vpack.c.b16 %v2919, %v2917
        %v3566 = vpack.c.b16 %v2920, %v2918
        %v3567 = vpack.c.b16 %v2923, %v2921
        %v3568 = vpack.c.b16 %v2924, %v2922
        %v3569 = vpack.c.b16 %v2927, %v2925
        %v3570 = vpack.c.b16 %v2928, %v2926
        %v3571 = vpack.c.b16 %v2931, %v2929
        %v3572 = vpack.c.b16 %v2932, %v2930
        %v3573 = vpack.c.b16 %v2935, %v2933
        %v3574 = vpack.c.b16 %v2936, %v2934
        %v3575 = vpack.c.b16 %v2939, %v2937
        %v3576 = vpack.c.b16 %v2940, %v2938
        %v3577 = vpack.c.b16 %v2943, %v2941
        %v3578 = vpack.c.b16 %v2944, %v2942
        %v3579 = vpack.c.b16 %v2947, %v2945
        %v3580 = vpack.c.b16 %v2948, %v2946
        %v3581 = vpack.c.b16 %v2951, %v2949
        %v3582 = vpack.c.b16 %v2952, %v2950
        %v3583 = vpack.c.b16 %v2955, %v2953
        %v3584 = vpack.c.b16 %v2956, %v2954
        %v3585 = vpack.c.b16 %v2959, %v2957
        %v3586 = vpack.c.b16 %v2960, %v2958
        %v3587 = vpack.c.b16 %v2963, %v2961
        %v3588 = vpack.c.b16 %v2964, %v2962
        %v3589 = vpack.c.b16 %v2967, %v2965
        %v3590 = vpack.c.b16 %v2968, %v2966
        %v3591 = vpack.c.b16 %v2971, %v2969
        %v3592 = vpack.c.b16 %v2972, %v2970
        %v3593 = vpack.c.b16 %v2975, %v2973
        %v3594 = vpack.c.b16 %v2976, %v2974
        %v3595 = vpack.c.b16 %v2979, %v2977
        %v3596 = vpack.c.b16 %v2980, %v2978
        %v3597 = vpack.c.b16 %v2983, %v2981
        %v3598 = vpack.c.b16 %v2984, %v2982
        %v3599 = vpack.c.b16 %v2987, %v2985
        %v3600 = vpack.c.b16 %v2988, %v2986
        %v3601 = vpack.c.b16 %v2991, %v2989
        %v3602 = vpack.c.b16 %v2992, %v2990
        %v3603 = vpack.c.b16 %v2995, %v2993
        %v3604 = vpack.c.b16 %v2996, %v2994
        %v3605 = vpack.c.b16 %v2999, %v2997
        %v3606 = vpack.c.b16 %v3000, %v2998
        %v3607 = vpack.c.b16 %v3003, %v3001
        %v3608 = vpack.c.b16 %v3004, %v3002
        %v3609 = vpack.c.b16 %v3007, %v3005
        %v3610 = vpack.c.b16 %v3008, %v3006
        %v3611 = vpack.c.b16 %v3011, %v3009
        %v3612 = vpack.c.b16 %v3012, %v3010
        %v3613 = vpack.c.b16 %v3015, %v3013
        %v3614 = vpack.c.b16 %v3016, %v3014
        %v3615 = vpack.c.b16 %v3019, %v3017
        %v3616 = vpack.c.b16 %v3020, %v3018
        %v3617 = vpack.c.b16 %v3023, %v3021
        %v3618 = vpack.c.b16 %v3024, %v3022
        %v3619 = vpack.c.b16 %v3027, %v3025
        %v3620 = vpack.c.b16 %v3028, %v3026
        %v3621 = vpack.c.b16 %v3031, %v3029
        %v3622 = vpack.c.b16 %v3032, %v3030
        %v3623 = vpack.c.b16 %v3035, %v3033
        %v3624 = vpack.c.b16 %v3036, %v3034
        %v3625 = vpack.c.b16 %v3039, %v3037
        %v3626 = vpack.c.b16 %v3040, %v3038
        %v3627 = vpack.c.b16 %v3043, %v3041
        %v3628 = vpack.c.b16 %v3044, %v3042
        %v3629 = vpack.c.b16 %v3047, %v3045
        %v3630 = vpack.c.b16 %v3048, %v3046
        %v3631 = vpack.c.b16 %v3051, %v3049
        %v3632 = vpack.c.b16 %v3052, %v3050
        %v3633 = vpack.c.b16 %v3055, %v3053
        %v3634 = vpack.c.b16 %v3056, %v3054
        %v3635 = vpack.c.b16 %v3059, %v3057
        %v3636 = vpack.c.b16 %v3060, %v3058
        %v3637 = vpack.c.b16 %v3063, %v3061
        %v3638 = vpack.c.b16 %v3064, %v3062
        %v3639 = vpack.c.b16 %v3067, %v3065
        %v3640 = vpack.c.b16 %v3068, %v3066
        %v3641 = vpack.c.b16 %v3071, %v3069
        %v3642 = vpack.c.b16 %v3072, %v3070
        %v3643 = vpack.c.b16 %v3075, %v3073
        %v3644 = vpack.c.b16 %v3076, %v3074
        %v3645 = vpack.c.b16 %v3079, %v3077
        %v3646 = vpack.c.b16 %v3080, %v3078
        %v3647 = vpack.c.b16 %v3083, %v3081
        %v3648 = vpack.c.b16 %v3084, %v3082
        %v3649 = vpack.c.b16 %v3087, %v3085
        %v3650 = vpack.c.b16 %v3088, %v3086
        %v3651 = vpack.c.b16 %v3091, %v3089
        %v3652 = vpack.c.b16 %v3092, %v3090
        %v3653 = vpack.c.b16 %v3095, %v3093
        %v3654 = vpack.c.b16 %v3096, %v3094
        %v3655 = vpack.c.b16 %v3099, %v3097
        %v3656 = vpack.c.b16 %v3100, %v3098
        %v3657 = vpack.c.b16 %v3103, %v3101
        %v3658 = vpack.c.b16 %v3104, %v3102
        %v3659 = vpack.c.b16 %v3107, %v3105
        %v3660 = vpack.c.b16 %v3108, %v3106
        %v3661 = vpack.c.b16 %v3111, %v3109
        %v3662 = vpack.c.b16 %v3112, %v3110
        %v3663 = vpack.c.b16 %v3115, %v3113
        %v3664 = vpack.c.b16 %v3116, %v3114
        %v3665 = vpack.c.b16 %v3119, %v3117
        %v3666 = vpack.c.b16 %v3120, %v3118
        %v3667 = vpack.c.b16 %v3123, %v3121
        %v3668 = vpack.c.b16 %v3124, %v3122
        %v3669 = vpack.c.b16 %v3127, %v3125
        %v3670 = vpack.c.b16 %v3128, %v3126
        %v3671 = vpack.c.b16 %v3131, %v3129
        %v3672 = vpack.c.b16 %v3132, %v3130
        %v3673 = vpack.c.b16 %v3135, %v3133
        %v3674 = vpack.c.b16 %v3136, %v3134
        %v3675 = vpack.c.b16 %v3139, %v3137
        %v3676 = vpack.c.b16 %v3140, %v3138
        %v3677 = vpack.c.b16 %v3143, %v3141
        %v3678 = vpack.c.b16 %v3144, %v3142
        %v3679 = vpack.c.b16 %v3147, %v3145
        %v3680 = vpack.c.b16 %v3148, %v3146
        %v3681 = vpack.c.b16 %v3151, %v3149
        %v3682 = vpack.c.b16 %v3152, %v3150
        %v3683 = vpack.c.b16 %v3155, %v3153
        %v3684 = vpack.c.b16 %v3156, %v3154
        %v3685 = vpack.c.b16 %v3159, %v3157
        %v3686 = vpack.c.b16 %v3160, %v3158
        %v3687 = vpack.c.b16 %v3163, %v3161
        %v3688 = vpack.c.b16 %v3164, %v3162
        %v3689 = vpack.c.b16 %v3167, %v3165
        %v3690 = vpack.c.b16 %v3168, %v3166
        %v3691 = vpack.c.b16 %v3171, %v3169
        %v3692 = vpack.c.b16 %v3172, %v3170
        %v3693 = vpack.c.b16 %v3175, %v3173
        %v3694 = vpack.c.b16 %v3176, %v3174
        %v3695 = vpack.c.b16 %v3179, %v3177
        %v3696 = vpack.c.b16 %v3180, %v3178
        %v3697 = vpack.c.b16 %v3183, %v3181
        %v3698 = vpack.c.b16 %v3184, %v3182
        %v3699 = vpack.c.b16 %v3187, %v3185
        %v3700 = vpack.c.b16 %v3188, %v3186
        %v3701 = vpack.c.b16 %v3191, %v3189
        %v3702 = vpack.c.b16 %v3192, %v3190
        %v3703 = vpack.c.b16 %v3195, %v3193
        %v3704 = vpack.c.b16 %v3196, %v3194
        %v3705 = vpack.c.b16 %v3199, %v3197
        %v3706 = vpack.c.b16 %v3200, %v3198
        %v3707 = vpack.c.b16 %v3203, %v3201
        %v3708 = vpack.c.b16 %v3204, %v3202
        %v3709 = vpack.c.b16 %v3207, %v3205
        %v3710 = vpack.c.b16 %v3208, %v3206
        %v3711 = vpack.c.b16 %v3211, %v3209
        %v3712 = vpack.c.b16 %v3212, %v3210
        %v3713 = vpack.c.b16 %v3215, %v3213
        %v3714 = vpack.c.b16 %v3216, %v3214
        %v3715 = vpack.c.b16 %v3219, %v3217
        %v3716 = vpack.c.b16 %v3220, %v3218
        %v3717 = vpack.c.b16 %v3223, %v3221
        %v3718 = vpack.c.b16 %v3224, %v3222
        %v3719 = vpack.c.b16 %v3227, %v3225
        %v3720 = vpack.c.b16 %v3228, %v3226
        %v3721 = vpack.c.b16 %v3231, %v3229
        %v3722 = vpack.c.b16 %v3232, %v3230
        %v3723 = vpack.c.b16 %v3235, %v3233
        %v3724 = vpack.c.b16 %v3236, %v3234
        %v3725 = vpack.c.b16 %v3239, %v3237
        %v3726 = vpack.c.b16 %v3240, %v3238
        %v3727 = vpack.c.b16 %v3243, %v3241
        %v3728 = vpack.c.b16 %v3244, %v3242
        %v3729 = vpack.c.b16 %v3247, %v3245
        %v3730 = vpack.c.b16 %v3248, %v3246
        %v3731 = vpack.c.b16 %v3251, %v3249
        %v3732 = vpack.c.b16 %v3252, %v3250
        %v3733 = vpack.c.b16 %v3255, %v3253
        %v3734 = vpack.c.b16 %v3256, %v3254
        %v3735 = vpack.c.b16 %v3259, %v3257
        %v3736 = vpack.c.b16 %v3260, %v3258
        %v3737 = vpack.c.b16 %v3263, %v3261
        %v3738 = vpack.c.b16 %v3264, %v3262
        %v3739 = vpack.c.b16 %v3267, %v3265
        %v3740 = vpack.c.b16 %v3268, %v3266
        %v3741 = vpack.c.b16 %v3271, %v3269
        %v3742 = vpack.c.b16 %v3272, %v3270
        %v3743 = vpack.c.b16 %v3275, %v3273
        %v3744 = vpack.c.b16 %v3276, %v3274
        %v3745 = vpack.c.b16 %v3279, %v3277
        %v3746 = vpack.c.b16 %v3280, %v3278
        %v3747 = vpack.c.b16 %v3283, %v3281
        %v3748 = vpack.c.b16 %v3284, %v3282
        %v3749 = vpack.c.b16 %v3287, %v3285
        %v3750 = vpack.c.b16 %v3288, %v3286
        %v3751 = vpack.c.b16 %v3291, %v3289
        %v3752 = vpack.c.b16 %v3292, %v3290
        %v3753 = vpack.c.b16 %v3295, %v3293
        %v3754 = vpack.c.b16 %v3296, %v3294
        %v3755 = vpack.c.b16 %v3299, %v3297
        %v3756 = vpack.c.b16 %v3300, %v3298
        %v3757 = vpack.c.b16 %v3303, %v3301
        %v3758 = vpack.c.b16 %v3304, %v3302
        %v3759 = vpack.c.b16 %v3307, %v3305
        %v3760 = vpack.c.b16 %v3308, %v3306
        %v3761 = vpack.c.b16 %v3311, %v3309
        %v3762 = vpack.c.b16 %v3312, %v3310
        %v3763 = vpack.c.b16 %v3315, %v3313
        %v3764 = vpack.c.b16 %v3316, %v3314
        %v3765 = vpack.c.b16 %v3319, %v3317
        %v3766 = vpack.c.b16 %v3320, %v3318
        %v3767 = vpack.c.b16 %v3323, %v3321
        %v3768 = vpack.c.b16 %v3324, %v3322
        %v3769 = vpack.c.b16 %v3327, %v3325
        %v3770 = vpack.c.b16 %v3328, %v3326
        %v3771 = vpack.c.b16 %v3331, %v3329
        %v3772 = vpack.c.b16 %v3332, %v3330
        %v3773 = vpack.c.b16 %v3335, %v3333
        %v3774 = vpack.c.b16 %v3336, %v3334
        %v3775 = vpack.c.b16 %v3339, %v3337
        %v3776 = vpack.c.b16 %v3340, %v3338
        %v3777 = vpack.c.b16 %v3343, %v3341
        %v3778 = vpack.c.b16 %v3344, %v3342
        %v3779 = vpack.c.b16 %v3347, %v3345
        %v3780 = vpack.c.b16 %v3348, %v3346
        %v3781 = vpack.c.b16 %v3351, %v3349
        %v3782 = vpack.c.b16 %v3352, %v3350
        %v3783 = vpack.c.b16 %v3355, %v3353
        %v3784 = vpack.c.b16 %v3356, %v3354
        %v3785 = vpack.c.b16 %v3359, %v3357
        %v3786 = vpack.c.b16 %v3360, %v3358
        %v3787 = vpack.c.b16 %v3363, %v3361
        %v3788 = vpack.c.b16 %v3364, %v3362
        %v3789 = vpack.c.b16 %v3367, %v3365
        %v3790 = vpack.c.b16 %v3368, %v3366
        %v3791 = vpack.c.b16 %v3371, %v3369
        %v3792 = vpack.c.b16 %v3372, %v3370
        %v3793 = vpack.c.b16 %v3375, %v3373
        %v3794 = vpack.c.b16 %v3376, %v3374
        %v3795 = vpack.c.b16 %v3379, %v3377
        %v3796 = vpack.c.b16 %v3380, %v3378
        %v3797 = vpack.c.b16 %v3383, %v3381
        %v3798 = vpack.c.b16 %v3384, %v3382
        %v3799 = vpack.c.b16 %v3387, %v3385
        %v3800 = vpack.c.b16 %v3388, %v3386
        %v3801 = vpack.c.b16 %v3391, %v3389
        %v3802 = vpack.c.b16 %v3392, %v3390
        %v3803 = vpack.c.b16 %v3395, %v3393
        %v3804 = vpack.c.b16 %v3396, %v3394
        %v3805 = vpack.c.b16 %v3399, %v3397
        %v3806 = vpack.c.b16 %v3400, %v3398
        %v3807 = vpack.c.b16 %v3403, %v3401
        %v3808 = vpack.c.b16 %v3404, %v3402
        %v3809 = vpack.c.b16 %v3407, %v3405
        %v3810 = vpack.c.b16 %v3408, %v3406
        %v3811 = vpack.c.b16 %v3411, %v3409
        %v3812 = vpack.c.b16 %v3412, %v3410
        %v3813 = vpack.c.b16 %v3415, %v3413
        %v3814 = vpack.c.b16 %v3416, %v3414
        %v3815 = vpack.c.b16 %v3419, %v3417
        %v3816 = vpack.c.b16 %v3420, %v3418
        %v3817 = vpack.c.b16 %v3423, %v3421
        %v3818 = vpack.c.b16 %v3424, %v3422
        %v3819 = vpack.c.b16 %v3427, %v3425
        %v3820 = vpack.c.b16 %v3428, %v3426
        %v3821 = vpack.c.b16 %v3431, %v3429
        %v3822 = vpack.c.b16 %v3432, %v3430
        %v3823 = vpack.c.b16 %v3435, %v3433
        %v3824 = vpack.c.b16 %v3436, %v3434
        %v3825 = vpack.c.b16 %v3439, %v3437
        %v3826 = vpack.c.b16 %v3440, %v3438
        %v3827 = vpack.c.b16 %v3443, %v3441
        %v3828 = vpack.c.b16 %v3444, %v3442
        %4213 = vmatprep.subr.bf16.mxu0 %v3446
        %4214 = vmatpush1.bf16.msra.mxu0 %v3445
        %4215 = vmatprep.subr.bf16.mxu0 %v3448
        %4216 = vmatpush1.bf16.msra.mxu0 %v3447
        %4217 = vmatprep.subr.bf16.mxu0 %v3450
        %4218 = vmatpush1.bf16.msra.mxu0 %v3449
        %4219 = vmatprep.subr.bf16.mxu0 %v3452
        %4220 = vmatpush1.bf16.msra.mxu0 %v3451
        %4221 = vmatprep.subr.bf16.mxu0 %v3454
        %4222 = vmatpush1.bf16.msra.mxu0 %v3453
        %4223 = vmatprep.subr.bf16.mxu0 %v3456
        %4224 = vmatpush1.bf16.msra.mxu0 %v3455
        %4225 = vmatprep.subr.bf16.mxu0 %v3458
        %4226 = vmatpush1.bf16.msra.mxu0 %v3457
        %4227 = vmatprep.subr.bf16.mxu0 %v3460
        %4228 = vmatpush1.bf16.msra.mxu0 %v3459
        %4229 = vmatprep.subr.bf16.mxu0 %v3462
        %4230 = vmatpush1.bf16.msra.mxu0 %v3461
        %4231 = vmatprep.subr.bf16.mxu0 %v3464
        %4232 = vmatpush1.bf16.msra.mxu0 %v3463
        %4233 = vmatprep.subr.bf16.mxu0 %v3466
        %4234 = vmatpush1.bf16.msra.mxu0 %v3465
        %4235 = vmatprep.subr.bf16.mxu0 %v3468
        %4236 = vmatpush1.bf16.msra.mxu0 %v3467
        %4237 = vmatprep.subr.bf16.mxu0 %v3470
        %4238 = vmatpush1.bf16.msra.mxu0 %v3469
        %4239 = vmatprep.subr.bf16.mxu0 %v3472
        %4240 = vmatpush1.bf16.msra.mxu0 %v3471
        %4241 = vmatprep.subr.bf16.mxu0 %v3474
        %4242 = vmatpush1.bf16.msra.mxu0 %v3473
        %4243 = vmatprep.subr.bf16.mxu0 %v3476
        %4244 = vmatpush1.bf16.msra.mxu0 %v3475
        %4245 = vmatprep.mubr.bf16.mxu0 %v2246
        %4246 = vmatmul.mubr.bf16.gmra.mrb[0].mxu0 %v2245
        %v4247 = vpop.f32.mrb[0].mxu0
        %v4248 = vadd.f32 %v2166, %v4247
        %v4249 = vpop.f32.mrb[0].mxu0
        %v4250 = vadd.f32 %v2170, %v4249
        %v4251 = vpop.f32.mrb[0].mxu0
        %v4252 = vadd.f32 %v2166, %v4251
        %v4253 = vpop.f32.mrb[0].mxu0
        %v4254 = vadd.f32 %v2170, %v4253
        %4255 = vdwg.mxu0
        %4256 = vmatprep.subr.bf16.mxu0 %v3478
        %4257 = vmatpush1.bf16.msra.mxu0 %v3477
        %4258 = vmatprep.subr.bf16.mxu0 %v3480
        %4259 = vmatpush1.bf16.msra.mxu0 %v3479
        %4260 = vmatprep.subr.bf16.mxu0 %v3482
        %4261 = vmatpush1.bf16.msra.mxu0 %v3481
        %4262 = vmatprep.subr.bf16.mxu0 %v3484
        %4263 = vmatpush1.bf16.msra.mxu0 %v3483
        %4264 = vmatprep.subr.bf16.mxu0 %v3486
        %4265 = vmatpush1.bf16.msra.mxu0 %v3485
        %4266 = vmatprep.subr.bf16.mxu0 %v3488
        %4267 = vmatpush1.bf16.msra.mxu0 %v3487
        %4268 = vmatprep.subr.bf16.mxu0 %v3490
        %4269 = vmatpush1.bf16.msra.mxu0 %v3489
        %4270 = vmatprep.subr.bf16.mxu0 %v3492
        %4271 = vmatpush1.bf16.msra.mxu0 %v3491
        %4272 = vmatprep.subr.bf16.mxu0 %v3494
        %4273 = vmatpush1.bf16.msra.mxu0 %v3493
        %4274 = vmatprep.subr.bf16.mxu0 %v3496
        %4275 = vmatpush1.bf16.msra.mxu0 %v3495
        %4276 = vmatprep.subr.bf16.mxu0 %v3498
        %4277 = vmatpush1.bf16.msra.mxu0 %v3497
        %4278 = vmatprep.subr.bf16.mxu0 %v3500
        %4279 = vmatpush1.bf16.msra.mxu0 %v3499
        %4280 = vmatprep.subr.bf16.mxu0 %v3502
        %4281 = vmatpush1.bf16.msra.mxu0 %v3501
        %4282 = vmatprep.subr.bf16.mxu0 %v3504
        %4283 = vmatpush1.bf16.msra.mxu0 %v3503
        %4284 = vmatprep.subr.bf16.mxu0 %v3506
        %4285 = vmatpush1.bf16.msra.mxu0 %v3505
        %4286 = vmatprep.subr.bf16.mxu0 %v3508
        %4287 = vmatpush1.bf16.msra.mxu0 %v3507
        %4288 = vmatprep.mubr.bf16.mxu0 %v2248
        %4289 = vmatmul.mubr.bf16.gmra.mrb[0].mxu0 %v2247
        %v4290 = vpop.f32.mrb[0].mxu0
        %v4291 = vadd.f32 %v4248, %v4290
        %v4292 = vpop.f32.mrb[0].mxu0
        %v4293 = vadd.f32 %v4250, %v4292
        %v4294 = vpop.f32.mrb[0].mxu0
        %v4295 = vadd.f32 %v4252, %v4294
        %v4296 = vpop.f32.mrb[0].mxu0
        %v4297 = vadd.f32 %v4254, %v4296
        %4298 = vdwg.mxu0
        %4299 = vmatprep.subr.bf16.mxu0 %v3510
        %4300 = vmatpush1.bf16.msra.mxu0 %v3509
        %4301 = vmatprep.subr.bf16.mxu0 %v3512
        %4302 = vmatpush1.bf16.msra.mxu0 %v3511
        %4303 = vmatprep.subr.bf16.mxu0 %v3514
        %4304 = vmatpush1.bf16.msra.mxu0 %v3513
        %4305 = vmatprep.subr.bf16.mxu0 %v3516
        %4306 = vmatpush1.bf16.msra.mxu0 %v3515
        %4307 = vmatprep.subr.bf16.mxu0 %v3518
        %4308 = vmatpush1.bf16.msra.mxu0 %v3517
        %4309 = vmatprep.subr.bf16.mxu0 %v3520
        %4310 = vmatpush1.bf16.msra.mxu0 %v3519
        %4311 = vmatprep.subr.bf16.mxu0 %v3522
        %4312 = vmatpush1.bf16.msra.mxu0 %v3521
        %4313 = vmatprep.subr.bf16.mxu0 %v3524
        %4314 = vmatpush1.bf16.msra.mxu0 %v3523
        %4315 = vmatprep.subr.bf16.mxu0 %v3526
        %4316 = vmatpush1.bf16.msra.mxu0 %v3525
        %4317 = vmatprep.subr.bf16.mxu0 %v3528
        %4318 = vmatpush1.bf16.msra.mxu0 %v3527
        %4319 = vmatprep.subr.bf16.mxu0 %v3530
        %4320 = vmatpush1.bf16.msra.mxu0 %v3529
        %4321 = vmatprep.subr.bf16.mxu0 %v3532
        %4322 = vmatpush1.bf16.msra.mxu0 %v3531
        %4323 = vmatprep.subr.bf16.mxu0 %v3534
        %4324 = vmatpush1.bf16.msra.mxu0 %v3533
        %4325 = vmatprep.subr.bf16.mxu0 %v3536
        %4326 = vmatpush1.bf16.msra.mxu0 %v3535
        %4327 = vmatprep.subr.bf16.mxu0 %v3538
        %4328 = vmatpush1.bf16.msra.mxu0 %v3537
        %4329 = vmatprep.subr.bf16.mxu0 %v3540
        %4330 = vmatpush1.bf16.msra.mxu0 %v3539
        %4331 = vmatprep.mubr.bf16.mxu0 %v2250
        %4332 = vmatmul.mubr.bf16.gmra.mrb[0].mxu0 %v2249
        %v4333 = vpop.f32.mrb[0].mxu0
        %v4334 = vadd.f32 %v4291, %v4333
        %v4335 = vpop.f32.mrb[0].mxu0
        %v4336 = vadd.f32 %v4293, %v4335
        %v4337 = vpop.f32.mrb[0].mxu0
        %v4338 = vadd.f32 %v4295, %v4337
        %v4339 = vpop.f32.mrb[0].mxu0
        %v4340 = vadd.f32 %v4297, %v4339
        %4341 = vdwg.mxu0
        %4342 = vmatprep.subr.bf16.mxu0 %v3542
        %4343 = vmatpush1.bf16.msra.mxu0 %v3541
        %4344 = vmatprep.subr.bf16.mxu0 %v3544
        %4345 = vmatpush1.bf16.msra.mxu0 %v3543
        %4346 = vmatprep.subr.bf16.mxu0 %v3546
        %4347 = vmatpush1.bf16.msra.mxu0 %v3545
        %4348 = vmatprep.subr.bf16.mxu0 %v3548
        %4349 = vmatpush1.bf16.msra.mxu0 %v3547
        %4350 = vmatprep.subr.bf16.mxu0 %v3550
        %4351 = vmatpush1.bf16.msra.mxu0 %v3549
        %4352 = vmatprep.subr.bf16.mxu0 %v3552
        %4353 = vmatpush1.bf16.msra.mxu0 %v3551
        %4354 = vmatprep.subr.bf16.mxu0 %v3554
        %4355 = vmatpush1.bf16.msra.mxu0 %v3553
        %4356 = vmatprep.subr.bf16.mxu0 %v3556
        %4357 = vmatpush1.bf16.msra.mxu0 %v3555
        %4358 = vmatprep.subr.bf16.mxu0 %v3558
        %4359 = vmatpush1.bf16.msra.mxu0 %v3557
        %4360 = vmatprep.subr.bf16.mxu0 %v3560
        %4361 = vmatpush1.bf16.msra.mxu0 %v3559
        %4362 = vmatprep.subr.bf16.mxu0 %v3562
        %4363 = vmatpush1.bf16.msra.mxu0 %v3561
        %4364 = vmatprep.subr.bf16.mxu0 %v3564
        %4365 = vmatpush1.bf16.msra.mxu0 %v3563
        %4366 = vmatprep.subr.bf16.mxu0 %v3566
        %4367 = vmatpush1.bf16.msra.mxu0 %v3565
        %4368 = vmatprep.subr.bf16.mxu0 %v3568
        %4369 = vmatpush1.bf16.msra.mxu0 %v3567
        %4370 = vmatprep.subr.bf16.mxu0 %v3570
        %4371 = vmatpush1.bf16.msra.mxu0 %v3569
        %4372 = vmatprep.subr.bf16.mxu0 %v3572
        %4373 = vmatpush1.bf16.msra.mxu0 %v3571
        %4374 = vmatprep.mubr.bf16.mxu0 %v2252
        %4375 = vmatmul.mubr.bf16.gmra.mrb[0].mxu0 %v2251
        %v4376 = vpop.f32.mrb[0].mxu0
        %v4377 = vadd.f32 %v4334, %v4376
        %v4378 = vpop.f32.mrb[0].mxu0
        %v4379 = vadd.f32 %v4336, %v4378
        %v4380 = vpop.f32.mrb[0].mxu0
        %v4381 = vadd.f32 %v4338, %v4380
        %v4382 = vpop.f32.mrb[0].mxu0
        %v4383 = vadd.f32 %v4340, %v4382
        %4384 = vdwg.mxu0
        %4385 = vmatprep.subr.bf16.mxu0 %v3574
        %4386 = vmatpush1.bf16.msra.mxu0 %v3573
        %4387 = vmatprep.subr.bf16.mxu0 %v3576
        %4388 = vmatpush1.bf16.msra.mxu0 %v3575
        %4389 = vmatprep.subr.bf16.mxu0 %v3578
        %4390 = vmatpush1.bf16.msra.mxu0 %v3577
        %4391 = vmatprep.subr.bf16.mxu0 %v3580
        %4392 = vmatpush1.bf16.msra.mxu0 %v3579
        %4393 = vmatprep.subr.bf16.mxu0 %v3582
        %4394 = vmatpush1.bf16.msra.mxu0 %v3581
        %4395 = vmatprep.subr.bf16.mxu0 %v3584
        %4396 = vmatpush1.bf16.msra.mxu0 %v3583
        %4397 = vmatprep.subr.bf16.mxu0 %v3586
        %4398 = vmatpush1.bf16.msra.mxu0 %v3585
        %4399 = vmatprep.subr.bf16.mxu0 %v3588
        %4400 = vmatpush1.bf16.msra.mxu0 %v3587
        %4401 = vmatprep.subr.bf16.mxu0 %v3590
        %4402 = vmatpush1.bf16.msra.mxu0 %v3589
        %4403 = vmatprep.subr.bf16.mxu0 %v3592
        %4404 = vmatpush1.bf16.msra.mxu0 %v3591
        %4405 = vmatprep.subr.bf16.mxu0 %v3594
        %4406 = vmatpush1.bf16.msra.mxu0 %v3593
        %4407 = vmatprep.subr.bf16.mxu0 %v3596
        %4408 = vmatpush1.bf16.msra.mxu0 %v3595
        %4409 = vmatprep.subr.bf16.mxu0 %v3598
        %4410 = vmatpush1.bf16.msra.mxu0 %v3597
        %4411 = vmatprep.subr.bf16.mxu0 %v3600
        %4412 = vmatpush1.bf16.msra.mxu0 %v3599
        %4413 = vmatprep.subr.bf16.mxu0 %v3602
        %4414 = vmatpush1.bf16.msra.mxu0 %v3601
        %4415 = vmatprep.subr.bf16.mxu0 %v3604
        %4416 = vmatpush1.bf16.msra.mxu0 %v3603
        %4417 = vmatprep.mubr.bf16.mxu0 %v2254
        %4418 = vmatmul.mubr.bf16.gmra.mrb[0].mxu0 %v2253
        %v4419 = vpop.f32.mrb[0].mxu0
        %v4420 = vadd.f32 %v4377, %v4419
        %v4421 = vpop.f32.mrb[0].mxu0
        %v4422 = vadd.f32 %v4379, %v4421
        %v4423 = vpop.f32.mrb[0].mxu0
        %v4424 = vadd.f32 %v4381, %v4423
        %v4425 = vpop.f32.mrb[0].mxu0
        %v4426 = vadd.f32 %v4383, %v4425
        %4427 = vdwg.mxu0
        %4428 = vmatprep.subr.bf16.mxu0 %v3606
        %4429 = vmatpush1.bf16.msra.mxu0 %v3605
        %4430 = vmatprep.subr.bf16.mxu0 %v3608
        %4431 = vmatpush1.bf16.msra.mxu0 %v3607
        %4432 = vmatprep.subr.bf16.mxu0 %v3610
        %4433 = vmatpush1.bf16.msra.mxu0 %v3609
        %4434 = vmatprep.subr.bf16.mxu0 %v3612
        %4435 = vmatpush1.bf16.msra.mxu0 %v3611
        %4436 = vmatprep.subr.bf16.mxu0 %v3614
        %4437 = vmatpush1.bf16.msra.mxu0 %v3613
        %4438 = vmatprep.subr.bf16.mxu0 %v3616
        %4439 = vmatpush1.bf16.msra.mxu0 %v3615
        %4440 = vmatprep.subr.bf16.mxu0 %v3618
        %4441 = vmatpush1.bf16.msra.mxu0 %v3617
        %4442 = vmatprep.subr.bf16.mxu0 %v3620
        %4443 = vmatpush1.bf16.msra.mxu0 %v3619
        %4444 = vmatprep.subr.bf16.mxu0 %v3622
        %4445 = vmatpush1.bf16.msra.mxu0 %v3621
        %4446 = vmatprep.subr.bf16.mxu0 %v3624
        %4447 = vmatpush1.bf16.msra.mxu0 %v3623
        %4448 = vmatprep.subr.bf16.mxu0 %v3626
        %4449 = vmatpush1.bf16.msra.mxu0 %v3625
        %4450 = vmatprep.subr.bf16.mxu0 %v3628
        %4451 = vmatpush1.bf16.msra.mxu0 %v3627
        %4452 = vmatprep.subr.bf16.mxu0 %v3630
        %4453 = vmatpush1.bf16.msra.mxu0 %v3629
        %4454 = vmatprep.subr.bf16.mxu0 %v3632
        %4455 = vmatpush1.bf16.msra.mxu0 %v3631
        %4456 = vmatprep.subr.bf16.mxu0 %v3634
        %4457 = vmatpush1.bf16.msra.mxu0 %v3633
        %4458 = vmatprep.subr.bf16.mxu0 %v3636
        %4459 = vmatpush1.bf16.msra.mxu0 %v3635
        %4460 = vmatprep.mubr.bf16.mxu0 %v2256
        %4461 = vmatmul.mubr.bf16.gmra.mrb[0].mxu0 %v2255
        %v4462 = vpop.f32.mrb[0].mxu0
        %v4463 = vadd.f32 %v4420, %v4462
        %v4464 = vpop.f32.mrb[0].mxu0
        %v4465 = vadd.f32 %v4422, %v4464
        %v4466 = vpop.f32.mrb[0].mxu0
        %v4467 = vadd.f32 %v4424, %v4466
        %v4468 = vpop.f32.mrb[0].mxu0
        %v4469 = vadd.f32 %v4426, %v4468
        %4470 = vdwg.mxu0
        %4471 = vmatprep.subr.bf16.mxu0 %v3638
        %4472 = vmatpush1.bf16.msra.mxu0 %v3637
        %4473 = vmatprep.subr.bf16.mxu0 %v3640
        %4474 = vmatpush1.bf16.msra.mxu0 %v3639
        %4475 = vmatprep.subr.bf16.mxu0 %v3642
        %4476 = vmatpush1.bf16.msra.mxu0 %v3641
        %4477 = vmatprep.subr.bf16.mxu0 %v3644
        %4478 = vmatpush1.bf16.msra.mxu0 %v3643
        %4479 = vmatprep.subr.bf16.mxu0 %v3646
        %4480 = vmatpush1.bf16.msra.mxu0 %v3645
        %4481 = vmatprep.subr.bf16.mxu0 %v3648
        %4482 = vmatpush1.bf16.msra.mxu0 %v3647
        %4483 = vmatprep.subr.bf16.mxu0 %v3650
        %4484 = vmatpush1.bf16.msra.mxu0 %v3649
        %4485 = vmatprep.subr.bf16.mxu0 %v3652
        %4486 = vmatpush1.bf16.msra.mxu0 %v3651
        %4487 = vmatprep.subr.bf16.mxu0 %v3654
        %4488 = vmatpush1.bf16.msra.mxu0 %v3653
        %4489 = vmatprep.subr.bf16.mxu0 %v3656
        %4490 = vmatpush1.bf16.msra.mxu0 %v3655
        %4491 = vmatprep.subr.bf16.mxu0 %v3658
        %4492 = vmatpush1.bf16.msra.mxu0 %v3657
        %4493 = vmatprep.subr.bf16.mxu0 %v3660
        %4494 = vmatpush1.bf16.msra.mxu0 %v3659
        %4495 = vmatprep.subr.bf16.mxu0 %v3662
        %4496 = vmatpush1.bf16.msra.mxu0 %v3661
        %4497 = vmatprep.subr.bf16.mxu0 %v3664
        %4498 = vmatpush1.bf16.msra.mxu0 %v3663
        %4499 = vmatprep.subr.bf16.mxu0 %v3666
        %4500 = vmatpush1.bf16.msra.mxu0 %v3665
        %4501 = vmatprep.subr.bf16.mxu0 %v3668
        %4502 = vmatpush1.bf16.msra.mxu0 %v3667
        %4503 = vmatprep.mubr.bf16.mxu0 %v2258
        %4504 = vmatmul.mubr.bf16.gmra.mrb[0].mxu0 %v2257
        %v4505 = vpop.f32.mrb[0].mxu0
        %v4506 = vadd.f32 %v4463, %v4505
        %v4507 = vpop.f32.mrb[0].mxu0
        %v4508 = vadd.f32 %v4465, %v4507
        %v4509 = vpop.f32.mrb[0].mxu0
        %v4510 = vadd.f32 %v4467, %v4509
        %v4511 = vpop.f32.mrb[0].mxu0
        %v4512 = vadd.f32 %v4469, %v4511
        %4513 = vdwg.mxu0
        %4514 = vmatprep.subr.bf16.mxu0 %v3670
        %4515 = vmatpush1.bf16.msra.mxu0 %v3669
        %4516 = vmatprep.subr.bf16.mxu0 %v3672
        %4517 = vmatpush1.bf16.msra.mxu0 %v3671
        %4518 = vmatprep.subr.bf16.mxu0 %v3674
        %4519 = vmatpush1.bf16.msra.mxu0 %v3673
        %4520 = vmatprep.subr.bf16.mxu0 %v3676
        %4521 = vmatpush1.bf16.msra.mxu0 %v3675
        %4522 = vmatprep.subr.bf16.mxu0 %v3678
        %4523 = vmatpush1.bf16.msra.mxu0 %v3677
        %4524 = vmatprep.subr.bf16.mxu0 %v3680
        %4525 = vmatpush1.bf16.msra.mxu0 %v3679
        %4526 = vmatprep.subr.bf16.mxu0 %v3682
        %4527 = vmatpush1.bf16.msra.mxu0 %v3681
        %4528 = vmatprep.subr.bf16.mxu0 %v3684
        %4529 = vmatpush1.bf16.msra.mxu0 %v3683
        %4530 = vmatprep.subr.bf16.mxu0 %v3686
        %4531 = vmatpush1.bf16.msra.mxu0 %v3685
        %4532 = vmatprep.subr.bf16.mxu0 %v3688
        %4533 = vmatpush1.bf16.msra.mxu0 %v3687
        %4534 = vmatprep.subr.bf16.mxu0 %v3690
        %4535 = vmatpush1.bf16.msra.mxu0 %v3689
        %4536 = vmatprep.subr.bf16.mxu0 %v3692
        %4537 = vmatpush1.bf16.msra.mxu0 %v3691
        %4538 = vmatprep.subr.bf16.mxu0 %v3694
        %4539 = vmatpush1.bf16.msra.mxu0 %v3693
        %4540 = vmatprep.subr.bf16.mxu0 %v3696
        %4541 = vmatpush1.bf16.msra.mxu0 %v3695
        %4542 = vmatprep.subr.bf16.mxu0 %v3698
        %4543 = vmatpush1.bf16.msra.mxu0 %v3697
        %4544 = vmatprep.subr.bf16.mxu0 %v3700
        %4545 = vmatpush1.bf16.msra.mxu0 %v3699
        %4546 = vmatprep.mubr.bf16.mxu0 %v2260
        %4547 = vmatmul.mubr.bf16.gmra.mrb[0].mxu0 %v2259
        %v4548 = vpop.f32.mrb[0].mxu0
        %v4549 = vadd.f32 %v4506, %v4548
        %v4550 = vpop.f32.mrb[0].mxu0
        %v4551 = vadd.f32 %v4508, %v4550
        %v4552 = vpop.f32.mrb[0].mxu0
        %v4553 = vadd.f32 %v4510, %v4552
        %v4554 = vpop.f32.mrb[0].mxu0
        %v4555 = vadd.f32 %v4512, %v4554
        %4556 = vdwg.mxu0
        %4557 = vmatprep.subr.bf16.mxu0 %v3702
        %4558 = vmatpush1.bf16.msra.mxu0 %v3701
        %4559 = vmatprep.subr.bf16.mxu0 %v3704
        %4560 = vmatpush1.bf16.msra.mxu0 %v3703
        %4561 = vmatprep.subr.bf16.mxu0 %v3706
        %4562 = vmatpush1.bf16.msra.mxu0 %v3705
        %4563 = vmatprep.subr.bf16.mxu0 %v3708
        %4564 = vmatpush1.bf16.msra.mxu0 %v3707
        %4565 = vmatprep.subr.bf16.mxu0 %v3710
        %4566 = vmatpush1.bf16.msra.mxu0 %v3709
        %4567 = vmatprep.subr.bf16.mxu0 %v3712
        %4568 = vmatpush1.bf16.msra.mxu0 %v3711
        %4569 = vmatprep.subr.bf16.mxu0 %v3714
        %4570 = vmatpush1.bf16.msra.mxu0 %v3713
        %4571 = vmatprep.subr.bf16.mxu0 %v3716
        %4572 = vmatpush1.bf16.msra.mxu0 %v3715
        %4573 = vmatprep.subr.bf16.mxu0 %v3718
        %4574 = vmatpush1.bf16.msra.mxu0 %v3717
        %4575 = vmatprep.subr.bf16.mxu0 %v3720
        %4576 = vmatpush1.bf16.msra.mxu0 %v3719
        %4577 = vmatprep.subr.bf16.mxu0 %v3722
        %4578 = vmatpush1.bf16.msra.mxu0 %v3721
        %4579 = vmatprep.subr.bf16.mxu0 %v3724
        %4580 = vmatpush1.bf16.msra.mxu0 %v3723
        %4581 = vmatprep.subr.bf16.mxu0 %v3726
        %4582 = vmatpush1.bf16.msra.mxu0 %v3725
        %4583 = vmatprep.subr.bf16.mxu0 %v3728
        %4584 = vmatpush1.bf16.msra.mxu0 %v3727
        %4585 = vmatprep.subr.bf16.mxu0 %v3730
        %4586 = vmatpush1.bf16.msra.mxu0 %v3729
        %4587 = vmatprep.subr.bf16.mxu0 %v3732
        %4588 = vmatpush1.bf16.msra.mxu0 %v3731
        %4589 = vmatprep.mubr.bf16.mxu0 %v2262
        %4590 = vmatmul.mubr.bf16.gmra.mrb[0].mxu0 %v2261
        %v4591 = vpop.f32.mrb[0].mxu0
        %v4592 = vadd.f32 %v4549, %v4591
        %v4593 = vpop.f32.mrb[0].mxu0
        %v4594 = vadd.f32 %v4551, %v4593
        %v4595 = vpop.f32.mrb[0].mxu0
        %v4596 = vadd.f32 %v4553, %v4595
        %v4597 = vpop.f32.mrb[0].mxu0
        %v4598 = vadd.f32 %v4555, %v4597
        %4599 = vdwg.mxu0
        %4600 = vmatprep.subr.bf16.mxu0 %v3734
        %4601 = vmatpush1.bf16.msra.mxu0 %v3733
        %4602 = vmatprep.subr.bf16.mxu0 %v3736
        %4603 = vmatpush1.bf16.msra.mxu0 %v3735
        %4604 = vmatprep.subr.bf16.mxu0 %v3738
        %4605 = vmatpush1.bf16.msra.mxu0 %v3737
        %4606 = vmatprep.subr.bf16.mxu0 %v3740
        %4607 = vmatpush1.bf16.msra.mxu0 %v3739
        %4608 = vmatprep.subr.bf16.mxu0 %v3742
        %4609 = vmatpush1.bf16.msra.mxu0 %v3741
        %4610 = vmatprep.subr.bf16.mxu0 %v3744
        %4611 = vmatpush1.bf16.msra.mxu0 %v3743
        %4612 = vmatprep.subr.bf16.mxu0 %v3746
        %4613 = vmatpush1.bf16.msra.mxu0 %v3745
        %4614 = vmatprep.subr.bf16.mxu0 %v3748
        %4615 = vmatpush1.bf16.msra.mxu0 %v3747
        %4616 = vmatprep.subr.bf16.mxu0 %v3750
        %4617 = vmatpush1.bf16.msra.mxu0 %v3749
        %4618 = vmatprep.subr.bf16.mxu0 %v3752
        %4619 = vmatpush1.bf16.msra.mxu0 %v3751
        %4620 = vmatprep.subr.bf16.mxu0 %v3754
        %4621 = vmatpush1.bf16.msra.mxu0 %v3753
        %4622 = vmatprep.subr.bf16.mxu0 %v3756
        %4623 = vmatpush1.bf16.msra.mxu0 %v3755
        %4624 = vmatprep.subr.bf16.mxu0 %v3758
        %4625 = vmatpush1.bf16.msra.mxu0 %v3757
        %4626 = vmatprep.subr.bf16.mxu0 %v3760
        %4627 = vmatpush1.bf16.msra.mxu0 %v3759
        %4628 = vmatprep.subr.bf16.mxu0 %v3762
        %4629 = vmatpush1.bf16.msra.mxu0 %v3761
        %4630 = vmatprep.subr.bf16.mxu0 %v3764
        %4631 = vmatpush1.bf16.msra.mxu0 %v3763
        %4632 = vmatprep.mubr.bf16.mxu0 %v2264
        %4633 = vmatmul.mubr.bf16.gmra.mrb[0].mxu0 %v2263
        %v4634 = vpop.f32.mrb[0].mxu0
        %v4635 = vadd.f32 %v4592, %v4634
        %v4636 = vpop.f32.mrb[0].mxu0
        %v4637 = vadd.f32 %v4594, %v4636
        %v4638 = vpop.f32.mrb[0].mxu0
        %v4639 = vadd.f32 %v4596, %v4638
        %v4640 = vpop.f32.mrb[0].mxu0
        %v4641 = vadd.f32 %v4598, %v4640
        %4642 = vdwg.mxu0
        %4643 = vmatprep.subr.bf16.mxu0 %v3766
        %4644 = vmatpush1.bf16.msra.mxu0 %v3765
        %4645 = vmatprep.subr.bf16.mxu0 %v3768
        %4646 = vmatpush1.bf16.msra.mxu0 %v3767
        %4647 = vmatprep.subr.bf16.mxu0 %v3770
        %4648 = vmatpush1.bf16.msra.mxu0 %v3769
        %4649 = vmatprep.subr.bf16.mxu0 %v3772
        %4650 = vmatpush1.bf16.msra.mxu0 %v3771
        %4651 = vmatprep.subr.bf16.mxu0 %v3774
        %4652 = vmatpush1.bf16.msra.mxu0 %v3773
        %4653 = vmatprep.subr.bf16.mxu0 %v3776
        %4654 = vmatpush1.bf16.msra.mxu0 %v3775
        %4655 = vmatprep.subr.bf16.mxu0 %v3778
        %4656 = vmatpush1.bf16.msra.mxu0 %v3777
        %4657 = vmatprep.subr.bf16.mxu0 %v3780
        %4658 = vmatpush1.bf16.msra.mxu0 %v3779
        %4659 = vmatprep.subr.bf16.mxu0 %v3782
        %4660 = vmatpush1.bf16.msra.mxu0 %v3781
        %4661 = vmatprep.subr.bf16.mxu0 %v3784
        %4662 = vmatpush1.bf16.msra.mxu0 %v3783
        %4663 = vmatprep.subr.bf16.mxu0 %v3786
        %4664 = vmatpush1.bf16.msra.mxu0 %v3785
        %4665 = vmatprep.subr.bf16.mxu0 %v3788
        %4666 = vmatpush1.bf16.msra.mxu0 %v3787
        %4667 = vmatprep.subr.bf16.mxu0 %v3790
        %4668 = vmatpush1.bf16.msra.mxu0 %v3789
        %4669 = vmatprep.subr.bf16.mxu0 %v3792
        %4670 = vmatpush1.bf16.msra.mxu0 %v3791
        %4671 = vmatprep.subr.bf16.mxu0 %v3794
        %4672 = vmatpush1.bf16.msra.mxu0 %v3793
        %4673 = vmatprep.subr.bf16.mxu0 %v3796
        %4674 = vmatpush1.bf16.msra.mxu0 %v3795
        %4675 = vmatprep.mubr.bf16.mxu0 %v2266
        %4676 = vmatmul.mubr.bf16.gmra.mrb[0].mxu0 %v2265
        %v4677 = vpop.f32.mrb[0].mxu0
        %v4678 = vadd.f32 %v4635, %v4677
        %v4679 = vpop.f32.mrb[0].mxu0
        %v4680 = vadd.f32 %v4637, %v4679
        %v4681 = vpop.f32.mrb[0].mxu0
        %v4682 = vadd.f32 %v4639, %v4681
        %v4683 = vpop.f32.mrb[0].mxu0
        %v4684 = vadd.f32 %v4641, %v4683
        %4685 = vdwg.mxu0
        %4686 = vmatprep.subr.bf16.mxu0 %v3798
        %4687 = vmatpush1.bf16.msra.mxu0 %v3797
        %4688 = vmatprep.subr.bf16.mxu0 %v3800
        %4689 = vmatpush1.bf16.msra.mxu0 %v3799
        %4690 = vmatprep.subr.bf16.mxu0 %v3802
        %4691 = vmatpush1.bf16.msra.mxu0 %v3801
        %4692 = vmatprep.subr.bf16.mxu0 %v3804
        %4693 = vmatpush1.bf16.msra.mxu0 %v3803
        %4694 = vmatprep.subr.bf16.mxu0 %v3806
        %4695 = vmatpush1.bf16.msra.mxu0 %v3805
        %4696 = vmatprep.subr.bf16.mxu0 %v3808
        %4697 = vmatpush1.bf16.msra.mxu0 %v3807
        %4698 = vmatprep.subr.bf16.mxu0 %v3810
        %4699 = vmatpush1.bf16.msra.mxu0 %v3809
        %4700 = vmatprep.subr.bf16.mxu0 %v3812
        %4701 = vmatpush1.bf16.msra.mxu0 %v3811
        %4702 = vmatprep.subr.bf16.mxu0 %v3814
        %4703 = vmatpush1.bf16.msra.mxu0 %v3813
        %4704 = vmatprep.subr.bf16.mxu0 %v3816
        %4705 = vmatpush1.bf16.msra.mxu0 %v3815
        %4706 = vmatprep.subr.bf16.mxu0 %v3818
        %4707 = vmatpush1.bf16.msra.mxu0 %v3817
        %4708 = vmatprep.subr.bf16.mxu0 %v3820
        %4709 = vmatpush1.bf16.msra.mxu0 %v3819
        %4710 = vmatprep.subr.bf16.mxu0 %v3822
        %4711 = vmatpush1.bf16.msra.mxu0 %v3821
        %4712 = vmatprep.subr.bf16.mxu0 %v3824
        %4713 = vmatpush1.bf16.msra.mxu0 %v3823
        %4714 = vmatprep.subr.bf16.mxu0 %v3826
        %4715 = vmatpush1.bf16.msra.mxu0 %v3825
        %4716 = vmatprep.subr.bf16.mxu0 %v3828
        %4717 = vmatpush1.bf16.msra.mxu0 %v3827
        %4718 = vmatprep.mubr.bf16.mxu0 %v2268
        %4719 = vmatmul.mubr.bf16.gmra.mrb[0].mxu0 %v2267
        %v4720 = vpop.f32.mrb[0].mxu0
        %v4721 = vadd.f32 %v4678, %v4720
        %v4722 = vpop.f32.mrb[0].mxu0
        %v4723 = vadd.f32 %v4680, %v4722
        %v4724 = vpop.f32.mrb[0].mxu0
        %v4725 = vadd.f32 %v4682, %v4724
        %v4726 = vpop.f32.mrb[0].mxu0
        %v4727 = vadd.f32 %v4684, %v4726
        %4728 = vdwg.mxu0
        %vm4729 = vcmp.ge.f32.partialorder %v4721, 0.0
        %vm4730 = vcmp.ge.f32.partialorder %v4723, 0.0
        %vm4731 = vcmp.ge.f32.partialorder %v4725, 0.0
        %vm4732 = vcmp.ge.f32.partialorder %v4727, 0.0
        %v4733 = vmul.f32 %v4721, 0.01
        %v4734 = vmul.f32 %v4723, 0.01
        %v4735 = vmul.f32 %v4725, 0.01
        %v4736 = vmul.f32 %v4727, 0.01
        %v4737 = vsel %vm4729, %v4721, %v4733
        %v4738 = vsel %vm4730, %v4723, %v4734
        %v4739 = vsel %vm4731, %v4725, %v4735
        %v4740 = vsel %vm4732, %v4727, %v4736
        %4741 = vst [vmem:[%s1745] sm:$0xff] %v4737
        %4742 = vst [vmem:[%s1745 + $0x8] sm:$0xff] %v4738
        %4743 = vst [vmem:[%s1745 + $0x10] sm:$0xff] %v4739
        %4744 = vst [vmem:[%s1745 + $0x18] sm:$0xff] %v4740
        %s4745 = sand.u32 %s95, 1
        %s4746 = sand.u32 %s95, 1
        %s4747 = smul.addr %s4746, 32
        %s4748 = scalar_lea.vmem [#allocation3], %s4747
        // Predicated region
        $region71: #{_encoder_convs.4} parent=65 // pred_check
          %p4749 = pneg %p105
        $region72: #{_encoder_convs.4} parent=65 // pred_check_branch
          %4751 = sbr.rel (%p4749) target = $region74
        $region73: #{_encoder_convs.4} parent=65 // pred_region
          %s4752 = smul.u32 2, %s14
          %s4753 = smul.addr %s4752, 8
          %s4754 = scalar_lea.vmem %s3, %s4753
          // Predicated region
          $region75: #{_encoder_convs.4} parent=73 // pred_check
            _
          $region76: #{_encoder_convs.4} parent=73 // pred_check_branch
            %4756 = sbr.rel (0) target = $region78
          $region77: #{_encoder_convs.4} parent=73 // pred_region
            // Predicated region
            $region79: #{_encoder_convs.4} parent=77 // pred_check
              _
            $region80: #{_encoder_convs.4} parent=77 // pred_check_branch
              %4758 = sbr.rel (0) target = $region82
            $region81: #{_encoder_convs.4} parent=77 // pred_region
              loop: start=0, step=1, limit=1
              $region83: #{_encoder_convs.4} parent=81 // loop_pre_header
                _
              $region84: #{_encoder_convs.4} parent=81 // loop_header
                %s4760 = sphi 0, %s4764
                %p4761 = scmp.ge.s32.totalorder %s4760, 1
                %s4765 = sphi %s4748, %s4748
                %s4766 = sphi %s4754, %s4754
              $region85: #{_encoder_convs.4} parent=81 // loop_header_branch
                %4763 = sbr.rel (%p4761) target = $region89
              $region86: #{_encoder_convs.4} parent=81 // loop_body
                %v4767 = vld [vmem:[%s4765] sm:$0xff]
                %4768 = vst [vmem:[%s4766] sm:$0xff] %v4767
                %v4769 = vld [vmem:[%s4765 + $0x8] sm:$0xff]
                %4770 = vst [vmem:[%s4766 + $0x8] sm:$0xff] %v4769
                %v4771 = vld [vmem:[%s4765 + $0x10] sm:$0xff]
                %4772 = vst [vmem:[%s4766 + $0x20] sm:$0xff] %v4771
                %v4773 = vld [vmem:[%s4765 + $0x18] sm:$0xff]
                %4774 = vst [vmem:[%s4766 + $0x28] sm:$0xff] %v4773
              $region87: #{_encoder_convs.4} parent=81 // loop_footer
                %s4764 = sadd.s32 1, %s4760
              $region88: #{_encoder_convs.4} parent=81 // loop_footer_branch
                %4759 = sbr.rel target = $region84
              $region89: #{_encoder_convs.4} parent=81 // loop_exit
                _
            $region82: #{_encoder_convs.4} parent=77 // pred_fallthru
              _
            // Predicated region
            $region90: #{_encoder_convs.4} parent=77 // pred_check
              _
            $region91: #{_encoder_convs.4} parent=77 // pred_check_branch
              %4776 = sbr.rel target = $region93
            $region92: #{_encoder_convs.4} parent=77 // pred_region
              _
            $region93: #{_encoder_convs.4} parent=77 // pred_fallthru
              _
          $region78: #{_encoder_convs.4} parent=73 // pred_fallthru
            _
          %4777 = vnop
        $region74: #{_encoder_convs.4} parent=65 // pred_fallthru
          _
      $region66: #{_encoder_convs.4} parent=5 // pred_fallthru
        _
      %p4778 = scmp.le.s32.totalorder 2, %s9
      // Predicated region
      $region94: #{_encoder_convs.4} parent=5 // pred_check
        %p4779 = pneg %p4778
      $region95: #{_encoder_convs.4} parent=5 // pred_check_branch
        %4781 = sbr.rel (%p4779) target = $region97
      $region96: #{_encoder_convs.4} parent=5 // pred_region
        %s4782 = ssub.s32 %s9, 2
        // Predicated region
        $region98: #{_encoder_convs.4} parent=96 // pred_check
          %p4783 = pneg %p111
        $region99: #{_encoder_convs.4} parent=96 // pred_check_branch
          %4785 = sbr.rel (%p4783) target = $region101
        $region100: #{_encoder_convs.4} parent=96 // pred_region
          %s4786 = sand.u32 %s96, 1
          %s4787 = sand.u32 %s96, 1
          %s4788 = smul.addr %s4787, 32
          %s4789 = scalar_lea.vmem [#allocation3], %s4788
        $region101: #{_encoder_convs.4} parent=96 // pred_fallthru
          _
      $region97: #{_encoder_convs.4} parent=5 // pred_fallthru
        _
    $region6: #{_encoder_convs.4} parent=1 // loop_footer
      %s13 = sadd.s32 1, %s9
    $region7: #{_encoder_convs.4} parent=1 // loop_footer_branch
      %8 = sbr.rel target = $region3
    $region8: #{_encoder_convs.4} parent=1 // loop_exit
      _

// kernel: _encoder_convs.5
$region0: #{_encoder_convs.5}
  #allocation0 [shape = 'u32[]', space=smem, size = 0x4, offset = 0x4, fixed_abs, tag = 'smem constant byte address 0x4 - core index']
  #allocation1 [shape = 'u32[144,128]{1,0:T(1,128)}', space=vmem, size = 0x12000, scoped, tag = 'internal scratch']
  %s0 = inlined_call_operand.vmem [shape: bf16[8,1536], index: 0, kind: input, shape index: {}]
  %s1 = inlined_call_operand.vmem [shape: bf16[1536,256], index: 1, kind: input, shape index: {}]
  %s2 = inlined_call_operand.vmem [shape: f32[1,256], index: 2, kind: input, shape index: {}]
  %s3 = inlined_call_operand.vmem [shape: f32[8,256], index: 3, kind: output, shape index: {}]
  %s4 = sld [smem:[#allocation0]]
  $region22: #{_encoder_convs.5} parent=0
    _
  %s6 = ssub.s32 1, %s4
  %s7 = scalar_select 0, %s6, %s4
  // Predicated region
  $region2: #{_encoder_convs.5} parent=0 // pred_check
    _
  $region3: #{_encoder_convs.5} parent=0 // pred_check_branch
    %9 = sbr.rel (0) target = $region5
  $region4: #{_encoder_convs.5} parent=0 // pred_region
    _
  $region5: #{_encoder_convs.5} parent=0 // pred_fallthru
    _
  // Predicated region
  $region6: #{_encoder_convs.5} parent=0 // pred_check
    _
  $region7: #{_encoder_convs.5} parent=0 // pred_check_branch
    %11 = sbr.rel (0) target = $region9
  $region8: #{_encoder_convs.5} parent=0 // pred_region
    _
  $region9: #{_encoder_convs.5} parent=0 // pred_fallthru
    _
  // Predicated region
  $region10: #{_encoder_convs.5} parent=0 // pred_check
    _
  $region11: #{_encoder_convs.5} parent=0 // pred_check_branch
    %13 = sbr.rel (0) target = $region13
  $region12: #{_encoder_convs.5} parent=0 // pred_region
    _
  $region13: #{_encoder_convs.5} parent=0 // pred_fallthru
    _
  %v14 = vld [vmem:[%s0] sm:$0xff]
  %v15 = vld [vmem:[%s0 + $0x8] sm:$0xff]
  %v16 = vld [vmem:[%s0 + $0x10] sm:$0xff]
  %v17 = vld [vmem:[%s0 + $0x18] sm:$0xff]
  %v18 = vld [vmem:[%s0 + $0x20] sm:$0xff]
  %v19 = vld [vmem:[%s0 + $0x28] sm:$0xff]
  %v20 = vld [vmem:[%s1] sm:$0xff]
  %v21 = vld [vmem:[%s1 + $0x8] sm:$0xff]
  %v22 = vld [vmem:[%s1 + $0x10] sm:$0xff]
  %v23 = vld [vmem:[%s1 + $0x18] sm:$0xff]
  %v24 = vld [vmem:[%s1 + $0x20] sm:$0xff]
  %v25 = vld [vmem:[%s1 + $0x28] sm:$0xff]
  %v26 = vld [vmem:[%s1 + $0x30] sm:$0xff]
  %v27 = vld [vmem:[%s1 + $0x38] sm:$0xff]
  %v28 = vld [vmem:[%s1 + $0x40] sm:$0xff]
  %v29 = vld [vmem:[%s1 + $0x48] sm:$0xff]
  %v30 = vld [vmem:[%s1 + $0x50] sm:$0xff]
  %v31 = vld [vmem:[%s1 + $0x58] sm:$0xff]
  %v32 = vld [vmem:[%s1 + $0x60] sm:$0xff]
  %v33 = vld [vmem:[%s1 + $0x68] sm:$0xff]
  %v34 = vld [vmem:[%s1 + $0x70] sm:$0xff]
  %v35 = vld [vmem:[%s1 + $0x78] sm:$0xff]
  %v36 = vld [vmem:[%s1 + $0x80] sm:$0xff]
  %v37 = vld [vmem:[%s1 + $0x88] sm:$0xff]
  %v38 = vld [vmem:[%s1 + $0x90] sm:$0xff]
  %v39 = vld [vmem:[%s1 + $0x98] sm:$0xff]
  %v40 = vld [vmem:[%s1 + $0xa0] sm:$0xff]
  %v41 = vld [vmem:[%s1 + $0xa8] sm:$0xff]
  %v42 = vld [vmem:[%s1 + $0xb0] sm:$0xff]
  %v43 = vld [vmem:[%s1 + $0xb8] sm:$0xff]
  %v44 = vld [vmem:[%s1 + $0xc0] sm:$0xff]
  %v45 = vld [vmem:[%s1 + $0xc8] sm:$0xff]
  %v46 = vld [vmem:[%s1 + $0xd0] sm:$0xff]
  %v47 = vld [vmem:[%s1 + $0xd8] sm:$0xff]
  %v48 = vld [vmem:[%s1 + $0xe0] sm:$0xff]
  %v49 = vld [vmem:[%s1 + $0xe8] sm:$0xff]
  %v50 = vld [vmem:[%s1 + $0xf0] sm:$0xff]
  %v51 = vld [vmem:[%s1 + $0xf8] sm:$0xff]
  %v52 = vld [vmem:[%s1 + $0x100] sm:$0xff]
  %v53 = vld [vmem:[%s1 + $0x108] sm:$0xff]
  %v54 = vld [vmem:[%s1 + $0x110] sm:$0xff]
  %v55 = vld [vmem:[%s1 + $0x118] sm:$0xff]
  %v56 = vld [vmem:[%s1 + $0x120] sm:$0xff]
  %v57 = vld [vmem:[%s1 + $0x128] sm:$0xff]
  %v58 = vld [vmem:[%s1 + $0x130] sm:$0xff]
  %v59 = vld [vmem:[%s1 + $0x138] sm:$0xff]
  %v60 = vld [vmem:[%s1 + $0x140] sm:$0xff]
  %v61 = vld [vmem:[%s1 + $0x148] sm:$0xff]
  %v62 = vld [vmem:[%s1 + $0x150] sm:$0xff]
  %v63 = vld [vmem:[%s1 + $0x158] sm:$0xff]
  %v64 = vld [vmem:[%s1 + $0x160] sm:$0xff]
  %v65 = vld [vmem:[%s1 + $0x168] sm:$0xff]
  %v66 = vld [vmem:[%s1 + $0x170] sm:$0xff]
  %v67 = vld [vmem:[%s1 + $0x178] sm:$0xff]
  %v68 = vld [vmem:[%s1 + $0x180] sm:$0xff]
  %v69 = vld [vmem:[%s1 + $0x188] sm:$0xff]
  %v70 = vld [vmem:[%s1 + $0x190] sm:$0xff]
  %v71 = vld [vmem:[%s1 + $0x198] sm:$0xff]
  %v72 = vld [vmem:[%s1 + $0x1a0] sm:$0xff]
  %v73 = vld [vmem:[%s1 + $0x1a8] sm:$0xff]
  %v74 = vld [vmem:[%s1 + $0x1b0] sm:$0xff]
  %v75 = vld [vmem:[%s1 + $0x1b8] sm:$0xff]
  %v76 = vld [vmem:[%s1 + $0x1c0] sm:$0xff]
  %v77 = vld [vmem:[%s1 + $0x1c8] sm:$0xff]
  %v78 = vld [vmem:[%s1 + $0x1d0] sm:$0xff]
  %v79 = vld [vmem:[%s1 + $0x1d8] sm:$0xff]
  %v80 = vld [vmem:[%s1 + $0x1e0] sm:$0xff]
  %v81 = vld [vmem:[%s1 + $0x1e8] sm:$0xff]
  %v82 = vld [vmem:[%s1 + $0x1f0] sm:$0xff]
  %v83 = vld [vmem:[%s1 + $0x1f8] sm:$0xff]
  %v84 = vld [vmem:[%s1 + $0x200] sm:$0xff]
  %v85 = vld [vmem:[%s1 + $0x208] sm:$0xff]
  %v86 = vld [vmem:[%s1 + $0x210] sm:$0xff]
  %v87 = vld [vmem:[%s1 + $0x218] sm:$0xff]
  %v88 = vld [vmem:[%s1 + $0x220] sm:$0xff]
  %v89 = vld [vmem:[%s1 + $0x228] sm:$0xff]
  %v90 = vld [vmem:[%s1 + $0x230] sm:$0xff]
  %v91 = vld [vmem:[%s1 + $0x238] sm:$0xff]
  %v92 = vld [vmem:[%s1 + $0x240] sm:$0xff]
  %v93 = vld [vmem:[%s1 + $0x248] sm:$0xff]
  %v94 = vld [vmem:[%s1 + $0x250] sm:$0xff]
  %v95 = vld [vmem:[%s1 + $0x258] sm:$0xff]
  %v96 = vld [vmem:[%s1 + $0x260] sm:$0xff]
  %v97 = vld [vmem:[%s1 + $0x268] sm:$0xff]
  %v98 = vld [vmem:[%s1 + $0x270] sm:$0xff]
  %v99 = vld [vmem:[%s1 + $0x278] sm:$0xff]
  %v100 = vld [vmem:[%s1 + $0x280] sm:$0xff]
  %v101 = vld [vmem:[%s1 + $0x288] sm:$0xff]
  %v102 = vld [vmem:[%s1 + $0x290] sm:$0xff]
  %v103 = vld [vmem:[%s1 + $0x298] sm:$0xff]
  %v104 = vld [vmem:[%s1 + $0x2a0] sm:$0xff]
  %v105 = vld [vmem:[%s1 + $0x2a8] sm:$0xff]
  %v106 = vld [vmem:[%s1 + $0x2b0] sm:$0xff]
  %v107 = vld [vmem:[%s1 + $0x2b8] sm:$0xff]
  %v108 = vld [vmem:[%s1 + $0x2c0] sm:$0xff]
  %v109 = vld [vmem:[%s1 + $0x2c8] sm:$0xff]
  %v110 = vld [vmem:[%s1 + $0x2d0] sm:$0xff]
  %v111 = vld [vmem:[%s1 + $0x2d8] sm:$0xff]
  %v112 = vld [vmem:[%s1 + $0x2e0] sm:$0xff]
  %v113 = vld [vmem:[%s1 + $0x2e8] sm:$0xff]
  %v114 = vld [vmem:[%s1 + $0x2f0] sm:$0xff]
  %v115 = vld [vmem:[%s1 + $0x2f8] sm:$0xff]
  %v116 = vld [vmem:[%s1 + $0x300] sm:$0xff]
  %v117 = vld [vmem:[%s1 + $0x308] sm:$0xff]
  %v118 = vld [vmem:[%s1 + $0x310] sm:$0xff]
  %v119 = vld [vmem:[%s1 + $0x318] sm:$0xff]
  %v120 = vld [vmem:[%s1 + $0x320] sm:$0xff]
  %v121 = vld [vmem:[%s1 + $0x328] sm:$0xff]
  %v122 = vld [vmem:[%s1 + $0x330] sm:$0xff]
  %v123 = vld [vmem:[%s1 + $0x338] sm:$0xff]
  %v124 = vld [vmem:[%s1 + $0x340] sm:$0xff]
  %v125 = vld [vmem:[%s1 + $0x348] sm:$0xff]
  %v126 = vld [vmem:[%s1 + $0x350] sm:$0xff]
  %v127 = vld [vmem:[%s1 + $0x358] sm:$0xff]
  %v128 = vld [vmem:[%s1 + $0x360] sm:$0xff]
  %v129 = vld [vmem:[%s1 + $0x368] sm:$0xff]
  %v130 = vld [vmem:[%s1 + $0x370] sm:$0xff]
  %v131 = vld [vmem:[%s1 + $0x378] sm:$0xff]
  %v132 = vld [vmem:[%s1 + $0x380] sm:$0xff]
  %v133 = vld [vmem:[%s1 + $0x388] sm:$0xff]
  %v134 = vld [vmem:[%s1 + $0x390] sm:$0xff]
  %v135 = vld [vmem:[%s1 + $0x398] sm:$0xff]
  %v136 = vld [vmem:[%s1 + $0x3a0] sm:$0xff]
  %v137 = vld [vmem:[%s1 + $0x3a8] sm:$0xff]
  %v138 = vld [vmem:[%s1 + $0x3b0] sm:$0xff]
  %v139 = vld [vmem:[%s1 + $0x3b8] sm:$0xff]
  %v140 = vld [vmem:[%s1 + $0x3c0] sm:$0xff]
  %v141 = vld [vmem:[%s1 + $0x3c8] sm:$0xff]
  %v142 = vld [vmem:[%s1 + $0x3d0] sm:$0xff]
  %v143 = vld [vmem:[%s1 + $0x3d8] sm:$0xff]
  %v144 = vld [vmem:[%s1 + $0x3e0] sm:$0xff]
  %v145 = vld [vmem:[%s1 + $0x3e8] sm:$0xff]
  %v146 = vld [vmem:[%s1 + $0x3f0] sm:$0xff]
  %v147 = vld [vmem:[%s1 + $0x3f8] sm:$0xff]
  %v148 = vld [vmem:[%s1 + $0x400] sm:$0xff]
  %v149 = vld [vmem:[%s1 + $0x408] sm:$0xff]
  %v150 = vld [vmem:[%s1 + $0x410] sm:$0xff]
  %v151 = vld [vmem:[%s1 + $0x418] sm:$0xff]
  %v152 = vld [vmem:[%s1 + $0x420] sm:$0xff]
  %v153 = vld [vmem:[%s1 + $0x428] sm:$0xff]
  %v154 = vld [vmem:[%s1 + $0x430] sm:$0xff]
  %v155 = vld [vmem:[%s1 + $0x438] sm:$0xff]
  %v156 = vld [vmem:[%s1 + $0x440] sm:$0xff]
  %v157 = vld [vmem:[%s1 + $0x448] sm:$0xff]
  %v158 = vld [vmem:[%s1 + $0x450] sm:$0xff]
  %v159 = vld [vmem:[%s1 + $0x458] sm:$0xff]
  %v160 = vld [vmem:[%s1 + $0x460] sm:$0xff]
  %v161 = vld [vmem:[%s1 + $0x468] sm:$0xff]
  %v162 = vld [vmem:[%s1 + $0x470] sm:$0xff]
  %v163 = vld [vmem:[%s1 + $0x478] sm:$0xff]
  %v164 = vld [vmem:[%s1 + $0x480] sm:$0xff]
  %v165 = vld [vmem:[%s1 + $0x488] sm:$0xff]
  %v166 = vld [vmem:[%s1 + $0x490] sm:$0xff]
  %v167 = vld [vmem:[%s1 + $0x498] sm:$0xff]
  %v168 = vld [vmem:[%s1 + $0x4a0] sm:$0xff]
  %v169 = vld [vmem:[%s1 + $0x4a8] sm:$0xff]
  %v170 = vld [vmem:[%s1 + $0x4b0] sm:$0xff]
  %v171 = vld [vmem:[%s1 + $0x4b8] sm:$0xff]
  %v172 = vld [vmem:[%s1 + $0x4c0] sm:$0xff]
  %v173 = vld [vmem:[%s1 + $0x4c8] sm:$0xff]
  %v174 = vld [vmem:[%s1 + $0x4d0] sm:$0xff]
  %v175 = vld [vmem:[%s1 + $0x4d8] sm:$0xff]
  %v176 = vld [vmem:[%s1 + $0x4e0] sm:$0xff]
  %v177 = vld [vmem:[%s1 + $0x4e8] sm:$0xff]
  %v178 = vld [vmem:[%s1 + $0x4f0] sm:$0xff]
  %v179 = vld [vmem:[%s1 + $0x4f8] sm:$0xff]
  %v180 = vld [vmem:[%s1 + $0x500] sm:$0xff]
  %v181 = vld [vmem:[%s1 + $0x508] sm:$0xff]
  %v182 = vld [vmem:[%s1 + $0x510] sm:$0xff]
  %v183 = vld [vmem:[%s1 + $0x518] sm:$0xff]
  %v184 = vld [vmem:[%s1 + $0x520] sm:$0xff]
  %v185 = vld [vmem:[%s1 + $0x528] sm:$0xff]
  %v186 = vld [vmem:[%s1 + $0x530] sm:$0xff]
  %v187 = vld [vmem:[%s1 + $0x538] sm:$0xff]
  %v188 = vld [vmem:[%s1 + $0x540] sm:$0xff]
  %v189 = vld [vmem:[%s1 + $0x548] sm:$0xff]
  %v190 = vld [vmem:[%s1 + $0x550] sm:$0xff]
  %v191 = vld [vmem:[%s1 + $0x558] sm:$0xff]
  %v192 = vld [vmem:[%s1 + $0x560] sm:$0xff]
  %v193 = vld [vmem:[%s1 + $0x568] sm:$0xff]
  %v194 = vld [vmem:[%s1 + $0x570] sm:$0xff]
  %v195 = vld [vmem:[%s1 + $0x578] sm:$0xff]
  %v196 = vld [vmem:[%s1 + $0x580] sm:$0xff]
  %v197 = vld [vmem:[%s1 + $0x588] sm:$0xff]
  %v198 = vld [vmem:[%s1 + $0x590] sm:$0xff]
  %v199 = vld [vmem:[%s1 + $0x598] sm:$0xff]
  %v200 = vld [vmem:[%s1 + $0x5a0] sm:$0xff]
  %v201 = vld [vmem:[%s1 + $0x5a8] sm:$0xff]
  %v202 = vld [vmem:[%s1 + $0x5b0] sm:$0xff]
  %v203 = vld [vmem:[%s1 + $0x5b8] sm:$0xff]
  %v204 = vld [vmem:[%s1 + $0x5c0] sm:$0xff]
  %v205 = vld [vmem:[%s1 + $0x5c8] sm:$0xff]
  %v206 = vld [vmem:[%s1 + $0x5d0] sm:$0xff]
  %v207 = vld [vmem:[%s1 + $0x5d8] sm:$0xff]
  %v208 = vld [vmem:[%s1 + $0x5e0] sm:$0xff]
  %v209 = vld [vmem:[%s1 + $0x5e8] sm:$0xff]
  %v210 = vld [vmem:[%s1 + $0x5f0] sm:$0xff]
  %v211 = vld [vmem:[%s1 + $0x5f8] sm:$0xff]
  %v212 = vld [vmem:[%s2] sm:$0x3]
  %v214 = vlaneseq
  %v215 = vshrl.u32 %v214, 7
  %v216 = vsub.s32 0, %v215
  %v217 = vrot.slane %v212, %v216
  %v218 = vlaneseq
  %v219 = vshrl.u32 %v218, 7
  %v220 = vsub.s32 1, %v219
  %v221 = vrot.slane %v212, %v220
  %v230 = vunpack.c.l.b16 %v14
  %v231 = vunpack.c.h.b16 %v14
  %v232 = vunpack.c.l.b16 %v15
  %v233 = vunpack.c.h.b16 %v15
  %v234 = vunpack.c.l.b16 %v16
  %v235 = vunpack.c.h.b16 %v16
  %v236 = vunpack.c.l.b16 %v17
  %v237 = vunpack.c.h.b16 %v17
  %v238 = vunpack.c.l.b16 %v18
  %v239 = vunpack.c.h.b16 %v18
  %v240 = vunpack.c.l.b16 %v19
  %v241 = vunpack.c.h.b16 %v19
  %v242 = vpack.c.b16 %v230, %v230
  %v243 = vpack.c.b16 %v231, %v231
  %v244 = vpack.c.b16 %v232, %v232
  %v245 = vpack.c.b16 %v233, %v233
  %v246 = vpack.c.b16 %v234, %v234
  %v247 = vpack.c.b16 %v235, %v235
  %v248 = vpack.c.b16 %v236, %v236
  %v249 = vpack.c.b16 %v237, %v237
  %v250 = vpack.c.b16 %v238, %v238
  %v251 = vpack.c.b16 %v239, %v239
  %v252 = vpack.c.b16 %v240, %v240
  %v253 = vpack.c.b16 %v241, %v241
  %v458 = vunpack.c.l.b16 %v20
  %v459 = vunpack.c.h.b16 %v20
  %v460 = vunpack.c.l.b16 %v21
  %v461 = vunpack.c.h.b16 %v21
  %v462 = vunpack.c.l.b16 %v22
  %v463 = vunpack.c.h.b16 %v22
  %v464 = vunpack.c.l.b16 %v23
  %v465 = vunpack.c.h.b16 %v23
  %v466 = vunpack.c.l.b16 %v24
  %v467 = vunpack.c.h.b16 %v24
  %v468 = vunpack.c.l.b16 %v25
  %v469 = vunpack.c.h.b16 %v25
  %v470 = vunpack.c.l.b16 %v26
  %v471 = vunpack.c.h.b16 %v26
  %v472 = vunpack.c.l.b16 %v27
  %v473 = vunpack.c.h.b16 %v27
  %v474 = vunpack.c.l.b16 %v28
  %v475 = vunpack.c.h.b16 %v28
  %v476 = vunpack.c.l.b16 %v29
  %v477 = vunpack.c.h.b16 %v29
  %v478 = vunpack.c.l.b16 %v30
  %v479 = vunpack.c.h.b16 %v30
  %v480 = vunpack.c.l.b16 %v31
  %v481 = vunpack.c.h.b16 %v31
  %v482 = vunpack.c.l.b16 %v32
  %v483 = vunpack.c.h.b16 %v32
  %v484 = vunpack.c.l.b16 %v33
  %v485 = vunpack.c.h.b16 %v33
  %v486 = vunpack.c.l.b16 %v34
  %v487 = vunpack.c.h.b16 %v34
  %v488 = vunpack.c.l.b16 %v35
  %v489 = vunpack.c.h.b16 %v35
  %v490 = vunpack.c.l.b16 %v36
  %v491 = vunpack.c.h.b16 %v36
  %v492 = vunpack.c.l.b16 %v37
  %v493 = vunpack.c.h.b16 %v37
  %v494 = vunpack.c.l.b16 %v38
  %v495 = vunpack.c.h.b16 %v38
  %v496 = vunpack.c.l.b16 %v39
  %v497 = vunpack.c.h.b16 %v39
  %v498 = vunpack.c.l.b16 %v40
  %v499 = vunpack.c.h.b16 %v40
  %v500 = vunpack.c.l.b16 %v41
  %v501 = vunpack.c.h.b16 %v41
  %v502 = vunpack.c.l.b16 %v42
  %v503 = vunpack.c.h.b16 %v42
  %v504 = vunpack.c.l.b16 %v43
  %v505 = vunpack.c.h.b16 %v43
  %v506 = vunpack.c.l.b16 %v44
  %v507 = vunpack.c.h.b16 %v44
  %v508 = vunpack.c.l.b16 %v45
  %v509 = vunpack.c.h.b16 %v45
  %v510 = vunpack.c.l.b16 %v46
  %v511 = vunpack.c.h.b16 %v46
  %v512 = vunpack.c.l.b16 %v47
  %v513 = vunpack.c.h.b16 %v47
  %v514 = vunpack.c.l.b16 %v48
  %v515 = vunpack.c.h.b16 %v48
  %v516 = vunpack.c.l.b16 %v49
  %v517 = vunpack.c.h.b16 %v49
  %v518 = vunpack.c.l.b16 %v50
  %v519 = vunpack.c.h.b16 %v50
  %v520 = vunpack.c.l.b16 %v51
  %v521 = vunpack.c.h.b16 %v51
  %v522 = vunpack.c.l.b16 %v52
  %v523 = vunpack.c.h.b16 %v52
  %v524 = vunpack.c.l.b16 %v53
  %v525 = vunpack.c.h.b16 %v53
  %v526 = vunpack.c.l.b16 %v54
  %v527 = vunpack.c.h.b16 %v54
  %v528 = vunpack.c.l.b16 %v55
  %v529 = vunpack.c.h.b16 %v55
  %v530 = vunpack.c.l.b16 %v56
  %v531 = vunpack.c.h.b16 %v56
  %v532 = vunpack.c.l.b16 %v57
  %v533 = vunpack.c.h.b16 %v57
  %v534 = vunpack.c.l.b16 %v58
  %v535 = vunpack.c.h.b16 %v58
  %v536 = vunpack.c.l.b16 %v59
  %v537 = vunpack.c.h.b16 %v59
  %v538 = vunpack.c.l.b16 %v60
  %v539 = vunpack.c.h.b16 %v60
  %v540 = vunpack.c.l.b16 %v61
  %v541 = vunpack.c.h.b16 %v61
  %v542 = vunpack.c.l.b16 %v62
  %v543 = vunpack.c.h.b16 %v62
  %v544 = vunpack.c.l.b16 %v63
  %v545 = vunpack.c.h.b16 %v63
  %v546 = vunpack.c.l.b16 %v64
  %v547 = vunpack.c.h.b16 %v64
  %v548 = vunpack.c.l.b16 %v65
  %v549 = vunpack.c.h.b16 %v65
  %v550 = vunpack.c.l.b16 %v66
  %v551 = vunpack.c.h.b16 %v66
  %v552 = vunpack.c.l.b16 %v67
  %v553 = vunpack.c.h.b16 %v67
  %v554 = vunpack.c.l.b16 %v68
  %v555 = vunpack.c.h.b16 %v68
  %v556 = vunpack.c.l.b16 %v69
  %v557 = vunpack.c.h.b16 %v69
  %v558 = vunpack.c.l.b16 %v70
  %v559 = vunpack.c.h.b16 %v70
  %v560 = vunpack.c.l.b16 %v71
  %v561 = vunpack.c.h.b16 %v71
  %v562 = vunpack.c.l.b16 %v72
  %v563 = vunpack.c.h.b16 %v72
  %v564 = vunpack.c.l.b16 %v73
  %v565 = vunpack.c.h.b16 %v73
  %v566 = vunpack.c.l.b16 %v74
  %v567 = vunpack.c.h.b16 %v74
  %v568 = vunpack.c.l.b16 %v75
  %v569 = vunpack.c.h.b16 %v75
  %v570 = vunpack.c.l.b16 %v76
  %v571 = vunpack.c.h.b16 %v76
  %v572 = vunpack.c.l.b16 %v77
  %v573 = vunpack.c.h.b16 %v77
  %v574 = vunpack.c.l.b16 %v78
  %v575 = vunpack.c.h.b16 %v78
  %v576 = vunpack.c.l.b16 %v79
  %v577 = vunpack.c.h.b16 %v79
  %v578 = vunpack.c.l.b16 %v80
  %v579 = vunpack.c.h.b16 %v80
  %v580 = vunpack.c.l.b16 %v81
  %v581 = vunpack.c.h.b16 %v81
  %v582 = vunpack.c.l.b16 %v82
  %v583 = vunpack.c.h.b16 %v82
  %v584 = vunpack.c.l.b16 %v83
  %v585 = vunpack.c.h.b16 %v83
  %v586 = vunpack.c.l.b16 %v84
  %v587 = vunpack.c.h.b16 %v84
  %v588 = vunpack.c.l.b16 %v85
  %v589 = vunpack.c.h.b16 %v85
  %v590 = vunpack.c.l.b16 %v86
  %v591 = vunpack.c.h.b16 %v86
  %v592 = vunpack.c.l.b16 %v87
  %v593 = vunpack.c.h.b16 %v87
  %v594 = vunpack.c.l.b16 %v88
  %v595 = vunpack.c.h.b16 %v88
  %v596 = vunpack.c.l.b16 %v89
  %v597 = vunpack.c.h.b16 %v89
  %v598 = vunpack.c.l.b16 %v90
  %v599 = vunpack.c.h.b16 %v90
  %v600 = vunpack.c.l.b16 %v91
  %v601 = vunpack.c.h.b16 %v91
  %v602 = vunpack.c.l.b16 %v92
  %v603 = vunpack.c.h.b16 %v92
  %v604 = vunpack.c.l.b16 %v93
  %v605 = vunpack.c.h.b16 %v93
  %v606 = vunpack.c.l.b16 %v94
  %v607 = vunpack.c.h.b16 %v94
  %v608 = vunpack.c.l.b16 %v95
  %v609 = vunpack.c.h.b16 %v95
  %v610 = vunpack.c.l.b16 %v96
  %v611 = vunpack.c.h.b16 %v96
  %v612 = vunpack.c.l.b16 %v97
  %v613 = vunpack.c.h.b16 %v97
  %v614 = vunpack.c.l.b16 %v98
  %v615 = vunpack.c.h.b16 %v98
  %v616 = vunpack.c.l.b16 %v99
  %v617 = vunpack.c.h.b16 %v99
  %v618 = vunpack.c.l.b16 %v100
  %v619 = vunpack.c.h.b16 %v100
  %v620 = vunpack.c.l.b16 %v101
  %v621 = vunpack.c.h.b16 %v101
  %v622 = vunpack.c.l.b16 %v102
  %v623 = vunpack.c.h.b16 %v102
  %v624 = vunpack.c.l.b16 %v103
  %v625 = vunpack.c.h.b16 %v103
  %v626 = vunpack.c.l.b16 %v104
  %v627 = vunpack.c.h.b16 %v104
  %v628 = vunpack.c.l.b16 %v105
  %v629 = vunpack.c.h.b16 %v105
  %v630 = vunpack.c.l.b16 %v106
  %v631 = vunpack.c.h.b16 %v106
  %v632 = vunpack.c.l.b16 %v107
  %v633 = vunpack.c.h.b16 %v107
  %v634 = vunpack.c.l.b16 %v108
  %v635 = vunpack.c.h.b16 %v108
  %v636 = vunpack.c.l.b16 %v109
  %v637 = vunpack.c.h.b16 %v109
  %v638 = vunpack.c.l.b16 %v110
  %v639 = vunpack.c.h.b16 %v110
  %v640 = vunpack.c.l.b16 %v111
  %v641 = vunpack.c.h.b16 %v111
  %v642 = vunpack.c.l.b16 %v112
  %v643 = vunpack.c.h.b16 %v112
  %v644 = vunpack.c.l.b16 %v113
  %v645 = vunpack.c.h.b16 %v113
  %v646 = vunpack.c.l.b16 %v114
  %v647 = vunpack.c.h.b16 %v114
  %v648 = vunpack.c.l.b16 %v115
  %v649 = vunpack.c.h.b16 %v115
  %v650 = vunpack.c.l.b16 %v116
  %v651 = vunpack.c.h.b16 %v116
  %v652 = vunpack.c.l.b16 %v117
  %v653 = vunpack.c.h.b16 %v117
  %v654 = vunpack.c.l.b16 %v118
  %v655 = vunpack.c.h.b16 %v118
  %v656 = vunpack.c.l.b16 %v119
  %v657 = vunpack.c.h.b16 %v119
  %v658 = vunpack.c.l.b16 %v120
  %v659 = vunpack.c.h.b16 %v120
  %v660 = vunpack.c.l.b16 %v121
  %v661 = vunpack.c.h.b16 %v121
  %v662 = vunpack.c.l.b16 %v122
  %v663 = vunpack.c.h.b16 %v122
  %v664 = vunpack.c.l.b16 %v123
  %v665 = vunpack.c.h.b16 %v123
  %v666 = vunpack.c.l.b16 %v124
  %v667 = vunpack.c.h.b16 %v124
  %v668 = vunpack.c.l.b16 %v125
  %v669 = vunpack.c.h.b16 %v125
  %v670 = vunpack.c.l.b16 %v126
  %v671 = vunpack.c.h.b16 %v126
  %v672 = vunpack.c.l.b16 %v127
  %v673 = vunpack.c.h.b16 %v127
  %v674 = vunpack.c.l.b16 %v128
  %v675 = vunpack.c.h.b16 %v128
  %v676 = vunpack.c.l.b16 %v129
  %v677 = vunpack.c.h.b16 %v129
  %v678 = vunpack.c.l.b16 %v130
  %v679 = vunpack.c.h.b16 %v130
  %v680 = vunpack.c.l.b16 %v131
  %v681 = vunpack.c.h.b16 %v131
  %v682 = vunpack.c.l.b16 %v132
  %v683 = vunpack.c.h.b16 %v132
  %v684 = vunpack.c.l.b16 %v133
  %v685 = vunpack.c.h.b16 %v133
  %v686 = vunpack.c.l.b16 %v134
  %v687 = vunpack.c.h.b16 %v134
  %v688 = vunpack.c.l.b16 %v135
  %v689 = vunpack.c.h.b16 %v135
  %v690 = vunpack.c.l.b16 %v136
  %v691 = vunpack.c.h.b16 %v136
  %v692 = vunpack.c.l.b16 %v137
  %v693 = vunpack.c.h.b16 %v137
  %v694 = vunpack.c.l.b16 %v138
  %v695 = vunpack.c.h.b16 %v138
  %v696 = vunpack.c.l.b16 %v139
  %v697 = vunpack.c.h.b16 %v139
  %v698 = vunpack.c.l.b16 %v140
  %v699 = vunpack.c.h.b16 %v140
  %v700 = vunpack.c.l.b16 %v141
  %v701 = vunpack.c.h.b16 %v141
  %v702 = vunpack.c.l.b16 %v142
  %v703 = vunpack.c.h.b16 %v142
  %v704 = vunpack.c.l.b16 %v143
  %v705 = vunpack.c.h.b16 %v143
  %v706 = vunpack.c.l.b16 %v144
  %v707 = vunpack.c.h.b16 %v144
  %v708 = vunpack.c.l.b16 %v145
  %v709 = vunpack.c.h.b16 %v145
  %v710 = vunpack.c.l.b16 %v146
  %v711 = vunpack.c.h.b16 %v146
  %v712 = vunpack.c.l.b16 %v147
  %v713 = vunpack.c.h.b16 %v147
  %v714 = vunpack.c.l.b16 %v148
  %v715 = vunpack.c.h.b16 %v148
  %v716 = vunpack.c.l.b16 %v149
  %v717 = vunpack.c.h.b16 %v149
  %v718 = vunpack.c.l.b16 %v150
  %v719 = vunpack.c.h.b16 %v150
  %v720 = vunpack.c.l.b16 %v151
  %v721 = vunpack.c.h.b16 %v151
  %v722 = vunpack.c.l.b16 %v152
  %v723 = vunpack.c.h.b16 %v152
  %v724 = vunpack.c.l.b16 %v153
  %v725 = vunpack.c.h.b16 %v153
  %v726 = vunpack.c.l.b16 %v154
  %v727 = vunpack.c.h.b16 %v154
  %v728 = vunpack.c.l.b16 %v155
  %v729 = vunpack.c.h.b16 %v155
  %v730 = vunpack.c.l.b16 %v156
  %v731 = vunpack.c.h.b16 %v156
  %v732 = vunpack.c.l.b16 %v157
  %v733 = vunpack.c.h.b16 %v157
  %v734 = vunpack.c.l.b16 %v158
  %v735 = vunpack.c.h.b16 %v158
  %v736 = vunpack.c.l.b16 %v159
  %v737 = vunpack.c.h.b16 %v159
  %v738 = vunpack.c.l.b16 %v160
  %v739 = vunpack.c.h.b16 %v160
  %v740 = vunpack.c.l.b16 %v161
  %v741 = vunpack.c.h.b16 %v161
  %v742 = vunpack.c.l.b16 %v162
  %v743 = vunpack.c.h.b16 %v162
  %v744 = vunpack.c.l.b16 %v163
  %v745 = vunpack.c.h.b16 %v163
  %v746 = vunpack.c.l.b16 %v164
  %v747 = vunpack.c.h.b16 %v164
  %v748 = vunpack.c.l.b16 %v165
  %v749 = vunpack.c.h.b16 %v165
  %v750 = vunpack.c.l.b16 %v166
  %v751 = vunpack.c.h.b16 %v166
  %v752 = vunpack.c.l.b16 %v167
  %v753 = vunpack.c.h.b16 %v167
  %v754 = vunpack.c.l.b16 %v168
  %v755 = vunpack.c.h.b16 %v168
  %v756 = vunpack.c.l.b16 %v169
  %v757 = vunpack.c.h.b16 %v169
  %v758 = vunpack.c.l.b16 %v170
  %v759 = vunpack.c.h.b16 %v170
  %v760 = vunpack.c.l.b16 %v171
  %v761 = vunpack.c.h.b16 %v171
  %v762 = vunpack.c.l.b16 %v172
  %v763 = vunpack.c.h.b16 %v172
  %v764 = vunpack.c.l.b16 %v173
  %v765 = vunpack.c.h.b16 %v173
  %v766 = vunpack.c.l.b16 %v174
  %v767 = vunpack.c.h.b16 %v174
  %v768 = vunpack.c.l.b16 %v175
  %v769 = vunpack.c.h.b16 %v175
  %v770 = vunpack.c.l.b16 %v176
  %v771 = vunpack.c.h.b16 %v176
  %v772 = vunpack.c.l.b16 %v177
  %v773 = vunpack.c.h.b16 %v177
  %v774 = vunpack.c.l.b16 %v178
  %v775 = vunpack.c.h.b16 %v178
  %v776 = vunpack.c.l.b16 %v179
  %v777 = vunpack.c.h.b16 %v179
  %v778 = vunpack.c.l.b16 %v180
  %v779 = vunpack.c.h.b16 %v180
  %v780 = vunpack.c.l.b16 %v181
  %v781 = vunpack.c.h.b16 %v181
  %v782 = vunpack.c.l.b16 %v182
  %v783 = vunpack.c.h.b16 %v182
  %v784 = vunpack.c.l.b16 %v183
  %v785 = vunpack.c.h.b16 %v183
  %v786 = vunpack.c.l.b16 %v184
  %v787 = vunpack.c.h.b16 %v184
  %v788 = vunpack.c.l.b16 %v185
  %v789 = vunpack.c.h.b16 %v185
  %v790 = vunpack.c.l.b16 %v186
  %v791 = vunpack.c.h.b16 %v186
  %v792 = vunpack.c.l.b16 %v187
  %v793 = vunpack.c.h.b16 %v187
  %v794 = vunpack.c.l.b16 %v188
  %v795 = vunpack.c.h.b16 %v188
  %v796 = vunpack.c.l.b16 %v189
  %v797 = vunpack.c.h.b16 %v189
  %v798 = vunpack.c.l.b16 %v190
  %v799 = vunpack.c.h.b16 %v190
  %v800 = vunpack.c.l.b16 %v191
  %v801 = vunpack.c.h.b16 %v191
  %v802 = vunpack.c.l.b16 %v192
  %v803 = vunpack.c.h.b16 %v192
  %v804 = vunpack.c.l.b16 %v193
  %v805 = vunpack.c.h.b16 %v193
  %v806 = vunpack.c.l.b16 %v194
  %v807 = vunpack.c.h.b16 %v194
  %v808 = vunpack.c.l.b16 %v195
  %v809 = vunpack.c.h.b16 %v195
  %v810 = vunpack.c.l.b16 %v196
  %v811 = vunpack.c.h.b16 %v196
  %v812 = vunpack.c.l.b16 %v197
  %v813 = vunpack.c.h.b16 %v197
  %v814 = vunpack.c.l.b16 %v198
  %v815 = vunpack.c.h.b16 %v198
  %v816 = vunpack.c.l.b16 %v199
  %v817 = vunpack.c.h.b16 %v199
  %v818 = vunpack.c.l.b16 %v200
  %v819 = vunpack.c.h.b16 %v200
  %v820 = vunpack.c.l.b16 %v201
  %v821 = vunpack.c.h.b16 %v201
  %v822 = vunpack.c.l.b16 %v202
  %v823 = vunpack.c.h.b16 %v202
  %v824 = vunpack.c.l.b16 %v203
  %v825 = vunpack.c.h.b16 %v203
  %v826 = vunpack.c.l.b16 %v204
  %v827 = vunpack.c.h.b16 %v204
  %v828 = vunpack.c.l.b16 %v205
  %v829 = vunpack.c.h.b16 %v205
  %v830 = vunpack.c.l.b16 %v206
  %v831 = vunpack.c.h.b16 %v206
  %v832 = vunpack.c.l.b16 %v207
  %v833 = vunpack.c.h.b16 %v207
  %v834 = vunpack.c.l.b16 %v208
  %v835 = vunpack.c.h.b16 %v208
  %v836 = vunpack.c.l.b16 %v209
  %v837 = vunpack.c.h.b16 %v209
  %v838 = vunpack.c.l.b16 %v210
  %v839 = vunpack.c.h.b16 %v210
  %v840 = vunpack.c.l.b16 %v211
  %v841 = vunpack.c.h.b16 %v211
  %v842 = vpack.c.b16 %v460, %v458
  %v843 = vpack.c.b16 %v461, %v459
  %v844 = vpack.c.b16 %v464, %v462
  %v845 = vpack.c.b16 %v465, %v463
  %v846 = vpack.c.b16 %v468, %v466
  %v847 = vpack.c.b16 %v469, %v467
  %v848 = vpack.c.b16 %v472, %v470
  %v849 = vpack.c.b16 %v473, %v471
  %v850 = vpack.c.b16 %v476, %v474
  %v851 = vpack.c.b16 %v477, %v475
  %v852 = vpack.c.b16 %v480, %v478
  %v853 = vpack.c.b16 %v481, %v479
  %v854 = vpack.c.b16 %v484, %v482
  %v855 = vpack.c.b16 %v485, %v483
  %v856 = vpack.c.b16 %v488, %v486
  %v857 = vpack.c.b16 %v489, %v487
  %v858 = vpack.c.b16 %v492, %v490
  %v859 = vpack.c.b16 %v493, %v491
  %v860 = vpack.c.b16 %v496, %v494
  %v861 = vpack.c.b16 %v497, %v495
  %v862 = vpack.c.b16 %v500, %v498
  %v863 = vpack.c.b16 %v501, %v499
  %v864 = vpack.c.b16 %v504, %v502
  %v865 = vpack.c.b16 %v505, %v503
  %v866 = vpack.c.b16 %v508, %v506
  %v867 = vpack.c.b16 %v509, %v507
  %v868 = vpack.c.b16 %v512, %v510
  %v869 = vpack.c.b16 %v513, %v511
  %v870 = vpack.c.b16 %v516, %v514
  %v871 = vpack.c.b16 %v517, %v515
  %v872 = vpack.c.b16 %v520, %v518
  %v873 = vpack.c.b16 %v521, %v519
  %v874 = vpack.c.b16 %v524, %v522
  %v875 = vpack.c.b16 %v525, %v523
  %v876 = vpack.c.b16 %v528, %v526
  %v877 = vpack.c.b16 %v529, %v527
  %v878 = vpack.c.b16 %v532, %v530
  %v879 = vpack.c.b16 %v533, %v531
  %v880 = vpack.c.b16 %v536, %v534
  %v881 = vpack.c.b16 %v537, %v535
  %v882 = vpack.c.b16 %v540, %v538
  %v883 = vpack.c.b16 %v541, %v539
  %v884 = vpack.c.b16 %v544, %v542
  %v885 = vpack.c.b16 %v545, %v543
  %v886 = vpack.c.b16 %v548, %v546
  %v887 = vpack.c.b16 %v549, %v547
  %v888 = vpack.c.b16 %v552, %v550
  %v889 = vpack.c.b16 %v553, %v551
  %v890 = vpack.c.b16 %v556, %v554
  %v891 = vpack.c.b16 %v557, %v555
  %v892 = vpack.c.b16 %v560, %v558
  %v893 = vpack.c.b16 %v561, %v559
  %v894 = vpack.c.b16 %v564, %v562
  %v895 = vpack.c.b16 %v565, %v563
  %v896 = vpack.c.b16 %v568, %v566
  %v897 = vpack.c.b16 %v569, %v567
  %v898 = vpack.c.b16 %v572, %v570
  %v899 = vpack.c.b16 %v573, %v571
  %v900 = vpack.c.b16 %v576, %v574
  %v901 = vpack.c.b16 %v577, %v575
  %v902 = vpack.c.b16 %v580, %v578
  %v903 = vpack.c.b16 %v581, %v579
  %v904 = vpack.c.b16 %v584, %v582
  %v905 = vpack.c.b16 %v585, %v583
  %v906 = vpack.c.b16 %v588, %v586
  %v907 = vpack.c.b16 %v589, %v587
  %v908 = vpack.c.b16 %v592, %v590
  %v909 = vpack.c.b16 %v593, %v591
  %v910 = vpack.c.b16 %v596, %v594
  %v911 = vpack.c.b16 %v597, %v595
  %v912 = vpack.c.b16 %v600, %v598
  %v913 = vpack.c.b16 %v601, %v599
  %v914 = vpack.c.b16 %v604, %v602
  %v915 = vpack.c.b16 %v605, %v603
  %v916 = vpack.c.b16 %v608, %v606
  %v917 = vpack.c.b16 %v609, %v607
  %v918 = vpack.c.b16 %v612, %v610
  %v919 = vpack.c.b16 %v613, %v611
  %v920 = vpack.c.b16 %v616, %v614
  %v921 = vpack.c.b16 %v617, %v615
  %v922 = vpack.c.b16 %v620, %v618
  %v923 = vpack.c.b16 %v621, %v619
  %v924 = vpack.c.b16 %v624, %v622
  %v925 = vpack.c.b16 %v625, %v623
  %v926 = vpack.c.b16 %v628, %v626
  %v927 = vpack.c.b16 %v629, %v627
  %v928 = vpack.c.b16 %v632, %v630
  %v929 = vpack.c.b16 %v633, %v631
  %v930 = vpack.c.b16 %v636, %v634
  %v931 = vpack.c.b16 %v637, %v635
  %v932 = vpack.c.b16 %v640, %v638
  %v933 = vpack.c.b16 %v641, %v639
  %v934 = vpack.c.b16 %v644, %v642
  %v935 = vpack.c.b16 %v645, %v643
  %v936 = vpack.c.b16 %v648, %v646
  %v937 = vpack.c.b16 %v649, %v647
  %v938 = vpack.c.b16 %v652, %v650
  %v939 = vpack.c.b16 %v653, %v651
  %v940 = vpack.c.b16 %v656, %v654
  %v941 = vpack.c.b16 %v657, %v655
  %v942 = vpack.c.b16 %v660, %v658
  %v943 = vpack.c.b16 %v661, %v659
  %v944 = vpack.c.b16 %v664, %v662
  %v945 = vpack.c.b16 %v665, %v663
  %v946 = vpack.c.b16 %v668, %v666
  %v947 = vpack.c.b16 %v669, %v667
  %v948 = vpack.c.b16 %v672, %v670
  %v949 = vpack.c.b16 %v673, %v671
  %v950 = vpack.c.b16 %v676, %v674
  %v951 = vpack.c.b16 %v677, %v675
  %v952 = vpack.c.b16 %v680, %v678
  %v953 = vpack.c.b16 %v681, %v679
  %v954 = vpack.c.b16 %v684, %v682
  %v955 = vpack.c.b16 %v685, %v683
  %v956 = vpack.c.b16 %v688, %v686
  %v957 = vpack.c.b16 %v689, %v687
  %v958 = vpack.c.b16 %v692, %v690
  %v959 = vpack.c.b16 %v693, %v691
  %v960 = vpack.c.b16 %v696, %v694
  %v961 = vpack.c.b16 %v697, %v695
  %v962 = vpack.c.b16 %v700, %v698
  %v963 = vpack.c.b16 %v701, %v699
  %v964 = vpack.c.b16 %v704, %v702
  %v965 = vpack.c.b16 %v705, %v703
  %v966 = vpack.c.b16 %v708, %v706
  %v967 = vpack.c.b16 %v709, %v707
  %v968 = vpack.c.b16 %v712, %v710
  %v969 = vpack.c.b16 %v713, %v711
  %v970 = vpack.c.b16 %v716, %v714
  %v971 = vpack.c.b16 %v717, %v715
  %v972 = vpack.c.b16 %v720, %v718
  %v973 = vpack.c.b16 %v721, %v719
  %v974 = vpack.c.b16 %v724, %v722
  %v975 = vpack.c.b16 %v725, %v723
  %v976 = vpack.c.b16 %v728, %v726
  %v977 = vpack.c.b16 %v729, %v727
  %v978 = vpack.c.b16 %v732, %v730
  %v979 = vpack.c.b16 %v733, %v731
  %v980 = vpack.c.b16 %v736, %v734
  %v981 = vpack.c.b16 %v737, %v735
  %v982 = vpack.c.b16 %v740, %v738
  %v983 = vpack.c.b16 %v741, %v739
  %v984 = vpack.c.b16 %v744, %v742
  %v985 = vpack.c.b16 %v745, %v743
  %v986 = vpack.c.b16 %v748, %v746
  %v987 = vpack.c.b16 %v749, %v747
  %v988 = vpack.c.b16 %v752, %v750
  %v989 = vpack.c.b16 %v753, %v751
  %v990 = vpack.c.b16 %v756, %v754
  %v991 = vpack.c.b16 %v757, %v755
  %v992 = vpack.c.b16 %v760, %v758
  %v993 = vpack.c.b16 %v761, %v759
  %v994 = vpack.c.b16 %v764, %v762
  %v995 = vpack.c.b16 %v765, %v763
  %v996 = vpack.c.b16 %v768, %v766
  %v997 = vpack.c.b16 %v769, %v767
  %v998 = vpack.c.b16 %v772, %v770
  %v999 = vpack.c.b16 %v773, %v771
  %v1000 = vpack.c.b16 %v776, %v774
  %v1001 = vpack.c.b16 %v777, %v775
  %v1002 = vpack.c.b16 %v780, %v778
  %v1003 = vpack.c.b16 %v781, %v779
  %v1004 = vpack.c.b16 %v784, %v782
  %v1005 = vpack.c.b16 %v785, %v783
  %v1006 = vpack.c.b16 %v788, %v786
  %v1007 = vpack.c.b16 %v789, %v787
  %v1008 = vpack.c.b16 %v792, %v790
  %v1009 = vpack.c.b16 %v793, %v791
  %v1010 = vpack.c.b16 %v796, %v794
  %v1011 = vpack.c.b16 %v797, %v795
  %v1012 = vpack.c.b16 %v800, %v798
  %v1013 = vpack.c.b16 %v801, %v799
  %v1014 = vpack.c.b16 %v804, %v802
  %v1015 = vpack.c.b16 %v805, %v803
  %v1016 = vpack.c.b16 %v808, %v806
  %v1017 = vpack.c.b16 %v809, %v807
  %v1018 = vpack.c.b16 %v812, %v810
  %v1019 = vpack.c.b16 %v813, %v811
  %v1020 = vpack.c.b16 %v816, %v814
  %v1021 = vpack.c.b16 %v817, %v815
  %v1022 = vpack.c.b16 %v820, %v818
  %v1023 = vpack.c.b16 %v821, %v819
  %v1024 = vpack.c.b16 %v824, %v822
  %v1025 = vpack.c.b16 %v825, %v823
  %v1026 = vpack.c.b16 %v828, %v826
  %v1027 = vpack.c.b16 %v829, %v827
  %v1028 = vpack.c.b16 %v832, %v830
  %v1029 = vpack.c.b16 %v833, %v831
  %v1030 = vpack.c.b16 %v836, %v834
  %v1031 = vpack.c.b16 %v837, %v835
  %v1032 = vpack.c.b16 %v840, %v838
  %v1033 = vpack.c.b16 %v841, %v839
  %1226 = vmatprep.subr.bf16.mxu0 %v843
  %1227 = vmatpush1.bf16.msra.mxu0 %v842
  %1228 = vmatprep.subr.bf16.mxu0 %v845
  %1229 = vmatpush1.bf16.msra.mxu0 %v844
  %1230 = vmatprep.subr.bf16.mxu0 %v847
  %1231 = vmatpush1.bf16.msra.mxu0 %v846
  %1232 = vmatprep.subr.bf16.mxu0 %v849
  %1233 = vmatpush1.bf16.msra.mxu0 %v848
  %1234 = vmatprep.subr.bf16.mxu0 %v851
  %1235 = vmatpush1.bf16.msra.mxu0 %v850
  %1236 = vmatprep.subr.bf16.mxu0 %v853
  %1237 = vmatpush1.bf16.msra.mxu0 %v852
  %1238 = vmatprep.subr.bf16.mxu0 %v855
  %1239 = vmatpush1.bf16.msra.mxu0 %v854
  %1240 = vmatprep.subr.bf16.mxu0 %v857
  %1241 = vmatpush1.bf16.msra.mxu0 %v856
  %1242 = vmatprep.subr.bf16.mxu0 %v859
  %1243 = vmatpush1.bf16.msra.mxu0 %v858
  %1244 = vmatprep.subr.bf16.mxu0 %v861
  %1245 = vmatpush1.bf16.msra.mxu0 %v860
  %1246 = vmatprep.subr.bf16.mxu0 %v863
  %1247 = vmatpush1.bf16.msra.mxu0 %v862
  %1248 = vmatprep.subr.bf16.mxu0 %v865
  %1249 = vmatpush1.bf16.msra.mxu0 %v864
  %1250 = vmatprep.subr.bf16.mxu0 %v867
  %1251 = vmatpush1.bf16.msra.mxu0 %v866
  %1252 = vmatprep.subr.bf16.mxu0 %v869
  %1253 = vmatpush1.bf16.msra.mxu0 %v868
  %1254 = vmatprep.subr.bf16.mxu0 %v871
  %1255 = vmatpush1.bf16.msra.mxu0 %v870
  %1256 = vmatprep.subr.bf16.mxu0 %v873
  %1257 = vmatpush1.bf16.msra.mxu0 %v872
  %1258 = vmatprep.mubr.bf16.mxu0 %v243
  %1259 = vmatmul.mubr.bf16.gmra.mrb[0].mxu0 %v242
  %v1260 = vpop.f32.mrb[0].mxu0
  %v1261 = vadd.f32 %v217, %v1260
  %v1262 = vpop.f32.mrb[0].mxu0
  %v1263 = vadd.f32 %v221, %v1262
  %v1264 = vpop.f32.mrb[0].mxu0
  %v1265 = vpop.f32.mrb[0].mxu0
  %1266 = vdwg.mxu0
  %1267 = vmatprep.subr.bf16.mxu0 %v875
  %1268 = vmatpush1.bf16.msra.mxu0 %v874
  %1269 = vmatprep.subr.bf16.mxu0 %v877
  %1270 = vmatpush1.bf16.msra.mxu0 %v876
  %1271 = vmatprep.subr.bf16.mxu0 %v879
  %1272 = vmatpush1.bf16.msra.mxu0 %v878
  %1273 = vmatprep.subr.bf16.mxu0 %v881
  %1274 = vmatpush1.bf16.msra.mxu0 %v880
  %1275 = vmatprep.subr.bf16.mxu0 %v883
  %1276 = vmatpush1.bf16.msra.mxu0 %v882
  %1277 = vmatprep.subr.bf16.mxu0 %v885
  %1278 = vmatpush1.bf16.msra.mxu0 %v884
  %1279 = vmatprep.subr.bf16.mxu0 %v887
  %1280 = vmatpush1.bf16.msra.mxu0 %v886
  %1281 = vmatprep.subr.bf16.mxu0 %v889
  %1282 = vmatpush1.bf16.msra.mxu0 %v888
  %1283 = vmatprep.subr.bf16.mxu0 %v891
  %1284 = vmatpush1.bf16.msra.mxu0 %v890
  %1285 = vmatprep.subr.bf16.mxu0 %v893
  %1286 = vmatpush1.bf16.msra.mxu0 %v892
  %1287 = vmatprep.subr.bf16.mxu0 %v895
  %1288 = vmatpush1.bf16.msra.mxu0 %v894
  %1289 = vmatprep.subr.bf16.mxu0 %v897
  %1290 = vmatpush1.bf16.msra.mxu0 %v896
  %1291 = vmatprep.subr.bf16.mxu0 %v899
  %1292 = vmatpush1.bf16.msra.mxu0 %v898
  %1293 = vmatprep.subr.bf16.mxu0 %v901
  %1294 = vmatpush1.bf16.msra.mxu0 %v900
  %1295 = vmatprep.subr.bf16.mxu0 %v903
  %1296 = vmatpush1.bf16.msra.mxu0 %v902
  %1297 = vmatprep.subr.bf16.mxu0 %v905
  %1298 = vmatpush1.bf16.msra.mxu0 %v904
  %1299 = vmatprep.mubr.bf16.mxu0 %v245
  %1300 = vmatmul.mubr.bf16.gmra.mrb[0].mxu0 %v244
  %v1301 = vpop.f32.mrb[0].mxu0
  %v1302 = vadd.f32 %v1261, %v1301
  %v1303 = vpop.f32.mrb[0].mxu0
  %v1304 = vadd.f32 %v1263, %v1303
  %v1305 = vpop.f32.mrb[0].mxu0
  %v1306 = vpop.f32.mrb[0].mxu0
  %1307 = vdwg.mxu0
  %1308 = vmatprep.subr.bf16.mxu0 %v907
  %1309 = vmatpush1.bf16.msra.mxu0 %v906
  %1310 = vmatprep.subr.bf16.mxu0 %v909
  %1311 = vmatpush1.bf16.msra.mxu0 %v908
  %1312 = vmatprep.subr.bf16.mxu0 %v911
  %1313 = vmatpush1.bf16.msra.mxu0 %v910
  %1314 = vmatprep.subr.bf16.mxu0 %v913
  %1315 = vmatpush1.bf16.msra.mxu0 %v912
  %1316 = vmatprep.subr.bf16.mxu0 %v915
  %1317 = vmatpush1.bf16.msra.mxu0 %v914
  %1318 = vmatprep.subr.bf16.mxu0 %v917
  %1319 = vmatpush1.bf16.msra.mxu0 %v916
  %1320 = vmatprep.subr.bf16.mxu0 %v919
  %1321 = vmatpush1.bf16.msra.mxu0 %v918
  %1322 = vmatprep.subr.bf16.mxu0 %v921
  %1323 = vmatpush1.bf16.msra.mxu0 %v920
  %1324 = vmatprep.subr.bf16.mxu0 %v923
  %1325 = vmatpush1.bf16.msra.mxu0 %v922
  %1326 = vmatprep.subr.bf16.mxu0 %v925
  %1327 = vmatpush1.bf16.msra.mxu0 %v924
  %1328 = vmatprep.subr.bf16.mxu0 %v927
  %1329 = vmatpush1.bf16.msra.mxu0 %v926
  %1330 = vmatprep.subr.bf16.mxu0 %v929
  %1331 = vmatpush1.bf16.msra.mxu0 %v928
  %1332 = vmatprep.subr.bf16.mxu0 %v931
  %1333 = vmatpush1.bf16.msra.mxu0 %v930
  %1334 = vmatprep.subr.bf16.mxu0 %v933
  %1335 = vmatpush1.bf16.msra.mxu0 %v932
  %1336 = vmatprep.subr.bf16.mxu0 %v935
  %1337 = vmatpush1.bf16.msra.mxu0 %v934
  %1338 = vmatprep.subr.bf16.mxu0 %v937
  %1339 = vmatpush1.bf16.msra.mxu0 %v936
  %1340 = vmatprep.mubr.bf16.mxu0 %v247
  %1341 = vmatmul.mubr.bf16.gmra.mrb[0].mxu0 %v246
  %v1342 = vpop.f32.mrb[0].mxu0
  %v1343 = vadd.f32 %v1302, %v1342
  %v1344 = vpop.f32.mrb[0].mxu0
  %v1345 = vadd.f32 %v1304, %v1344
  %v1346 = vpop.f32.mrb[0].mxu0
  %v1347 = vpop.f32.mrb[0].mxu0
  %1348 = vdwg.mxu0
  %1349 = vmatprep.subr.bf16.mxu0 %v939
  %1350 = vmatpush1.bf16.msra.mxu0 %v938
  %1351 = vmatprep.subr.bf16.mxu0 %v941
  %1352 = vmatpush1.bf16.msra.mxu0 %v940
  %1353 = vmatprep.subr.bf16.mxu0 %v943
  %1354 = vmatpush1.bf16.msra.mxu0 %v942
  %1355 = vmatprep.subr.bf16.mxu0 %v945
  %1356 = vmatpush1.bf16.msra.mxu0 %v944
  %1357 = vmatprep.subr.bf16.mxu0 %v947
  %1358 = vmatpush1.bf16.msra.mxu0 %v946
  %1359 = vmatprep.subr.bf16.mxu0 %v949
  %1360 = vmatpush1.bf16.msra.mxu0 %v948
  %1361 = vmatprep.subr.bf16.mxu0 %v951
  %1362 = vmatpush1.bf16.msra.mxu0 %v950
  %1363 = vmatprep.subr.bf16.mxu0 %v953
  %1364 = vmatpush1.bf16.msra.mxu0 %v952
  %1365 = vmatprep.subr.bf16.mxu0 %v955
  %1366 = vmatpush1.bf16.msra.mxu0 %v954
  %1367 = vmatprep.subr.bf16.mxu0 %v957
  %1368 = vmatpush1.bf16.msra.mxu0 %v956
  %1369 = vmatprep.subr.bf16.mxu0 %v959
  %1370 = vmatpush1.bf16.msra.mxu0 %v958
  %1371 = vmatprep.subr.bf16.mxu0 %v961
  %1372 = vmatpush1.bf16.msra.mxu0 %v960
  %1373 = vmatprep.subr.bf16.mxu0 %v963
  %1374 = vmatpush1.bf16.msra.mxu0 %v962
  %1375 = vmatprep.subr.bf16.mxu0 %v965
  %1376 = vmatpush1.bf16.msra.mxu0 %v964
  %1377 = vmatprep.subr.bf16.mxu0 %v967
  %1378 = vmatpush1.bf16.msra.mxu0 %v966
  %1379 = vmatprep.subr.bf16.mxu0 %v969
  %1380 = vmatpush1.bf16.msra.mxu0 %v968
  %1381 = vmatprep.mubr.bf16.mxu0 %v249
  %1382 = vmatmul.mubr.bf16.gmra.mrb[0].mxu0 %v248
  %v1383 = vpop.f32.mrb[0].mxu0
  %v1384 = vadd.f32 %v1343, %v1383
  %v1385 = vpop.f32.mrb[0].mxu0
  %v1386 = vadd.f32 %v1345, %v1385
  %v1387 = vpop.f32.mrb[0].mxu0
  %v1388 = vpop.f32.mrb[0].mxu0
  %1389 = vdwg.mxu0
  %1390 = vmatprep.subr.bf16.mxu0 %v971
  %1391 = vmatpush1.bf16.msra.mxu0 %v970
  %1392 = vmatprep.subr.bf16.mxu0 %v973
  %1393 = vmatpush1.bf16.msra.mxu0 %v972
  %1394 = vmatprep.subr.bf16.mxu0 %v975
  %1395 = vmatpush1.bf16.msra.mxu0 %v974
  %1396 = vmatprep.subr.bf16.mxu0 %v977
  %1397 = vmatpush1.bf16.msra.mxu0 %v976
  %1398 = vmatprep.subr.bf16.mxu0 %v979
  %1399 = vmatpush1.bf16.msra.mxu0 %v978
  %1400 = vmatprep.subr.bf16.mxu0 %v981
  %1401 = vmatpush1.bf16.msra.mxu0 %v980
  %1402 = vmatprep.subr.bf16.mxu0 %v983
  %1403 = vmatpush1.bf16.msra.mxu0 %v982
  %1404 = vmatprep.subr.bf16.mxu0 %v985
  %1405 = vmatpush1.bf16.msra.mxu0 %v984
  %1406 = vmatprep.subr.bf16.mxu0 %v987
  %1407 = vmatpush1.bf16.msra.mxu0 %v986
  %1408 = vmatprep.subr.bf16.mxu0 %v989
  %1409 = vmatpush1.bf16.msra.mxu0 %v988
  %1410 = vmatprep.subr.bf16.mxu0 %v991
  %1411 = vmatpush1.bf16.msra.mxu0 %v990
  %1412 = vmatprep.subr.bf16.mxu0 %v993
  %1413 = vmatpush1.bf16.msra.mxu0 %v992
  %1414 = vmatprep.subr.bf16.mxu0 %v995
  %1415 = vmatpush1.bf16.msra.mxu0 %v994
  %1416 = vmatprep.subr.bf16.mxu0 %v997
  %1417 = vmatpush1.bf16.msra.mxu0 %v996
  %1418 = vmatprep.subr.bf16.mxu0 %v999
  %1419 = vmatpush1.bf16.msra.mxu0 %v998
  %1420 = vmatprep.subr.bf16.mxu0 %v1001
  %1421 = vmatpush1.bf16.msra.mxu0 %v1000
  %1422 = vmatprep.mubr.bf16.mxu0 %v251
  %1423 = vmatmul.mubr.bf16.gmra.mrb[0].mxu0 %v250
  %v1424 = vpop.f32.mrb[0].mxu0
  %v1425 = vadd.f32 %v1384, %v1424
  %v1426 = vpop.f32.mrb[0].mxu0
  %v1427 = vadd.f32 %v1386, %v1426
  %v1428 = vpop.f32.mrb[0].mxu0
  %v1429 = vpop.f32.mrb[0].mxu0
  %1430 = vdwg.mxu0
  %1431 = vmatprep.subr.bf16.mxu0 %v1003
  %1432 = vmatpush1.bf16.msra.mxu0 %v1002
  %1433 = vmatprep.subr.bf16.mxu0 %v1005
  %1434 = vmatpush1.bf16.msra.mxu0 %v1004
  %1435 = vmatprep.subr.bf16.mxu0 %v1007
  %1436 = vmatpush1.bf16.msra.mxu0 %v1006
  %1437 = vmatprep.subr.bf16.mxu0 %v1009
  %1438 = vmatpush1.bf16.msra.mxu0 %v1008
  %1439 = vmatprep.subr.bf16.mxu0 %v1011
  %1440 = vmatpush1.bf16.msra.mxu0 %v1010
  %1441 = vmatprep.subr.bf16.mxu0 %v1013
  %1442 = vmatpush1.bf16.msra.mxu0 %v1012
  %1443 = vmatprep.subr.bf16.mxu0 %v1015
  %1444 = vmatpush1.bf16.msra.mxu0 %v1014
  %1445 = vmatprep.subr.bf16.mxu0 %v1017
  %1446 = vmatpush1.bf16.msra.mxu0 %v1016
  %1447 = vmatprep.subr.bf16.mxu0 %v1019
  %1448 = vmatpush1.bf16.msra.mxu0 %v1018
  %1449 = vmatprep.subr.bf16.mxu0 %v1021
  %1450 = vmatpush1.bf16.msra.mxu0 %v1020
  %1451 = vmatprep.subr.bf16.mxu0 %v1023
  %1452 = vmatpush1.bf16.msra.mxu0 %v1022
  %1453 = vmatprep.subr.bf16.mxu0 %v1025
  %1454 = vmatpush1.bf16.msra.mxu0 %v1024
  %1455 = vmatprep.subr.bf16.mxu0 %v1027
  %1456 = vmatpush1.bf16.msra.mxu0 %v1026
  %1457 = vmatprep.subr.bf16.mxu0 %v1029
  %1458 = vmatpush1.bf16.msra.mxu0 %v1028
  %1459 = vmatprep.subr.bf16.mxu0 %v1031
  %1460 = vmatpush1.bf16.msra.mxu0 %v1030
  %1461 = vmatprep.subr.bf16.mxu0 %v1033
  %1462 = vmatpush1.bf16.msra.mxu0 %v1032
  %1463 = vmatprep.mubr.bf16.mxu0 %v253
  %1464 = vmatmul.mubr.bf16.gmra.mrb[0].mxu0 %v252
  %v1465 = vpop.f32.mrb[0].mxu0
  %v1466 = vadd.f32 %v1425, %v1465
  %v1467 = vpop.f32.mrb[0].mxu0
  %v1468 = vadd.f32 %v1427, %v1467
  %v1469 = vpop.f32.mrb[0].mxu0
  %v1470 = vpop.f32.mrb[0].mxu0
  %1471 = vdwg.mxu0
  %vm1472 = vcmp.ge.f32.partialorder %v1466, 0.0
  %vm1473 = vcmp.ge.f32.partialorder %v1468, 0.0
  %v1474 = vmul.f32 %v1466, 0.01
  %v1475 = vmul.f32 %v1468, 0.01
  %v1476 = vsel %vm1472, %v1466, %v1474
  %v1477 = vsel %vm1473, %v1468, %v1475
  %1478 = vst [vmem:[%s3] sm:$0xff] %v1476
  %1479 = vst [vmem:[%s3 + $0x8] sm:$0xff] %v1477
  // Predicated region
  $region14: #{_encoder_convs.5} parent=0 // pred_check
    _
  $region15: #{_encoder_convs.5} parent=0 // pred_check_branch
    %1481 = sbr.rel (0) target = $region17
  $region16: #{_encoder_convs.5} parent=0 // pred_region
    _
  $region17: #{_encoder_convs.5} parent=0 // pred_fallthru
    _
  // Predicated region
  $region18: #{_encoder_convs.5} parent=0 // pred_check
    _
  $region19: #{_encoder_convs.5} parent=0 // pred_check_branch
    %1483 = sbr.rel (0) target = $region21
  $region20: #{_encoder_convs.5} parent=0 // pred_region
    _
  $region21: #{_encoder_convs.5} parent=0 // pred_fallthru
    _

</llo_original>
